<compile_context>
chip_gen: v6e
topology: v6e:2x2x1
jax: 0.10.0
libtpu: 0.0.40
codegen_flags: <defaults>
</compile_context>

<pallas_src>
import math
import random

import jax
import jax.numpy as jnp
from jax.experimental import pallas as pl
from jax.experimental.pallas import tpu as pltpu

# Scaled-down synthetic sizes (original module hardcodes hidden=512,
# word_dim=1024, vocab=len(i2w)+4; same structure at small size).
H = 128   # hidden_size
W = 256   # word_dim
V = 128   # vocab_size == output_size  (= len(i2w) + 4 in the original)


def expit(x):
    return 1.0 / (1.0 + math.exp(-x))


def fused_decoder_kernel(
    # inputs
    tf_ref,      # (T1,)      int32 SMEM  teacher-forcing mask (1 -> teacher word)
    tgt_ref,     # (T1, B, W) f32   teacher word embeddings, time-major
    h0_ref,      # (B, H)     f32   initial hidden state
    fb0_ref,     # (B, W)     f32   initial feedback embedding (token id 1)
    score0_ref,  # (B, S)     f32   folded attention score, encoder part + bias
    enc_ref,     # (B, S, H)  f32   encoder outputs
    emb_ref,     # (V, W)     bf16  embedding table (argmax feedback lookup)
    wh_ref,      # (1, H)     f32   folded attention weight, hidden part
    wih_ref,     # (W+H, 3H)  bf16  merged GRU W_ih ([word rows; context rows])
    whh_ref,     # (H, 3H)    bf16  GRU W_hh
    grub_ref,    # (2, 3H)    f32   packed [b_ih; b_hh]
    wout_ref,    # (H, V)     bf16  output projection
    bout_ref,    # (1, V)     f32
    # outputs
    logits_ref,  # (T1, B, V) f32
    # scratch (VMEM, persists across loop steps)
    h_scr,       # (B, H)     f32   recurrent hidden state
    fb_scr,      # (B, W)     f32   argmax-feedback word embedding
):
    f32 = jnp.float32
    bf16 = jnp.bfloat16
    T1, B, Vd = logits_ref.shape
    S = enc_ref.shape[1]
    Hd = h_scr.shape[1]
    Wd = fb_scr.shape[1]

    # one-time state init (everything else was precomputed in the wrapper)
    h_scr[...] = h0_ref[...]
    fb_scr[...] = fb0_ref[...]

    def step(t, carry):
        h = h_scr[...]

        # ---- teacher-forcing select: splat mask, vector compare, one vsel ----
        m = tf_ref[t]
        use_teacher = jnp.full((B, Wd), m, dtype=jnp.int32) != 0
        word = jnp.where(use_teacher, tgt_ref[t], fb_scr[...])          # (B, W)

        # ---- attention (linear chain folded; enc part precomputed) -----------
        h_score = jnp.sum(h * wh_ref[...], axis=-1, keepdims=True)      # (B, 1)
        scores = score0_ref[...] + h_score                               # (B, S)
        scores = scores - jnp.max(scores, axis=-1, keepdims=True)
        e = jnp.exp(scores)
        attn = e * pl.reciprocal(jnp.sum(e, axis=-1, keepdims=True), approx=True)
        if S >= 128:
            # production-size S: batched MXU matmul instead of VPU mul+reduce
            context = jnp.einsum('bs,bsh->bh', attn.astype(bf16),
                                 enc_ref[...].astype(bf16),
                                 preferred_element_type=f32)
        else:
            context = jnp.sum(attn[:, :, None] * enc_ref[...], axis=1)   # (B, H)

        # ---- GRU cell (gate order r, z, n), single merged input matmul -------
        gb = grub_ref[...]                                               # (2, 3H)
        x_cat = jnp.concatenate([word, context], axis=-1).astype(bf16)  # (B, W+H)
        gx = (jnp.dot(x_cat, wih_ref[...], preferred_element_type=f32)
              + gb[0:1, :])                                              # (B, 3H)
        gh = (jnp.dot(h.astype(bf16), whh_ref[...], preferred_element_type=f32)
              + gb[1:2, :])                                              # (B, 3H)
        r = jax.nn.sigmoid(gx[:, 0:Hd] + gh[:, 0:Hd])
        z = jax.nn.sigmoid(gx[:, Hd:2 * Hd] + gh[:, Hd:2 * Hd])
        n = jnp.tanh(gx[:, 2 * Hd:3 * Hd] + r * gh[:, 2 * Hd:3 * Hd])
        h_new = (1.0 - z) * n + z * h                                    # (B, H)

        # ---- output projection ------------------------------------------------
        logits = (jnp.dot(h_new.astype(bf16), wout_ref[...],
                          preferred_element_type=f32)
                  + bout_ref[...])                                       # (B, V)
        logits_ref[t] = logits

        # ---- argmax feedback + embedding lookup (one-hot @ emb) --------------
        iota = jax.lax.broadcasted_iota(jnp.int32, (B, Vd), 1)
        max_val = jnp.max(logits, axis=-1, keepdims=True)
        idx = jnp.min(jnp.where(logits == max_val, iota, Vd),
                      axis=-1, keepdims=True)                            # (B, 1)
        onehot = (iota == idx).astype(bf16)
        fb_scr[...] = jnp.dot(onehot, emb_ref[...], preferred_element_type=f32)

        h_scr[...] = h_new
        return carry

    jax.lax.fori_loop(0, T1, step, 0, unroll=True)


def _fold_attention(p):
    """linear2/3/4 and to_weight have no nonlinearity between them in the
    original module, so fold the whole chain into two (1, H) vectors plus a
    scalar bias (bias is softmax-invariant but kept for parity).
    Weights here are stored / applied in x @ W orientation."""
    m = p["w2"] @ p["w3"] @ p["w4"] @ p["wwt"].T                  # (H, 1)
    w_enc = (p["w1e"] @ m).T                                      # (1, H)
    w_h = (p["w1h"] @ m).T                                        # (1, H)
    c = ((((p["b1"] @ p["w2"] + p["b2"]) @ p["w3"] + p["b3"]) @ p["w4"]
          + p["b4"]) @ p["wwt"].T)                                # (1, 1)
    return w_enc, w_h, c


def decoder_forward(encoder_last_hidden_state, encoder_output, targets, p,
                    tr_steps=10, py_rng=None):
    """DecoderNet.forward (mode='train') semantics, one fused kernel call."""
    if py_rng is None:
        py_rng = random.Random(0)

    f32 = jnp.float32
    bf16 = jnp.bfloat16

    _, B, _ = encoder_last_hidden_state.shape
    _, S, _ = encoder_output.shape
    T = targets.shape[1]
    T1 = T - 1

    h0 = encoder_last_hidden_state.reshape(B, H).astype(f32)
    enc = encoder_output.astype(f32)

    # Teacher-forcing coin flips are drawn on the host (as in the PyTorch loop)
    # and passed as int32 data, so they stay per-call random even though the
    # whole decode loop is one compiled kernel.
    threshold = expit(tr_steps / 20 + 0.85)
    tf_flags = jnp.asarray(
        [1 if py_rng.uniform(0.05, 0.995) > threshold else 0 for _ in range(T1)],
        dtype=jnp.int32)

    # Teacher embeddings for steps 0..T-2, time-major.
    tgt_emb = jnp.take(p["emb"], targets[:, :T1], axis=0)         # (B, T-1, W)
    tgt_emb = jnp.transpose(tgt_emb, (1, 0, 2)).astype(f32)       # (T-1, B, W)

    # Fold attention; precompute one-time pieces on the XLA side.
    w_enc, w_h, c_bias = _fold_attention(p)
    score0 = (jnp.einsum('bsh,h->bs', enc, w_enc[0]) + c_bias[0, 0]).astype(f32)
    fb0 = jnp.broadcast_to(p["emb"][1:2, :], (B, W)).astype(f32)  # token id 1

    # Merged GRU input weight + packed biases.
    wih = jnp.concatenate([p["wih_w"], p["wih_c"]], axis=0).astype(bf16)  # (W+H,3H)
    gru_b = jnp.concatenate([p["b_ih"], p["b_hh"]], axis=0).astype(f32)   # (2, 3H)

    # TODO(synk): nn.Dropout(0.3) is declared in __init__ but never applied in
    # the original forward, so it is intentionally omitted here.
    # TODO(synk): on v7x with B >= 16, split the batch over the second
    # TensorCore (core_parallel leading grid axis); at B=8 it is not worth it.

    vmem = pl.BlockSpec(memory_space=pltpu.MemorySpace.VMEM)
    smem = pl.BlockSpec(memory_space=pltpu.MemorySpace.SMEM)

    logits_t = pl.pallas_call(
        fused_decoder_kernel,
        out_shape=jax.ShapeDtypeStruct((T1, B, V), f32),
        in_specs=[smem] + [vmem] * 12,
        out_specs=vmem,
        scratch_shapes=[
            pltpu.VMEM((B, H), f32),    # recurrent hidden state
            pltpu.VMEM((B, W), f32),    # argmax-feedback word embedding
        ],
    )(
        tf_flags,
        tgt_emb, h0, fb0, score0, enc,
        p["emb"].astype(bf16),
        w_h.astype(f32),
        wih,
        p["whh"].astype(bf16),
        gru_b,
        p["wout"].astype(bf16),
        p["bout"].astype(f32),
    )

    # The original module returns the raw to_final_output activations (calls
    # them "logProb" but never applies log_softmax), so raw logits are returned.
    seq_logprob = jnp.transpose(logits_t, (1, 0, 2))     # (B, T-1, V)
    seq_predictions = jnp.argmax(seq_logprob, axis=2)    # (B, T-1)
    return seq_logprob, seq_predictions


def init_params(key):
    """Deterministic synthetic parameters (shapes mirror the PyTorch module,
    stored in x @ W orientation)."""
    ks = jax.random.split(key, 20)
    s = 0.05
    p = {}
    p["emb"] = jax.random.normal(ks[0], (V, W), jnp.float32) * s   # nn.Embedding(V, W)
    # Attention: linear1 (2H -> H) split into enc-part / hidden-part
    p["w1e"] = jax.random.normal(ks[1], (H, H), jnp.float32) * s
    p["w1h"] = jax.random.normal(ks[2], (H, H), jnp.float32) * s
    p["b1"] = jax.random.normal(ks[3], (1, H), jnp.float32) * s
    p["w2"] = jax.random.normal(ks[4], (H, H), jnp.float32) * s
    p["b2"] = jax.random.normal(ks[5], (1, H), jnp.float32) * s
    p["w3"] = jax.random.normal(ks[6], (H, H), jnp.float32) * s
    p["b3"] = jax.random.normal(ks[7], (1, H), jnp.float32) * s
    p["w4"] = jax.random.normal(ks[8], (H, H), jnp.float32) * s
    p["b4"] = jax.random.normal(ks[9], (1, H), jnp.float32) * s
    p["wwt"] = jax.random.normal(ks[10], (1, H), jnp.float32) * s  # to_weight (H -> 1)
    # GRU (input_size = W + H, hidden = H), gate order r,z,n ; W_ih split word/context
    p["wih_w"] = jax.random.normal(ks[11], (W, 3 * H), jnp.float32) * s
    p["wih_c"] = jax.random.normal(ks[12], (H, 3 * H), jnp.float32) * s
    p["b_ih"] = jax.random.normal(ks[13], (1, 3 * H), jnp.float32) * s
    p["whh"] = jax.random.normal(ks[14], (H, 3 * H), jnp.float32) * s
    p["b_hh"] = jax.random.normal(ks[15], (1, 3 * H), jnp.float32) * s
    p["wout"] = jax.random.normal(ks[16], (H, V), jnp.float32) * s
    p["bout"] = jax.random.normal(ks[17], (1, V), jnp.float32) * s
    return p


if __name__ == "__main__":
    key = jax.random.PRNGKey(0)
    k_par, k_h, k_enc, k_tgt = jax.random.split(key, 4)

    params = init_params(k_par)

    # B >= 8 keeps matmul sublanes full and the (B, V)/(B, H) stores unmasked.
    B, S, T = 8, 8, 6
    encoder_last_hidden_state = jax.random.normal(k_h, (1, B, H), jnp.float32)
    encoder_output = jax.random.normal(k_enc, (B, S, H), jnp.float32)
    targets = jax.random.randint(k_tgt, (B, T), 0, V, dtype=jnp.int32)

    seq_logprob, seq_pred = decoder_forward(
        encoder_last_hidden_state, encoder_output, targets, params,
        tr_steps=10, py_rng=random.Random(0))

    jax.block_until_ready((seq_logprob, seq_pred))
    assert seq_logprob.shape == (B, T - 1, V)
    assert seq_pred.shape == (B, T - 1)
    assert bool(jnp.all(jnp.isfinite(seq_logprob)))
    print("KERNEL_OK")
</pallas_src>

<mosaic_0001>
module attributes {stable_mosaic.version = 11 : i64} {
  func.func @fused_decoder_kernel(%arg0: memref<5xi32, #tpu.memory_space<smem>>, %arg1: memref<5x8x256xf32, #tpu.memory_space<vmem>>, %arg2: memref<8x128xf32, #tpu.memory_space<vmem>>, %arg3: memref<8x256xf32, #tpu.memory_space<vmem>>, %arg4: memref<8x8xf32, #tpu.memory_space<vmem>>, %arg5: memref<8x8x128xf32, #tpu.memory_space<vmem>>, %arg6: memref<128x256xbf16, #tpu.memory_space<vmem>>, %arg7: memref<1x128xf32, #tpu.memory_space<vmem>>, %arg8: memref<384x384xbf16, #tpu.memory_space<vmem>>, %arg9: memref<128x384xbf16, #tpu.memory_space<vmem>>, %arg10: memref<2x384xf32, #tpu.memory_space<vmem>>, %arg11: memref<128x128xbf16, #tpu.memory_space<vmem>>, %arg12: memref<1x128xf32, #tpu.memory_space<vmem>>, %arg13: memref<5x8x128xf32, #tpu.memory_space<vmem>>, %arg14: memref<8x128xf32, #tpu.memory_space<vmem>>, %arg15: memref<8x256xf32, #tpu.memory_space<vmem>>) attributes {dimension_semantics = [], scalar_prefetch = 0 : i64, scratch_operands = 2 : i64, tpu.core_type = #tpu.core_type<tc>} {
    %c0 = arith.constant 0 : index
    %c0_0 = arith.constant 0 : index
    %0 = vector.load %arg2[%c0, %c0_0] : memref<8x128xf32, #tpu.memory_space<vmem>>, vector<8x128xf32>
    %c0_1 = arith.constant 0 : index
    %c0_2 = arith.constant 0 : index
    %1 = vector.load %arg14[%c0_1, %c0_2] : memref<8x128xf32, #tpu.memory_space<vmem>>, vector<8x128xf32>
    tpu.vector_store %arg14[%c0_1, %c0_2], %0 {strides = array<i32>} : memref<8x128xf32, #tpu.memory_space<vmem>>, vector<8x128xf32>,
    %c0_3 = arith.constant 0 : index
    %c0_4 = arith.constant 0 : index
    %2 = vector.load %arg3[%c0_3, %c0_4] : memref<8x256xf32, #tpu.memory_space<vmem>>, vector<8x256xf32>
    %c0_5 = arith.constant 0 : index
    %c0_6 = arith.constant 0 : index
    %3 = vector.load %arg15[%c0_5, %c0_6] : memref<8x256xf32, #tpu.memory_space<vmem>>, vector<8x256xf32>
    tpu.vector_store %arg15[%c0_5, %c0_6], %2 {strides = array<i32>} : memref<8x256xf32, #tpu.memory_space<vmem>>, vector<8x256xf32>,
    %c0_i32 = arith.constant 0 : i32
    %c0_7 = arith.constant 0 : index
    %c0_8 = arith.constant 0 : index
    %4 = vector.load %arg14[%c0_7, %c0_8] : memref<8x128xf32, #tpu.memory_space<vmem>>, vector<8x128xf32>
    %5 = arith.index_cast %c0_i32 : i32 to index
    %6 = memref.load %arg0[%5] : memref<5xi32, #tpu.memory_space<smem>>
    %7 = vector.broadcast %6 : i32 to vector<8x256xi32>
    %c0_i32_9 = arith.constant 0 : i32
    %8 = vector.broadcast %c0_i32_9 : i32 to vector<8x256xi32>
    %9 = arith.cmpi ne, %7, %8 : vector<8x256xi32>
    %10 = arith.index_cast %c0_i32 : i32 to index
    %c0_10 = arith.constant 0 : index
    %c0_11 = arith.constant 0 : index
    %11 = vector.load %arg1[%10, %c0_10, %c0_11] : memref<5x8x256xf32, #tpu.memory_space<vmem>>, vector<1x8x256xf32>
    %12 = vector.shape_cast %11 : vector<1x8x256xf32> to vector<8x256xf32>
    %c0_12 = arith.constant 0 : index
    %c0_13 = arith.constant 0 : index
    %13 = vector.load %arg15[%c0_12, %c0_13] : memref<8x256xf32, #tpu.memory_space<vmem>>, vector<8x256xf32>
    %14 = arith.select %9, %12, %13 : vector<8x256xi1>, vector<8x256xf32>
    %c0_14 = arith.constant 0 : index
    %c0_15 = arith.constant 0 : index
    %15 = vector.load %arg7[%c0_14, %c0_15] : memref<1x128xf32, #tpu.memory_space<vmem>>, vector<1x128xf32>
    %16 = vector.broadcast %15 : vector<1x128xf32> to vector<8x128xf32>
    %17 = arith.mulf %4, %16 : vector<8x128xf32>
    %cst = arith.constant dense<0.000000e+00> : vector<8xf32>
    %18 = vector.multi_reduction <add>, %17, %cst [1] : vector<8x128xf32> to vector<8xf32>
    %19 = vector.shape_cast %18 : vector<8xf32> to vector<8x1xf32>
    %c0_16 = arith.constant 0 : index
    %c0_17 = arith.constant 0 : index
    %20 = vector.load %arg4[%c0_16, %c0_17] : memref<8x8xf32, #tpu.memory_space<vmem>>, vector<8x8xf32>
    %21 = vector.broadcast %19 : vector<8x1xf32> to vector<8x8xf32>
    %22 = arith.addf %20, %21 : vector<8x8xf32>
    %cst_18 = arith.constant dense<0xFF800000> : vector<8xf32>
    %23 = vector.multi_reduction <maximumf>, %22, %cst_18 [1] : vector<8x8xf32> to vector<8xf32>
    %24 = vector.shape_cast %23 : vector<8xf32> to vector<8x1xf32>
    %25 = vector.broadcast %24 : vector<8x1xf32> to vector<8x8xf32>
    %26 = arith.subf %22, %25 : vector<8x8xf32>
    %27 = math.exp %26 : vector<8x8xf32>
    %cst_19 = arith.constant dense<0.000000e+00> : vector<8xf32>
    %28 = vector.multi_reduction <add>, %27, %cst_19 [1] : vector<8x8xf32> to vector<8xf32>
    %29 = vector.shape_cast %28 : vector<8xf32> to vector<8x1xf32>
    %30 = tpu.reciprocal %29 {approx = true} : vector<8x1xf32> -> vector<8x1xf32>
    %31 = vector.broadcast %30 : vector<8x1xf32> to vector<8x8xf32>
    %32 = arith.mulf %27, %31 : vector<8x8xf32>
    %33 = vector.shape_cast %32 : vector<8x8xf32> to vector<8x8x1xf32>
    %c0_20 = arith.constant 0 : index
    %c0_21 = arith.constant 0 : index
    %c0_22 = arith.constant 0 : index
    %34 = vector.load %arg5[%c0_20, %c0_21, %c0_22] : memref<8x8x128xf32, #tpu.memory_space<vmem>>, vector<8x8x128xf32>
    %35 = vector.broadcast %33 : vector<8x8x1xf32> to vector<8x8x128xf32>
    %36 = arith.mulf %35, %34 : vector<8x8x128xf32>
    %cst_23 = arith.constant dense<0.000000e+00> : vector<8x128xf32>
    %37 = vector.multi_reduction <add>, %36, %cst_23 [1] : vector<8x8x128xf32> to vector<8x128xf32>
    %c0_24 = arith.constant 0 : index
    %c0_25 = arith.constant 0 : index
    %38 = vector.load %arg10[%c0_24, %c0_25] : memref<2x384xf32, #tpu.memory_space<vmem>>, vector<2x384xf32>
    %39 = tpu.concatenate %14, %37 in 1 : vector<8x256xf32>, vector<8x128xf32> -> vector<8x384xf32>
    %40 = arith.truncf %39 : vector<8x384xf32> to vector<8x384xbf16>
    %c0_26 = arith.constant 0 : index
    %c0_27 = arith.constant 0 : index
    %41 = vector.load %arg8[%c0_26, %c0_27] : memref<384x384xbf16, #tpu.memory_space<vmem>>, vector<384x384xbf16>
    %cst_28 = arith.constant dense<0.000000e+00> : vector<8x384xf32>
    %42 = tpu.matmul %40, %41, %cst_28 {dimension_numbers = #tpu.dot_dimension_numbers<[1], [0], [0], [1], [0, 0, 1, 1], [], []>} : vector<8x384xbf16>, vector<384x384xbf16>, vector<8x384xf32> -> vector<8x384xf32>
    %43 = vector.extract_strided_slice %38 {offsets = [0, 0], sizes = [1, 384], strides = [1, 1]} : vector<2x384xf32> to vector<1x384xf32>
    %44 = vector.broadcast %43 : vector<1x384xf32> to vector<8x384xf32>
    %45 = arith.addf %42, %44 : vector<8x384xf32>
    %46 = arith.truncf %4 : vector<8x128xf32> to vector<8x128xbf16>
    %c0_29 = arith.constant 0 : index
    %c0_30 = arith.constant 0 : index
    %47 = vector.load %arg9[%c0_29, %c0_30] : memref<128x384xbf16, #tpu.memory_space<vmem>>, vector<128x384xbf16>
    %cst_31 = arith.constant dense<0.000000e+00> : vector<8x384xf32>
    %48 = tpu.matmul %46, %47, %cst_31 {dimension_numbers = #tpu.dot_dimension_numbers<[1], [0], [0], [1], [0, 0, 1, 1], [], []>} : vector<8x128xbf16>, vector<128x384xbf16>, vector<8x384xf32> -> vector<8x384xf32>
    %49 = vector.extract_strided_slice %38 {offsets = [1, 0], sizes = [1, 384], strides = [1, 1]} : vector<2x384xf32> to vector<1x384xf32>
    %50 = vector.broadcast %49 : vector<1x384xf32> to vector<8x384xf32>
    %51 = arith.addf %48, %50 : vector<8x384xf32>
    %52 = vector.extract_strided_slice %45 {offsets = [0, 0], sizes = [8, 128], strides = [1, 1]} : vector<8x384xf32> to vector<8x128xf32>
    %53 = vector.extract_strided_slice %51 {offsets = [0, 0], sizes = [8, 128], strides = [1, 1]} : vector<8x384xf32> to vector<8x128xf32>
    %54 = arith.addf %52, %53 : vector<8x128xf32>
    %55 = arith.negf %54 : vector<8x128xf32>
    %56 = math.exp %55 : vector<8x128xf32>
    %cst_32 = arith.constant 1.000000e+00 : f32
    %57 = vector.broadcast %cst_32 : f32 to vector<8x128xf32>
    %58 = arith.addf %57, %56 : vector<8x128xf32>
    %59 = arith.divf %57, %58 : vector<8x128xf32>
    %60 = vector.extract_strided_slice %45 {offsets = [0, 128], sizes = [8, 128], strides = [1, 1]} : vector<8x384xf32> to vector<8x128xf32>
    %61 = vector.extract_strided_slice %51 {offsets = [0, 128], sizes = [8, 128], strides = [1, 1]} : vector<8x384xf32> to vector<8x128xf32>
    %62 = arith.addf %60, %61 : vector<8x128xf32>
    %63 = arith.negf %62 : vector<8x128xf32>
    %64 = math.exp %63 : vector<8x128xf32>
    %cst_33 = arith.constant 1.000000e+00 : f32
    %65 = vector.broadcast %cst_33 : f32 to vector<8x128xf32>
    %66 = arith.addf %65, %64 : vector<8x128xf32>
    %67 = arith.divf %65, %66 : vector<8x128xf32>
    %68 = vector.extract_strided_slice %45 {offsets = [0, 256], sizes = [8, 128], strides = [1, 1]} : vector<8x384xf32> to vector<8x128xf32>
    %69 = vector.extract_strided_slice %51 {offsets = [0, 256], sizes = [8, 128], strides = [1, 1]} : vector<8x384xf32> to vector<8x128xf32>
    %70 = arith.mulf %59, %69 : vector<8x128xf32>
    %71 = arith.addf %68, %70 : vector<8x128xf32>
    %72 = math.tanh %71 : vector<8x128xf32>
    %cst_34 = arith.constant 1.000000e+00 : f32
    %73 = vector.broadcast %cst_34 : f32 to vector<8x128xf32>
    %74 = arith.subf %73, %67 : vector<8x128xf32>
    %75 = arith.mulf %74, %72 : vector<8x128xf32>
    %76 = arith.mulf %67, %4 : vector<8x128xf32>
    %77 = arith.addf %75, %76 : vector<8x128xf32>
    %78 = arith.truncf %77 : vector<8x128xf32> to vector<8x128xbf16>
    %c0_35 = arith.constant 0 : index
    %c0_36 = arith.constant 0 : index
    %79 = vector.load %arg11[%c0_35, %c0_36] : memref<128x128xbf16, #tpu.memory_space<vmem>>, vector<128x128xbf16>
    %cst_37 = arith.constant dense<0.000000e+00> : vector<8x128xf32>
    %80 = tpu.matmul %78, %79, %cst_37 {dimension_numbers = #tpu.dot_dimension_numbers<[1], [0], [0], [1], [0, 0, 1, 1], [], []>} : vector<8x128xbf16>, vector<128x128xbf16>, vector<8x128xf32> -> vector<8x128xf32>
    %c0_38 = arith.constant 0 : index
    %c0_39 = arith.constant 0 : index
    %81 = vector.load %arg12[%c0_38, %c0_39] : memref<1x128xf32, #tpu.memory_space<vmem>>, vector<1x128xf32>
    %82 = vector.broadcast %81 : vector<1x128xf32> to vector<8x128xf32>
    %83 = arith.addf %80, %82 : vector<8x128xf32>
    %84 = arith.index_cast %c0_i32 : i32 to index
    %c0_40 = arith.constant 0 : index
    %c0_41 = arith.constant 0 : index
    %85 = vector.load %arg13[%84, %c0_40, %c0_41] : memref<5x8x128xf32, #tpu.memory_space<vmem>>, vector<1x8x128xf32>
    %86 = vector.shape_cast %85 : vector<1x8x128xf32> to vector<8x128xf32>
    %87 = vector.shape_cast %83 : vector<8x128xf32> to vector<1x8x128xf32>
    tpu.vector_store %arg13[%84, %c0_40, %c0_41], %87 {strides = array<i32>} : memref<5x8x128xf32, #tpu.memory_space<vmem>>, vector<1x8x128xf32>,
    %88 = tpu.iota {dimensions = array<i32: 1>} : vector<8x128xi32>
    %cst_42 = arith.constant dense<0xFF800000> : vector<8xf32>
    %89 = vector.multi_reduction <maximumf>, %83, %cst_42 [1] : vector<8x128xf32> to vector<8xf32>
    %90 = vector.shape_cast %89 : vector<8xf32> to vector<8x1xf32>
    %91 = vector.broadcast %90 : vector<8x1xf32> to vector<8x128xf32>
    %92 = arith.cmpf oeq, %83, %91 : vector<8x128xf32>
    %c128_i32 = arith.constant 128 : i32
    %93 = vector.broadcast %c128_i32 : i32 to vector<8x128xi32>
    %94 = arith.select %92, %88, %93 : vector<8x128xi1>, vector<8x128xi32>
    %cst_43 = arith.constant dense<2147483647> : vector<8xi32>
    %95 = vector.multi_reduction <minsi>, %94, %cst_43 [1] : vector<8x128xi32> to vector<8xi32>
    %96 = vector.shape_cast %95 : vector<8xi32> to vector<8x1xi32>
    %97 = vector.broadcast %96 : vector<8x1xi32> to vector<8x128xi32>
    %98 = arith.cmpi eq, %88, %97 : vector<8x128xi32>
    %99 = arith.extui %98 : vector<8x128xi1> to vector<8x128xi32>
    %100 = arith.sitofp %99 : vector<8x128xi32> to vector<8x128xf32>
    %101 = arith.truncf %100 : vector<8x128xf32> to vector<8x128xbf16>
    %c0_44 = arith.constant 0 : index
    %c0_45 = arith.constant 0 : index
    %102 = vector.load %arg6[%c0_44, %c0_45] : memref<128x256xbf16, #tpu.memory_space<vmem>>, vector<128x256xbf16>
    %cst_46 = arith.constant dense<0.000000e+00> : vector<8x256xf32>
    %103 = tpu.matmul %101, %102, %cst_46 {dimension_numbers = #tpu.dot_dimension_numbers<[1], [0], [0], [1], [0, 0, 1, 1], [], []>} : vector<8x128xbf16>, vector<128x256xbf16>, vector<8x256xf32> -> vector<8x256xf32>
    %c0_47 = arith.constant 0 : index
    %c0_48 = arith.constant 0 : index
    %104 = vector.load %arg15[%c0_47, %c0_48] : memref<8x256xf32, #tpu.memory_space<vmem>>, vector<8x256xf32>
    tpu.vector_store %arg15[%c0_47, %c0_48], %103 {strides = array<i32>} : memref<8x256xf32, #tpu.memory_space<vmem>>, vector<8x256xf32>,
    %c0_49 = arith.constant 0 : index
    %c0_50 = arith.constant 0 : index
    %105 = vector.load %arg14[%c0_49, %c0_50] : memref<8x128xf32, #tpu.memory_space<vmem>>, vector<8x128xf32>
    tpu.vector_store %arg14[%c0_49, %c0_50], %77 {strides = array<i32>} : memref<8x128xf32, #tpu.memory_space<vmem>>, vector<8x128xf32>,
    %c1_i32 = arith.constant 1 : i32
    %c0_51 = arith.constant 0 : index
    %c0_52 = arith.constant 0 : index
    %106 = vector.load %arg14[%c0_51, %c0_52] : memref<8x128xf32, #tpu.memory_space<vmem>>, vector<8x128xf32>
    %107 = arith.index_cast %c1_i32 : i32 to index
    %108 = memref.load %arg0[%107] : memref<5xi32, #tpu.memory_space<smem>>
    %109 = vector.broadcast %108 : i32 to vector<8x256xi32>
    %c0_i32_53 = arith.constant 0 : i32
    %110 = vector.broadcast %c0_i32_53 : i32 to vector<8x256xi32>
    %111 = arith.cmpi ne, %109, %110 : vector<8x256xi32>
    %112 = arith.index_cast %c1_i32 : i32 to index
    %c0_54 = arith.constant 0 : index
    %c0_55 = arith.constant 0 : index
    %113 = vector.load %arg1[%112, %c0_54, %c0_55] : memref<5x8x256xf32, #tpu.memory_space<vmem>>, vector<1x8x256xf32>
    %114 = vector.shape_cast %113 : vector<1x8x256xf32> to vector<8x256xf32>
    %c0_56 = arith.constant 0 : index
    %c0_57 = arith.constant 0 : index
    %115 = vector.load %arg15[%c0_56, %c0_57] : memref<8x256xf32, #tpu.memory_space<vmem>>, vector<8x256xf32>
    %116 = arith.select %111, %114, %115 : vector<8x256xi1>, vector<8x256xf32>
    %c0_58 = arith.constant 0 : index
    %c0_59 = arith.constant 0 : index
    %117 = vector.load %arg7[%c0_58, %c0_59] : memref<1x128xf32, #tpu.memory_space<vmem>>, vector<1x128xf32>
    %118 = vector.broadcast %117 : vector<1x128xf32> to vector<8x128xf32>
    %119 = arith.mulf %106, %118 : vector<8x128xf32>
    %cst_60 = arith.constant dense<0.000000e+00> : vector<8xf32>
    %120 = vector.multi_reduction <add>, %119, %cst_60 [1] : vector<8x128xf32> to vector<8xf32>
    %121 = vector.shape_cast %120 : vector<8xf32> to vector<8x1xf32>
    %c0_61 = arith.constant 0 : index
    %c0_62 = arith.constant 0 : index
    %122 = vector.load %arg4[%c0_61, %c0_62] : memref<8x8xf32, #tpu.memory_space<vmem>>, vector<8x8xf32>
    %123 = vector.broadcast %121 : vector<8x1xf32> to vector<8x8xf32>
    %124 = arith.addf %122, %123 : vector<8x8xf32>
    %cst_63 = arith.constant dense<0xFF800000> : vector<8xf32>
    %125 = vector.multi_reduction <maximumf>, %124, %cst_63 [1] : vector<8x8xf32> to vector<8xf32>
    %126 = vector.shape_cast %125 : vector<8xf32> to vector<8x1xf32>
    %127 = vector.broadcast %126 : vector<8x1xf32> to vector<8x8xf32>
    %128 = arith.subf %124, %127 : vector<8x8xf32>
    %129 = math.exp %128 : vector<8x8xf32>
    %cst_64 = arith.constant dense<0.000000e+00> : vector<8xf32>
    %130 = vector.multi_reduction <add>, %129, %cst_64 [1] : vector<8x8xf32> to vector<8xf32>
    %131 = vector.shape_cast %130 : vector<8xf32> to vector<8x1xf32>
    %132 = tpu.reciprocal %131 {approx = true} : vector<8x1xf32> -> vector<8x1xf32>
    %133 = vector.broadcast %132 : vector<8x1xf32> to vector<8x8xf32>
    %134 = arith.mulf %129, %133 : vector<8x8xf32>
    %135 = vector.shape_cast %134 : vector<8x8xf32> to vector<8x8x1xf32>
    %c0_65 = arith.constant 0 : index
    %c0_66 = arith.constant 0 : index
    %c0_67 = arith.constant 0 : index
    %136 = vector.load %arg5[%c0_65, %c0_66, %c0_67] : memref<8x8x128xf32, #tpu.memory_space<vmem>>, vector<8x8x128xf32>
    %137 = vector.broadcast %135 : vector<8x8x1xf32> to vector<8x8x128xf32>
    %138 = arith.mulf %137, %136 : vector<8x8x128xf32>
    %cst_68 = arith.constant dense<0.000000e+00> : vector<8x128xf32>
    %139 = vector.multi_reduction <add>, %138, %cst_68 [1] : vector<8x8x128xf32> to vector<8x128xf32>
    %c0_69 = arith.constant 0 : index
    %c0_70 = arith.constant 0 : index
    %140 = vector.load %arg10[%c0_69, %c0_70] : memref<2x384xf32, #tpu.memory_space<vmem>>, vector<2x384xf32>
    %141 = tpu.concatenate %116, %139 in 1 : vector<8x256xf32>, vector<8x128xf32> -> vector<8x384xf32>
    %142 = arith.truncf %141 : vector<8x384xf32> to vector<8x384xbf16>
    %c0_71 = arith.constant 0 : index
    %c0_72 = arith.constant 0 : index
    %143 = vector.load %arg8[%c0_71, %c0_72] : memref<384x384xbf16, #tpu.memory_space<vmem>>, vector<384x384xbf16>
    %cst_73 = arith.constant dense<0.000000e+00> : vector<8x384xf32>
    %144 = tpu.matmul %142, %143, %cst_73 {dimension_numbers = #tpu.dot_dimension_numbers<[1], [0], [0], [1], [0, 0, 1, 1], [], []>} : vector<8x384xbf16>, vector<384x384xbf16>, vector<8x384xf32> -> vector<8x384xf32>
    %145 = vector.extract_strided_slice %140 {offsets = [0, 0], sizes = [1, 384], strides = [1, 1]} : vector<2x384xf32> to vector<1x384xf32>
    %146 = vector.broadcast %145 : vector<1x384xf32> to vector<8x384xf32>
    %147 = arith.addf %144, %146 : vector<8x384xf32>
    %148 = arith.truncf %106 : vector<8x128xf32> to vector<8x128xbf16>
    %c0_74 = arith.constant 0 : index
    %c0_75 = arith.constant 0 : index
    %149 = vector.load %arg9[%c0_74, %c0_75] : memref<128x384xbf16, #tpu.memory_space<vmem>>, vector<128x384xbf16>
    %cst_76 = arith.constant dense<0.000000e+00> : vector<8x384xf32>
    %150 = tpu.matmul %148, %149, %cst_76 {dimension_numbers = #tpu.dot_dimension_numbers<[1], [0], [0], [1], [0, 0, 1, 1], [], []>} : vector<8x128xbf16>, vector<128x384xbf16>, vector<8x384xf32> -> vector<8x384xf32>
    %151 = vector.extract_strided_slice %140 {offsets = [1, 0], sizes = [1, 384], strides = [1, 1]} : vector<2x384xf32> to vector<1x384xf32>
    %152 = vector.broadcast %151 : vector<1x384xf32> to vector<8x384xf32>
    %153 = arith.addf %150, %152 : vector<8x384xf32>
    %154 = vector.extract_strided_slice %147 {offsets = [0, 0], sizes = [8, 128], strides = [1, 1]} : vector<8x384xf32> to vector<8x128xf32>
    %155 = vector.extract_strided_slice %153 {offsets = [0, 0], sizes = [8, 128], strides = [1, 1]} : vector<8x384xf32> to vector<8x128xf32>
    %156 = arith.addf %154, %155 : vector<8x128xf32>
    %157 = arith.negf %156 : vector<8x128xf32>
    %158 = math.exp %157 : vector<8x128xf32>
    %cst_77 = arith.constant 1.000000e+00 : f32
    %159 = vector.broadcast %cst_77 : f32 to vector<8x128xf32>
    %160 = arith.addf %159, %158 : vector<8x128xf32>
    %161 = arith.divf %159, %160 : vector<8x128xf32>
    %162 = vector.extract_strided_slice %147 {offsets = [0, 128], sizes = [8, 128], strides = [1, 1]} : vector<8x384xf32> to vector<8x128xf32>
    %163 = vector.extract_strided_slice %153 {offsets = [0, 128], sizes = [8, 128], strides = [1, 1]} : vector<8x384xf32> to vector<8x128xf32>
    %164 = arith.addf %162, %163 : vector<8x128xf32>
    %165 = arith.negf %164 : vector<8x128xf32>
    %166 = math.exp %165 : vector<8x128xf32>
    %cst_78 = arith.constant 1.000000e+00 : f32
    %167 = vector.broadcast %cst_78 : f32 to vector<8x128xf32>
    %168 = arith.addf %167, %166 : vector<8x128xf32>
    %169 = arith.divf %167, %168 : vector<8x128xf32>
    %170 = vector.extract_strided_slice %147 {offsets = [0, 256], sizes = [8, 128], strides = [1, 1]} : vector<8x384xf32> to vector<8x128xf32>
    %171 = vector.extract_strided_slice %153 {offsets = [0, 256], sizes = [8, 128], strides = [1, 1]} : vector<8x384xf32> to vector<8x128xf32>
    %172 = arith.mulf %161, %171 : vector<8x128xf32>
    %173 = arith.addf %170, %172 : vector<8x128xf32>
    %174 = math.tanh %173 : vector<8x128xf32>
    %cst_79 = arith.constant 1.000000e+00 : f32
    %175 = vector.broadcast %cst_79 : f32 to vector<8x128xf32>
    %176 = arith.subf %175, %169 : vector<8x128xf32>
    %177 = arith.mulf %176, %174 : vector<8x128xf32>
    %178 = arith.mulf %169, %106 : vector<8x128xf32>
    %179 = arith.addf %177, %178 : vector<8x128xf32>
    %180 = arith.truncf %179 : vector<8x128xf32> to vector<8x128xbf16>
    %c0_80 = arith.constant 0 : index
    %c0_81 = arith.constant 0 : index
    %181 = vector.load %arg11[%c0_80, %c0_81] : memref<128x128xbf16, #tpu.memory_space<vmem>>, vector<128x128xbf16>
    %cst_82 = arith.constant dense<0.000000e+00> : vector<8x128xf32>
    %182 = tpu.matmul %180, %181, %cst_82 {dimension_numbers = #tpu.dot_dimension_numbers<[1], [0], [0], [1], [0, 0, 1, 1], [], []>} : vector<8x128xbf16>, vector<128x128xbf16>, vector<8x128xf32> -> vector<8x128xf32>
    %c0_83 = arith.constant 0 : index
    %c0_84 = arith.constant 0 : index
    %183 = vector.load %arg12[%c0_83, %c0_84] : memref<1x128xf32, #tpu.memory_space<vmem>>, vector<1x128xf32>
    %184 = vector.broadcast %183 : vector<1x128xf32> to vector<8x128xf32>
    %185 = arith.addf %182, %184 : vector<8x128xf32>
    %186 = arith.index_cast %c1_i32 : i32 to index
    %c0_85 = arith.constant 0 : index
    %c0_86 = arith.constant 0 : index
    %187 = vector.load %arg13[%186, %c0_85, %c0_86] : memref<5x8x128xf32, #tpu.memory_space<vmem>>, vector<1x8x128xf32>
    %188 = vector.shape_cast %187 : vector<1x8x128xf32> to vector<8x128xf32>
    %189 = vector.shape_cast %185 : vector<8x128xf32> to vector<1x8x128xf32>
    tpu.vector_store %arg13[%186, %c0_85, %c0_86], %189 {strides = array<i32>} : memref<5x8x128xf32, #tpu.memory_space<vmem>>, vector<1x8x128xf32>,
    %190 = tpu.iota {dimensions = array<i32: 1>} : vector<8x128xi32>
    %cst_87 = arith.constant dense<0xFF800000> : vector<8xf32>
    %191 = vector.multi_reduction <maximumf>, %185, %cst_87 [1] : vector<8x128xf32> to vector<8xf32>
    %192 = vector.shape_cast %191 : vector<8xf32> to vector<8x1xf32>
    %193 = vector.broadcast %192 : vector<8x1xf32> to vector<8x128xf32>
    %194 = arith.cmpf oeq, %185, %193 : vector<8x128xf32>
    %c128_i32_88 = arith.constant 128 : i32
    %195 = vector.broadcast %c128_i32_88 : i32 to vector<8x128xi32>
    %196 = arith.select %194, %190, %195 : vector<8x128xi1>, vector<8x128xi32>
    %cst_89 = arith.constant dense<2147483647> : vector<8xi32>
    %197 = vector.multi_reduction <minsi>, %196, %cst_89 [1] : vector<8x128xi32> to vector<8xi32>
    %198 = vector.shape_cast %197 : vector<8xi32> to vector<8x1xi32>
    %199 = vector.broadcast %198 : vector<8x1xi32> to vector<8x128xi32>
    %200 = arith.cmpi eq, %190, %199 : vector<8x128xi32>
    %201 = arith.extui %200 : vector<8x128xi1> to vector<8x128xi32>
    %202 = arith.sitofp %201 : vector<8x128xi32> to vector<8x128xf32>
    %203 = arith.truncf %202 : vector<8x128xf32> to vector<8x128xbf16>
    %c0_90 = arith.constant 0 : index
    %c0_91 = arith.constant 0 : index
    %204 = vector.load %arg6[%c0_90, %c0_91] : memref<128x256xbf16, #tpu.memory_space<vmem>>, vector<128x256xbf16>
    %cst_92 = arith.constant dense<0.000000e+00> : vector<8x256xf32>
    %205 = tpu.matmul %203, %204, %cst_92 {dimension_numbers = #tpu.dot_dimension_numbers<[1], [0], [0], [1], [0, 0, 1, 1], [], []>} : vector<8x128xbf16>, vector<128x256xbf16>, vector<8x256xf32> -> vector<8x256xf32>
    %c0_93 = arith.constant 0 : index
    %c0_94 = arith.constant 0 : index
    %206 = vector.load %arg15[%c0_93, %c0_94] : memref<8x256xf32, #tpu.memory_space<vmem>>, vector<8x256xf32>
    tpu.vector_store %arg15[%c0_93, %c0_94], %205 {strides = array<i32>} : memref<8x256xf32, #tpu.memory_space<vmem>>, vector<8x256xf32>,
    %c0_95 = arith.constant 0 : index
    %c0_96 = arith.constant 0 : index
    %207 = vector.load %arg14[%c0_95, %c0_96] : memref<8x128xf32, #tpu.memory_space<vmem>>, vector<8x128xf32>
    tpu.vector_store %arg14[%c0_95, %c0_96], %179 {strides = array<i32>} : memref<8x128xf32, #tpu.memory_space<vmem>>, vector<8x128xf32>,
    %c2_i32 = arith.constant 2 : i32
    %c0_97 = arith.constant 0 : index
    %c0_98 = arith.constant 0 : index
    %208 = vector.load %arg14[%c0_97, %c0_98] : memref<8x128xf32, #tpu.memory_space<vmem>>, vector<8x128xf32>
    %209 = arith.index_cast %c2_i32 : i32 to index
    %210 = memref.load %arg0[%209] : memref<5xi32, #tpu.memory_space<smem>>
    %211 = vector.broadcast %210 : i32 to vector<8x256xi32>
    %c0_i32_99 = arith.constant 0 : i32
    %212 = vector.broadcast %c0_i32_99 : i32 to vector<8x256xi32>
    %213 = arith.cmpi ne, %211, %212 : vector<8x256xi32>
    %214 = arith.index_cast %c2_i32 : i32 to index
    %c0_100 = arith.constant 0 : index
    %c0_101 = arith.constant 0 : index
    %215 = vector.load %arg1[%214, %c0_100, %c0_101] : memref<5x8x256xf32, #tpu.memory_space<vmem>>, vector<1x8x256xf32>
    %216 = vector.shape_cast %215 : vector<1x8x256xf32> to vector<8x256xf32>
    %c0_102 = arith.constant 0 : index
    %c0_103 = arith.constant 0 : index
    %217 = vector.load %arg15[%c0_102, %c0_103] : memref<8x256xf32, #tpu.memory_space<vmem>>, vector<8x256xf32>
    %218 = arith.select %213, %216, %217 : vector<8x256xi1>, vector<8x256xf32>
    %c0_104 = arith.constant 0 : index
    %c0_105 = arith.constant 0 : index
    %219 = vector.load %arg7[%c0_104, %c0_105] : memref<1x128xf32, #tpu.memory_space<vmem>>, vector<1x128xf32>
    %220 = vector.broadcast %219 : vector<1x128xf32> to vector<8x128xf32>
    %221 = arith.mulf %208, %220 : vector<8x128xf32>
    %cst_106 = arith.constant dense<0.000000e+00> : vector<8xf32>
    %222 = vector.multi_reduction <add>, %221, %cst_106 [1] : vector<8x128xf32> to vector<8xf32>
    %223 = vector.shape_cast %222 : vector<8xf32> to vector<8x1xf32>
    %c0_107 = arith.constant 0 : index
    %c0_108 = arith.constant 0 : index
    %224 = vector.load %arg4[%c0_107, %c0_108] : memref<8x8xf32, #tpu.memory_space<vmem>>, vector<8x8xf32>
    %225 = vector.broadcast %223 : vector<8x1xf32> to vector<8x8xf32>
    %226 = arith.addf %224, %225 : vector<8x8xf32>
    %cst_109 = arith.constant dense<0xFF800000> : vector<8xf32>
    %227 = vector.multi_reduction <maximumf>, %226, %cst_109 [1] : vector<8x8xf32> to vector<8xf32>
    %228 = vector.shape_cast %227 : vector<8xf32> to vector<8x1xf32>
    %229 = vector.broadcast %228 : vector<8x1xf32> to vector<8x8xf32>
    %230 = arith.subf %226, %229 : vector<8x8xf32>
    %231 = math.exp %230 : vector<8x8xf32>
    %cst_110 = arith.constant dense<0.000000e+00> : vector<8xf32>
    %232 = vector.multi_reduction <add>, %231, %cst_110 [1] : vector<8x8xf32> to vector<8xf32>
    %233 = vector.shape_cast %232 : vector<8xf32> to vector<8x1xf32>
    %234 = tpu.reciprocal %233 {approx = true} : vector<8x1xf32> -> vector<8x1xf32>
    %235 = vector.broadcast %234 : vector<8x1xf32> to vector<8x8xf32>
    %236 = arith.mulf %231, %235 : vector<8x8xf32>
    %237 = vector.shape_cast %236 : vector<8x8xf32> to vector<8x8x1xf32>
    %c0_111 = arith.constant 0 : index
    %c0_112 = arith.constant 0 : index
    %c0_113 = arith.constant 0 : index
    %238 = vector.load %arg5[%c0_111, %c0_112, %c0_113] : memref<8x8x128xf32, #tpu.memory_space<vmem>>, vector<8x8x128xf32>
    %239 = vector.broadcast %237 : vector<8x8x1xf32> to vector<8x8x128xf32>
    %240 = arith.mulf %239, %238 : vector<8x8x128xf32>
    %cst_114 = arith.constant dense<0.000000e+00> : vector<8x128xf32>
    %241 = vector.multi_reduction <add>, %240, %cst_114 [1] : vector<8x8x128xf32> to vector<8x128xf32>
    %c0_115 = arith.constant 0 : index
    %c0_116 = arith.constant 0 : index
    %242 = vector.load %arg10[%c0_115, %c0_116] : memref<2x384xf32, #tpu.memory_space<vmem>>, vector<2x384xf32>
    %243 = tpu.concatenate %218, %241 in 1 : vector<8x256xf32>, vector<8x128xf32> -> vector<8x384xf32>
    %244 = arith.truncf %243 : vector<8x384xf32> to vector<8x384xbf16>
    %c0_117 = arith.constant 0 : index
    %c0_118 = arith.constant 0 : index
    %245 = vector.load %arg8[%c0_117, %c0_118] : memref<384x384xbf16, #tpu.memory_space<vmem>>, vector<384x384xbf16>
    %cst_119 = arith.constant dense<0.000000e+00> : vector<8x384xf32>
    %246 = tpu.matmul %244, %245, %cst_119 {dimension_numbers = #tpu.dot_dimension_numbers<[1], [0], [0], [1], [0, 0, 1, 1], [], []>} : vector<8x384xbf16>, vector<384x384xbf16>, vector<8x384xf32> -> vector<8x384xf32>
    %247 = vector.extract_strided_slice %242 {offsets = [0, 0], sizes = [1, 384], strides = [1, 1]} : vector<2x384xf32> to vector<1x384xf32>
    %248 = vector.broadcast %247 : vector<1x384xf32> to vector<8x384xf32>
    %249 = arith.addf %246, %248 : vector<8x384xf32>
    %250 = arith.truncf %208 : vector<8x128xf32> to vector<8x128xbf16>
    %c0_120 = arith.constant 0 : index
    %c0_121 = arith.constant 0 : index
    %251 = vector.load %arg9[%c0_120, %c0_121] : memref<128x384xbf16, #tpu.memory_space<vmem>>, vector<128x384xbf16>
    %cst_122 = arith.constant dense<0.000000e+00> : vector<8x384xf32>
    %252 = tpu.matmul %250, %251, %cst_122 {dimension_numbers = #tpu.dot_dimension_numbers<[1], [0], [0], [1], [0, 0, 1, 1], [], []>} : vector<8x128xbf16>, vector<128x384xbf16>, vector<8x384xf32> -> vector<8x384xf32>
    %253 = vector.extract_strided_slice %242 {offsets = [1, 0], sizes = [1, 384], strides = [1, 1]} : vector<2x384xf32> to vector<1x384xf32>
    %254 = vector.broadcast %253 : vector<1x384xf32> to vector<8x384xf32>
    %255 = arith.addf %252, %254 : vector<8x384xf32>
    %256 = vector.extract_strided_slice %249 {offsets = [0, 0], sizes = [8, 128], strides = [1, 1]} : vector<8x384xf32> to vector<8x128xf32>
    %257 = vector.extract_strided_slice %255 {offsets = [0, 0], sizes = [8, 128], strides = [1, 1]} : vector<8x384xf32> to vector<8x128xf32>
    %258 = arith.addf %256, %257 : vector<8x128xf32>
    %259 = arith.negf %258 : vector<8x128xf32>
    %260 = math.exp %259 : vector<8x128xf32>
    %cst_123 = arith.constant 1.000000e+00 : f32
    %261 = vector.broadcast %cst_123 : f32 to vector<8x128xf32>
    %262 = arith.addf %261, %260 : vector<8x128xf32>
    %263 = arith.divf %261, %262 : vector<8x128xf32>
    %264 = vector.extract_strided_slice %249 {offsets = [0, 128], sizes = [8, 128], strides = [1, 1]} : vector<8x384xf32> to vector<8x128xf32>
    %265 = vector.extract_strided_slice %255 {offsets = [0, 128], sizes = [8, 128], strides = [1, 1]} : vector<8x384xf32> to vector<8x128xf32>
    %266 = arith.addf %264, %265 : vector<8x128xf32>
    %267 = arith.negf %266 : vector<8x128xf32>
    %268 = math.exp %267 : vector<8x128xf32>
    %cst_124 = arith.constant 1.000000e+00 : f32
    %269 = vector.broadcast %cst_124 : f32 to vector<8x128xf32>
    %270 = arith.addf %269, %268 : vector<8x128xf32>
    %271 = arith.divf %269, %270 : vector<8x128xf32>
    %272 = vector.extract_strided_slice %249 {offsets = [0, 256], sizes = [8, 128], strides = [1, 1]} : vector<8x384xf32> to vector<8x128xf32>
    %273 = vector.extract_strided_slice %255 {offsets = [0, 256], sizes = [8, 128], strides = [1, 1]} : vector<8x384xf32> to vector<8x128xf32>
    %274 = arith.mulf %263, %273 : vector<8x128xf32>
    %275 = arith.addf %272, %274 : vector<8x128xf32>
    %276 = math.tanh %275 : vector<8x128xf32>
    %cst_125 = arith.constant 1.000000e+00 : f32
    %277 = vector.broadcast %cst_125 : f32 to vector<8x128xf32>
    %278 = arith.subf %277, %271 : vector<8x128xf32>
    %279 = arith.mulf %278, %276 : vector<8x128xf32>
    %280 = arith.mulf %271, %208 : vector<8x128xf32>
    %281 = arith.addf %279, %280 : vector<8x128xf32>
    %282 = arith.truncf %281 : vector<8x128xf32> to vector<8x128xbf16>
    %c0_126 = arith.constant 0 : index
    %c0_127 = arith.constant 0 : index
    %283 = vector.load %arg11[%c0_126, %c0_127] : memref<128x128xbf16, #tpu.memory_space<vmem>>, vector<128x128xbf16>
    %cst_128 = arith.constant dense<0.000000e+00> : vector<8x128xf32>
    %284 = tpu.matmul %282, %283, %cst_128 {dimension_numbers = #tpu.dot_dimension_numbers<[1], [0], [0], [1], [0, 0, 1, 1], [], []>} : vector<8x128xbf16>, vector<128x128xbf16>, vector<8x128xf32> -> vector<8x128xf32>
    %c0_129 = arith.constant 0 : index
    %c0_130 = arith.constant 0 : index
    %285 = vector.load %arg12[%c0_129, %c0_130] : memref<1x128xf32, #tpu.memory_space<vmem>>, vector<1x128xf32>
    %286 = vector.broadcast %285 : vector<1x128xf32> to vector<8x128xf32>
    %287 = arith.addf %284, %286 : vector<8x128xf32>
    %288 = arith.index_cast %c2_i32 : i32 to index
    %c0_131 = arith.constant 0 : index
    %c0_132 = arith.constant 0 : index
    %289 = vector.load %arg13[%288, %c0_131, %c0_132] : memref<5x8x128xf32, #tpu.memory_space<vmem>>, vector<1x8x128xf32>
    %290 = vector.shape_cast %289 : vector<1x8x128xf32> to vector<8x128xf32>
    %291 = vector.shape_cast %287 : vector<8x128xf32> to vector<1x8x128xf32>
    tpu.vector_store %arg13[%288, %c0_131, %c0_132], %291 {strides = array<i32>} : memref<5x8x128xf32, #tpu.memory_space<vmem>>, vector<1x8x128xf32>,
    %292 = tpu.iota {dimensions = array<i32: 1>} : vector<8x128xi32>
    %cst_133 = arith.constant dense<0xFF800000> : vector<8xf32>
    %293 = vector.multi_reduction <maximumf>, %287, %cst_133 [1] : vector<8x128xf32> to vector<8xf32>
    %294 = vector.shape_cast %293 : vector<8xf32> to vector<8x1xf32>
    %295 = vector.broadcast %294 : vector<8x1xf32> to vector<8x128xf32>
    %296 = arith.cmpf oeq, %287, %295 : vector<8x128xf32>
    %c128_i32_134 = arith.constant 128 : i32
    %297 = vector.broadcast %c128_i32_134 : i32 to vector<8x128xi32>
    %298 = arith.select %296, %292, %297 : vector<8x128xi1>, vector<8x128xi32>
    %cst_135 = arith.constant dense<2147483647> : vector<8xi32>
    %299 = vector.multi_reduction <minsi>, %298, %cst_135 [1] : vector<8x128xi32> to vector<8xi32>
    %300 = vector.shape_cast %299 : vector<8xi32> to vector<8x1xi32>
    %301 = vector.broadcast %300 : vector<8x1xi32> to vector<8x128xi32>
    %302 = arith.cmpi eq, %292, %301 : vector<8x128xi32>
    %303 = arith.extui %302 : vector<8x128xi1> to vector<8x128xi32>
    %304 = arith.sitofp %303 : vector<8x128xi32> to vector<8x128xf32>
    %305 = arith.truncf %304 : vector<8x128xf32> to vector<8x128xbf16>
    %c0_136 = arith.constant 0 : index
    %c0_137 = arith.constant 0 : index
    %306 = vector.load %arg6[%c0_136, %c0_137] : memref<128x256xbf16, #tpu.memory_space<vmem>>, vector<128x256xbf16>
    %cst_138 = arith.constant dense<0.000000e+00> : vector<8x256xf32>
    %307 = tpu.matmul %305, %306, %cst_138 {dimension_numbers = #tpu.dot_dimension_numbers<[1], [0], [0], [1], [0, 0, 1, 1], [], []>} : vector<8x128xbf16>, vector<128x256xbf16>, vector<8x256xf32> -> vector<8x256xf32>
    %c0_139 = arith.constant 0 : index
    %c0_140 = arith.constant 0 : index
    %308 = vector.load %arg15[%c0_139, %c0_140] : memref<8x256xf32, #tpu.memory_space<vmem>>, vector<8x256xf32>
    tpu.vector_store %arg15[%c0_139, %c0_140], %307 {strides = array<i32>} : memref<8x256xf32, #tpu.memory_space<vmem>>, vector<8x256xf32>,
    %c0_141 = arith.constant 0 : index
    %c0_142 = arith.constant 0 : index
    %309 = vector.load %arg14[%c0_141, %c0_142] : memref<8x128xf32, #tpu.memory_space<vmem>>, vector<8x128xf32>
    tpu.vector_store %arg14[%c0_141, %c0_142], %281 {strides = array<i32>} : memref<8x128xf32, #tpu.memory_space<vmem>>, vector<8x128xf32>,
    %c3_i32 = arith.constant 3 : i32
    %c0_143 = arith.constant 0 : index
    %c0_144 = arith.constant 0 : index
    %310 = vector.load %arg14[%c0_143, %c0_144] : memref<8x128xf32, #tpu.memory_space<vmem>>, vector<8x128xf32>
    %311 = arith.index_cast %c3_i32 : i32 to index
    %312 = memref.load %arg0[%311] : memref<5xi32, #tpu.memory_space<smem>>
    %313 = vector.broadcast %312 : i32 to vector<8x256xi32>
    %c0_i32_145 = arith.constant 0 : i32
    %314 = vector.broadcast %c0_i32_145 : i32 to vector<8x256xi32>
    %315 = arith.cmpi ne, %313, %314 : vector<8x256xi32>
    %316 = arith.index_cast %c3_i32 : i32 to index
    %c0_146 = arith.constant 0 : index
    %c0_147 = arith.constant 0 : index
    %317 = vector.load %arg1[%316, %c0_146, %c0_147] : memref<5x8x256xf32, #tpu.memory_space<vmem>>, vector<1x8x256xf32>
    %318 = vector.shape_cast %317 : vector<1x8x256xf32> to vector<8x256xf32>
    %c0_148 = arith.constant 0 : index
    %c0_149 = arith.constant 0 : index
    %319 = vector.load %arg15[%c0_148, %c0_149] : memref<8x256xf32, #tpu.memory_space<vmem>>, vector<8x256xf32>
    %320 = arith.select %315, %318, %319 : vector<8x256xi1>, vector<8x256xf32>
    %c0_150 = arith.constant 0 : index
    %c0_151 = arith.constant 0 : index
    %321 = vector.load %arg7[%c0_150, %c0_151] : memref<1x128xf32, #tpu.memory_space<vmem>>, vector<1x128xf32>
    %322 = vector.broadcast %321 : vector<1x128xf32> to vector<8x128xf32>
    %323 = arith.mulf %310, %322 : vector<8x128xf32>
    %cst_152 = arith.constant dense<0.000000e+00> : vector<8xf32>
    %324 = vector.multi_reduction <add>, %323, %cst_152 [1] : vector<8x128xf32> to vector<8xf32>
    %325 = vector.shape_cast %324 : vector<8xf32> to vector<8x1xf32>
    %c0_153 = arith.constant 0 : index
    %c0_154 = arith.constant 0 : index
    %326 = vector.load %arg4[%c0_153, %c0_154] : memref<8x8xf32, #tpu.memory_space<vmem>>, vector<8x8xf32>
    %327 = vector.broadcast %325 : vector<8x1xf32> to vector<8x8xf32>
    %328 = arith.addf %326, %327 : vector<8x8xf32>
    %cst_155 = arith.constant dense<0xFF800000> : vector<8xf32>
    %329 = vector.multi_reduction <maximumf>, %328, %cst_155 [1] : vector<8x8xf32> to vector<8xf32>
    %330 = vector.shape_cast %329 : vector<8xf32> to vector<8x1xf32>
    %331 = vector.broadcast %330 : vector<8x1xf32> to vector<8x8xf32>
    %332 = arith.subf %328, %331 : vector<8x8xf32>
    %333 = math.exp %332 : vector<8x8xf32>
    %cst_156 = arith.constant dense<0.000000e+00> : vector<8xf32>
    %334 = vector.multi_reduction <add>, %333, %cst_156 [1] : vector<8x8xf32> to vector<8xf32>
    %335 = vector.shape_cast %334 : vector<8xf32> to vector<8x1xf32>
    %336 = tpu.reciprocal %335 {approx = true} : vector<8x1xf32> -> vector<8x1xf32>
    %337 = vector.broadcast %336 : vector<8x1xf32> to vector<8x8xf32>
    %338 = arith.mulf %333, %337 : vector<8x8xf32>
    %339 = vector.shape_cast %338 : vector<8x8xf32> to vector<8x8x1xf32>
    %c0_157 = arith.constant 0 : index
    %c0_158 = arith.constant 0 : index
    %c0_159 = arith.constant 0 : index
    %340 = vector.load %arg5[%c0_157, %c0_158, %c0_159] : memref<8x8x128xf32, #tpu.memory_space<vmem>>, vector<8x8x128xf32>
    %341 = vector.broadcast %339 : vector<8x8x1xf32> to vector<8x8x128xf32>
    %342 = arith.mulf %341, %340 : vector<8x8x128xf32>
    %cst_160 = arith.constant dense<0.000000e+00> : vector<8x128xf32>
    %343 = vector.multi_reduction <add>, %342, %cst_160 [1] : vector<8x8x128xf32> to vector<8x128xf32>
    %c0_161 = arith.constant 0 : index
    %c0_162 = arith.constant 0 : index
    %344 = vector.load %arg10[%c0_161, %c0_162] : memref<2x384xf32, #tpu.memory_space<vmem>>, vector<2x384xf32>
    %345 = tpu.concatenate %320, %343 in 1 : vector<8x256xf32>, vector<8x128xf32> -> vector<8x384xf32>
    %346 = arith.truncf %345 : vector<8x384xf32> to vector<8x384xbf16>
    %c0_163 = arith.constant 0 : index
    %c0_164 = arith.constant 0 : index
    %347 = vector.load %arg8[%c0_163, %c0_164] : memref<384x384xbf16, #tpu.memory_space<vmem>>, vector<384x384xbf16>
    %cst_165 = arith.constant dense<0.000000e+00> : vector<8x384xf32>
    %348 = tpu.matmul %346, %347, %cst_165 {dimension_numbers = #tpu.dot_dimension_numbers<[1], [0], [0], [1], [0, 0, 1, 1], [], []>} : vector<8x384xbf16>, vector<384x384xbf16>, vector<8x384xf32> -> vector<8x384xf32>
    %349 = vector.extract_strided_slice %344 {offsets = [0, 0], sizes = [1, 384], strides = [1, 1]} : vector<2x384xf32> to vector<1x384xf32>
    %350 = vector.broadcast %349 : vector<1x384xf32> to vector<8x384xf32>
    %351 = arith.addf %348, %350 : vector<8x384xf32>
    %352 = arith.truncf %310 : vector<8x128xf32> to vector<8x128xbf16>
    %c0_166 = arith.constant 0 : index
    %c0_167 = arith.constant 0 : index
    %353 = vector.load %arg9[%c0_166, %c0_167] : memref<128x384xbf16, #tpu.memory_space<vmem>>, vector<128x384xbf16>
    %cst_168 = arith.constant dense<0.000000e+00> : vector<8x384xf32>
    %354 = tpu.matmul %352, %353, %cst_168 {dimension_numbers = #tpu.dot_dimension_numbers<[1], [0], [0], [1], [0, 0, 1, 1], [], []>} : vector<8x128xbf16>, vector<128x384xbf16>, vector<8x384xf32> -> vector<8x384xf32>
    %355 = vector.extract_strided_slice %344 {offsets = [1, 0], sizes = [1, 384], strides = [1, 1]} : vector<2x384xf32> to vector<1x384xf32>
    %356 = vector.broadcast %355 : vector<1x384xf32> to vector<8x384xf32>
    %357 = arith.addf %354, %356 : vector<8x384xf32>
    %358 = vector.extract_strided_slice %351 {offsets = [0, 0], sizes = [8, 128], strides = [1, 1]} : vector<8x384xf32> to vector<8x128xf32>
    %359 = vector.extract_strided_slice %357 {offsets = [0, 0], sizes = [8, 128], strides = [1, 1]} : vector<8x384xf32> to vector<8x128xf32>
    %360 = arith.addf %358, %359 : vector<8x128xf32>
    %361 = arith.negf %360 : vector<8x128xf32>
    %362 = math.exp %361 : vector<8x128xf32>
    %cst_169 = arith.constant 1.000000e+00 : f32
    %363 = vector.broadcast %cst_169 : f32 to vector<8x128xf32>
    %364 = arith.addf %363, %362 : vector<8x128xf32>
    %365 = arith.divf %363, %364 : vector<8x128xf32>
    %366 = vector.extract_strided_slice %351 {offsets = [0, 128], sizes = [8, 128], strides = [1, 1]} : vector<8x384xf32> to vector<8x128xf32>
    %367 = vector.extract_strided_slice %357 {offsets = [0, 128], sizes = [8, 128], strides = [1, 1]} : vector<8x384xf32> to vector<8x128xf32>
    %368 = arith.addf %366, %367 : vector<8x128xf32>
    %369 = arith.negf %368 : vector<8x128xf32>
    %370 = math.exp %369 : vector<8x128xf32>
    %cst_170 = arith.constant 1.000000e+00 : f32
    %371 = vector.broadcast %cst_170 : f32 to vector<8x128xf32>
    %372 = arith.addf %371, %370 : vector<8x128xf32>
    %373 = arith.divf %371, %372 : vector<8x128xf32>
    %374 = vector.extract_strided_slice %351 {offsets = [0, 256], sizes = [8, 128], strides = [1, 1]} : vector<8x384xf32> to vector<8x128xf32>
    %375 = vector.extract_strided_slice %357 {offsets = [0, 256], sizes = [8, 128], strides = [1, 1]} : vector<8x384xf32> to vector<8x128xf32>
    %376 = arith.mulf %365, %375 : vector<8x128xf32>
    %377 = arith.addf %374, %376 : vector<8x128xf32>
    %378 = math.tanh %377 : vector<8x128xf32>
    %cst_171 = arith.constant 1.000000e+00 : f32
    %379 = vector.broadcast %cst_171 : f32 to vector<8x128xf32>
    %380 = arith.subf %379, %373 : vector<8x128xf32>
    %381 = arith.mulf %380, %378 : vector<8x128xf32>
    %382 = arith.mulf %373, %310 : vector<8x128xf32>
    %383 = arith.addf %381, %382 : vector<8x128xf32>
    %384 = arith.truncf %383 : vector<8x128xf32> to vector<8x128xbf16>
    %c0_172 = arith.constant 0 : index
    %c0_173 = arith.constant 0 : index
    %385 = vector.load %arg11[%c0_172, %c0_173] : memref<128x128xbf16, #tpu.memory_space<vmem>>, vector<128x128xbf16>
    %cst_174 = arith.constant dense<0.000000e+00> : vector<8x128xf32>
    %386 = tpu.matmul %384, %385, %cst_174 {dimension_numbers = #tpu.dot_dimension_numbers<[1], [0], [0], [1], [0, 0, 1, 1], [], []>} : vector<8x128xbf16>, vector<128x128xbf16>, vector<8x128xf32> -> vector<8x128xf32>
    %c0_175 = arith.constant 0 : index
    %c0_176 = arith.constant 0 : index
    %387 = vector.load %arg12[%c0_175, %c0_176] : memref<1x128xf32, #tpu.memory_space<vmem>>, vector<1x128xf32>
    %388 = vector.broadcast %387 : vector<1x128xf32> to vector<8x128xf32>
    %389 = arith.addf %386, %388 : vector<8x128xf32>
    %390 = arith.index_cast %c3_i32 : i32 to index
    %c0_177 = arith.constant 0 : index
    %c0_178 = arith.constant 0 : index
    %391 = vector.load %arg13[%390, %c0_177, %c0_178] : memref<5x8x128xf32, #tpu.memory_space<vmem>>, vector<1x8x128xf32>
    %392 = vector.shape_cast %391 : vector<1x8x128xf32> to vector<8x128xf32>
    %393 = vector.shape_cast %389 : vector<8x128xf32> to vector<1x8x128xf32>
    tpu.vector_store %arg13[%390, %c0_177, %c0_178], %393 {strides = array<i32>} : memref<5x8x128xf32, #tpu.memory_space<vmem>>, vector<1x8x128xf32>,
    %394 = tpu.iota {dimensions = array<i32: 1>} : vector<8x128xi32>
    %cst_179 = arith.constant dense<0xFF800000> : vector<8xf32>
    %395 = vector.multi_reduction <maximumf>, %389, %cst_179 [1] : vector<8x128xf32> to vector<8xf32>
    %396 = vector.shape_cast %395 : vector<8xf32> to vector<8x1xf32>
    %397 = vector.broadcast %396 : vector<8x1xf32> to vector<8x128xf32>
    %398 = arith.cmpf oeq, %389, %397 : vector<8x128xf32>
    %c128_i32_180 = arith.constant 128 : i32
    %399 = vector.broadcast %c128_i32_180 : i32 to vector<8x128xi32>
    %400 = arith.select %398, %394, %399 : vector<8x128xi1>, vector<8x128xi32>
    %cst_181 = arith.constant dense<2147483647> : vector<8xi32>
    %401 = vector.multi_reduction <minsi>, %400, %cst_181 [1] : vector<8x128xi32> to vector<8xi32>
    %402 = vector.shape_cast %401 : vector<8xi32> to vector<8x1xi32>
    %403 = vector.broadcast %402 : vector<8x1xi32> to vector<8x128xi32>
    %404 = arith.cmpi eq, %394, %403 : vector<8x128xi32>
    %405 = arith.extui %404 : vector<8x128xi1> to vector<8x128xi32>
    %406 = arith.sitofp %405 : vector<8x128xi32> to vector<8x128xf32>
    %407 = arith.truncf %406 : vector<8x128xf32> to vector<8x128xbf16>
    %c0_182 = arith.constant 0 : index
    %c0_183 = arith.constant 0 : index
    %408 = vector.load %arg6[%c0_182, %c0_183] : memref<128x256xbf16, #tpu.memory_space<vmem>>, vector<128x256xbf16>
    %cst_184 = arith.constant dense<0.000000e+00> : vector<8x256xf32>
    %409 = tpu.matmul %407, %408, %cst_184 {dimension_numbers = #tpu.dot_dimension_numbers<[1], [0], [0], [1], [0, 0, 1, 1], [], []>} : vector<8x128xbf16>, vector<128x256xbf16>, vector<8x256xf32> -> vector<8x256xf32>
    %c0_185 = arith.constant 0 : index
    %c0_186 = arith.constant 0 : index
    %410 = vector.load %arg15[%c0_185, %c0_186] : memref<8x256xf32, #tpu.memory_space<vmem>>, vector<8x256xf32>
    tpu.vector_store %arg15[%c0_185, %c0_186], %409 {strides = array<i32>} : memref<8x256xf32, #tpu.memory_space<vmem>>, vector<8x256xf32>,
    %c0_187 = arith.constant 0 : index
    %c0_188 = arith.constant 0 : index
    %411 = vector.load %arg14[%c0_187, %c0_188] : memref<8x128xf32, #tpu.memory_space<vmem>>, vector<8x128xf32>
    tpu.vector_store %arg14[%c0_187, %c0_188], %383 {strides = array<i32>} : memref<8x128xf32, #tpu.memory_space<vmem>>, vector<8x128xf32>,
    %c4_i32 = arith.constant 4 : i32
    %c0_189 = arith.constant 0 : index
    %c0_190 = arith.constant 0 : index
    %412 = vector.load %arg14[%c0_189, %c0_190] : memref<8x128xf32, #tpu.memory_space<vmem>>, vector<8x128xf32>
    %413 = arith.index_cast %c4_i32 : i32 to index
    %414 = memref.load %arg0[%413] : memref<5xi32, #tpu.memory_space<smem>>
    %415 = vector.broadcast %414 : i32 to vector<8x256xi32>
    %c0_i32_191 = arith.constant 0 : i32
    %416 = vector.broadcast %c0_i32_191 : i32 to vector<8x256xi32>
    %417 = arith.cmpi ne, %415, %416 : vector<8x256xi32>
    %418 = arith.index_cast %c4_i32 : i32 to index
    %c0_192 = arith.constant 0 : index
    %c0_193 = arith.constant 0 : index
    %419 = vector.load %arg1[%418, %c0_192, %c0_193] : memref<5x8x256xf32, #tpu.memory_space<vmem>>, vector<1x8x256xf32>
    %420 = vector.shape_cast %419 : vector<1x8x256xf32> to vector<8x256xf32>
    %c0_194 = arith.constant 0 : index
    %c0_195 = arith.constant 0 : index
    %421 = vector.load %arg15[%c0_194, %c0_195] : memref<8x256xf32, #tpu.memory_space<vmem>>, vector<8x256xf32>
    %422 = arith.select %417, %420, %421 : vector<8x256xi1>, vector<8x256xf32>
    %c0_196 = arith.constant 0 : index
    %c0_197 = arith.constant 0 : index
    %423 = vector.load %arg7[%c0_196, %c0_197] : memref<1x128xf32, #tpu.memory_space<vmem>>, vector<1x128xf32>
    %424 = vector.broadcast %423 : vector<1x128xf32> to vector<8x128xf32>
    %425 = arith.mulf %412, %424 : vector<8x128xf32>
    %cst_198 = arith.constant dense<0.000000e+00> : vector<8xf32>
    %426 = vector.multi_reduction <add>, %425, %cst_198 [1] : vector<8x128xf32> to vector<8xf32>
    %427 = vector.shape_cast %426 : vector<8xf32> to vector<8x1xf32>
    %c0_199 = arith.constant 0 : index
    %c0_200 = arith.constant 0 : index
    %428 = vector.load %arg4[%c0_199, %c0_200] : memref<8x8xf32, #tpu.memory_space<vmem>>, vector<8x8xf32>
    %429 = vector.broadcast %427 : vector<8x1xf32> to vector<8x8xf32>
    %430 = arith.addf %428, %429 : vector<8x8xf32>
    %cst_201 = arith.constant dense<0xFF800000> : vector<8xf32>
    %431 = vector.multi_reduction <maximumf>, %430, %cst_201 [1] : vector<8x8xf32> to vector<8xf32>
    %432 = vector.shape_cast %431 : vector<8xf32> to vector<8x1xf32>
    %433 = vector.broadcast %432 : vector<8x1xf32> to vector<8x8xf32>
    %434 = arith.subf %430, %433 : vector<8x8xf32>
    %435 = math.exp %434 : vector<8x8xf32>
    %cst_202 = arith.constant dense<0.000000e+00> : vector<8xf32>
    %436 = vector.multi_reduction <add>, %435, %cst_202 [1] : vector<8x8xf32> to vector<8xf32>
    %437 = vector.shape_cast %436 : vector<8xf32> to vector<8x1xf32>
    %438 = tpu.reciprocal %437 {approx = true} : vector<8x1xf32> -> vector<8x1xf32>
    %439 = vector.broadcast %438 : vector<8x1xf32> to vector<8x8xf32>
    %440 = arith.mulf %435, %439 : vector<8x8xf32>
    %441 = vector.shape_cast %440 : vector<8x8xf32> to vector<8x8x1xf32>
    %c0_203 = arith.constant 0 : index
    %c0_204 = arith.constant 0 : index
    %c0_205 = arith.constant 0 : index
    %442 = vector.load %arg5[%c0_203, %c0_204, %c0_205] : memref<8x8x128xf32, #tpu.memory_space<vmem>>, vector<8x8x128xf32>
    %443 = vector.broadcast %441 : vector<8x8x1xf32> to vector<8x8x128xf32>
    %444 = arith.mulf %443, %442 : vector<8x8x128xf32>
    %cst_206 = arith.constant dense<0.000000e+00> : vector<8x128xf32>
    %445 = vector.multi_reduction <add>, %444, %cst_206 [1] : vector<8x8x128xf32> to vector<8x128xf32>
    %c0_207 = arith.constant 0 : index
    %c0_208 = arith.constant 0 : index
    %446 = vector.load %arg10[%c0_207, %c0_208] : memref<2x384xf32, #tpu.memory_space<vmem>>, vector<2x384xf32>
    %447 = tpu.concatenate %422, %445 in 1 : vector<8x256xf32>, vector<8x128xf32> -> vector<8x384xf32>
    %448 = arith.truncf %447 : vector<8x384xf32> to vector<8x384xbf16>
    %c0_209 = arith.constant 0 : index
    %c0_210 = arith.constant 0 : index
    %449 = vector.load %arg8[%c0_209, %c0_210] : memref<384x384xbf16, #tpu.memory_space<vmem>>, vector<384x384xbf16>
    %cst_211 = arith.constant dense<0.000000e+00> : vector<8x384xf32>
    %450 = tpu.matmul %448, %449, %cst_211 {dimension_numbers = #tpu.dot_dimension_numbers<[1], [0], [0], [1], [0, 0, 1, 1], [], []>} : vector<8x384xbf16>, vector<384x384xbf16>, vector<8x384xf32> -> vector<8x384xf32>
    %451 = vector.extract_strided_slice %446 {offsets = [0, 0], sizes = [1, 384], strides = [1, 1]} : vector<2x384xf32> to vector<1x384xf32>
    %452 = vector.broadcast %451 : vector<1x384xf32> to vector<8x384xf32>
    %453 = arith.addf %450, %452 : vector<8x384xf32>
    %454 = arith.truncf %412 : vector<8x128xf32> to vector<8x128xbf16>
    %c0_212 = arith.constant 0 : index
    %c0_213 = arith.constant 0 : index
    %455 = vector.load %arg9[%c0_212, %c0_213] : memref<128x384xbf16, #tpu.memory_space<vmem>>, vector<128x384xbf16>
    %cst_214 = arith.constant dense<0.000000e+00> : vector<8x384xf32>
    %456 = tpu.matmul %454, %455, %cst_214 {dimension_numbers = #tpu.dot_dimension_numbers<[1], [0], [0], [1], [0, 0, 1, 1], [], []>} : vector<8x128xbf16>, vector<128x384xbf16>, vector<8x384xf32> -> vector<8x384xf32>
    %457 = vector.extract_strided_slice %446 {offsets = [1, 0], sizes = [1, 384], strides = [1, 1]} : vector<2x384xf32> to vector<1x384xf32>
    %458 = vector.broadcast %457 : vector<1x384xf32> to vector<8x384xf32>
    %459 = arith.addf %456, %458 : vector<8x384xf32>
    %460 = vector.extract_strided_slice %453 {offsets = [0, 0], sizes = [8, 128], strides = [1, 1]} : vector<8x384xf32> to vector<8x128xf32>
    %461 = vector.extract_strided_slice %459 {offsets = [0, 0], sizes = [8, 128], strides = [1, 1]} : vector<8x384xf32> to vector<8x128xf32>
    %462 = arith.addf %460, %461 : vector<8x128xf32>
    %463 = arith.negf %462 : vector<8x128xf32>
    %464 = math.exp %463 : vector<8x128xf32>
    %cst_215 = arith.constant 1.000000e+00 : f32
    %465 = vector.broadcast %cst_215 : f32 to vector<8x128xf32>
    %466 = arith.addf %465, %464 : vector<8x128xf32>
    %467 = arith.divf %465, %466 : vector<8x128xf32>
    %468 = vector.extract_strided_slice %453 {offsets = [0, 128], sizes = [8, 128], strides = [1, 1]} : vector<8x384xf32> to vector<8x128xf32>
    %469 = vector.extract_strided_slice %459 {offsets = [0, 128], sizes = [8, 128], strides = [1, 1]} : vector<8x384xf32> to vector<8x128xf32>
    %470 = arith.addf %468, %469 : vector<8x128xf32>
    %471 = arith.negf %470 : vector<8x128xf32>
    %472 = math.exp %471 : vector<8x128xf32>
    %cst_216 = arith.constant 1.000000e+00 : f32
    %473 = vector.broadcast %cst_216 : f32 to vector<8x128xf32>
    %474 = arith.addf %473, %472 : vector<8x128xf32>
    %475 = arith.divf %473, %474 : vector<8x128xf32>
    %476 = vector.extract_strided_slice %453 {offsets = [0, 256], sizes = [8, 128], strides = [1, 1]} : vector<8x384xf32> to vector<8x128xf32>
    %477 = vector.extract_strided_slice %459 {offsets = [0, 256], sizes = [8, 128], strides = [1, 1]} : vector<8x384xf32> to vector<8x128xf32>
    %478 = arith.mulf %467, %477 : vector<8x128xf32>
    %479 = arith.addf %476, %478 : vector<8x128xf32>
    %480 = math.tanh %479 : vector<8x128xf32>
    %cst_217 = arith.constant 1.000000e+00 : f32
    %481 = vector.broadcast %cst_217 : f32 to vector<8x128xf32>
    %482 = arith.subf %481, %475 : vector<8x128xf32>
    %483 = arith.mulf %482, %480 : vector<8x128xf32>
    %484 = arith.mulf %475, %412 : vector<8x128xf32>
    %485 = arith.addf %483, %484 : vector<8x128xf32>
    %486 = arith.truncf %485 : vector<8x128xf32> to vector<8x128xbf16>
    %c0_218 = arith.constant 0 : index
    %c0_219 = arith.constant 0 : index
    %487 = vector.load %arg11[%c0_218, %c0_219] : memref<128x128xbf16, #tpu.memory_space<vmem>>, vector<128x128xbf16>
    %cst_220 = arith.constant dense<0.000000e+00> : vector<8x128xf32>
    %488 = tpu.matmul %486, %487, %cst_220 {dimension_numbers = #tpu.dot_dimension_numbers<[1], [0], [0], [1], [0, 0, 1, 1], [], []>} : vector<8x128xbf16>, vector<128x128xbf16>, vector<8x128xf32> -> vector<8x128xf32>
    %c0_221 = arith.constant 0 : index
    %c0_222 = arith.constant 0 : index
    %489 = vector.load %arg12[%c0_221, %c0_222] : memref<1x128xf32, #tpu.memory_space<vmem>>, vector<1x128xf32>
    %490 = vector.broadcast %489 : vector<1x128xf32> to vector<8x128xf32>
    %491 = arith.addf %488, %490 : vector<8x128xf32>
    %492 = arith.index_cast %c4_i32 : i32 to index
    %c0_223 = arith.constant 0 : index
    %c0_224 = arith.constant 0 : index
    %493 = vector.load %arg13[%492, %c0_223, %c0_224] : memref<5x8x128xf32, #tpu.memory_space<vmem>>, vector<1x8x128xf32>
    %494 = vector.shape_cast %493 : vector<1x8x128xf32> to vector<8x128xf32>
    %495 = vector.shape_cast %491 : vector<8x128xf32> to vector<1x8x128xf32>
    tpu.vector_store %arg13[%492, %c0_223, %c0_224], %495 {strides = array<i32>} : memref<5x8x128xf32, #tpu.memory_space<vmem>>, vector<1x8x128xf32>,
    %496 = tpu.iota {dimensions = array<i32: 1>} : vector<8x128xi32>
    %cst_225 = arith.constant dense<0xFF800000> : vector<8xf32>
    %497 = vector.multi_reduction <maximumf>, %491, %cst_225 [1] : vector<8x128xf32> to vector<8xf32>
    %498 = vector.shape_cast %497 : vector<8xf32> to vector<8x1xf32>
    %499 = vector.broadcast %498 : vector<8x1xf32> to vector<8x128xf32>
    %500 = arith.cmpf oeq, %491, %499 : vector<8x128xf32>
    %c128_i32_226 = arith.constant 128 : i32
    %501 = vector.broadcast %c128_i32_226 : i32 to vector<8x128xi32>
    %502 = arith.select %500, %496, %501 : vector<8x128xi1>, vector<8x128xi32>
    %cst_227 = arith.constant dense<2147483647> : vector<8xi32>
    %503 = vector.multi_reduction <minsi>, %502, %cst_227 [1] : vector<8x128xi32> to vector<8xi32>
    %504 = vector.shape_cast %503 : vector<8xi32> to vector<8x1xi32>
    %505 = vector.broadcast %504 : vector<8x1xi32> to vector<8x128xi32>
    %506 = arith.cmpi eq, %496, %505 : vector<8x128xi32>
    %507 = arith.extui %506 : vector<8x128xi1> to vector<8x128xi32>
    %508 = arith.sitofp %507 : vector<8x128xi32> to vector<8x128xf32>
    %509 = arith.truncf %508 : vector<8x128xf32> to vector<8x128xbf16>
    %c0_228 = arith.constant 0 : index
    %c0_229 = arith.constant 0 : index
    %510 = vector.load %arg6[%c0_228, %c0_229] : memref<128x256xbf16, #tpu.memory_space<vmem>>, vector<128x256xbf16>
    %cst_230 = arith.constant dense<0.000000e+00> : vector<8x256xf32>
    %511 = tpu.matmul %509, %510, %cst_230 {dimension_numbers = #tpu.dot_dimension_numbers<[1], [0], [0], [1], [0, 0, 1, 1], [], []>} : vector<8x128xbf16>, vector<128x256xbf16>, vector<8x256xf32> -> vector<8x256xf32>
    %c0_231 = arith.constant 0 : index
    %c0_232 = arith.constant 0 : index
    %512 = vector.load %arg15[%c0_231, %c0_232] : memref<8x256xf32, #tpu.memory_space<vmem>>, vector<8x256xf32>
    tpu.vector_store %arg15[%c0_231, %c0_232], %511 {strides = array<i32>} : memref<8x256xf32, #tpu.memory_space<vmem>>, vector<8x256xf32>,
    %c0_233 = arith.constant 0 : index
    %c0_234 = arith.constant 0 : index
    %513 = vector.load %arg14[%c0_233, %c0_234] : memref<8x128xf32, #tpu.memory_space<vmem>>, vector<8x128xf32>
    tpu.vector_store %arg14[%c0_233, %c0_234], %485 {strides = array<i32>} : memref<8x128xf32, #tpu.memory_space<vmem>>, vector<8x128xf32>,
    %c5_i32 = arith.constant 5 : i32
    return
  }
}

</mosaic_0001>

<llo_original>
// kernel: tpu_custom_call.1
$region0: #{tpu_custom_call.1}
  #allocation0 [shape = 'u32[]', space=smem, size = 0x4, offset = 0x4, fixed_abs, tag = 'smem constant byte address 0x4 - core index']
  #allocation1 [shape = 'u32[144,128]{1,0:T(1,128)}', space=vmem, size = 0x12000, scoped, tag = 'internal scratch']
  #allocation2 [shape = 'f32[8,128]{1,0:T(8,128)}', space=vmem, size = 0x1000, scoped, tag = 'scratch operand']
  #allocation3 [shape = 'f32[8,256]{1,0:T(8,128)}', space=vmem, size = 0x2000, scoped, tag = 'scratch operand']
  %s0 = inlined_call_operand.hbm [shape: s32[5], index: 0, kind: input, shape index: {}]
  %s1 = inlined_call_operand.hbm [shape: f32[5,8,256], index: 1, kind: input, shape index: {}]
  %s2 = inlined_call_operand.hbm [shape: f32[8,128], index: 2, kind: input, shape index: {}]
  %s3 = inlined_call_operand.hbm [shape: f32[8,256], index: 3, kind: input, shape index: {}]
  %s4 = inlined_call_operand.hbm [shape: f32[8,8], index: 4, kind: input, shape index: {}]
  %s5 = inlined_call_operand.hbm [shape: f32[8,8,128], index: 5, kind: input, shape index: {}]
  %s6 = inlined_call_operand.hbm [shape: bf16[128,256], index: 6, kind: input, shape index: {}]
  %s7 = inlined_call_operand.vmem [shape: f32[1,128], index: 7, kind: input, shape index: {}]
  %s8 = inlined_call_operand.hbm [shape: bf16[384,384], index: 8, kind: input, shape index: {}]
  %s9 = inlined_call_operand.hbm [shape: bf16[128,384], index: 9, kind: input, shape index: {}]
  %s10 = inlined_call_operand.vmem [shape: f32[2,384], index: 10, kind: input, shape index: {}]
  %s11 = inlined_call_operand.hbm [shape: bf16[128,128], index: 11, kind: input, shape index: {}]
  %s12 = inlined_call_operand.vmem [shape: f32[1,128], index: 12, kind: input, shape index: {}]
  %s13 = inlined_call_operand.hbm [shape: f32[5,8,128], index: 13, kind: output, shape index: {}]
  %s14 = sld [smem:[#allocation0]]
  $region102: #{tpu_custom_call.1} parent=0
    _
  %s16 = ssub.s32 1, %s14
  %s17 = scalar_select 0, %s16, %s14
  $region1: #{tpu_custom_call.1} parent=0
    #allocation4 [shape = 'u8[512]{0}', space=smem, size = 0x200, scoped, tag = 'input window, operand 0, single buffered']
    #allocation5 [shape = 's32[1]{0}', space=sflag, size = 0x4, scoped, tag = 'scoped memory for tpu_custom_call.1']
    #allocation6 [shape = 's32[1]{0}', space=sflag, size = 0x4, scoped, tag = 'scoped memory for tpu_custom_call.1']
    #allocation7 [shape = 's32[1]{0}', space=sflag, size = 0x4, scoped, tag = 'scoped memory for tpu_custom_call.1']
    #allocation8 [shape = 'u8[40960]{0}', space=vmem, size = 0xa000, scoped, tag = 'input window, operand 1, single buffered']
    #allocation9 [shape = 'u8[4096]{0}', space=vmem, size = 0x1000, scoped, tag = 'input window, operand 2, single buffered']
    #allocation10 [shape = 's32[1]{0}', space=sflag, size = 0x4, scoped, tag = 'scoped memory for tpu_custom_call.1']
    #allocation11 [shape = 'u8[8192]{0}', space=vmem, size = 0x2000, scoped, tag = 'input window, operand 3, single buffered']
    #allocation12 [shape = 'u8[4096]{0}', space=vmem, size = 0x1000, scoped, tag = 'input window, operand 4, single buffered']
    #allocation13 [shape = 's32[1]{0}', space=sflag, size = 0x4, scoped, tag = 'scoped memory for tpu_custom_call.1']
    #allocation14 [shape = 'u8[32768]{0}', space=vmem, size = 0x8000, scoped, tag = 'input window, operand 5, single buffered']
    #allocation15 [shape = 'u8[65536]{0}', space=vmem, size = 0x10000, scoped, tag = 'input window, operand 6, single buffered']
    #allocation16 [shape = 's32[1]{0}', space=sflag, size = 0x4, scoped, tag = 'scoped memory for tpu_custom_call.1']
    #allocation17 [shape = 'u8[294912]{0}', space=vmem, size = 0x48000, scoped, tag = 'input window, operand 8, single buffered']
    #allocation18 [shape = 'u8[98304]{0}', space=vmem, size = 0x18000, scoped, tag = 'input window, operand 9, single buffered']
    #allocation19 [shape = 's32[1]{0}', space=sflag, size = 0x4, scoped, tag = 'scoped memory for tpu_custom_call.1']
    #allocation20 [shape = 'u8[32768]{0}', space=vmem, size = 0x8000, scoped, tag = 'input window, operand 11, single buffered']
    #allocation21 [shape = 'u8[20480]{0}', space=vmem, size = 0x5000, scoped, tag = 'output window, operand 0, single buffered']
    %18 = vsyncpa [#allocation7], 0
    %19 = vsyncpa [#allocation5], 0
    %20 = vsyncpa [#allocation10], 0
    %21 = vsyncpa [#allocation13], 0
    %22 = vsyncpa [#allocation16], 0
    %23 = vsyncpa [#allocation19], 0
    %24 = vsyncpa [#allocation6], 0
    // Predicated region
    $region2: #{tpu_custom_call.1} parent=1 // pred_check
      _
    $region3: #{tpu_custom_call.1} parent=1 // pred_check_branch
      %26 = sbr.rel (0) target = $region5
    $region4: #{tpu_custom_call.1} parent=1 // pred_region
      %s28 = ssub.s32 16, 16
      %29 = vsyncadd [#allocation7], %s28
      %32 = dma.hbm_to_smem %s0, 16, [#allocation4], [#allocation7]
    $region5: #{tpu_custom_call.1} parent=1 // pred_fallthru
      _
    // Predicated region
    $region6: #{tpu_custom_call.1} parent=1 // pred_check
      _
    $region7: #{tpu_custom_call.1} parent=1 // pred_check_branch
      %34 = sbr.rel (0) target = $region9
    $region8: #{tpu_custom_call.1} parent=1 // pred_region
      %s36 = ssub.s32 1280, 1280
      %37 = vsyncadd [#allocation5], %s36
      %s38 = sshll.u32 [#allocation8], 4
      %s39 = int_to_ptr.vmem [resolvable:$true] %s38
      %44 = dma.hbm_to_vmem [thread:$0]  %s1, 1280, %s39, [#allocation5], 256, 256, 16
    $region9: #{tpu_custom_call.1} parent=1 // pred_fallthru
      _
    // Predicated region
    $region10: #{tpu_custom_call.1} parent=1 // pred_check
      _
    $region11: #{tpu_custom_call.1} parent=1 // pred_check_branch
      %46 = sbr.rel (0) target = $region13
    $region12: #{tpu_custom_call.1} parent=1 // pred_region
      %s48 = ssub.s32 128, 128
      %49 = vsyncadd [#allocation10], %s48
      %s51 = sshll.u32 [#allocation9], 4
      %s52 = int_to_ptr.vmem [resolvable:$true] %s51
      %54 = dma.hbm_to_vmem [thread:$0]  %s2, 128, %s52, [#allocation10]
    $region13: #{tpu_custom_call.1} parent=1 // pred_fallthru
      _
    // Predicated region
    $region14: #{tpu_custom_call.1} parent=1 // pred_check
      _
    $region15: #{tpu_custom_call.1} parent=1 // pred_check_branch
      %56 = sbr.rel (0) target = $region17
    $region16: #{tpu_custom_call.1} parent=1 // pred_region
      %s58 = ssub.s32 256, 256
      %59 = vsyncadd [#allocation10], %s58
      %s61 = sshll.u32 [#allocation11], 4
      %s62 = int_to_ptr.vmem [resolvable:$true] %s61
      %64 = dma.hbm_to_vmem [thread:$0]  %s3, 256, %s62, [#allocation10]
    $region17: #{tpu_custom_call.1} parent=1 // pred_fallthru
      _
    // Predicated region
    $region18: #{tpu_custom_call.1} parent=1 // pred_check
      _
    $region19: #{tpu_custom_call.1} parent=1 // pred_check_branch
      %66 = sbr.rel (0) target = $region21
    $region20: #{tpu_custom_call.1} parent=1 // pred_region
      %s68 = ssub.s32 128, 128
      %69 = vsyncadd [#allocation13], %s68
      %s71 = sshll.u32 [#allocation12], 4
      %s72 = int_to_ptr.vmem [resolvable:$true] %s71
      %74 = dma.hbm_to_vmem [thread:$0]  %s4, 128, %s72, [#allocation13]
    $region21: #{tpu_custom_call.1} parent=1 // pred_fallthru
      _
    // Predicated region
    $region22: #{tpu_custom_call.1} parent=1 // pred_check
      _
    $region23: #{tpu_custom_call.1} parent=1 // pred_check_branch
      %76 = sbr.rel (0) target = $region25
    $region24: #{tpu_custom_call.1} parent=1 // pred_region
      %s78 = ssub.s32 1024, 1024
      %79 = vsyncadd [#allocation13], %s78
      %s80 = sshll.u32 [#allocation14], 4
      %s81 = int_to_ptr.vmem [resolvable:$true] %s80
      %86 = dma.hbm_to_vmem [thread:$0]  %s5, 1024, %s81, [#allocation13], 128, 128, 8
    $region25: #{tpu_custom_call.1} parent=1 // pred_fallthru
      _
    // Predicated region
    $region26: #{tpu_custom_call.1} parent=1 // pred_check
      _
    $region27: #{tpu_custom_call.1} parent=1 // pred_check_branch
      %88 = sbr.rel (0) target = $region29
    $region28: #{tpu_custom_call.1} parent=1 // pred_region
      %s90 = ssub.s32 2048, 2048
      %91 = vsyncadd [#allocation16], %s90
      %s92 = sshll.u32 [#allocation15], 4
      %s93 = int_to_ptr.vmem [resolvable:$true] %s92
      %98 = dma.hbm_to_vmem [thread:$0]  %s6, 2048, %s93, [#allocation16], 128, 128, 8
    $region29: #{tpu_custom_call.1} parent=1 // pred_fallthru
      _
    // Predicated region
    $region30: #{tpu_custom_call.1} parent=1 // pred_check
      _
    $region31: #{tpu_custom_call.1} parent=1 // pred_check_branch
      %100 = sbr.rel (0) target = $region33
    $region32: #{tpu_custom_call.1} parent=1 // pred_region
      _
    $region33: #{tpu_custom_call.1} parent=1 // pred_fallthru
      _
    // Predicated region
    $region34: #{tpu_custom_call.1} parent=1 // pred_check
      _
    $region35: #{tpu_custom_call.1} parent=1 // pred_check_branch
      %102 = sbr.rel (0) target = $region37
    $region36: #{tpu_custom_call.1} parent=1 // pred_region
      %s104 = ssub.s32 9216, 9216
      %105 = vsyncadd [#allocation16], %s104
      %s106 = sshll.u32 [#allocation17], 4
      %s107 = int_to_ptr.vmem [resolvable:$true] %s106
      %112 = dma.hbm_to_vmem [thread:$0]  %s8, 9216, %s107, [#allocation16], 192, 192, 12
    $region37: #{tpu_custom_call.1} parent=1 // pred_fallthru
      _
    // Predicated region
    $region38: #{tpu_custom_call.1} parent=1 // pred_check
      _
    $region39: #{tpu_custom_call.1} parent=1 // pred_check_branch
      %114 = sbr.rel (0) target = $region41
    $region40: #{tpu_custom_call.1} parent=1 // pred_region
      %s116 = ssub.s32 3072, 3072
      %117 = vsyncadd [#allocation19], %s116
      %s118 = sshll.u32 [#allocation18], 4
      %s119 = int_to_ptr.vmem [resolvable:$true] %s118
      %124 = dma.hbm_to_vmem [thread:$0]  %s9, 3072, %s119, [#allocation19], 192, 192, 12
    $region41: #{tpu_custom_call.1} parent=1 // pred_fallthru
      _
    // Predicated region
    $region42: #{tpu_custom_call.1} parent=1 // pred_check
      _
    $region43: #{tpu_custom_call.1} parent=1 // pred_check_branch
      %126 = sbr.rel (0) target = $region45
    $region44: #{tpu_custom_call.1} parent=1 // pred_region
      _
    $region45: #{tpu_custom_call.1} parent=1 // pred_fallthru
      _
    // Predicated region
    $region46: #{tpu_custom_call.1} parent=1 // pred_check
      _
    $region47: #{tpu_custom_call.1} parent=1 // pred_check_branch
      %128 = sbr.rel (0) target = $region49
    $region48: #{tpu_custom_call.1} parent=1 // pred_region
      %s130 = ssub.s32 1024, 1024
      %131 = vsyncadd [#allocation19], %s130
      %s132 = sshll.u32 [#allocation20], 4
      %s133 = int_to_ptr.vmem [resolvable:$true] %s132
      %138 = dma.hbm_to_vmem [thread:$0]  %s11, 1024, %s133, [#allocation19], 64, 64, 4
    $region49: #{tpu_custom_call.1} parent=1 // pred_fallthru
      _
    // Predicated region
    $region50: #{tpu_custom_call.1} parent=1 // pred_check
      _
    $region51: #{tpu_custom_call.1} parent=1 // pred_check_branch
      %140 = sbr.rel (0) target = $region53
    $region52: #{tpu_custom_call.1} parent=1 // pred_region
      _
    $region53: #{tpu_custom_call.1} parent=1 // pred_fallthru
      _
    // Predicated region
    $region54: #{tpu_custom_call.1} parent=1 // pred_check
      _
    $region55: #{tpu_custom_call.1} parent=1 // pred_check_branch
      %142 = sbr.rel (0) target = $region57
    $region56: #{tpu_custom_call.1} parent=1 // pred_region
      %143 = dma.done [#allocation7], 16
    $region57: #{tpu_custom_call.1} parent=1 // pred_fallthru
      _
    // Predicated region
    $region58: #{tpu_custom_call.1} parent=1 // pred_check
      _
    $region59: #{tpu_custom_call.1} parent=1 // pred_check_branch
      %145 = sbr.rel (0) target = $region61
    $region60: #{tpu_custom_call.1} parent=1 // pred_region
      %146 = dma.done [#allocation5], 1280
    $region61: #{tpu_custom_call.1} parent=1 // pred_fallthru
      _
    // Predicated region
    $region62: #{tpu_custom_call.1} parent=1 // pred_check
      _
    $region63: #{tpu_custom_call.1} parent=1 // pred_check_branch
      %148 = sbr.rel (0) target = $region65
    $region64: #{tpu_custom_call.1} parent=1 // pred_region
      %149 = dma.done [#allocation10], 128
    $region65: #{tpu_custom_call.1} parent=1 // pred_fallthru
      _
    // Predicated region
    $region66: #{tpu_custom_call.1} parent=1 // pred_check
      _
    $region67: #{tpu_custom_call.1} parent=1 // pred_check_branch
      %151 = sbr.rel (0) target = $region69
    $region68: #{tpu_custom_call.1} parent=1 // pred_region
      %152 = dma.done [#allocation10], 256
    $region69: #{tpu_custom_call.1} parent=1 // pred_fallthru
      _
    // Predicated region
    $region70: #{tpu_custom_call.1} parent=1 // pred_check
      _
    $region71: #{tpu_custom_call.1} parent=1 // pred_check_branch
      %154 = sbr.rel (0) target = $region73
    $region72: #{tpu_custom_call.1} parent=1 // pred_region
      %155 = dma.done [#allocation13], 128
    $region73: #{tpu_custom_call.1} parent=1 // pred_fallthru
      _
    // Predicated region
    $region74: #{tpu_custom_call.1} parent=1 // pred_check
      _
    $region75: #{tpu_custom_call.1} parent=1 // pred_check_branch
      %157 = sbr.rel (0) target = $region77
    $region76: #{tpu_custom_call.1} parent=1 // pred_region
      %158 = dma.done [#allocation13], 1024
    $region77: #{tpu_custom_call.1} parent=1 // pred_fallthru
      _
    // Predicated region
    $region78: #{tpu_custom_call.1} parent=1 // pred_check
      _
    $region79: #{tpu_custom_call.1} parent=1 // pred_check_branch
      %160 = sbr.rel (0) target = $region81
    $region80: #{tpu_custom_call.1} parent=1 // pred_region
      %161 = dma.done [#allocation16], 2048
    $region81: #{tpu_custom_call.1} parent=1 // pred_fallthru
      _
    // Predicated region
    $region82: #{tpu_custom_call.1} parent=1 // pred_check
      _
    $region83: #{tpu_custom_call.1} parent=1 // pred_check_branch
      %163 = sbr.rel (0) target = $region85
    $region84: #{tpu_custom_call.1} parent=1 // pred_region
      %164 = dma.done [#allocation16], 9216
    $region85: #{tpu_custom_call.1} parent=1 // pred_fallthru
      _
    // Predicated region
    $region86: #{tpu_custom_call.1} parent=1 // pred_check
      _
    $region87: #{tpu_custom_call.1} parent=1 // pred_check_branch
      %166 = sbr.rel (0) target = $region89
    $region88: #{tpu_custom_call.1} parent=1 // pred_region
      %167 = dma.done [#allocation19], 3072
    $region89: #{tpu_custom_call.1} parent=1 // pred_fallthru
      _
    // Predicated region
    $region90: #{tpu_custom_call.1} parent=1 // pred_check
      _
    $region91: #{tpu_custom_call.1} parent=1 // pred_check_branch
      %169 = sbr.rel (0) target = $region93
    $region92: #{tpu_custom_call.1} parent=1 // pred_region
      %170 = dma.done [#allocation19], 1024
    $region93: #{tpu_custom_call.1} parent=1 // pred_fallthru
      _
    %171 = sfence
    %v173 = vld [vmem:[#allocation9] sm:$0xff]
    %174 = vst [vmem:[#allocation2] sm:$0xff] %v173
    %v175 = vld [vmem:[#allocation11] sm:$0xff]
    %v176 = vld [vmem:[#allocation11 + $0x8] sm:$0xff]
    %177 = vst [vmem:[#allocation3] sm:$0xff] %v175
    %178 = vst [vmem:[#allocation3 + $0x8] sm:$0xff] %v176
    %v179 = vld [vmem:[#allocation2] sm:$0xff]
    %s180 = sld [smem:[#allocation4]]
    %v181 = vstv %s180
    %vm182 = vcmp.ne.s32.totalorder %v181, 0
    %v183 = vld [vmem:[#allocation8] sm:$0xff]
    %v184 = vld [vmem:[#allocation8 + $0x8] sm:$0xff]
    %v185 = vld [vmem:[#allocation3] sm:$0xff]
    %v186 = vld [vmem:[#allocation3 + $0x8] sm:$0xff]
    %v187 = vsel %vm182, %v183, %v185
    %v188 = vsel %vm182, %v184, %v186
    %v189 = vld [vmem:[%s7] sm:$0x1]
    %v191 = vlaneseq
    %v192 = vshrl.u32 %v191, 7
    %v193 = vsub.s32 0, %v192
    %v194 = vrot.slane %v189, %v193
    %v196 = vmul.f32 %v179, %v194
    %197 = vadd.xlane.f32.xlu0 %v196
    %v198 = vpop.xlane.xlu0 %197
    %v199 = vld [vmem:[#allocation12] sm:$0xff]
    %v200 = vadd.f32 %v199, %v198
    %vm201 = vcmask 64512
    %v202 = vsel %vm201, %v200, -inf
    %203 = vmax.xlane.f32.xlu0 %v202
    %v204 = vpop.xlane.xlu0 %203
    %v205 = vsub.f32 %v200, %v204
    %v206 = vmul.f32 %v205, 1.442695
    %v207 = vpow.pop %v206
    %v208 = vsel %vm201, %v207, 0.0
    %209 = vadd.xlane.f32.xlu0 %v208
    %v210 = vpop.xlane.xlu0 %209
    %v211 = vrcp.pop %v210
    %v212 = vmul.f32 %v207, %v211
    %v213 = vlaneseq
    %v214 = vshrl.u32 %v213, 7
    %v215 = vsub.s32 0, %v214
    %v216 = vrot.slane %v212, %v215
    %218 = vbcast.lane.b32.xlu0 %v216, 256
    %v219 = vpop.permute.xlu0 %218
    %v220 = vlaneseq
    %v221 = vshrl.u32 %v220, 7
    %v222 = vsub.s32 1, %v221
    %v223 = vrot.slane %v212, %v222
    %225 = vbcast.lane.b32.xlu0 %v223, 256
    %v226 = vpop.permute.xlu0 %225
    %v227 = vlaneseq
    %v228 = vshrl.u32 %v227, 7
    %v229 = vsub.s32 2, %v228
    %v230 = vrot.slane %v212, %v229
    %232 = vbcast.lane.b32.xlu0 %v230, 256
    %v233 = vpop.permute.xlu0 %232
    %v234 = vlaneseq
    %v235 = vshrl.u32 %v234, 7
    %v236 = vsub.s32 3, %v235
    %v237 = vrot.slane %v212, %v236
    %239 = vbcast.lane.b32.xlu0 %v237, 256
    %v240 = vpop.permute.xlu0 %239
    %v241 = vlaneseq
    %v242 = vshrl.u32 %v241, 7
    %v243 = vsub.s32 4, %v242
    %v244 = vrot.slane %v212, %v243
    %246 = vbcast.lane.b32.xlu0 %v244, 256
    %v247 = vpop.permute.xlu0 %246
    %v248 = vlaneseq
    %v249 = vshrl.u32 %v248, 7
    %v250 = vsub.s32 5, %v249
    %v251 = vrot.slane %v212, %v250
    %253 = vbcast.lane.b32.xlu0 %v251, 256
    %v254 = vpop.permute.xlu0 %253
    %v255 = vlaneseq
    %v256 = vshrl.u32 %v255, 7
    %v257 = vsub.s32 6, %v256
    %v258 = vrot.slane %v212, %v257
    %260 = vbcast.lane.b32.xlu0 %v258, 256
    %v261 = vpop.permute.xlu0 %260
    %v262 = vlaneseq
    %v263 = vshrl.u32 %v262, 7
    %v264 = vsub.s32 7, %v263
    %v265 = vrot.slane %v212, %v264
    %267 = vbcast.lane.b32.xlu0 %v265, 256
    %v268 = vpop.permute.xlu0 %267
    %v269 = vld [vmem:[#allocation14] sm:$0xff]
    %v270 = vld [vmem:[#allocation14 + $0x8] sm:$0xff]
    %v271 = vld [vmem:[#allocation14 + $0x10] sm:$0xff]
    %v272 = vld [vmem:[#allocation14 + $0x18] sm:$0xff]
    %v273 = vld [vmem:[#allocation14 + $0x20] sm:$0xff]
    %v274 = vld [vmem:[#allocation14 + $0x28] sm:$0xff]
    %v275 = vld [vmem:[#allocation14 + $0x30] sm:$0xff]
    %v276 = vld [vmem:[#allocation14 + $0x38] sm:$0xff]
    %v277 = vmul.f32 %v219, %v269
    %v278 = vmul.f32 %v226, %v270
    %v279 = vmul.f32 %v233, %v271
    %v280 = vmul.f32 %v240, %v272
    %v281 = vmul.f32 %v247, %v273
    %v282 = vmul.f32 %v254, %v274
    %v283 = vmul.f32 %v261, %v275
    %v284 = vmul.f32 %v268, %v276
    %v285 = vrot.slane %v277, 4
    %v286 = vadd.f32 %v277, %v285
    %v287 = vrot.slane %v286, 2
    %v288 = vadd.f32 %v286, %v287
    %v289 = vrot.slane %v288, 1
    %v290 = vadd.f32 %v288, %v289
    %v291 = vrot.slane %v278, 4
    %v292 = vadd.f32 %v278, %v291
    %v293 = vrot.slane %v292, 2
    %v294 = vadd.f32 %v292, %v293
    %v295 = vrot.slane %v294, 1
    %v296 = vadd.f32 %v294, %v295
    %v297 = vrot.slane %v279, 4
    %v298 = vadd.f32 %v279, %v297
    %v299 = vrot.slane %v298, 2
    %v300 = vadd.f32 %v298, %v299
    %v301 = vrot.slane %v300, 1
    %v302 = vadd.f32 %v300, %v301
    %v303 = vrot.slane %v280, 4
    %v304 = vadd.f32 %v280, %v303
    %v305 = vrot.slane %v304, 2
    %v306 = vadd.f32 %v304, %v305
    %v307 = vrot.slane %v306, 1
    %v308 = vadd.f32 %v306, %v307
    %v309 = vrot.slane %v281, 4
    %v310 = vadd.f32 %v281, %v309
    %v311 = vrot.slane %v310, 2
    %v312 = vadd.f32 %v310, %v311
    %v313 = vrot.slane %v312, 1
    %v314 = vadd.f32 %v312, %v313
    %v315 = vrot.slane %v282, 4
    %v316 = vadd.f32 %v282, %v315
    %v317 = vrot.slane %v316, 2
    %v318 = vadd.f32 %v316, %v317
    %v319 = vrot.slane %v318, 1
    %v320 = vadd.f32 %v318, %v319
    %v321 = vrot.slane %v283, 4
    %v322 = vadd.f32 %v283, %v321
    %v323 = vrot.slane %v322, 2
    %v324 = vadd.f32 %v322, %v323
    %v325 = vrot.slane %v324, 1
    %v326 = vadd.f32 %v324, %v325
    %v327 = vrot.slane %v284, 4
    %v328 = vadd.f32 %v284, %v327
    %v329 = vrot.slane %v328, 2
    %v330 = vadd.f32 %v328, %v329
    %v331 = vrot.slane %v330, 1
    %v332 = vadd.f32 %v330, %v331
    %v333 = vld [vmem:[%s10] sm:$0x3f]
    %vm342 = vcmask 1041409
    %v343 = vsel %vm342, %v296, %v290
    %vm344 = vcmask 1042434
    %v345 = vsel %vm344, %v302, %v343
    %vm346 = vcmask 1043459
    %v347 = vsel %vm346, %v308, %v345
    %vm348 = vcmask 1044484
    %v349 = vsel %vm348, %v314, %v347
    %vm350 = vcmask 1045509
    %v351 = vsel %vm350, %v320, %v349
    %vm352 = vcmask 1046534
    %v353 = vsel %vm352, %v326, %v351
    %vm354 = vcmask 1047559
    %v355 = vsel %vm354, %v332, %v353
    %v357 = vpack.c.bf16 %v187, %v187
    %v358 = vpack.c.bf16 %v188, %v188
    %v359 = vpack.c.bf16 %v355, %v355
    %v360 = vld [vmem:[#allocation17] sm:$0xff]
    %v361 = vld [vmem:[#allocation17 + $0x8] sm:$0xf]
    %v362 = vld [vmem:[#allocation17 + $0xc] sm:$0xff]
    %v363 = vld [vmem:[#allocation17 + $0x14] sm:$0xf]
    %v364 = vld [vmem:[#allocation17 + $0x18] sm:$0xff]
    %v365 = vld [vmem:[#allocation17 + $0x20] sm:$0xf]
    %v366 = vld [vmem:[#allocation17 + $0x24] sm:$0xff]
    %v367 = vld [vmem:[#allocation17 + $0x2c] sm:$0xf]
    %v368 = vld [vmem:[#allocation17 + $0x30] sm:$0xff]
    %v369 = vld [vmem:[#allocation17 + $0x38] sm:$0xf]
    %v370 = vld [vmem:[#allocation17 + $0x3c] sm:$0xff]
    %v371 = vld [vmem:[#allocation17 + $0x44] sm:$0xf]
    %v372 = vld [vmem:[#allocation17 + $0x48] sm:$0xff]
    %v373 = vld [vmem:[#allocation17 + $0x50] sm:$0xf]
    %v374 = vld [vmem:[#allocation17 + $0x54] sm:$0xff]
    %v375 = vld [vmem:[#allocation17 + $0x5c] sm:$0xf]
    %v376 = vld [vmem:[#allocation17 + $0x60] sm:$0xff]
    %v377 = vld [vmem:[#allocation17 + $0x68] sm:$0xf]
    %v378 = vld [vmem:[#allocation17 + $0x6c] sm:$0xff]
    %v379 = vld [vmem:[#allocation17 + $0x74] sm:$0xf]
    %v380 = vld [vmem:[#allocation17 + $0x78] sm:$0xff]
    %v381 = vld [vmem:[#allocation17 + $0x80] sm:$0xf]
    %v382 = vld [vmem:[#allocation17 + $0x84] sm:$0xff]
    %v383 = vld [vmem:[#allocation17 + $0x8c] sm:$0xf]
    %v384 = vld [vmem:[#allocation17 + $0x90] sm:$0xff]
    %v385 = vld [vmem:[#allocation17 + $0x98] sm:$0xf]
    %v386 = vld [vmem:[#allocation17 + $0x9c] sm:$0xff]
    %v387 = vld [vmem:[#allocation17 + $0xa4] sm:$0xf]
    %v388 = vld [vmem:[#allocation17 + $0xa8] sm:$0xff]
    %v389 = vld [vmem:[#allocation17 + $0xb0] sm:$0xf]
    %v390 = vld [vmem:[#allocation17 + $0xb4] sm:$0xff]
    %v391 = vld [vmem:[#allocation17 + $0xbc] sm:$0xf]
    %v392 = vld [vmem:[#allocation17 + $0xc0] sm:$0xff]
    %v393 = vld [vmem:[#allocation17 + $0xc8] sm:$0xf]
    %v394 = vld [vmem:[#allocation17 + $0xcc] sm:$0xff]
    %v395 = vld [vmem:[#allocation17 + $0xd4] sm:$0xf]
    %v396 = vld [vmem:[#allocation17 + $0xd8] sm:$0xff]
    %v397 = vld [vmem:[#allocation17 + $0xe0] sm:$0xf]
    %v398 = vld [vmem:[#allocation17 + $0xe4] sm:$0xff]
    %v399 = vld [vmem:[#allocation17 + $0xec] sm:$0xf]
    %v400 = vld [vmem:[#allocation17 + $0xf0] sm:$0xff]
    %v401 = vld [vmem:[#allocation17 + $0xf8] sm:$0xf]
    %v402 = vld [vmem:[#allocation17 + $0xfc] sm:$0xff]
    %v403 = vld [vmem:[#allocation17 + $0x104] sm:$0xf]
    %v404 = vld [vmem:[#allocation17 + $0x108] sm:$0xff]
    %v405 = vld [vmem:[#allocation17 + $0x110] sm:$0xf]
    %v406 = vld [vmem:[#allocation17 + $0x114] sm:$0xff]
    %v407 = vld [vmem:[#allocation17 + $0x11c] sm:$0xf]
    %v408 = vld [vmem:[#allocation17 + $0x120] sm:$0xff]
    %v409 = vld [vmem:[#allocation17 + $0x128] sm:$0xf]
    %v410 = vld [vmem:[#allocation17 + $0x12c] sm:$0xff]
    %v411 = vld [vmem:[#allocation17 + $0x134] sm:$0xf]
    %v412 = vld [vmem:[#allocation17 + $0x138] sm:$0xff]
    %v413 = vld [vmem:[#allocation17 + $0x140] sm:$0xf]
    %v414 = vld [vmem:[#allocation17 + $0x144] sm:$0xff]
    %v415 = vld [vmem:[#allocation17 + $0x14c] sm:$0xf]
    %v416 = vld [vmem:[#allocation17 + $0x150] sm:$0xff]
    %v417 = vld [vmem:[#allocation17 + $0x158] sm:$0xf]
    %v418 = vld [vmem:[#allocation17 + $0x15c] sm:$0xff]
    %v419 = vld [vmem:[#allocation17 + $0x164] sm:$0xf]
    %v420 = vld [vmem:[#allocation17 + $0x168] sm:$0xff]
    %v421 = vld [vmem:[#allocation17 + $0x170] sm:$0xf]
    %v422 = vld [vmem:[#allocation17 + $0x174] sm:$0xff]
    %v423 = vld [vmem:[#allocation17 + $0x17c] sm:$0xf]
    %v424 = vld [vmem:[#allocation17 + $0x180] sm:$0xff]
    %v425 = vld [vmem:[#allocation17 + $0x188] sm:$0xf]
    %v426 = vld [vmem:[#allocation17 + $0x18c] sm:$0xff]
    %v427 = vld [vmem:[#allocation17 + $0x194] sm:$0xf]
    %v428 = vld [vmem:[#allocation17 + $0x198] sm:$0xff]
    %v429 = vld [vmem:[#allocation17 + $0x1a0] sm:$0xf]
    %v430 = vld [vmem:[#allocation17 + $0x1a4] sm:$0xff]
    %v431 = vld [vmem:[#allocation17 + $0x1ac] sm:$0xf]
    %v432 = vld [vmem:[#allocation17 + $0x1b0] sm:$0xff]
    %v433 = vld [vmem:[#allocation17 + $0x1b8] sm:$0xf]
    %v434 = vld [vmem:[#allocation17 + $0x1bc] sm:$0xff]
    %v435 = vld [vmem:[#allocation17 + $0x1c4] sm:$0xf]
    %v436 = vld [vmem:[#allocation17 + $0x1c8] sm:$0xff]
    %v437 = vld [vmem:[#allocation17 + $0x1d0] sm:$0xf]
    %v438 = vld [vmem:[#allocation17 + $0x1d4] sm:$0xff]
    %v439 = vld [vmem:[#allocation17 + $0x1dc] sm:$0xf]
    %v440 = vld [vmem:[#allocation17 + $0x1e0] sm:$0xff]
    %v441 = vld [vmem:[#allocation17 + $0x1e8] sm:$0xf]
    %v442 = vld [vmem:[#allocation17 + $0x1ec] sm:$0xff]
    %v443 = vld [vmem:[#allocation17 + $0x1f4] sm:$0xf]
    %v444 = vld [vmem:[#allocation17 + $0x1f8] sm:$0xff]
    %v445 = vld [vmem:[#allocation17 + $0x200] sm:$0xf]
    %v446 = vld [vmem:[#allocation17 + $0x204] sm:$0xff]
    %v447 = vld [vmem:[#allocation17 + $0x20c] sm:$0xf]
    %v448 = vld [vmem:[#allocation17 + $0x210] sm:$0xff]
    %v449 = vld [vmem:[#allocation17 + $0x218] sm:$0xf]
    %v450 = vld [vmem:[#allocation17 + $0x21c] sm:$0xff]
    %v451 = vld [vmem:[#allocation17 + $0x224] sm:$0xf]
    %v452 = vld [vmem:[#allocation17 + $0x228] sm:$0xff]
    %v453 = vld [vmem:[#allocation17 + $0x230] sm:$0xf]
    %v454 = vld [vmem:[#allocation17 + $0x234] sm:$0xff]
    %v455 = vld [vmem:[#allocation17 + $0x23c] sm:$0xf]
    %v457 = vlaneseq
    %v458 = vshrl.u32 %v457, 7
    %v459 = vsub.s32 0, %v458
    %v460 = vrot.slane %v333, %v459
    %v461 = vlaneseq
    %v462 = vshrl.u32 %v461, 7
    %v463 = vsub.s32 2, %v462
    %v464 = vrot.slane %v333, %v463
    %v465 = vlaneseq
    %v466 = vshrl.u32 %v465, 7
    %v467 = vsub.s32 4, %v466
    %v468 = vrot.slane %v333, %v467
    %v472 = vlaneseq
    %v473 = vshrl.u32 %v472, 7
    %v474 = vsub.s32 0, %v473
    %v475 = vrot.slane %v460, %v474
    %v476 = vlaneseq
    %v477 = vshrl.u32 %v476, 7
    %v478 = vsub.s32 0, %v477
    %v479 = vrot.slane %v464, %v478
    %v480 = vlaneseq
    %v481 = vshrl.u32 %v480, 7
    %v482 = vsub.s32 0, %v481
    %v483 = vrot.slane %v468, %v482
    %v580 = vunpack.c.l.b16 %v360
    %v581 = vunpack.c.h.b16 %v360
    %v582 = vunpack.c.l.b16 %v361
    %v583 = vunpack.c.l.b16 %v362
    %v584 = vunpack.c.h.b16 %v362
    %v585 = vunpack.c.l.b16 %v363
    %v586 = vunpack.c.l.b16 %v364
    %v587 = vunpack.c.h.b16 %v364
    %v588 = vunpack.c.l.b16 %v365
    %v589 = vunpack.c.l.b16 %v366
    %v590 = vunpack.c.h.b16 %v366
    %v591 = vunpack.c.l.b16 %v367
    %v592 = vunpack.c.l.b16 %v368
    %v593 = vunpack.c.h.b16 %v368
    %v594 = vunpack.c.l.b16 %v369
    %v595 = vunpack.c.l.b16 %v370
    %v596 = vunpack.c.h.b16 %v370
    %v597 = vunpack.c.l.b16 %v371
    %v598 = vunpack.c.l.b16 %v372
    %v599 = vunpack.c.h.b16 %v372
    %v600 = vunpack.c.l.b16 %v373
    %v601 = vunpack.c.l.b16 %v374
    %v602 = vunpack.c.h.b16 %v374
    %v603 = vunpack.c.l.b16 %v375
    %v604 = vunpack.c.l.b16 %v376
    %v605 = vunpack.c.h.b16 %v376
    %v606 = vunpack.c.l.b16 %v377
    %v607 = vunpack.c.l.b16 %v378
    %v608 = vunpack.c.h.b16 %v378
    %v609 = vunpack.c.l.b16 %v379
    %v610 = vunpack.c.l.b16 %v380
    %v611 = vunpack.c.h.b16 %v380
    %v612 = vunpack.c.l.b16 %v381
    %v613 = vunpack.c.l.b16 %v382
    %v614 = vunpack.c.h.b16 %v382
    %v615 = vunpack.c.l.b16 %v383
    %v616 = vunpack.c.l.b16 %v384
    %v617 = vunpack.c.h.b16 %v384
    %v618 = vunpack.c.l.b16 %v385
    %v619 = vunpack.c.l.b16 %v386
    %v620 = vunpack.c.h.b16 %v386
    %v621 = vunpack.c.l.b16 %v387
    %v622 = vunpack.c.l.b16 %v388
    %v623 = vunpack.c.h.b16 %v388
    %v624 = vunpack.c.l.b16 %v389
    %v625 = vunpack.c.l.b16 %v390
    %v626 = vunpack.c.h.b16 %v390
    %v627 = vunpack.c.l.b16 %v391
    %v628 = vunpack.c.l.b16 %v392
    %v629 = vunpack.c.h.b16 %v392
    %v630 = vunpack.c.l.b16 %v393
    %v631 = vunpack.c.l.b16 %v394
    %v632 = vunpack.c.h.b16 %v394
    %v633 = vunpack.c.l.b16 %v395
    %v634 = vunpack.c.l.b16 %v396
    %v635 = vunpack.c.h.b16 %v396
    %v636 = vunpack.c.l.b16 %v397
    %v637 = vunpack.c.l.b16 %v398
    %v638 = vunpack.c.h.b16 %v398
    %v639 = vunpack.c.l.b16 %v399
    %v640 = vunpack.c.l.b16 %v400
    %v641 = vunpack.c.h.b16 %v400
    %v642 = vunpack.c.l.b16 %v401
    %v643 = vunpack.c.l.b16 %v402
    %v644 = vunpack.c.h.b16 %v402
    %v645 = vunpack.c.l.b16 %v403
    %v646 = vunpack.c.l.b16 %v404
    %v647 = vunpack.c.h.b16 %v404
    %v648 = vunpack.c.l.b16 %v405
    %v649 = vunpack.c.l.b16 %v406
    %v650 = vunpack.c.h.b16 %v406
    %v651 = vunpack.c.l.b16 %v407
    %v652 = vunpack.c.l.b16 %v408
    %v653 = vunpack.c.h.b16 %v408
    %v654 = vunpack.c.l.b16 %v409
    %v655 = vunpack.c.l.b16 %v410
    %v656 = vunpack.c.h.b16 %v410
    %v657 = vunpack.c.l.b16 %v411
    %v658 = vunpack.c.l.b16 %v412
    %v659 = vunpack.c.h.b16 %v412
    %v660 = vunpack.c.l.b16 %v413
    %v661 = vunpack.c.l.b16 %v414
    %v662 = vunpack.c.h.b16 %v414
    %v663 = vunpack.c.l.b16 %v415
    %v664 = vunpack.c.l.b16 %v416
    %v665 = vunpack.c.h.b16 %v416
    %v666 = vunpack.c.l.b16 %v417
    %v667 = vunpack.c.l.b16 %v418
    %v668 = vunpack.c.h.b16 %v418
    %v669 = vunpack.c.l.b16 %v419
    %v670 = vunpack.c.l.b16 %v420
    %v671 = vunpack.c.h.b16 %v420
    %v672 = vunpack.c.l.b16 %v421
    %v673 = vunpack.c.l.b16 %v422
    %v674 = vunpack.c.h.b16 %v422
    %v675 = vunpack.c.l.b16 %v423
    %v676 = vunpack.c.l.b16 %v424
    %v677 = vunpack.c.h.b16 %v424
    %v678 = vunpack.c.l.b16 %v425
    %v679 = vunpack.c.l.b16 %v426
    %v680 = vunpack.c.h.b16 %v426
    %v681 = vunpack.c.l.b16 %v427
    %v682 = vunpack.c.l.b16 %v428
    %v683 = vunpack.c.h.b16 %v428
    %v684 = vunpack.c.l.b16 %v429
    %v685 = vunpack.c.l.b16 %v430
    %v686 = vunpack.c.h.b16 %v430
    %v687 = vunpack.c.l.b16 %v431
    %v688 = vunpack.c.l.b16 %v432
    %v689 = vunpack.c.h.b16 %v432
    %v690 = vunpack.c.l.b16 %v433
    %v691 = vunpack.c.l.b16 %v434
    %v692 = vunpack.c.h.b16 %v434
    %v693 = vunpack.c.l.b16 %v435
    %v694 = vunpack.c.l.b16 %v436
    %v695 = vunpack.c.h.b16 %v436
    %v696 = vunpack.c.l.b16 %v437
    %v697 = vunpack.c.l.b16 %v438
    %v698 = vunpack.c.h.b16 %v438
    %v699 = vunpack.c.l.b16 %v439
    %v700 = vunpack.c.l.b16 %v440
    %v701 = vunpack.c.h.b16 %v440
    %v702 = vunpack.c.l.b16 %v441
    %v703 = vunpack.c.l.b16 %v442
    %v704 = vunpack.c.h.b16 %v442
    %v705 = vunpack.c.l.b16 %v443
    %v706 = vunpack.c.l.b16 %v444
    %v707 = vunpack.c.h.b16 %v444
    %v708 = vunpack.c.l.b16 %v445
    %v709 = vunpack.c.l.b16 %v446
    %v710 = vunpack.c.h.b16 %v446
    %v711 = vunpack.c.l.b16 %v447
    %v712 = vunpack.c.l.b16 %v448
    %v713 = vunpack.c.h.b16 %v448
    %v714 = vunpack.c.l.b16 %v449
    %v715 = vunpack.c.l.b16 %v450
    %v716 = vunpack.c.h.b16 %v450
    %v717 = vunpack.c.l.b16 %v451
    %v718 = vunpack.c.l.b16 %v452
    %v719 = vunpack.c.h.b16 %v452
    %v720 = vunpack.c.l.b16 %v453
    %v721 = vunpack.c.l.b16 %v454
    %v722 = vunpack.c.h.b16 %v454
    %v723 = vunpack.c.l.b16 %v455
    %v724 = vpack.c.b16 %v583, %v580
    %v725 = vpack.c.b16 %v584, %v581
    %v726 = vpack.c.b16 %v585, %v582
    %v727 = vpack.c.b16 %v589, %v586
    %v728 = vpack.c.b16 %v590, %v587
    %v729 = vpack.c.b16 %v591, %v588
    %v730 = vpack.c.b16 %v595, %v592
    %v731 = vpack.c.b16 %v596, %v593
    %v732 = vpack.c.b16 %v597, %v594
    %v733 = vpack.c.b16 %v601, %v598
    %v734 = vpack.c.b16 %v602, %v599
    %v735 = vpack.c.b16 %v603, %v600
    %v736 = vpack.c.b16 %v607, %v604
    %v737 = vpack.c.b16 %v608, %v605
    %v738 = vpack.c.b16 %v609, %v606
    %v739 = vpack.c.b16 %v613, %v610
    %v740 = vpack.c.b16 %v614, %v611
    %v741 = vpack.c.b16 %v615, %v612
    %v742 = vpack.c.b16 %v619, %v616
    %v743 = vpack.c.b16 %v620, %v617
    %v744 = vpack.c.b16 %v621, %v618
    %v745 = vpack.c.b16 %v625, %v622
    %v746 = vpack.c.b16 %v626, %v623
    %v747 = vpack.c.b16 %v627, %v624
    %v748 = vpack.c.b16 %v631, %v628
    %v749 = vpack.c.b16 %v632, %v629
    %v750 = vpack.c.b16 %v633, %v630
    %v751 = vpack.c.b16 %v637, %v634
    %v752 = vpack.c.b16 %v638, %v635
    %v753 = vpack.c.b16 %v639, %v636
    %v754 = vpack.c.b16 %v643, %v640
    %v755 = vpack.c.b16 %v644, %v641
    %v756 = vpack.c.b16 %v645, %v642
    %v757 = vpack.c.b16 %v649, %v646
    %v758 = vpack.c.b16 %v650, %v647
    %v759 = vpack.c.b16 %v651, %v648
    %v760 = vpack.c.b16 %v655, %v652
    %v761 = vpack.c.b16 %v656, %v653
    %v762 = vpack.c.b16 %v657, %v654
    %v763 = vpack.c.b16 %v661, %v658
    %v764 = vpack.c.b16 %v662, %v659
    %v765 = vpack.c.b16 %v663, %v660
    %v766 = vpack.c.b16 %v667, %v664
    %v767 = vpack.c.b16 %v668, %v665
    %v768 = vpack.c.b16 %v669, %v666
    %v769 = vpack.c.b16 %v673, %v670
    %v770 = vpack.c.b16 %v674, %v671
    %v771 = vpack.c.b16 %v675, %v672
    %v772 = vpack.c.b16 %v679, %v676
    %v773 = vpack.c.b16 %v680, %v677
    %v774 = vpack.c.b16 %v681, %v678
    %v775 = vpack.c.b16 %v685, %v682
    %v776 = vpack.c.b16 %v686, %v683
    %v777 = vpack.c.b16 %v687, %v684
    %v778 = vpack.c.b16 %v691, %v688
    %v779 = vpack.c.b16 %v692, %v689
    %v780 = vpack.c.b16 %v693, %v690
    %v781 = vpack.c.b16 %v697, %v694
    %v782 = vpack.c.b16 %v698, %v695
    %v783 = vpack.c.b16 %v699, %v696
    %v784 = vpack.c.b16 %v703, %v700
    %v785 = vpack.c.b16 %v704, %v701
    %v786 = vpack.c.b16 %v705, %v702
    %v787 = vpack.c.b16 %v709, %v706
    %v788 = vpack.c.b16 %v710, %v707
    %v789 = vpack.c.b16 %v711, %v708
    %v790 = vpack.c.b16 %v715, %v712
    %v791 = vpack.c.b16 %v716, %v713
    %v792 = vpack.c.b16 %v717, %v714
    %v793 = vpack.c.b16 %v721, %v718
    %v794 = vpack.c.b16 %v722, %v719
    %v795 = vpack.c.b16 %v723, %v720
    %868 = vmatprep.subr.bf16.mxu0 %v746
    %869 = vmatpush1.bf16.msra.mxu0 %v745
    %870 = vmatprep.subr.bf16.mxu0 %v743
    %871 = vmatpush1.bf16.msra.mxu0 %v742
    %872 = vmatprep.subr.bf16.mxu0 %v740
    %873 = vmatpush1.bf16.msra.mxu0 %v739
    %874 = vmatprep.subr.bf16.mxu0 %v737
    %875 = vmatpush1.bf16.msra.mxu0 %v736
    %876 = vmatprep.subr.bf16.mxu0 %v734
    %877 = vmatpush1.bf16.msra.mxu0 %v733
    %878 = vmatprep.subr.bf16.mxu0 %v731
    %879 = vmatpush1.bf16.msra.mxu0 %v730
    %880 = vmatprep.subr.bf16.mxu0 %v728
    %881 = vmatpush1.bf16.msra.mxu0 %v727
    %882 = vmatprep.subr.bf16.mxu0 %v725
    %883 = vmatpush1.bf16.msra.mxu0 %v724
    %884 = vmatprep.subr.bf16.mxu0 %v770
    %885 = vmatpush2.bf16.msra.mxu0 %v769
    %886 = vmatprep.subr.bf16.mxu0 %v767
    %887 = vmatpush2.bf16.msra.mxu0 %v766
    %888 = vmatprep.subr.bf16.mxu0 %v764
    %889 = vmatpush2.bf16.msra.mxu0 %v763
    %890 = vmatprep.subr.bf16.mxu0 %v761
    %891 = vmatpush2.bf16.msra.mxu0 %v760
    %892 = vmatprep.subr.bf16.mxu0 %v758
    %893 = vmatpush2.bf16.msra.mxu0 %v757
    %894 = vmatprep.subr.bf16.mxu0 %v755
    %895 = vmatpush2.bf16.msra.mxu0 %v754
    %896 = vmatprep.subr.bf16.mxu0 %v752
    %897 = vmatpush2.bf16.msra.mxu0 %v751
    %898 = vmatprep.subr.bf16.mxu0 %v749
    %899 = vmatpush2.bf16.msra.mxu0 %v748
    %900 = vmatprep.mubr.bf16.mxu0 %v358
    %901 = vmatmul.mubr.bf16.gmra.mxu0 %v357
    %v902 = vpop.f32.mrf.mxu0
    %v903 = vadd.f32 %v475, %v902
    %v904 = vpop.f32.mrf.mxu0
    %v905 = vadd.f32 %v479, %v904
    %v906 = vpop.f32.mrf.mxu0
    %v907 = vpop.f32.mrf.mxu0
    %908 = vdwg.mxu0
    %909 = vmatprep.subr.bf16.mxu0 %v794
    %910 = vmatpush1.bf16.msra.mxu0 %v793
    %911 = vmatprep.subr.bf16.mxu0 %v791
    %912 = vmatpush1.bf16.msra.mxu0 %v790
    %913 = vmatprep.subr.bf16.mxu0 %v788
    %914 = vmatpush1.bf16.msra.mxu0 %v787
    %915 = vmatprep.subr.bf16.mxu0 %v785
    %916 = vmatpush1.bf16.msra.mxu0 %v784
    %917 = vmatprep.subr.bf16.mxu0 %v782
    %918 = vmatpush1.bf16.msra.mxu0 %v781
    %919 = vmatprep.subr.bf16.mxu0 %v779
    %920 = vmatpush1.bf16.msra.mxu0 %v778
    %921 = vmatprep.subr.bf16.mxu0 %v776
    %922 = vmatpush1.bf16.msra.mxu0 %v775
    %923 = vmatprep.subr.bf16.mxu0 %v773
    %924 = vmatpush1.bf16.msra.mxu0 %v772
    %925 = vmatprep.subr.bf16.mxu0 0
    %926 = vmatpush2.bf16.msra.mxu0 0
    %927 = vmatprep.subr.bf16.mxu0 0
    %928 = vmatpush2.bf16.msra.mxu0 0
    %929 = vmatprep.subr.bf16.mxu0 0
    %930 = vmatpush2.bf16.msra.mxu0 0
    %931 = vmatprep.subr.bf16.mxu0 0
    %932 = vmatpush2.bf16.msra.mxu0 0
    %933 = vmatprep.subr.bf16.mxu0 0
    %934 = vmatpush2.bf16.msra.mxu0 0
    %935 = vmatprep.subr.bf16.mxu0 0
    %936 = vmatpush2.bf16.msra.mxu0 0
    %937 = vmatprep.subr.bf16.mxu0 0
    %938 = vmatpush2.bf16.msra.mxu0 0
    %939 = vmatprep.subr.bf16.mxu0 0
    %940 = vmatpush2.bf16.msra.mxu0 0
    %941 = vmatprep.mubr.bf16.mxu0 0
    %942 = vmatmul.mubr.bf16.gmra.mxu0 %v359
    %v943 = vpop.f32.mrf.mxu0
    %v944 = vadd.f32 %v903, %v943
    %v945 = vpop.f32.mrf.mxu0
    %v946 = vadd.f32 %v905, %v945
    %v947 = vpop.f32.mrf.mxu0
    %v948 = vpop.f32.mrf.mxu0
    %949 = vdwg.mxu0
    %950 = vmatprep.subr.bf16.mxu0 0
    %951 = vmatpush1.bf16.msra.mxu0 %v747
    %952 = vmatprep.subr.bf16.mxu0 0
    %953 = vmatpush1.bf16.msra.mxu0 %v744
    %954 = vmatprep.subr.bf16.mxu0 0
    %955 = vmatpush1.bf16.msra.mxu0 %v741
    %956 = vmatprep.subr.bf16.mxu0 0
    %957 = vmatpush1.bf16.msra.mxu0 %v738
    %958 = vmatprep.subr.bf16.mxu0 0
    %959 = vmatpush1.bf16.msra.mxu0 %v735
    %960 = vmatprep.subr.bf16.mxu0 0
    %961 = vmatpush1.bf16.msra.mxu0 %v732
    %962 = vmatprep.subr.bf16.mxu0 0
    %963 = vmatpush1.bf16.msra.mxu0 %v729
    %964 = vmatprep.subr.bf16.mxu0 0
    %965 = vmatpush1.bf16.msra.mxu0 %v726
    %966 = vmatprep.subr.bf16.mxu0 0
    %967 = vmatpush2.bf16.msra.mxu0 %v771
    %968 = vmatprep.subr.bf16.mxu0 0
    %969 = vmatpush2.bf16.msra.mxu0 %v768
    %970 = vmatprep.subr.bf16.mxu0 0
    %971 = vmatpush2.bf16.msra.mxu0 %v765
    %972 = vmatprep.subr.bf16.mxu0 0
    %973 = vmatpush2.bf16.msra.mxu0 %v762
    %974 = vmatprep.subr.bf16.mxu0 0
    %975 = vmatpush2.bf16.msra.mxu0 %v759
    %976 = vmatprep.subr.bf16.mxu0 0
    %977 = vmatpush2.bf16.msra.mxu0 %v756
    %978 = vmatprep.subr.bf16.mxu0 0
    %979 = vmatpush2.bf16.msra.mxu0 %v753
    %980 = vmatprep.subr.bf16.mxu0 0
    %981 = vmatpush2.bf16.msra.mxu0 %v750
    %982 = vmatprep.mubr.bf16.mxu0 %v358
    %983 = vmatmul.mubr.bf16.gmra.mxu0 %v357
    %v984 = vpop.f32.mrf.mxu0
    %v985 = vadd.f32 %v483, %v984
    %v986 = vpop.f32.mrf.mxu0
    %v987 = vpop.f32.mrf.mxu0
    %v988 = vpop.f32.mrf.mxu0
    %989 = vdwg.mxu0
    %990 = vmatprep.subr.bf16.mxu0 0
    %991 = vmatpush1.bf16.msra.mxu0 %v795
    %992 = vmatprep.subr.bf16.mxu0 0
    %993 = vmatpush1.bf16.msra.mxu0 %v792
    %994 = vmatprep.subr.bf16.mxu0 0
    %995 = vmatpush1.bf16.msra.mxu0 %v789
    %996 = vmatprep.subr.bf16.mxu0 0
    %997 = vmatpush1.bf16.msra.mxu0 %v786
    %998 = vmatprep.subr.bf16.mxu0 0
    %999 = vmatpush1.bf16.msra.mxu0 %v783
    %1000 = vmatprep.subr.bf16.mxu0 0
    %1001 = vmatpush1.bf16.msra.mxu0 %v780
    %1002 = vmatprep.subr.bf16.mxu0 0
    %1003 = vmatpush1.bf16.msra.mxu0 %v777
    %1004 = vmatprep.subr.bf16.mxu0 0
    %1005 = vmatpush1.bf16.msra.mxu0 %v774
    %1006 = vmatprep.subr.bf16.mxu0 0
    %1007 = vmatpush2.bf16.msra.mxu0 0
    %1008 = vmatprep.subr.bf16.mxu0 0
    %1009 = vmatpush2.bf16.msra.mxu0 0
    %1010 = vmatprep.subr.bf16.mxu0 0
    %1011 = vmatpush2.bf16.msra.mxu0 0
    %1012 = vmatprep.subr.bf16.mxu0 0
    %1013 = vmatpush2.bf16.msra.mxu0 0
    %1014 = vmatprep.subr.bf16.mxu0 0
    %1015 = vmatpush2.bf16.msra.mxu0 0
    %1016 = vmatprep.subr.bf16.mxu0 0
    %1017 = vmatpush2.bf16.msra.mxu0 0
    %1018 = vmatprep.subr.bf16.mxu0 0
    %1019 = vmatpush2.bf16.msra.mxu0 0
    %1020 = vmatprep.subr.bf16.mxu0 0
    %1021 = vmatpush2.bf16.msra.mxu0 0
    %1022 = vmatprep.mubr.bf16.mxu0 0
    %1023 = vmatmul.mubr.bf16.gmra.mxu0 %v359
    %v1024 = vpop.f32.mrf.mxu0
    %v1025 = vadd.f32 %v985, %v1024
    %v1026 = vpop.f32.mrf.mxu0
    %v1027 = vpop.f32.mrf.mxu0
    %v1028 = vpop.f32.mrf.mxu0
    %1029 = vdwg.mxu0
    %v1030 = vpack.c.bf16 %v179, %v179
    %v1031 = vld [vmem:[#allocation18] sm:$0xff]
    %v1032 = vld [vmem:[#allocation18 + $0x8] sm:$0xf]
    %v1033 = vld [vmem:[#allocation18 + $0xc] sm:$0xff]
    %v1034 = vld [vmem:[#allocation18 + $0x14] sm:$0xf]
    %v1035 = vld [vmem:[#allocation18 + $0x18] sm:$0xff]
    %v1036 = vld [vmem:[#allocation18 + $0x20] sm:$0xf]
    %v1037 = vld [vmem:[#allocation18 + $0x24] sm:$0xff]
    %v1038 = vld [vmem:[#allocation18 + $0x2c] sm:$0xf]
    %v1039 = vld [vmem:[#allocation18 + $0x30] sm:$0xff]
    %v1040 = vld [vmem:[#allocation18 + $0x38] sm:$0xf]
    %v1041 = vld [vmem:[#allocation18 + $0x3c] sm:$0xff]
    %v1042 = vld [vmem:[#allocation18 + $0x44] sm:$0xf]
    %v1043 = vld [vmem:[#allocation18 + $0x48] sm:$0xff]
    %v1044 = vld [vmem:[#allocation18 + $0x50] sm:$0xf]
    %v1045 = vld [vmem:[#allocation18 + $0x54] sm:$0xff]
    %v1046 = vld [vmem:[#allocation18 + $0x5c] sm:$0xf]
    %v1047 = vld [vmem:[#allocation18 + $0x60] sm:$0xff]
    %v1048 = vld [vmem:[#allocation18 + $0x68] sm:$0xf]
    %v1049 = vld [vmem:[#allocation18 + $0x6c] sm:$0xff]
    %v1050 = vld [vmem:[#allocation18 + $0x74] sm:$0xf]
    %v1051 = vld [vmem:[#allocation18 + $0x78] sm:$0xff]
    %v1052 = vld [vmem:[#allocation18 + $0x80] sm:$0xf]
    %v1053 = vld [vmem:[#allocation18 + $0x84] sm:$0xff]
    %v1054 = vld [vmem:[#allocation18 + $0x8c] sm:$0xf]
    %v1055 = vld [vmem:[#allocation18 + $0x90] sm:$0xff]
    %v1056 = vld [vmem:[#allocation18 + $0x98] sm:$0xf]
    %v1057 = vld [vmem:[#allocation18 + $0x9c] sm:$0xff]
    %v1058 = vld [vmem:[#allocation18 + $0xa4] sm:$0xf]
    %v1059 = vld [vmem:[#allocation18 + $0xa8] sm:$0xff]
    %v1060 = vld [vmem:[#allocation18 + $0xb0] sm:$0xf]
    %v1061 = vld [vmem:[#allocation18 + $0xb4] sm:$0xff]
    %v1062 = vld [vmem:[#allocation18 + $0xbc] sm:$0xf]
    %v1063 = vlaneseq
    %v1064 = vshrl.u32 %v1063, 7
    %v1065 = vsub.s32 1, %v1064
    %v1066 = vrot.slane %v333, %v1065
    %v1067 = vlaneseq
    %v1068 = vshrl.u32 %v1067, 7
    %v1069 = vsub.s32 3, %v1068
    %v1070 = vrot.slane %v333, %v1069
    %v1071 = vlaneseq
    %v1072 = vshrl.u32 %v1071, 7
    %v1073 = vsub.s32 5, %v1072
    %v1074 = vrot.slane %v333, %v1073
    %v1078 = vlaneseq
    %v1079 = vshrl.u32 %v1078, 7
    %v1080 = vsub.s32 1, %v1079
    %v1081 = vrot.slane %v1066, %v1080
    %v1082 = vlaneseq
    %v1083 = vshrl.u32 %v1082, 7
    %v1084 = vsub.s32 1, %v1083
    %v1085 = vrot.slane %v1070, %v1084
    %v1086 = vlaneseq
    %v1087 = vshrl.u32 %v1086, 7
    %v1088 = vsub.s32 1, %v1087
    %v1089 = vrot.slane %v1074, %v1088
    %v1122 = vunpack.c.l.b16 %v1031
    %v1123 = vunpack.c.h.b16 %v1031
    %v1124 = vunpack.c.l.b16 %v1032
    %v1125 = vunpack.c.l.b16 %v1033
    %v1126 = vunpack.c.h.b16 %v1033
    %v1127 = vunpack.c.l.b16 %v1034
    %v1128 = vunpack.c.l.b16 %v1035
    %v1129 = vunpack.c.h.b16 %v1035
    %v1130 = vunpack.c.l.b16 %v1036
    %v1131 = vunpack.c.l.b16 %v1037
    %v1132 = vunpack.c.h.b16 %v1037
    %v1133 = vunpack.c.l.b16 %v1038
    %v1134 = vunpack.c.l.b16 %v1039
    %v1135 = vunpack.c.h.b16 %v1039
    %v1136 = vunpack.c.l.b16 %v1040
    %v1137 = vunpack.c.l.b16 %v1041
    %v1138 = vunpack.c.h.b16 %v1041
    %v1139 = vunpack.c.l.b16 %v1042
    %v1140 = vunpack.c.l.b16 %v1043
    %v1141 = vunpack.c.h.b16 %v1043
    %v1142 = vunpack.c.l.b16 %v1044
    %v1143 = vunpack.c.l.b16 %v1045
    %v1144 = vunpack.c.h.b16 %v1045
    %v1145 = vunpack.c.l.b16 %v1046
    %v1146 = vunpack.c.l.b16 %v1047
    %v1147 = vunpack.c.h.b16 %v1047
    %v1148 = vunpack.c.l.b16 %v1048
    %v1149 = vunpack.c.l.b16 %v1049
    %v1150 = vunpack.c.h.b16 %v1049
    %v1151 = vunpack.c.l.b16 %v1050
    %v1152 = vunpack.c.l.b16 %v1051
    %v1153 = vunpack.c.h.b16 %v1051
    %v1154 = vunpack.c.l.b16 %v1052
    %v1155 = vunpack.c.l.b16 %v1053
    %v1156 = vunpack.c.h.b16 %v1053
    %v1157 = vunpack.c.l.b16 %v1054
    %v1158 = vunpack.c.l.b16 %v1055
    %v1159 = vunpack.c.h.b16 %v1055
    %v1160 = vunpack.c.l.b16 %v1056
    %v1161 = vunpack.c.l.b16 %v1057
    %v1162 = vunpack.c.h.b16 %v1057
    %v1163 = vunpack.c.l.b16 %v1058
    %v1164 = vunpack.c.l.b16 %v1059
    %v1165 = vunpack.c.h.b16 %v1059
    %v1166 = vunpack.c.l.b16 %v1060
    %v1167 = vunpack.c.l.b16 %v1061
    %v1168 = vunpack.c.h.b16 %v1061
    %v1169 = vunpack.c.l.b16 %v1062
    %v1170 = vpack.c.b16 %v1125, %v1122
    %v1171 = vpack.c.b16 %v1126, %v1123
    %v1172 = vpack.c.b16 %v1127, %v1124
    %v1173 = vpack.c.b16 %v1131, %v1128
    %v1174 = vpack.c.b16 %v1132, %v1129
    %v1175 = vpack.c.b16 %v1133, %v1130
    %v1176 = vpack.c.b16 %v1137, %v1134
    %v1177 = vpack.c.b16 %v1138, %v1135
    %v1178 = vpack.c.b16 %v1139, %v1136
    %v1179 = vpack.c.b16 %v1143, %v1140
    %v1180 = vpack.c.b16 %v1144, %v1141
    %v1181 = vpack.c.b16 %v1145, %v1142
    %v1182 = vpack.c.b16 %v1149, %v1146
    %v1183 = vpack.c.b16 %v1150, %v1147
    %v1184 = vpack.c.b16 %v1151, %v1148
    %v1185 = vpack.c.b16 %v1155, %v1152
    %v1186 = vpack.c.b16 %v1156, %v1153
    %v1187 = vpack.c.b16 %v1157, %v1154
    %v1188 = vpack.c.b16 %v1161, %v1158
    %v1189 = vpack.c.b16 %v1162, %v1159
    %v1190 = vpack.c.b16 %v1163, %v1160
    %v1191 = vpack.c.b16 %v1167, %v1164
    %v1192 = vpack.c.b16 %v1168, %v1165
    %v1193 = vpack.c.b16 %v1169, %v1166
    %1218 = vmatprep.subr.bf16.mxu0 %v1192
    %1219 = vmatpush1.bf16.msra.mxu0 %v1191
    %1220 = vmatprep.subr.bf16.mxu0 %v1189
    %1221 = vmatpush1.bf16.msra.mxu0 %v1188
    %1222 = vmatprep.subr.bf16.mxu0 %v1186
    %1223 = vmatpush1.bf16.msra.mxu0 %v1185
    %1224 = vmatprep.subr.bf16.mxu0 %v1183
    %1225 = vmatpush1.bf16.msra.mxu0 %v1182
    %1226 = vmatprep.subr.bf16.mxu0 %v1180
    %1227 = vmatpush1.bf16.msra.mxu0 %v1179
    %1228 = vmatprep.subr.bf16.mxu0 %v1177
    %1229 = vmatpush1.bf16.msra.mxu0 %v1176
    %1230 = vmatprep.subr.bf16.mxu0 %v1174
    %1231 = vmatpush1.bf16.msra.mxu0 %v1173
    %1232 = vmatprep.subr.bf16.mxu0 %v1171
    %1233 = vmatpush1.bf16.msra.mxu0 %v1170
    %1234 = vmatprep.subr.bf16.mxu0 0
    %1235 = vmatpush2.bf16.msra.mxu0 0
    %1236 = vmatprep.subr.bf16.mxu0 0
    %1237 = vmatpush2.bf16.msra.mxu0 0
    %1238 = vmatprep.subr.bf16.mxu0 0
    %1239 = vmatpush2.bf16.msra.mxu0 0
    %1240 = vmatprep.subr.bf16.mxu0 0
    %1241 = vmatpush2.bf16.msra.mxu0 0
    %1242 = vmatprep.subr.bf16.mxu0 0
    %1243 = vmatpush2.bf16.msra.mxu0 0
    %1244 = vmatprep.subr.bf16.mxu0 0
    %1245 = vmatpush2.bf16.msra.mxu0 0
    %1246 = vmatprep.subr.bf16.mxu0 0
    %1247 = vmatpush2.bf16.msra.mxu0 0
    %1248 = vmatprep.subr.bf16.mxu0 0
    %1249 = vmatpush2.bf16.msra.mxu0 0
    %1250 = vmatprep.mubr.bf16.mxu0 0
    %1251 = vmatmul.mubr.bf16.gmra.mxu0 %v1030
    %v1252 = vpop.f32.mrf.mxu0
    %v1253 = vadd.f32 %v1081, %v1252
    %v1254 = vpop.f32.mrf.mxu0
    %v1255 = vadd.f32 %v1085, %v1254
    %v1256 = vpop.f32.mrf.mxu0
    %v1257 = vpop.f32.mrf.mxu0
    %1258 = vdwg.mxu0
    %1259 = vmatprep.subr.bf16.mxu0 0
    %1260 = vmatpush1.bf16.msra.mxu0 %v1193
    %1261 = vmatprep.subr.bf16.mxu0 0
    %1262 = vmatpush1.bf16.msra.mxu0 %v1190
    %1263 = vmatprep.subr.bf16.mxu0 0
    %1264 = vmatpush1.bf16.msra.mxu0 %v1187
    %1265 = vmatprep.subr.bf16.mxu0 0
    %1266 = vmatpush1.bf16.msra.mxu0 %v1184
    %1267 = vmatprep.subr.bf16.mxu0 0
    %1268 = vmatpush1.bf16.msra.mxu0 %v1181
    %1269 = vmatprep.subr.bf16.mxu0 0
    %1270 = vmatpush1.bf16.msra.mxu0 %v1178
    %1271 = vmatprep.subr.bf16.mxu0 0
    %1272 = vmatpush1.bf16.msra.mxu0 %v1175
    %1273 = vmatprep.subr.bf16.mxu0 0
    %1274 = vmatpush1.bf16.msra.mxu0 %v1172
    %1275 = vmatprep.subr.bf16.mxu0 0
    %1276 = vmatpush2.bf16.msra.mxu0 0
    %1277 = vmatprep.subr.bf16.mxu0 0
    %1278 = vmatpush2.bf16.msra.mxu0 0
    %1279 = vmatprep.subr.bf16.mxu0 0
    %1280 = vmatpush2.bf16.msra.mxu0 0
    %1281 = vmatprep.subr.bf16.mxu0 0
    %1282 = vmatpush2.bf16.msra.mxu0 0
    %1283 = vmatprep.subr.bf16.mxu0 0
    %1284 = vmatpush2.bf16.msra.mxu0 0
    %1285 = vmatprep.subr.bf16.mxu0 0
    %1286 = vmatpush2.bf16.msra.mxu0 0
    %1287 = vmatprep.subr.bf16.mxu0 0
    %1288 = vmatpush2.bf16.msra.mxu0 0
    %1289 = vmatprep.subr.bf16.mxu0 0
    %1290 = vmatpush2.bf16.msra.mxu0 0
    %1291 = vmatprep.mubr.bf16.mxu0 0
    %1292 = vmatmul.mubr.bf16.gmra.mxu0 %v1030
    %v1293 = vpop.f32.mrf.mxu0
    %v1294 = vadd.f32 %v1089, %v1293
    %v1295 = vpop.f32.mrf.mxu0
    %v1296 = vpop.f32.mrf.mxu0
    %v1297 = vpop.f32.mrf.mxu0
    %1298 = vdwg.mxu0
    %v1299 = vadd.f32 %v944, %v1253
    %v1300 = vxor.u32 %v1299, 2147483648
    %v1301 = vmul.f32 %v1300, 1.442695
    %v1302 = vpow.pop %v1301
    %v1303 = vadd.f32 %v1302, 1.0
    %v1304 = vrcp.pop %v1303
    %v1305 = vmul.f32 1.0, %v1304
    %v1306 = vadd.f32 %v946, %v1255
    %v1307 = vxor.u32 %v1306, 2147483648
    %v1308 = vmul.f32 %v1307, 1.442695
    %v1309 = vpow.pop %v1308
    %v1310 = vadd.f32 %v1309, 1.0
    %v1311 = vrcp.pop %v1310
    %v1312 = vmul.f32 1.0, %v1311
    %v1313 = vmul.f32 %v1305, %v1294
    %v1314 = vadd.f32 %v1025, %v1313
    %v1315 = vtanh.pop %v1314
    %v1316 = vsub.f32 1.0, %v1312
    %v1317 = vmul.f32 %v1316, %v1315
    %v1318 = vmul.f32 %v1312, %v179
    %v1319 = vadd.f32 %v1317, %v1318
    %v1320 = vpack.c.bf16 %v1319, %v1319
    %v1321 = vld [vmem:[#allocation20] sm:$0xf]
    %v1322 = vld [vmem:[#allocation20 + $0x4] sm:$0xf]
    %v1323 = vld [vmem:[#allocation20 + $0x8] sm:$0xf]
    %v1324 = vld [vmem:[#allocation20 + $0xc] sm:$0xf]
    %v1325 = vld [vmem:[#allocation20 + $0x10] sm:$0xf]
    %v1326 = vld [vmem:[#allocation20 + $0x14] sm:$0xf]
    %v1327 = vld [vmem:[#allocation20 + $0x18] sm:$0xf]
    %v1328 = vld [vmem:[#allocation20 + $0x1c] sm:$0xf]
    %v1329 = vld [vmem:[#allocation20 + $0x20] sm:$0xf]
    %v1330 = vld [vmem:[#allocation20 + $0x24] sm:$0xf]
    %v1331 = vld [vmem:[#allocation20 + $0x28] sm:$0xf]
    %v1332 = vld [vmem:[#allocation20 + $0x2c] sm:$0xf]
    %v1333 = vld [vmem:[#allocation20 + $0x30] sm:$0xf]
    %v1334 = vld [vmem:[#allocation20 + $0x34] sm:$0xf]
    %v1335 = vld [vmem:[#allocation20 + $0x38] sm:$0xf]
    %v1336 = vld [vmem:[#allocation20 + $0x3c] sm:$0xf]
    %v1337 = vld [vmem:[%s12] sm:$0x1]
    %v1339 = vlaneseq
    %v1340 = vshrl.u32 %v1339, 7
    %v1341 = vsub.s32 0, %v1340
    %v1342 = vrot.slane %v1337, %v1341
    %v1360 = vunpack.c.l.b16 %v1321
    %v1361 = vunpack.c.l.b16 %v1322
    %v1362 = vunpack.c.l.b16 %v1323
    %v1363 = vunpack.c.l.b16 %v1324
    %v1364 = vunpack.c.l.b16 %v1325
    %v1365 = vunpack.c.l.b16 %v1326
    %v1366 = vunpack.c.l.b16 %v1327
    %v1367 = vunpack.c.l.b16 %v1328
    %v1368 = vunpack.c.l.b16 %v1329
    %v1369 = vunpack.c.l.b16 %v1330
    %v1370 = vunpack.c.l.b16 %v1331
    %v1371 = vunpack.c.l.b16 %v1332
    %v1372 = vunpack.c.l.b16 %v1333
    %v1373 = vunpack.c.l.b16 %v1334
    %v1374 = vunpack.c.l.b16 %v1335
    %v1375 = vunpack.c.l.b16 %v1336
    %v1376 = vpack.c.b16 %v1361, %v1360
    %v1377 = vpack.c.b16 %v1363, %v1362
    %v1378 = vpack.c.b16 %v1365, %v1364
    %v1379 = vpack.c.b16 %v1367, %v1366
    %v1380 = vpack.c.b16 %v1369, %v1368
    %v1381 = vpack.c.b16 %v1371, %v1370
    %v1382 = vpack.c.b16 %v1373, %v1372
    %v1383 = vpack.c.b16 %v1375, %v1374
    %1392 = vmatprep.subr.bf16.mxu0 0
    %1393 = vmatpush1.bf16.msra.mxu0 %v1383
    %1394 = vmatprep.subr.bf16.mxu0 0
    %1395 = vmatpush1.bf16.msra.mxu0 %v1382
    %1396 = vmatprep.subr.bf16.mxu0 0
    %1397 = vmatpush1.bf16.msra.mxu0 %v1381
    %1398 = vmatprep.subr.bf16.mxu0 0
    %1399 = vmatpush1.bf16.msra.mxu0 %v1380
    %1400 = vmatprep.subr.bf16.mxu0 0
    %1401 = vmatpush1.bf16.msra.mxu0 %v1379
    %1402 = vmatprep.subr.bf16.mxu0 0
    %1403 = vmatpush1.bf16.msra.mxu0 %v1378
    %1404 = vmatprep.subr.bf16.mxu0 0
    %1405 = vmatpush1.bf16.msra.mxu0 %v1377
    %1406 = vmatprep.subr.bf16.mxu0 0
    %1407 = vmatpush1.bf16.msra.mxu0 %v1376
    %1408 = vmatprep.subr.bf16.mxu0 0
    %1409 = vmatpush2.bf16.msra.mxu0 0
    %1410 = vmatprep.subr.bf16.mxu0 0
    %1411 = vmatpush2.bf16.msra.mxu0 0
    %1412 = vmatprep.subr.bf16.mxu0 0
    %1413 = vmatpush2.bf16.msra.mxu0 0
    %1414 = vmatprep.subr.bf16.mxu0 0
    %1415 = vmatpush2.bf16.msra.mxu0 0
    %1416 = vmatprep.subr.bf16.mxu0 0
    %1417 = vmatpush2.bf16.msra.mxu0 0
    %1418 = vmatprep.subr.bf16.mxu0 0
    %1419 = vmatpush2.bf16.msra.mxu0 0
    %1420 = vmatprep.subr.bf16.mxu0 0
    %1421 = vmatpush2.bf16.msra.mxu0 0
    %1422 = vmatprep.subr.bf16.mxu0 0
    %1423 = vmatpush2.bf16.msra.mxu0 0
    %1424 = vmatprep.mubr.bf16.mxu0 0
    %1425 = vmatmul.mubr.bf16.gmra.mxu0 %v1320
    %v1426 = vpop.f32.mrf.mxu0
    %v1427 = vadd.f32 %v1342, %v1426
    %v1428 = vpop.f32.mrf.mxu0
    %v1429 = vpop.f32.mrf.mxu0
    %v1430 = vpop.f32.mrf.mxu0
    %1431 = vdwg.mxu0
    %1432 = vst [vmem:[#allocation21] sm:$0xff] %v1427
    %v1433 = vlaneseq
    %v1434 = vand.u32 %v1433, 127
    %1435 = vmax.xlane.f32.xlu0 %v1427
    %v1436 = vpop.xlane.xlu0 %1435
    %vm1437 = vcmp.eq.f32.partialorder %v1427, %v1436
    %v1438 = vsel %vm1437, %v1434, 128
    %v1439 = vand.u32 %v1438, 65535
    %v1440 = vshra.s32 %v1438, 16
    %v1441 = vcvt.s32.f32 %v1439
    %v1442 = vcvt.s32.f32 %v1440
    %1443 = vmin.xlane.f32.xlu0 %v1442
    %v1444 = vpop.xlane.xlu0 %1443
    %vm1445 = vcmp.eq.f32.partialorder %v1442, %v1444
    %v1446 = vsel %vm1445, %v1441, inf
    %1447 = vmin.xlane.f32.xlu0 %v1446
    %v1448 = vpop.xlane.xlu0 %1447
    %v1449 = vcvt.f32.s32 %v1448
    %v1450 = vcvt.f32.s32 %v1444
    %v1451 = vshll.u32 %v1450, 16
    %v1452 = vadd.s32 %v1451, %v1449
    %vm1453 = vcmp.eq.s32.totalorder %v1434, %v1452
    %v1454 = vsel %vm1453, 1, 0
    %v1455 = vcvt.s32.f32 %v1454
    %v1456 = vpack.c.bf16 %v1455, %v1455
    %v1457 = vld [vmem:[#allocation15] sm:$0xff]
    %v1458 = vld [vmem:[#allocation15 + $0x8] sm:$0xff]
    %v1459 = vld [vmem:[#allocation15 + $0x10] sm:$0xff]
    %v1460 = vld [vmem:[#allocation15 + $0x18] sm:$0xff]
    %v1461 = vld [vmem:[#allocation15 + $0x20] sm:$0xff]
    %v1462 = vld [vmem:[#allocation15 + $0x28] sm:$0xff]
    %v1463 = vld [vmem:[#allocation15 + $0x30] sm:$0xff]
    %v1464 = vld [vmem:[#allocation15 + $0x38] sm:$0xff]
    %v1465 = vld [vmem:[#allocation15 + $0x40] sm:$0xff]
    %v1466 = vld [vmem:[#allocation15 + $0x48] sm:$0xff]
    %v1467 = vld [vmem:[#allocation15 + $0x50] sm:$0xff]
    %v1468 = vld [vmem:[#allocation15 + $0x58] sm:$0xff]
    %v1469 = vld [vmem:[#allocation15 + $0x60] sm:$0xff]
    %v1470 = vld [vmem:[#allocation15 + $0x68] sm:$0xff]
    %v1471 = vld [vmem:[#allocation15 + $0x70] sm:$0xff]
    %v1472 = vld [vmem:[#allocation15 + $0x78] sm:$0xff]
    %v1489 = vunpack.c.l.b16 %v1457
    %v1490 = vunpack.c.h.b16 %v1457
    %v1491 = vunpack.c.l.b16 %v1458
    %v1492 = vunpack.c.h.b16 %v1458
    %v1493 = vunpack.c.l.b16 %v1459
    %v1494 = vunpack.c.h.b16 %v1459
    %v1495 = vunpack.c.l.b16 %v1460
    %v1496 = vunpack.c.h.b16 %v1460
    %v1497 = vunpack.c.l.b16 %v1461
    %v1498 = vunpack.c.h.b16 %v1461
    %v1499 = vunpack.c.l.b16 %v1462
    %v1500 = vunpack.c.h.b16 %v1462
    %v1501 = vunpack.c.l.b16 %v1463
    %v1502 = vunpack.c.h.b16 %v1463
    %v1503 = vunpack.c.l.b16 %v1464
    %v1504 = vunpack.c.h.b16 %v1464
    %v1505 = vunpack.c.l.b16 %v1465
    %v1506 = vunpack.c.h.b16 %v1465
    %v1507 = vunpack.c.l.b16 %v1466
    %v1508 = vunpack.c.h.b16 %v1466
    %v1509 = vunpack.c.l.b16 %v1467
    %v1510 = vunpack.c.h.b16 %v1467
    %v1511 = vunpack.c.l.b16 %v1468
    %v1512 = vunpack.c.h.b16 %v1468
    %v1513 = vunpack.c.l.b16 %v1469
    %v1514 = vunpack.c.h.b16 %v1469
    %v1515 = vunpack.c.l.b16 %v1470
    %v1516 = vunpack.c.h.b16 %v1470
    %v1517 = vunpack.c.l.b16 %v1471
    %v1518 = vunpack.c.h.b16 %v1471
    %v1519 = vunpack.c.l.b16 %v1472
    %v1520 = vunpack.c.h.b16 %v1472
    %v1521 = vpack.c.b16 %v1491, %v1489
    %v1522 = vpack.c.b16 %v1492, %v1490
    %v1523 = vpack.c.b16 %v1495, %v1493
    %v1524 = vpack.c.b16 %v1496, %v1494
    %v1525 = vpack.c.b16 %v1499, %v1497
    %v1526 = vpack.c.b16 %v1500, %v1498
    %v1527 = vpack.c.b16 %v1503, %v1501
    %v1528 = vpack.c.b16 %v1504, %v1502
    %v1529 = vpack.c.b16 %v1507, %v1505
    %v1530 = vpack.c.b16 %v1508, %v1506
    %v1531 = vpack.c.b16 %v1511, %v1509
    %v1532 = vpack.c.b16 %v1512, %v1510
    %v1533 = vpack.c.b16 %v1515, %v1513
    %v1534 = vpack.c.b16 %v1516, %v1514
    %v1535 = vpack.c.b16 %v1519, %v1517
    %v1536 = vpack.c.b16 %v1520, %v1518
    %1553 = vmatprep.subr.bf16.mxu0 %v1536
    %1554 = vmatpush1.bf16.msra.mxu0 %v1535
    %1555 = vmatprep.subr.bf16.mxu0 %v1534
    %1556 = vmatpush1.bf16.msra.mxu0 %v1533
    %1557 = vmatprep.subr.bf16.mxu0 %v1532
    %1558 = vmatpush1.bf16.msra.mxu0 %v1531
    %1559 = vmatprep.subr.bf16.mxu0 %v1530
    %1560 = vmatpush1.bf16.msra.mxu0 %v1529
    %1561 = vmatprep.subr.bf16.mxu0 %v1528
    %1562 = vmatpush1.bf16.msra.mxu0 %v1527
    %1563 = vmatprep.subr.bf16.mxu0 %v1526
    %1564 = vmatpush1.bf16.msra.mxu0 %v1525
    %1565 = vmatprep.subr.bf16.mxu0 %v1524
    %1566 = vmatpush1.bf16.msra.mxu0 %v1523
    %1567 = vmatprep.subr.bf16.mxu0 %v1522
    %1568 = vmatpush1.bf16.msra.mxu0 %v1521
    %1569 = vmatprep.subr.bf16.mxu0 0
    %1570 = vmatpush2.bf16.msra.mxu0 0
    %1571 = vmatprep.subr.bf16.mxu0 0
    %1572 = vmatpush2.bf16.msra.mxu0 0
    %1573 = vmatprep.subr.bf16.mxu0 0
    %1574 = vmatpush2.bf16.msra.mxu0 0
    %1575 = vmatprep.subr.bf16.mxu0 0
    %1576 = vmatpush2.bf16.msra.mxu0 0
    %1577 = vmatprep.subr.bf16.mxu0 0
    %1578 = vmatpush2.bf16.msra.mxu0 0
    %1579 = vmatprep.subr.bf16.mxu0 0
    %1580 = vmatpush2.bf16.msra.mxu0 0
    %1581 = vmatprep.subr.bf16.mxu0 0
    %1582 = vmatpush2.bf16.msra.mxu0 0
    %1583 = vmatprep.subr.bf16.mxu0 0
    %1584 = vmatpush2.bf16.msra.mxu0 0
    %1585 = vmatprep.mubr.bf16.mxu0 0
    %1586 = vmatmul.mubr.bf16.gmra.mxu0 %v1456
    %v1587 = vpop.f32.mrf.mxu0
    %v1588 = vadd.f32 0.0, %v1587
    %v1589 = vpop.f32.mrf.mxu0
    %v1590 = vadd.f32 0.0, %v1589
    %v1591 = vpop.f32.mrf.mxu0
    %v1592 = vpop.f32.mrf.mxu0
    %1593 = vdwg.mxu0
    %1594 = vst [vmem:[#allocation3] sm:$0xff] %v1588
    %1595 = vst [vmem:[#allocation3 + $0x8] sm:$0xff] %v1590
    %1596 = vst [vmem:[#allocation2] sm:$0xff] %v1319
    %v1597 = vld [vmem:[#allocation2] sm:$0xff]
    %s1598 = sld [smem:[#allocation4 + $0x1]]
    %v1599 = vstv %s1598
    %vm1600 = vcmp.ne.s32.totalorder %v1599, 0
    %s1601 = scalar_lea.vmem [#allocation8], 16
    %v1602 = vld [vmem:[%s1601] sm:$0xff]
    %v1603 = vld [vmem:[%s1601 + $0x8] sm:$0xff]
    %v1604 = vld [vmem:[#allocation3] sm:$0xff]
    %v1605 = vld [vmem:[#allocation3 + $0x8] sm:$0xff]
    %v1606 = vsel %vm1600, %v1602, %v1604
    %v1607 = vsel %vm1600, %v1603, %v1605
    %v1608 = vld [vmem:[%s7] sm:$0x1]
    %v1610 = vlaneseq
    %v1611 = vshrl.u32 %v1610, 7
    %v1612 = vsub.s32 0, %v1611
    %v1613 = vrot.slane %v1608, %v1612
    %v1615 = vmul.f32 %v1597, %v1613
    %1616 = vadd.xlane.f32.xlu0 %v1615
    %v1617 = vpop.xlane.xlu0 %1616
    %v1618 = vld [vmem:[#allocation12] sm:$0xff]
    %v1619 = vadd.f32 %v1618, %v1617
    %v1620 = vsel %vm201, %v1619, -inf
    %1621 = vmax.xlane.f32.xlu0 %v1620
    %v1622 = vpop.xlane.xlu0 %1621
    %v1623 = vsub.f32 %v1619, %v1622
    %v1624 = vmul.f32 %v1623, 1.442695
    %v1625 = vpow.pop %v1624
    %v1626 = vsel %vm201, %v1625, 0.0
    %1627 = vadd.xlane.f32.xlu0 %v1626
    %v1628 = vpop.xlane.xlu0 %1627
    %v1629 = vrcp.pop %v1628
    %v1630 = vmul.f32 %v1625, %v1629
    %v1631 = vlaneseq
    %v1632 = vshrl.u32 %v1631, 7
    %v1633 = vsub.s32 0, %v1632
    %v1634 = vrot.slane %v1630, %v1633
    %1636 = vbcast.lane.b32.xlu0 %v1634, 256
    %v1637 = vpop.permute.xlu0 %1636
    %v1638 = vlaneseq
    %v1639 = vshrl.u32 %v1638, 7
    %v1640 = vsub.s32 1, %v1639
    %v1641 = vrot.slane %v1630, %v1640
    %1643 = vbcast.lane.b32.xlu0 %v1641, 256
    %v1644 = vpop.permute.xlu0 %1643
    %v1645 = vlaneseq
    %v1646 = vshrl.u32 %v1645, 7
    %v1647 = vsub.s32 2, %v1646
    %v1648 = vrot.slane %v1630, %v1647
    %1650 = vbcast.lane.b32.xlu0 %v1648, 256
    %v1651 = vpop.permute.xlu0 %1650
    %v1652 = vlaneseq
    %v1653 = vshrl.u32 %v1652, 7
    %v1654 = vsub.s32 3, %v1653
    %v1655 = vrot.slane %v1630, %v1654
    %1657 = vbcast.lane.b32.xlu0 %v1655, 256
    %v1658 = vpop.permute.xlu0 %1657
    %v1659 = vlaneseq
    %v1660 = vshrl.u32 %v1659, 7
    %v1661 = vsub.s32 4, %v1660
    %v1662 = vrot.slane %v1630, %v1661
    %1664 = vbcast.lane.b32.xlu0 %v1662, 256
    %v1665 = vpop.permute.xlu0 %1664
    %v1666 = vlaneseq
    %v1667 = vshrl.u32 %v1666, 7
    %v1668 = vsub.s32 5, %v1667
    %v1669 = vrot.slane %v1630, %v1668
    %1671 = vbcast.lane.b32.xlu0 %v1669, 256
    %v1672 = vpop.permute.xlu0 %1671
    %v1673 = vlaneseq
    %v1674 = vshrl.u32 %v1673, 7
    %v1675 = vsub.s32 6, %v1674
    %v1676 = vrot.slane %v1630, %v1675
    %1678 = vbcast.lane.b32.xlu0 %v1676, 256
    %v1679 = vpop.permute.xlu0 %1678
    %v1680 = vlaneseq
    %v1681 = vshrl.u32 %v1680, 7
    %v1682 = vsub.s32 7, %v1681
    %v1683 = vrot.slane %v1630, %v1682
    %1685 = vbcast.lane.b32.xlu0 %v1683, 256
    %v1686 = vpop.permute.xlu0 %1685
    %v1687 = vld [vmem:[#allocation14] sm:$0xff]
    %v1688 = vld [vmem:[#allocation14 + $0x8] sm:$0xff]
    %v1689 = vld [vmem:[#allocation14 + $0x10] sm:$0xff]
    %v1690 = vld [vmem:[#allocation14 + $0x18] sm:$0xff]
    %v1691 = vld [vmem:[#allocation14 + $0x20] sm:$0xff]
    %v1692 = vld [vmem:[#allocation14 + $0x28] sm:$0xff]
    %v1693 = vld [vmem:[#allocation14 + $0x30] sm:$0xff]
    %v1694 = vld [vmem:[#allocation14 + $0x38] sm:$0xff]
    %v1695 = vmul.f32 %v1637, %v1687
    %v1696 = vmul.f32 %v1644, %v1688
    %v1697 = vmul.f32 %v1651, %v1689
    %v1698 = vmul.f32 %v1658, %v1690
    %v1699 = vmul.f32 %v1665, %v1691
    %v1700 = vmul.f32 %v1672, %v1692
    %v1701 = vmul.f32 %v1679, %v1693
    %v1702 = vmul.f32 %v1686, %v1694
    %v1703 = vrot.slane %v1695, 4
    %v1704 = vadd.f32 %v1695, %v1703
    %v1705 = vrot.slane %v1704, 2
    %v1706 = vadd.f32 %v1704, %v1705
    %v1707 = vrot.slane %v1706, 1
    %v1708 = vadd.f32 %v1706, %v1707
    %v1709 = vrot.slane %v1696, 4
    %v1710 = vadd.f32 %v1696, %v1709
    %v1711 = vrot.slane %v1710, 2
    %v1712 = vadd.f32 %v1710, %v1711
    %v1713 = vrot.slane %v1712, 1
    %v1714 = vadd.f32 %v1712, %v1713
    %v1715 = vrot.slane %v1697, 4
    %v1716 = vadd.f32 %v1697, %v1715
    %v1717 = vrot.slane %v1716, 2
    %v1718 = vadd.f32 %v1716, %v1717
    %v1719 = vrot.slane %v1718, 1
    %v1720 = vadd.f32 %v1718, %v1719
    %v1721 = vrot.slane %v1698, 4
    %v1722 = vadd.f32 %v1698, %v1721
    %v1723 = vrot.slane %v1722, 2
    %v1724 = vadd.f32 %v1722, %v1723
    %v1725 = vrot.slane %v1724, 1
    %v1726 = vadd.f32 %v1724, %v1725
    %v1727 = vrot.slane %v1699, 4
    %v1728 = vadd.f32 %v1699, %v1727
    %v1729 = vrot.slane %v1728, 2
    %v1730 = vadd.f32 %v1728, %v1729
    %v1731 = vrot.slane %v1730, 1
    %v1732 = vadd.f32 %v1730, %v1731
    %v1733 = vrot.slane %v1700, 4
    %v1734 = vadd.f32 %v1700, %v1733
    %v1735 = vrot.slane %v1734, 2
    %v1736 = vadd.f32 %v1734, %v1735
    %v1737 = vrot.slane %v1736, 1
    %v1738 = vadd.f32 %v1736, %v1737
    %v1739 = vrot.slane %v1701, 4
    %v1740 = vadd.f32 %v1701, %v1739
    %v1741 = vrot.slane %v1740, 2
    %v1742 = vadd.f32 %v1740, %v1741
    %v1743 = vrot.slane %v1742, 1
    %v1744 = vadd.f32 %v1742, %v1743
    %v1745 = vrot.slane %v1702, 4
    %v1746 = vadd.f32 %v1702, %v1745
    %v1747 = vrot.slane %v1746, 2
    %v1748 = vadd.f32 %v1746, %v1747
    %v1749 = vrot.slane %v1748, 1
    %v1750 = vadd.f32 %v1748, %v1749
    %v1751 = vld [vmem:[%s10] sm:$0x3f]
    %v1760 = vsel %vm342, %v1714, %v1708
    %v1761 = vsel %vm344, %v1720, %v1760
    %v1762 = vsel %vm346, %v1726, %v1761
    %v1763 = vsel %vm348, %v1732, %v1762
    %v1764 = vsel %vm350, %v1738, %v1763
    %v1765 = vsel %vm352, %v1744, %v1764
    %v1766 = vsel %vm354, %v1750, %v1765
    %v1768 = vpack.c.bf16 %v1606, %v1606
    %v1769 = vpack.c.bf16 %v1607, %v1607
    %v1770 = vpack.c.bf16 %v1766, %v1766
    %v1771 = vld [vmem:[#allocation17] sm:$0xff]
    %v1772 = vld [vmem:[#allocation17 + $0x8] sm:$0xf]
    %v1773 = vld [vmem:[#allocation17 + $0xc] sm:$0xff]
    %v1774 = vld [vmem:[#allocation17 + $0x14] sm:$0xf]
    %v1775 = vld [vmem:[#allocation17 + $0x18] sm:$0xff]
    %v1776 = vld [vmem:[#allocation17 + $0x20] sm:$0xf]
    %v1777 = vld [vmem:[#allocation17 + $0x24] sm:$0xff]
    %v1778 = vld [vmem:[#allocation17 + $0x2c] sm:$0xf]
    %v1779 = vld [vmem:[#allocation17 + $0x30] sm:$0xff]
    %v1780 = vld [vmem:[#allocation17 + $0x38] sm:$0xf]
    %v1781 = vld [vmem:[#allocation17 + $0x3c] sm:$0xff]
    %v1782 = vld [vmem:[#allocation17 + $0x44] sm:$0xf]
    %v1783 = vld [vmem:[#allocation17 + $0x48] sm:$0xff]
    %v1784 = vld [vmem:[#allocation17 + $0x50] sm:$0xf]
    %v1785 = vld [vmem:[#allocation17 + $0x54] sm:$0xff]
    %v1786 = vld [vmem:[#allocation17 + $0x5c] sm:$0xf]
    %v1787 = vld [vmem:[#allocation17 + $0x60] sm:$0xff]
    %v1788 = vld [vmem:[#allocation17 + $0x68] sm:$0xf]
    %v1789 = vld [vmem:[#allocation17 + $0x6c] sm:$0xff]
    %v1790 = vld [vmem:[#allocation17 + $0x74] sm:$0xf]
    %v1791 = vld [vmem:[#allocation17 + $0x78] sm:$0xff]
    %v1792 = vld [vmem:[#allocation17 + $0x80] sm:$0xf]
    %v1793 = vld [vmem:[#allocation17 + $0x84] sm:$0xff]
    %v1794 = vld [vmem:[#allocation17 + $0x8c] sm:$0xf]
    %v1795 = vld [vmem:[#allocation17 + $0x90] sm:$0xff]
    %v1796 = vld [vmem:[#allocation17 + $0x98] sm:$0xf]
    %v1797 = vld [vmem:[#allocation17 + $0x9c] sm:$0xff]
    %v1798 = vld [vmem:[#allocation17 + $0xa4] sm:$0xf]
    %v1799 = vld [vmem:[#allocation17 + $0xa8] sm:$0xff]
    %v1800 = vld [vmem:[#allocation17 + $0xb0] sm:$0xf]
    %v1801 = vld [vmem:[#allocation17 + $0xb4] sm:$0xff]
    %v1802 = vld [vmem:[#allocation17 + $0xbc] sm:$0xf]
    %v1803 = vld [vmem:[#allocation17 + $0xc0] sm:$0xff]
    %v1804 = vld [vmem:[#allocation17 + $0xc8] sm:$0xf]
    %v1805 = vld [vmem:[#allocation17 + $0xcc] sm:$0xff]
    %v1806 = vld [vmem:[#allocation17 + $0xd4] sm:$0xf]
    %v1807 = vld [vmem:[#allocation17 + $0xd8] sm:$0xff]
    %v1808 = vld [vmem:[#allocation17 + $0xe0] sm:$0xf]
    %v1809 = vld [vmem:[#allocation17 + $0xe4] sm:$0xff]
    %v1810 = vld [vmem:[#allocation17 + $0xec] sm:$0xf]
    %v1811 = vld [vmem:[#allocation17 + $0xf0] sm:$0xff]
    %v1812 = vld [vmem:[#allocation17 + $0xf8] sm:$0xf]
    %v1813 = vld [vmem:[#allocation17 + $0xfc] sm:$0xff]
    %v1814 = vld [vmem:[#allocation17 + $0x104] sm:$0xf]
    %v1815 = vld [vmem:[#allocation17 + $0x108] sm:$0xff]
    %v1816 = vld [vmem:[#allocation17 + $0x110] sm:$0xf]
    %v1817 = vld [vmem:[#allocation17 + $0x114] sm:$0xff]
    %v1818 = vld [vmem:[#allocation17 + $0x11c] sm:$0xf]
    %v1819 = vld [vmem:[#allocation17 + $0x120] sm:$0xff]
    %v1820 = vld [vmem:[#allocation17 + $0x128] sm:$0xf]
    %v1821 = vld [vmem:[#allocation17 + $0x12c] sm:$0xff]
    %v1822 = vld [vmem:[#allocation17 + $0x134] sm:$0xf]
    %v1823 = vld [vmem:[#allocation17 + $0x138] sm:$0xff]
    %v1824 = vld [vmem:[#allocation17 + $0x140] sm:$0xf]
    %v1825 = vld [vmem:[#allocation17 + $0x144] sm:$0xff]
    %v1826 = vld [vmem:[#allocation17 + $0x14c] sm:$0xf]
    %v1827 = vld [vmem:[#allocation17 + $0x150] sm:$0xff]
    %v1828 = vld [vmem:[#allocation17 + $0x158] sm:$0xf]
    %v1829 = vld [vmem:[#allocation17 + $0x15c] sm:$0xff]
    %v1830 = vld [vmem:[#allocation17 + $0x164] sm:$0xf]
    %v1831 = vld [vmem:[#allocation17 + $0x168] sm:$0xff]
    %v1832 = vld [vmem:[#allocation17 + $0x170] sm:$0xf]
    %v1833 = vld [vmem:[#allocation17 + $0x174] sm:$0xff]
    %v1834 = vld [vmem:[#allocation17 + $0x17c] sm:$0xf]
    %v1835 = vld [vmem:[#allocation17 + $0x180] sm:$0xff]
    %v1836 = vld [vmem:[#allocation17 + $0x188] sm:$0xf]
    %v1837 = vld [vmem:[#allocation17 + $0x18c] sm:$0xff]
    %v1838 = vld [vmem:[#allocation17 + $0x194] sm:$0xf]
    %v1839 = vld [vmem:[#allocation17 + $0x198] sm:$0xff]
    %v1840 = vld [vmem:[#allocation17 + $0x1a0] sm:$0xf]
    %v1841 = vld [vmem:[#allocation17 + $0x1a4] sm:$0xff]
    %v1842 = vld [vmem:[#allocation17 + $0x1ac] sm:$0xf]
    %v1843 = vld [vmem:[#allocation17 + $0x1b0] sm:$0xff]
    %v1844 = vld [vmem:[#allocation17 + $0x1b8] sm:$0xf]
    %v1845 = vld [vmem:[#allocation17 + $0x1bc] sm:$0xff]
    %v1846 = vld [vmem:[#allocation17 + $0x1c4] sm:$0xf]
    %v1847 = vld [vmem:[#allocation17 + $0x1c8] sm:$0xff]
    %v1848 = vld [vmem:[#allocation17 + $0x1d0] sm:$0xf]
    %v1849 = vld [vmem:[#allocation17 + $0x1d4] sm:$0xff]
    %v1850 = vld [vmem:[#allocation17 + $0x1dc] sm:$0xf]
    %v1851 = vld [vmem:[#allocation17 + $0x1e0] sm:$0xff]
    %v1852 = vld [vmem:[#allocation17 + $0x1e8] sm:$0xf]
    %v1853 = vld [vmem:[#allocation17 + $0x1ec] sm:$0xff]
    %v1854 = vld [vmem:[#allocation17 + $0x1f4] sm:$0xf]
    %v1855 = vld [vmem:[#allocation17 + $0x1f8] sm:$0xff]
    %v1856 = vld [vmem:[#allocation17 + $0x200] sm:$0xf]
    %v1857 = vld [vmem:[#allocation17 + $0x204] sm:$0xff]
    %v1858 = vld [vmem:[#allocation17 + $0x20c] sm:$0xf]
    %v1859 = vld [vmem:[#allocation17 + $0x210] sm:$0xff]
    %v1860 = vld [vmem:[#allocation17 + $0x218] sm:$0xf]
    %v1861 = vld [vmem:[#allocation17 + $0x21c] sm:$0xff]
    %v1862 = vld [vmem:[#allocation17 + $0x224] sm:$0xf]
    %v1863 = vld [vmem:[#allocation17 + $0x228] sm:$0xff]
    %v1864 = vld [vmem:[#allocation17 + $0x230] sm:$0xf]
    %v1865 = vld [vmem:[#allocation17 + $0x234] sm:$0xff]
    %v1866 = vld [vmem:[#allocation17 + $0x23c] sm:$0xf]
    %v1868 = vlaneseq
    %v1869 = vshrl.u32 %v1868, 7
    %v1870 = vsub.s32 0, %v1869
    %v1871 = vrot.slane %v1751, %v1870
    %v1872 = vlaneseq
    %v1873 = vshrl.u32 %v1872, 7
    %v1874 = vsub.s32 2, %v1873
    %v1875 = vrot.slane %v1751, %v1874
    %v1876 = vlaneseq
    %v1877 = vshrl.u32 %v1876, 7
    %v1878 = vsub.s32 4, %v1877
    %v1879 = vrot.slane %v1751, %v1878
    %v1883 = vlaneseq
    %v1884 = vshrl.u32 %v1883, 7
    %v1885 = vsub.s32 0, %v1884
    %v1886 = vrot.slane %v1871, %v1885
    %v1887 = vlaneseq
    %v1888 = vshrl.u32 %v1887, 7
    %v1889 = vsub.s32 0, %v1888
    %v1890 = vrot.slane %v1875, %v1889
    %v1891 = vlaneseq
    %v1892 = vshrl.u32 %v1891, 7
    %v1893 = vsub.s32 0, %v1892
    %v1894 = vrot.slane %v1879, %v1893
    %v1991 = vunpack.c.l.b16 %v1771
    %v1992 = vunpack.c.h.b16 %v1771
    %v1993 = vunpack.c.l.b16 %v1772
    %v1994 = vunpack.c.l.b16 %v1773
    %v1995 = vunpack.c.h.b16 %v1773
    %v1996 = vunpack.c.l.b16 %v1774
    %v1997 = vunpack.c.l.b16 %v1775
    %v1998 = vunpack.c.h.b16 %v1775
    %v1999 = vunpack.c.l.b16 %v1776
    %v2000 = vunpack.c.l.b16 %v1777
    %v2001 = vunpack.c.h.b16 %v1777
    %v2002 = vunpack.c.l.b16 %v1778
    %v2003 = vunpack.c.l.b16 %v1779
    %v2004 = vunpack.c.h.b16 %v1779
    %v2005 = vunpack.c.l.b16 %v1780
    %v2006 = vunpack.c.l.b16 %v1781
    %v2007 = vunpack.c.h.b16 %v1781
    %v2008 = vunpack.c.l.b16 %v1782
    %v2009 = vunpack.c.l.b16 %v1783
    %v2010 = vunpack.c.h.b16 %v1783
    %v2011 = vunpack.c.l.b16 %v1784
    %v2012 = vunpack.c.l.b16 %v1785
    %v2013 = vunpack.c.h.b16 %v1785
    %v2014 = vunpack.c.l.b16 %v1786
    %v2015 = vunpack.c.l.b16 %v1787
    %v2016 = vunpack.c.h.b16 %v1787
    %v2017 = vunpack.c.l.b16 %v1788
    %v2018 = vunpack.c.l.b16 %v1789
    %v2019 = vunpack.c.h.b16 %v1789
    %v2020 = vunpack.c.l.b16 %v1790
    %v2021 = vunpack.c.l.b16 %v1791
    %v2022 = vunpack.c.h.b16 %v1791
    %v2023 = vunpack.c.l.b16 %v1792
    %v2024 = vunpack.c.l.b16 %v1793
    %v2025 = vunpack.c.h.b16 %v1793
    %v2026 = vunpack.c.l.b16 %v1794
    %v2027 = vunpack.c.l.b16 %v1795
    %v2028 = vunpack.c.h.b16 %v1795
    %v2029 = vunpack.c.l.b16 %v1796
    %v2030 = vunpack.c.l.b16 %v1797
    %v2031 = vunpack.c.h.b16 %v1797
    %v2032 = vunpack.c.l.b16 %v1798
    %v2033 = vunpack.c.l.b16 %v1799
    %v2034 = vunpack.c.h.b16 %v1799
    %v2035 = vunpack.c.l.b16 %v1800
    %v2036 = vunpack.c.l.b16 %v1801
    %v2037 = vunpack.c.h.b16 %v1801
    %v2038 = vunpack.c.l.b16 %v1802
    %v2039 = vunpack.c.l.b16 %v1803
    %v2040 = vunpack.c.h.b16 %v1803
    %v2041 = vunpack.c.l.b16 %v1804
    %v2042 = vunpack.c.l.b16 %v1805
    %v2043 = vunpack.c.h.b16 %v1805
    %v2044 = vunpack.c.l.b16 %v1806
    %v2045 = vunpack.c.l.b16 %v1807
    %v2046 = vunpack.c.h.b16 %v1807
    %v2047 = vunpack.c.l.b16 %v1808
    %v2048 = vunpack.c.l.b16 %v1809
    %v2049 = vunpack.c.h.b16 %v1809
    %v2050 = vunpack.c.l.b16 %v1810
    %v2051 = vunpack.c.l.b16 %v1811
    %v2052 = vunpack.c.h.b16 %v1811
    %v2053 = vunpack.c.l.b16 %v1812
    %v2054 = vunpack.c.l.b16 %v1813
    %v2055 = vunpack.c.h.b16 %v1813
    %v2056 = vunpack.c.l.b16 %v1814
    %v2057 = vunpack.c.l.b16 %v1815
    %v2058 = vunpack.c.h.b16 %v1815
    %v2059 = vunpack.c.l.b16 %v1816
    %v2060 = vunpack.c.l.b16 %v1817
    %v2061 = vunpack.c.h.b16 %v1817
    %v2062 = vunpack.c.l.b16 %v1818
    %v2063 = vunpack.c.l.b16 %v1819
    %v2064 = vunpack.c.h.b16 %v1819
    %v2065 = vunpack.c.l.b16 %v1820
    %v2066 = vunpack.c.l.b16 %v1821
    %v2067 = vunpack.c.h.b16 %v1821
    %v2068 = vunpack.c.l.b16 %v1822
    %v2069 = vunpack.c.l.b16 %v1823
    %v2070 = vunpack.c.h.b16 %v1823
    %v2071 = vunpack.c.l.b16 %v1824
    %v2072 = vunpack.c.l.b16 %v1825
    %v2073 = vunpack.c.h.b16 %v1825
    %v2074 = vunpack.c.l.b16 %v1826
    %v2075 = vunpack.c.l.b16 %v1827
    %v2076 = vunpack.c.h.b16 %v1827
    %v2077 = vunpack.c.l.b16 %v1828
    %v2078 = vunpack.c.l.b16 %v1829
    %v2079 = vunpack.c.h.b16 %v1829
    %v2080 = vunpack.c.l.b16 %v1830
    %v2081 = vunpack.c.l.b16 %v1831
    %v2082 = vunpack.c.h.b16 %v1831
    %v2083 = vunpack.c.l.b16 %v1832
    %v2084 = vunpack.c.l.b16 %v1833
    %v2085 = vunpack.c.h.b16 %v1833
    %v2086 = vunpack.c.l.b16 %v1834
    %v2087 = vunpack.c.l.b16 %v1835
    %v2088 = vunpack.c.h.b16 %v1835
    %v2089 = vunpack.c.l.b16 %v1836
    %v2090 = vunpack.c.l.b16 %v1837
    %v2091 = vunpack.c.h.b16 %v1837
    %v2092 = vunpack.c.l.b16 %v1838
    %v2093 = vunpack.c.l.b16 %v1839
    %v2094 = vunpack.c.h.b16 %v1839
    %v2095 = vunpack.c.l.b16 %v1840
    %v2096 = vunpack.c.l.b16 %v1841
    %v2097 = vunpack.c.h.b16 %v1841
    %v2098 = vunpack.c.l.b16 %v1842
    %v2099 = vunpack.c.l.b16 %v1843
    %v2100 = vunpack.c.h.b16 %v1843
    %v2101 = vunpack.c.l.b16 %v1844
    %v2102 = vunpack.c.l.b16 %v1845
    %v2103 = vunpack.c.h.b16 %v1845
    %v2104 = vunpack.c.l.b16 %v1846
    %v2105 = vunpack.c.l.b16 %v1847
    %v2106 = vunpack.c.h.b16 %v1847
    %v2107 = vunpack.c.l.b16 %v1848
    %v2108 = vunpack.c.l.b16 %v1849
    %v2109 = vunpack.c.h.b16 %v1849
    %v2110 = vunpack.c.l.b16 %v1850
    %v2111 = vunpack.c.l.b16 %v1851
    %v2112 = vunpack.c.h.b16 %v1851
    %v2113 = vunpack.c.l.b16 %v1852
    %v2114 = vunpack.c.l.b16 %v1853
    %v2115 = vunpack.c.h.b16 %v1853
    %v2116 = vunpack.c.l.b16 %v1854
    %v2117 = vunpack.c.l.b16 %v1855
    %v2118 = vunpack.c.h.b16 %v1855
    %v2119 = vunpack.c.l.b16 %v1856
    %v2120 = vunpack.c.l.b16 %v1857
    %v2121 = vunpack.c.h.b16 %v1857
    %v2122 = vunpack.c.l.b16 %v1858
    %v2123 = vunpack.c.l.b16 %v1859
    %v2124 = vunpack.c.h.b16 %v1859
    %v2125 = vunpack.c.l.b16 %v1860
    %v2126 = vunpack.c.l.b16 %v1861
    %v2127 = vunpack.c.h.b16 %v1861
    %v2128 = vunpack.c.l.b16 %v1862
    %v2129 = vunpack.c.l.b16 %v1863
    %v2130 = vunpack.c.h.b16 %v1863
    %v2131 = vunpack.c.l.b16 %v1864
    %v2132 = vunpack.c.l.b16 %v1865
    %v2133 = vunpack.c.h.b16 %v1865
    %v2134 = vunpack.c.l.b16 %v1866
    %v2135 = vpack.c.b16 %v1994, %v1991
    %v2136 = vpack.c.b16 %v1995, %v1992
    %v2137 = vpack.c.b16 %v1996, %v1993
    %v2138 = vpack.c.b16 %v2000, %v1997
    %v2139 = vpack.c.b16 %v2001, %v1998
    %v2140 = vpack.c.b16 %v2002, %v1999
    %v2141 = vpack.c.b16 %v2006, %v2003
    %v2142 = vpack.c.b16 %v2007, %v2004
    %v2143 = vpack.c.b16 %v2008, %v2005
    %v2144 = vpack.c.b16 %v2012, %v2009
    %v2145 = vpack.c.b16 %v2013, %v2010
    %v2146 = vpack.c.b16 %v2014, %v2011
    %v2147 = vpack.c.b16 %v2018, %v2015
    %v2148 = vpack.c.b16 %v2019, %v2016
    %v2149 = vpack.c.b16 %v2020, %v2017
    %v2150 = vpack.c.b16 %v2024, %v2021
    %v2151 = vpack.c.b16 %v2025, %v2022
    %v2152 = vpack.c.b16 %v2026, %v2023
    %v2153 = vpack.c.b16 %v2030, %v2027
    %v2154 = vpack.c.b16 %v2031, %v2028
    %v2155 = vpack.c.b16 %v2032, %v2029
    %v2156 = vpack.c.b16 %v2036, %v2033
    %v2157 = vpack.c.b16 %v2037, %v2034
    %v2158 = vpack.c.b16 %v2038, %v2035
    %v2159 = vpack.c.b16 %v2042, %v2039
    %v2160 = vpack.c.b16 %v2043, %v2040
    %v2161 = vpack.c.b16 %v2044, %v2041
    %v2162 = vpack.c.b16 %v2048, %v2045
    %v2163 = vpack.c.b16 %v2049, %v2046
    %v2164 = vpack.c.b16 %v2050, %v2047
    %v2165 = vpack.c.b16 %v2054, %v2051
    %v2166 = vpack.c.b16 %v2055, %v2052
    %v2167 = vpack.c.b16 %v2056, %v2053
    %v2168 = vpack.c.b16 %v2060, %v2057
    %v2169 = vpack.c.b16 %v2061, %v2058
    %v2170 = vpack.c.b16 %v2062, %v2059
    %v2171 = vpack.c.b16 %v2066, %v2063
    %v2172 = vpack.c.b16 %v2067, %v2064
    %v2173 = vpack.c.b16 %v2068, %v2065
    %v2174 = vpack.c.b16 %v2072, %v2069
    %v2175 = vpack.c.b16 %v2073, %v2070
    %v2176 = vpack.c.b16 %v2074, %v2071
    %v2177 = vpack.c.b16 %v2078, %v2075
    %v2178 = vpack.c.b16 %v2079, %v2076
    %v2179 = vpack.c.b16 %v2080, %v2077
    %v2180 = vpack.c.b16 %v2084, %v2081
    %v2181 = vpack.c.b16 %v2085, %v2082
    %v2182 = vpack.c.b16 %v2086, %v2083
    %v2183 = vpack.c.b16 %v2090, %v2087
    %v2184 = vpack.c.b16 %v2091, %v2088
    %v2185 = vpack.c.b16 %v2092, %v2089
    %v2186 = vpack.c.b16 %v2096, %v2093
    %v2187 = vpack.c.b16 %v2097, %v2094
    %v2188 = vpack.c.b16 %v2098, %v2095
    %v2189 = vpack.c.b16 %v2102, %v2099
    %v2190 = vpack.c.b16 %v2103, %v2100
    %v2191 = vpack.c.b16 %v2104, %v2101
    %v2192 = vpack.c.b16 %v2108, %v2105
    %v2193 = vpack.c.b16 %v2109, %v2106
    %v2194 = vpack.c.b16 %v2110, %v2107
    %v2195 = vpack.c.b16 %v2114, %v2111
    %v2196 = vpack.c.b16 %v2115, %v2112
    %v2197 = vpack.c.b16 %v2116, %v2113
    %v2198 = vpack.c.b16 %v2120, %v2117
    %v2199 = vpack.c.b16 %v2121, %v2118
    %v2200 = vpack.c.b16 %v2122, %v2119
    %v2201 = vpack.c.b16 %v2126, %v2123
    %v2202 = vpack.c.b16 %v2127, %v2124
    %v2203 = vpack.c.b16 %v2128, %v2125
    %v2204 = vpack.c.b16 %v2132, %v2129
    %v2205 = vpack.c.b16 %v2133, %v2130
    %v2206 = vpack.c.b16 %v2134, %v2131
    %2279 = vmatprep.subr.bf16.mxu0 %v2157
    %2280 = vmatpush1.bf16.msra.mxu0 %v2156
    %2281 = vmatprep.subr.bf16.mxu0 %v2154
    %2282 = vmatpush1.bf16.msra.mxu0 %v2153
    %2283 = vmatprep.subr.bf16.mxu0 %v2151
    %2284 = vmatpush1.bf16.msra.mxu0 %v2150
    %2285 = vmatprep.subr.bf16.mxu0 %v2148
    %2286 = vmatpush1.bf16.msra.mxu0 %v2147
    %2287 = vmatprep.subr.bf16.mxu0 %v2145
    %2288 = vmatpush1.bf16.msra.mxu0 %v2144
    %2289 = vmatprep.subr.bf16.mxu0 %v2142
    %2290 = vmatpush1.bf16.msra.mxu0 %v2141
    %2291 = vmatprep.subr.bf16.mxu0 %v2139
    %2292 = vmatpush1.bf16.msra.mxu0 %v2138
    %2293 = vmatprep.subr.bf16.mxu0 %v2136
    %2294 = vmatpush1.bf16.msra.mxu0 %v2135
    %2295 = vmatprep.subr.bf16.mxu0 %v2181
    %2296 = vmatpush2.bf16.msra.mxu0 %v2180
    %2297 = vmatprep.subr.bf16.mxu0 %v2178
    %2298 = vmatpush2.bf16.msra.mxu0 %v2177
    %2299 = vmatprep.subr.bf16.mxu0 %v2175
    %2300 = vmatpush2.bf16.msra.mxu0 %v2174
    %2301 = vmatprep.subr.bf16.mxu0 %v2172
    %2302 = vmatpush2.bf16.msra.mxu0 %v2171
    %2303 = vmatprep.subr.bf16.mxu0 %v2169
    %2304 = vmatpush2.bf16.msra.mxu0 %v2168
    %2305 = vmatprep.subr.bf16.mxu0 %v2166
    %2306 = vmatpush2.bf16.msra.mxu0 %v2165
    %2307 = vmatprep.subr.bf16.mxu0 %v2163
    %2308 = vmatpush2.bf16.msra.mxu0 %v2162
    %2309 = vmatprep.subr.bf16.mxu0 %v2160
    %2310 = vmatpush2.bf16.msra.mxu0 %v2159
    %2311 = vmatprep.mubr.bf16.mxu0 %v1769
    %2312 = vmatmul.mubr.bf16.gmra.mxu0 %v1768
    %v2313 = vpop.f32.mrf.mxu0
    %v2314 = vadd.f32 %v1886, %v2313
    %v2315 = vpop.f32.mrf.mxu0
    %v2316 = vadd.f32 %v1890, %v2315
    %v2317 = vpop.f32.mrf.mxu0
    %v2318 = vpop.f32.mrf.mxu0
    %2319 = vdwg.mxu0
    %2320 = vmatprep.subr.bf16.mxu0 %v2205
    %2321 = vmatpush1.bf16.msra.mxu0 %v2204
    %2322 = vmatprep.subr.bf16.mxu0 %v2202
    %2323 = vmatpush1.bf16.msra.mxu0 %v2201
    %2324 = vmatprep.subr.bf16.mxu0 %v2199
    %2325 = vmatpush1.bf16.msra.mxu0 %v2198
    %2326 = vmatprep.subr.bf16.mxu0 %v2196
    %2327 = vmatpush1.bf16.msra.mxu0 %v2195
    %2328 = vmatprep.subr.bf16.mxu0 %v2193
    %2329 = vmatpush1.bf16.msra.mxu0 %v2192
    %2330 = vmatprep.subr.bf16.mxu0 %v2190
    %2331 = vmatpush1.bf16.msra.mxu0 %v2189
    %2332 = vmatprep.subr.bf16.mxu0 %v2187
    %2333 = vmatpush1.bf16.msra.mxu0 %v2186
    %2334 = vmatprep.subr.bf16.mxu0 %v2184
    %2335 = vmatpush1.bf16.msra.mxu0 %v2183
    %2336 = vmatprep.subr.bf16.mxu0 0
    %2337 = vmatpush2.bf16.msra.mxu0 0
    %2338 = vmatprep.subr.bf16.mxu0 0
    %2339 = vmatpush2.bf16.msra.mxu0 0
    %2340 = vmatprep.subr.bf16.mxu0 0
    %2341 = vmatpush2.bf16.msra.mxu0 0
    %2342 = vmatprep.subr.bf16.mxu0 0
    %2343 = vmatpush2.bf16.msra.mxu0 0
    %2344 = vmatprep.subr.bf16.mxu0 0
    %2345 = vmatpush2.bf16.msra.mxu0 0
    %2346 = vmatprep.subr.bf16.mxu0 0
    %2347 = vmatpush2.bf16.msra.mxu0 0
    %2348 = vmatprep.subr.bf16.mxu0 0
    %2349 = vmatpush2.bf16.msra.mxu0 0
    %2350 = vmatprep.subr.bf16.mxu0 0
    %2351 = vmatpush2.bf16.msra.mxu0 0
    %2352 = vmatprep.mubr.bf16.mxu0 0
    %2353 = vmatmul.mubr.bf16.gmra.mxu0 %v1770
    %v2354 = vpop.f32.mrf.mxu0
    %v2355 = vadd.f32 %v2314, %v2354
    %v2356 = vpop.f32.mrf.mxu0
    %v2357 = vadd.f32 %v2316, %v2356
    %v2358 = vpop.f32.mrf.mxu0
    %v2359 = vpop.f32.mrf.mxu0
    %2360 = vdwg.mxu0
    %2361 = vmatprep.subr.bf16.mxu0 0
    %2362 = vmatpush1.bf16.msra.mxu0 %v2158
    %2363 = vmatprep.subr.bf16.mxu0 0
    %2364 = vmatpush1.bf16.msra.mxu0 %v2155
    %2365 = vmatprep.subr.bf16.mxu0 0
    %2366 = vmatpush1.bf16.msra.mxu0 %v2152
    %2367 = vmatprep.subr.bf16.mxu0 0
    %2368 = vmatpush1.bf16.msra.mxu0 %v2149
    %2369 = vmatprep.subr.bf16.mxu0 0
    %2370 = vmatpush1.bf16.msra.mxu0 %v2146
    %2371 = vmatprep.subr.bf16.mxu0 0
    %2372 = vmatpush1.bf16.msra.mxu0 %v2143
    %2373 = vmatprep.subr.bf16.mxu0 0
    %2374 = vmatpush1.bf16.msra.mxu0 %v2140
    %2375 = vmatprep.subr.bf16.mxu0 0
    %2376 = vmatpush1.bf16.msra.mxu0 %v2137
    %2377 = vmatprep.subr.bf16.mxu0 0
    %2378 = vmatpush2.bf16.msra.mxu0 %v2182
    %2379 = vmatprep.subr.bf16.mxu0 0
    %2380 = vmatpush2.bf16.msra.mxu0 %v2179
    %2381 = vmatprep.subr.bf16.mxu0 0
    %2382 = vmatpush2.bf16.msra.mxu0 %v2176
    %2383 = vmatprep.subr.bf16.mxu0 0
    %2384 = vmatpush2.bf16.msra.mxu0 %v2173
    %2385 = vmatprep.subr.bf16.mxu0 0
    %2386 = vmatpush2.bf16.msra.mxu0 %v2170
    %2387 = vmatprep.subr.bf16.mxu0 0
    %2388 = vmatpush2.bf16.msra.mxu0 %v2167
    %2389 = vmatprep.subr.bf16.mxu0 0
    %2390 = vmatpush2.bf16.msra.mxu0 %v2164
    %2391 = vmatprep.subr.bf16.mxu0 0
    %2392 = vmatpush2.bf16.msra.mxu0 %v2161
    %2393 = vmatprep.mubr.bf16.mxu0 %v1769
    %2394 = vmatmul.mubr.bf16.gmra.mxu0 %v1768
    %v2395 = vpop.f32.mrf.mxu0
    %v2396 = vadd.f32 %v1894, %v2395
    %v2397 = vpop.f32.mrf.mxu0
    %v2398 = vpop.f32.mrf.mxu0
    %v2399 = vpop.f32.mrf.mxu0
    %2400 = vdwg.mxu0
    %2401 = vmatprep.subr.bf16.mxu0 0
    %2402 = vmatpush1.bf16.msra.mxu0 %v2206
    %2403 = vmatprep.subr.bf16.mxu0 0
    %2404 = vmatpush1.bf16.msra.mxu0 %v2203
    %2405 = vmatprep.subr.bf16.mxu0 0
    %2406 = vmatpush1.bf16.msra.mxu0 %v2200
    %2407 = vmatprep.subr.bf16.mxu0 0
    %2408 = vmatpush1.bf16.msra.mxu0 %v2197
    %2409 = vmatprep.subr.bf16.mxu0 0
    %2410 = vmatpush1.bf16.msra.mxu0 %v2194
    %2411 = vmatprep.subr.bf16.mxu0 0
    %2412 = vmatpush1.bf16.msra.mxu0 %v2191
    %2413 = vmatprep.subr.bf16.mxu0 0
    %2414 = vmatpush1.bf16.msra.mxu0 %v2188
    %2415 = vmatprep.subr.bf16.mxu0 0
    %2416 = vmatpush1.bf16.msra.mxu0 %v2185
    %2417 = vmatprep.subr.bf16.mxu0 0
    %2418 = vmatpush2.bf16.msra.mxu0 0
    %2419 = vmatprep.subr.bf16.mxu0 0
    %2420 = vmatpush2.bf16.msra.mxu0 0
    %2421 = vmatprep.subr.bf16.mxu0 0
    %2422 = vmatpush2.bf16.msra.mxu0 0
    %2423 = vmatprep.subr.bf16.mxu0 0
    %2424 = vmatpush2.bf16.msra.mxu0 0
    %2425 = vmatprep.subr.bf16.mxu0 0
    %2426 = vmatpush2.bf16.msra.mxu0 0
    %2427 = vmatprep.subr.bf16.mxu0 0
    %2428 = vmatpush2.bf16.msra.mxu0 0
    %2429 = vmatprep.subr.bf16.mxu0 0
    %2430 = vmatpush2.bf16.msra.mxu0 0
    %2431 = vmatprep.subr.bf16.mxu0 0
    %2432 = vmatpush2.bf16.msra.mxu0 0
    %2433 = vmatprep.mubr.bf16.mxu0 0
    %2434 = vmatmul.mubr.bf16.gmra.mxu0 %v1770
    %v2435 = vpop.f32.mrf.mxu0
    %v2436 = vadd.f32 %v2396, %v2435
    %v2437 = vpop.f32.mrf.mxu0
    %v2438 = vpop.f32.mrf.mxu0
    %v2439 = vpop.f32.mrf.mxu0
    %2440 = vdwg.mxu0
    %v2441 = vpack.c.bf16 %v1597, %v1597
    %v2442 = vld [vmem:[#allocation18] sm:$0xff]
    %v2443 = vld [vmem:[#allocation18 + $0x8] sm:$0xf]
    %v2444 = vld [vmem:[#allocation18 + $0xc] sm:$0xff]
    %v2445 = vld [vmem:[#allocation18 + $0x14] sm:$0xf]
    %v2446 = vld [vmem:[#allocation18 + $0x18] sm:$0xff]
    %v2447 = vld [vmem:[#allocation18 + $0x20] sm:$0xf]
    %v2448 = vld [vmem:[#allocation18 + $0x24] sm:$0xff]
    %v2449 = vld [vmem:[#allocation18 + $0x2c] sm:$0xf]
    %v2450 = vld [vmem:[#allocation18 + $0x30] sm:$0xff]
    %v2451 = vld [vmem:[#allocation18 + $0x38] sm:$0xf]
    %v2452 = vld [vmem:[#allocation18 + $0x3c] sm:$0xff]
    %v2453 = vld [vmem:[#allocation18 + $0x44] sm:$0xf]
    %v2454 = vld [vmem:[#allocation18 + $0x48] sm:$0xff]
    %v2455 = vld [vmem:[#allocation18 + $0x50] sm:$0xf]
    %v2456 = vld [vmem:[#allocation18 + $0x54] sm:$0xff]
    %v2457 = vld [vmem:[#allocation18 + $0x5c] sm:$0xf]
    %v2458 = vld [vmem:[#allocation18 + $0x60] sm:$0xff]
    %v2459 = vld [vmem:[#allocation18 + $0x68] sm:$0xf]
    %v2460 = vld [vmem:[#allocation18 + $0x6c] sm:$0xff]
    %v2461 = vld [vmem:[#allocation18 + $0x74] sm:$0xf]
    %v2462 = vld [vmem:[#allocation18 + $0x78] sm:$0xff]
    %v2463 = vld [vmem:[#allocation18 + $0x80] sm:$0xf]
    %v2464 = vld [vmem:[#allocation18 + $0x84] sm:$0xff]
    %v2465 = vld [vmem:[#allocation18 + $0x8c] sm:$0xf]
    %v2466 = vld [vmem:[#allocation18 + $0x90] sm:$0xff]
    %v2467 = vld [vmem:[#allocation18 + $0x98] sm:$0xf]
    %v2468 = vld [vmem:[#allocation18 + $0x9c] sm:$0xff]
    %v2469 = vld [vmem:[#allocation18 + $0xa4] sm:$0xf]
    %v2470 = vld [vmem:[#allocation18 + $0xa8] sm:$0xff]
    %v2471 = vld [vmem:[#allocation18 + $0xb0] sm:$0xf]
    %v2472 = vld [vmem:[#allocation18 + $0xb4] sm:$0xff]
    %v2473 = vld [vmem:[#allocation18 + $0xbc] sm:$0xf]
    %v2474 = vlaneseq
    %v2475 = vshrl.u32 %v2474, 7
    %v2476 = vsub.s32 1, %v2475
    %v2477 = vrot.slane %v1751, %v2476
    %v2478 = vlaneseq
    %v2479 = vshrl.u32 %v2478, 7
    %v2480 = vsub.s32 3, %v2479
    %v2481 = vrot.slane %v1751, %v2480
    %v2482 = vlaneseq
    %v2483 = vshrl.u32 %v2482, 7
    %v2484 = vsub.s32 5, %v2483
    %v2485 = vrot.slane %v1751, %v2484
    %v2489 = vlaneseq
    %v2490 = vshrl.u32 %v2489, 7
    %v2491 = vsub.s32 1, %v2490
    %v2492 = vrot.slane %v2477, %v2491
    %v2493 = vlaneseq
    %v2494 = vshrl.u32 %v2493, 7
    %v2495 = vsub.s32 1, %v2494
    %v2496 = vrot.slane %v2481, %v2495
    %v2497 = vlaneseq
    %v2498 = vshrl.u32 %v2497, 7
    %v2499 = vsub.s32 1, %v2498
    %v2500 = vrot.slane %v2485, %v2499
    %v2533 = vunpack.c.l.b16 %v2442
    %v2534 = vunpack.c.h.b16 %v2442
    %v2535 = vunpack.c.l.b16 %v2443
    %v2536 = vunpack.c.l.b16 %v2444
    %v2537 = vunpack.c.h.b16 %v2444
    %v2538 = vunpack.c.l.b16 %v2445
    %v2539 = vunpack.c.l.b16 %v2446
    %v2540 = vunpack.c.h.b16 %v2446
    %v2541 = vunpack.c.l.b16 %v2447
    %v2542 = vunpack.c.l.b16 %v2448
    %v2543 = vunpack.c.h.b16 %v2448
    %v2544 = vunpack.c.l.b16 %v2449
    %v2545 = vunpack.c.l.b16 %v2450
    %v2546 = vunpack.c.h.b16 %v2450
    %v2547 = vunpack.c.l.b16 %v2451
    %v2548 = vunpack.c.l.b16 %v2452
    %v2549 = vunpack.c.h.b16 %v2452
    %v2550 = vunpack.c.l.b16 %v2453
    %v2551 = vunpack.c.l.b16 %v2454
    %v2552 = vunpack.c.h.b16 %v2454
    %v2553 = vunpack.c.l.b16 %v2455
    %v2554 = vunpack.c.l.b16 %v2456
    %v2555 = vunpack.c.h.b16 %v2456
    %v2556 = vunpack.c.l.b16 %v2457
    %v2557 = vunpack.c.l.b16 %v2458
    %v2558 = vunpack.c.h.b16 %v2458
    %v2559 = vunpack.c.l.b16 %v2459
    %v2560 = vunpack.c.l.b16 %v2460
    %v2561 = vunpack.c.h.b16 %v2460
    %v2562 = vunpack.c.l.b16 %v2461
    %v2563 = vunpack.c.l.b16 %v2462
    %v2564 = vunpack.c.h.b16 %v2462
    %v2565 = vunpack.c.l.b16 %v2463
    %v2566 = vunpack.c.l.b16 %v2464
    %v2567 = vunpack.c.h.b16 %v2464
    %v2568 = vunpack.c.l.b16 %v2465
    %v2569 = vunpack.c.l.b16 %v2466
    %v2570 = vunpack.c.h.b16 %v2466
    %v2571 = vunpack.c.l.b16 %v2467
    %v2572 = vunpack.c.l.b16 %v2468
    %v2573 = vunpack.c.h.b16 %v2468
    %v2574 = vunpack.c.l.b16 %v2469
    %v2575 = vunpack.c.l.b16 %v2470
    %v2576 = vunpack.c.h.b16 %v2470
    %v2577 = vunpack.c.l.b16 %v2471
    %v2578 = vunpack.c.l.b16 %v2472
    %v2579 = vunpack.c.h.b16 %v2472
    %v2580 = vunpack.c.l.b16 %v2473
    %v2581 = vpack.c.b16 %v2536, %v2533
    %v2582 = vpack.c.b16 %v2537, %v2534
    %v2583 = vpack.c.b16 %v2538, %v2535
    %v2584 = vpack.c.b16 %v2542, %v2539
    %v2585 = vpack.c.b16 %v2543, %v2540
    %v2586 = vpack.c.b16 %v2544, %v2541
    %v2587 = vpack.c.b16 %v2548, %v2545
    %v2588 = vpack.c.b16 %v2549, %v2546
    %v2589 = vpack.c.b16 %v2550, %v2547
    %v2590 = vpack.c.b16 %v2554, %v2551
    %v2591 = vpack.c.b16 %v2555, %v2552
    %v2592 = vpack.c.b16 %v2556, %v2553
    %v2593 = vpack.c.b16 %v2560, %v2557
    %v2594 = vpack.c.b16 %v2561, %v2558
    %v2595 = vpack.c.b16 %v2562, %v2559
    %v2596 = vpack.c.b16 %v2566, %v2563
    %v2597 = vpack.c.b16 %v2567, %v2564
    %v2598 = vpack.c.b16 %v2568, %v2565
    %v2599 = vpack.c.b16 %v2572, %v2569
    %v2600 = vpack.c.b16 %v2573, %v2570
    %v2601 = vpack.c.b16 %v2574, %v2571
    %v2602 = vpack.c.b16 %v2578, %v2575
    %v2603 = vpack.c.b16 %v2579, %v2576
    %v2604 = vpack.c.b16 %v2580, %v2577
    %2629 = vmatprep.subr.bf16.mxu0 %v2603
    %2630 = vmatpush1.bf16.msra.mxu0 %v2602
    %2631 = vmatprep.subr.bf16.mxu0 %v2600
    %2632 = vmatpush1.bf16.msra.mxu0 %v2599
    %2633 = vmatprep.subr.bf16.mxu0 %v2597
    %2634 = vmatpush1.bf16.msra.mxu0 %v2596
    %2635 = vmatprep.subr.bf16.mxu0 %v2594
    %2636 = vmatpush1.bf16.msra.mxu0 %v2593
    %2637 = vmatprep.subr.bf16.mxu0 %v2591
    %2638 = vmatpush1.bf16.msra.mxu0 %v2590
    %2639 = vmatprep.subr.bf16.mxu0 %v2588
    %2640 = vmatpush1.bf16.msra.mxu0 %v2587
    %2641 = vmatprep.subr.bf16.mxu0 %v2585
    %2642 = vmatpush1.bf16.msra.mxu0 %v2584
    %2643 = vmatprep.subr.bf16.mxu0 %v2582
    %2644 = vmatpush1.bf16.msra.mxu0 %v2581
    %2645 = vmatprep.subr.bf16.mxu0 0
    %2646 = vmatpush2.bf16.msra.mxu0 0
    %2647 = vmatprep.subr.bf16.mxu0 0
    %2648 = vmatpush2.bf16.msra.mxu0 0
    %2649 = vmatprep.subr.bf16.mxu0 0
    %2650 = vmatpush2.bf16.msra.mxu0 0
    %2651 = vmatprep.subr.bf16.mxu0 0
    %2652 = vmatpush2.bf16.msra.mxu0 0
    %2653 = vmatprep.subr.bf16.mxu0 0
    %2654 = vmatpush2.bf16.msra.mxu0 0
    %2655 = vmatprep.subr.bf16.mxu0 0
    %2656 = vmatpush2.bf16.msra.mxu0 0
    %2657 = vmatprep.subr.bf16.mxu0 0
    %2658 = vmatpush2.bf16.msra.mxu0 0
    %2659 = vmatprep.subr.bf16.mxu0 0
    %2660 = vmatpush2.bf16.msra.mxu0 0
    %2661 = vmatprep.mubr.bf16.mxu0 0
    %2662 = vmatmul.mubr.bf16.gmra.mxu0 %v2441
    %v2663 = vpop.f32.mrf.mxu0
    %v2664 = vadd.f32 %v2492, %v2663
    %v2665 = vpop.f32.mrf.mxu0
    %v2666 = vadd.f32 %v2496, %v2665
    %v2667 = vpop.f32.mrf.mxu0
    %v2668 = vpop.f32.mrf.mxu0
    %2669 = vdwg.mxu0
    %2670 = vmatprep.subr.bf16.mxu0 0
    %2671 = vmatpush1.bf16.msra.mxu0 %v2604
    %2672 = vmatprep.subr.bf16.mxu0 0
    %2673 = vmatpush1.bf16.msra.mxu0 %v2601
    %2674 = vmatprep.subr.bf16.mxu0 0
    %2675 = vmatpush1.bf16.msra.mxu0 %v2598
    %2676 = vmatprep.subr.bf16.mxu0 0
    %2677 = vmatpush1.bf16.msra.mxu0 %v2595
    %2678 = vmatprep.subr.bf16.mxu0 0
    %2679 = vmatpush1.bf16.msra.mxu0 %v2592
    %2680 = vmatprep.subr.bf16.mxu0 0
    %2681 = vmatpush1.bf16.msra.mxu0 %v2589
    %2682 = vmatprep.subr.bf16.mxu0 0
    %2683 = vmatpush1.bf16.msra.mxu0 %v2586
    %2684 = vmatprep.subr.bf16.mxu0 0
    %2685 = vmatpush1.bf16.msra.mxu0 %v2583
    %2686 = vmatprep.subr.bf16.mxu0 0
    %2687 = vmatpush2.bf16.msra.mxu0 0
    %2688 = vmatprep.subr.bf16.mxu0 0
    %2689 = vmatpush2.bf16.msra.mxu0 0
    %2690 = vmatprep.subr.bf16.mxu0 0
    %2691 = vmatpush2.bf16.msra.mxu0 0
    %2692 = vmatprep.subr.bf16.mxu0 0
    %2693 = vmatpush2.bf16.msra.mxu0 0
    %2694 = vmatprep.subr.bf16.mxu0 0
    %2695 = vmatpush2.bf16.msra.mxu0 0
    %2696 = vmatprep.subr.bf16.mxu0 0
    %2697 = vmatpush2.bf16.msra.mxu0 0
    %2698 = vmatprep.subr.bf16.mxu0 0
    %2699 = vmatpush2.bf16.msra.mxu0 0
    %2700 = vmatprep.subr.bf16.mxu0 0
    %2701 = vmatpush2.bf16.msra.mxu0 0
    %2702 = vmatprep.mubr.bf16.mxu0 0
    %2703 = vmatmul.mubr.bf16.gmra.mxu0 %v2441
    %v2704 = vpop.f32.mrf.mxu0
    %v2705 = vadd.f32 %v2500, %v2704
    %v2706 = vpop.f32.mrf.mxu0
    %v2707 = vpop.f32.mrf.mxu0
    %v2708 = vpop.f32.mrf.mxu0
    %2709 = vdwg.mxu0
    %v2710 = vadd.f32 %v2355, %v2664
    %v2711 = vxor.u32 %v2710, 2147483648
    %v2712 = vmul.f32 %v2711, 1.442695
    %v2713 = vpow.pop %v2712
    %v2714 = vadd.f32 %v2713, 1.0
    %v2715 = vrcp.pop %v2714
    %v2716 = vmul.f32 1.0, %v2715
    %v2717 = vadd.f32 %v2357, %v2666
    %v2718 = vxor.u32 %v2717, 2147483648
    %v2719 = vmul.f32 %v2718, 1.442695
    %v2720 = vpow.pop %v2719
    %v2721 = vadd.f32 %v2720, 1.0
    %v2722 = vrcp.pop %v2721
    %v2723 = vmul.f32 1.0, %v2722
    %v2724 = vmul.f32 %v2716, %v2705
    %v2725 = vadd.f32 %v2436, %v2724
    %v2726 = vtanh.pop %v2725
    %v2727 = vsub.f32 1.0, %v2723
    %v2728 = vmul.f32 %v2727, %v2726
    %v2729 = vmul.f32 %v2723, %v1597
    %v2730 = vadd.f32 %v2728, %v2729
    %v2731 = vpack.c.bf16 %v2730, %v2730
    %v2732 = vld [vmem:[#allocation20] sm:$0xf]
    %v2733 = vld [vmem:[#allocation20 + $0x4] sm:$0xf]
    %v2734 = vld [vmem:[#allocation20 + $0x8] sm:$0xf]
    %v2735 = vld [vmem:[#allocation20 + $0xc] sm:$0xf]
    %v2736 = vld [vmem:[#allocation20 + $0x10] sm:$0xf]
    %v2737 = vld [vmem:[#allocation20 + $0x14] sm:$0xf]
    %v2738 = vld [vmem:[#allocation20 + $0x18] sm:$0xf]
    %v2739 = vld [vmem:[#allocation20 + $0x1c] sm:$0xf]
    %v2740 = vld [vmem:[#allocation20 + $0x20] sm:$0xf]
    %v2741 = vld [vmem:[#allocation20 + $0x24] sm:$0xf]
    %v2742 = vld [vmem:[#allocation20 + $0x28] sm:$0xf]
    %v2743 = vld [vmem:[#allocation20 + $0x2c] sm:$0xf]
    %v2744 = vld [vmem:[#allocation20 + $0x30] sm:$0xf]
    %v2745 = vld [vmem:[#allocation20 + $0x34] sm:$0xf]
    %v2746 = vld [vmem:[#allocation20 + $0x38] sm:$0xf]
    %v2747 = vld [vmem:[#allocation20 + $0x3c] sm:$0xf]
    %v2748 = vld [vmem:[%s12] sm:$0x1]
    %v2750 = vlaneseq
    %v2751 = vshrl.u32 %v2750, 7
    %v2752 = vsub.s32 0, %v2751
    %v2753 = vrot.slane %v2748, %v2752
    %v2771 = vunpack.c.l.b16 %v2732
    %v2772 = vunpack.c.l.b16 %v2733
    %v2773 = vunpack.c.l.b16 %v2734
    %v2774 = vunpack.c.l.b16 %v2735
    %v2775 = vunpack.c.l.b16 %v2736
    %v2776 = vunpack.c.l.b16 %v2737
    %v2777 = vunpack.c.l.b16 %v2738
    %v2778 = vunpack.c.l.b16 %v2739
    %v2779 = vunpack.c.l.b16 %v2740
    %v2780 = vunpack.c.l.b16 %v2741
    %v2781 = vunpack.c.l.b16 %v2742
    %v2782 = vunpack.c.l.b16 %v2743
    %v2783 = vunpack.c.l.b16 %v2744
    %v2784 = vunpack.c.l.b16 %v2745
    %v2785 = vunpack.c.l.b16 %v2746
    %v2786 = vunpack.c.l.b16 %v2747
    %v2787 = vpack.c.b16 %v2772, %v2771
    %v2788 = vpack.c.b16 %v2774, %v2773
    %v2789 = vpack.c.b16 %v2776, %v2775
    %v2790 = vpack.c.b16 %v2778, %v2777
    %v2791 = vpack.c.b16 %v2780, %v2779
    %v2792 = vpack.c.b16 %v2782, %v2781
    %v2793 = vpack.c.b16 %v2784, %v2783
    %v2794 = vpack.c.b16 %v2786, %v2785
    %2803 = vmatprep.subr.bf16.mxu0 0
    %2804 = vmatpush1.bf16.msra.mxu0 %v2794
    %2805 = vmatprep.subr.bf16.mxu0 0
    %2806 = vmatpush1.bf16.msra.mxu0 %v2793
    %2807 = vmatprep.subr.bf16.mxu0 0
    %2808 = vmatpush1.bf16.msra.mxu0 %v2792
    %2809 = vmatprep.subr.bf16.mxu0 0
    %2810 = vmatpush1.bf16.msra.mxu0 %v2791
    %2811 = vmatprep.subr.bf16.mxu0 0
    %2812 = vmatpush1.bf16.msra.mxu0 %v2790
    %2813 = vmatprep.subr.bf16.mxu0 0
    %2814 = vmatpush1.bf16.msra.mxu0 %v2789
    %2815 = vmatprep.subr.bf16.mxu0 0
    %2816 = vmatpush1.bf16.msra.mxu0 %v2788
    %2817 = vmatprep.subr.bf16.mxu0 0
    %2818 = vmatpush1.bf16.msra.mxu0 %v2787
    %2819 = vmatprep.subr.bf16.mxu0 0
    %2820 = vmatpush2.bf16.msra.mxu0 0
    %2821 = vmatprep.subr.bf16.mxu0 0
    %2822 = vmatpush2.bf16.msra.mxu0 0
    %2823 = vmatprep.subr.bf16.mxu0 0
    %2824 = vmatpush2.bf16.msra.mxu0 0
    %2825 = vmatprep.subr.bf16.mxu0 0
    %2826 = vmatpush2.bf16.msra.mxu0 0
    %2827 = vmatprep.subr.bf16.mxu0 0
    %2828 = vmatpush2.bf16.msra.mxu0 0
    %2829 = vmatprep.subr.bf16.mxu0 0
    %2830 = vmatpush2.bf16.msra.mxu0 0
    %2831 = vmatprep.subr.bf16.mxu0 0
    %2832 = vmatpush2.bf16.msra.mxu0 0
    %2833 = vmatprep.subr.bf16.mxu0 0
    %2834 = vmatpush2.bf16.msra.mxu0 0
    %2835 = vmatprep.mubr.bf16.mxu0 0
    %2836 = vmatmul.mubr.bf16.gmra.mxu0 %v2731
    %v2837 = vpop.f32.mrf.mxu0
    %v2838 = vadd.f32 %v2753, %v2837
    %v2839 = vpop.f32.mrf.mxu0
    %v2840 = vpop.f32.mrf.mxu0
    %v2841 = vpop.f32.mrf.mxu0
    %2842 = vdwg.mxu0
    %s2843 = scalar_lea.vmem [#allocation21], 8
    %2844 = vst [vmem:[%s2843] sm:$0xff] %v2838
    %2845 = vmax.xlane.f32.xlu0 %v2838
    %v2846 = vpop.xlane.xlu0 %2845
    %vm2847 = vcmp.eq.f32.partialorder %v2838, %v2846
    %v2848 = vsel %vm2847, %v1434, 128
    %v2849 = vand.u32 %v2848, 65535
    %v2850 = vshra.s32 %v2848, 16
    %v2851 = vcvt.s32.f32 %v2849
    %v2852 = vcvt.s32.f32 %v2850
    %2853 = vmin.xlane.f32.xlu0 %v2852
    %v2854 = vpop.xlane.xlu0 %2853
    %vm2855 = vcmp.eq.f32.partialorder %v2852, %v2854
    %v2856 = vsel %vm2855, %v2851, inf
    %2857 = vmin.xlane.f32.xlu0 %v2856
    %v2858 = vpop.xlane.xlu0 %2857
    %v2859 = vcvt.f32.s32 %v2858
    %v2860 = vcvt.f32.s32 %v2854
    %v2861 = vshll.u32 %v2860, 16
    %v2862 = vadd.s32 %v2861, %v2859
    %vm2863 = vcmp.eq.s32.totalorder %v1434, %v2862
    %v2864 = vsel %vm2863, 1, 0
    %v2865 = vcvt.s32.f32 %v2864
    %v2866 = vpack.c.bf16 %v2865, %v2865
    %v2867 = vld [vmem:[#allocation15] sm:$0xff]
    %v2868 = vld [vmem:[#allocation15 + $0x8] sm:$0xff]
    %v2869 = vld [vmem:[#allocation15 + $0x10] sm:$0xff]
    %v2870 = vld [vmem:[#allocation15 + $0x18] sm:$0xff]
    %v2871 = vld [vmem:[#allocation15 + $0x20] sm:$0xff]
    %v2872 = vld [vmem:[#allocation15 + $0x28] sm:$0xff]
    %v2873 = vld [vmem:[#allocation15 + $0x30] sm:$0xff]
    %v2874 = vld [vmem:[#allocation15 + $0x38] sm:$0xff]
    %v2875 = vld [vmem:[#allocation15 + $0x40] sm:$0xff]
    %v2876 = vld [vmem:[#allocation15 + $0x48] sm:$0xff]
    %v2877 = vld [vmem:[#allocation15 + $0x50] sm:$0xff]
    %v2878 = vld [vmem:[#allocation15 + $0x58] sm:$0xff]
    %v2879 = vld [vmem:[#allocation15 + $0x60] sm:$0xff]
    %v2880 = vld [vmem:[#allocation15 + $0x68] sm:$0xff]
    %v2881 = vld [vmem:[#allocation15 + $0x70] sm:$0xff]
    %v2882 = vld [vmem:[#allocation15 + $0x78] sm:$0xff]
    %v2899 = vunpack.c.l.b16 %v2867
    %v2900 = vunpack.c.h.b16 %v2867
    %v2901 = vunpack.c.l.b16 %v2868
    %v2902 = vunpack.c.h.b16 %v2868
    %v2903 = vunpack.c.l.b16 %v2869
    %v2904 = vunpack.c.h.b16 %v2869
    %v2905 = vunpack.c.l.b16 %v2870
    %v2906 = vunpack.c.h.b16 %v2870
    %v2907 = vunpack.c.l.b16 %v2871
    %v2908 = vunpack.c.h.b16 %v2871
    %v2909 = vunpack.c.l.b16 %v2872
    %v2910 = vunpack.c.h.b16 %v2872
    %v2911 = vunpack.c.l.b16 %v2873
    %v2912 = vunpack.c.h.b16 %v2873
    %v2913 = vunpack.c.l.b16 %v2874
    %v2914 = vunpack.c.h.b16 %v2874
    %v2915 = vunpack.c.l.b16 %v2875
    %v2916 = vunpack.c.h.b16 %v2875
    %v2917 = vunpack.c.l.b16 %v2876
    %v2918 = vunpack.c.h.b16 %v2876
    %v2919 = vunpack.c.l.b16 %v2877
    %v2920 = vunpack.c.h.b16 %v2877
    %v2921 = vunpack.c.l.b16 %v2878
    %v2922 = vunpack.c.h.b16 %v2878
    %v2923 = vunpack.c.l.b16 %v2879
    %v2924 = vunpack.c.h.b16 %v2879
    %v2925 = vunpack.c.l.b16 %v2880
    %v2926 = vunpack.c.h.b16 %v2880
    %v2927 = vunpack.c.l.b16 %v2881
    %v2928 = vunpack.c.h.b16 %v2881
    %v2929 = vunpack.c.l.b16 %v2882
    %v2930 = vunpack.c.h.b16 %v2882
    %v2931 = vpack.c.b16 %v2901, %v2899
    %v2932 = vpack.c.b16 %v2902, %v2900
    %v2933 = vpack.c.b16 %v2905, %v2903
    %v2934 = vpack.c.b16 %v2906, %v2904
    %v2935 = vpack.c.b16 %v2909, %v2907
    %v2936 = vpack.c.b16 %v2910, %v2908
    %v2937 = vpack.c.b16 %v2913, %v2911
    %v2938 = vpack.c.b16 %v2914, %v2912
    %v2939 = vpack.c.b16 %v2917, %v2915
    %v2940 = vpack.c.b16 %v2918, %v2916
    %v2941 = vpack.c.b16 %v2921, %v2919
    %v2942 = vpack.c.b16 %v2922, %v2920
    %v2943 = vpack.c.b16 %v2925, %v2923
    %v2944 = vpack.c.b16 %v2926, %v2924
    %v2945 = vpack.c.b16 %v2929, %v2927
    %v2946 = vpack.c.b16 %v2930, %v2928
    %2963 = vmatprep.subr.bf16.mxu0 %v2946
    %2964 = vmatpush1.bf16.msra.mxu0 %v2945
    %2965 = vmatprep.subr.bf16.mxu0 %v2944
    %2966 = vmatpush1.bf16.msra.mxu0 %v2943
    %2967 = vmatprep.subr.bf16.mxu0 %v2942
    %2968 = vmatpush1.bf16.msra.mxu0 %v2941
    %2969 = vmatprep.subr.bf16.mxu0 %v2940
    %2970 = vmatpush1.bf16.msra.mxu0 %v2939
    %2971 = vmatprep.subr.bf16.mxu0 %v2938
    %2972 = vmatpush1.bf16.msra.mxu0 %v2937
    %2973 = vmatprep.subr.bf16.mxu0 %v2936
    %2974 = vmatpush1.bf16.msra.mxu0 %v2935
    %2975 = vmatprep.subr.bf16.mxu0 %v2934
    %2976 = vmatpush1.bf16.msra.mxu0 %v2933
    %2977 = vmatprep.subr.bf16.mxu0 %v2932
    %2978 = vmatpush1.bf16.msra.mxu0 %v2931
    %2979 = vmatprep.subr.bf16.mxu0 0
    %2980 = vmatpush2.bf16.msra.mxu0 0
    %2981 = vmatprep.subr.bf16.mxu0 0
    %2982 = vmatpush2.bf16.msra.mxu0 0
    %2983 = vmatprep.subr.bf16.mxu0 0
    %2984 = vmatpush2.bf16.msra.mxu0 0
    %2985 = vmatprep.subr.bf16.mxu0 0
    %2986 = vmatpush2.bf16.msra.mxu0 0
    %2987 = vmatprep.subr.bf16.mxu0 0
    %2988 = vmatpush2.bf16.msra.mxu0 0
    %2989 = vmatprep.subr.bf16.mxu0 0
    %2990 = vmatpush2.bf16.msra.mxu0 0
    %2991 = vmatprep.subr.bf16.mxu0 0
    %2992 = vmatpush2.bf16.msra.mxu0 0
    %2993 = vmatprep.subr.bf16.mxu0 0
    %2994 = vmatpush2.bf16.msra.mxu0 0
    %2995 = vmatprep.mubr.bf16.mxu0 0
    %2996 = vmatmul.mubr.bf16.gmra.mxu0 %v2866
    %v2997 = vpop.f32.mrf.mxu0
    %v2998 = vadd.f32 0.0, %v2997
    %v2999 = vpop.f32.mrf.mxu0
    %v3000 = vadd.f32 0.0, %v2999
    %v3001 = vpop.f32.mrf.mxu0
    %v3002 = vpop.f32.mrf.mxu0
    %3003 = vdwg.mxu0
    %3004 = vst [vmem:[#allocation3] sm:$0xff] %v2998
    %3005 = vst [vmem:[#allocation3 + $0x8] sm:$0xff] %v3000
    %3006 = vst [vmem:[#allocation2] sm:$0xff] %v2730
    %v3007 = vld [vmem:[#allocation2] sm:$0xff]
    %s3008 = sld [smem:[#allocation4 + $0x2]]
    %v3009 = vstv %s3008
    %vm3010 = vcmp.ne.s32.totalorder %v3009, 0
    %s3011 = scalar_lea.vmem [#allocation8], 32
    %v3012 = vld [vmem:[%s3011] sm:$0xff]
    %v3013 = vld [vmem:[%s3011 + $0x8] sm:$0xff]
    %v3014 = vld [vmem:[#allocation3] sm:$0xff]
    %v3015 = vld [vmem:[#allocation3 + $0x8] sm:$0xff]
    %v3016 = vsel %vm3010, %v3012, %v3014
    %v3017 = vsel %vm3010, %v3013, %v3015
    %v3018 = vld [vmem:[%s7] sm:$0x1]
    %v3020 = vlaneseq
    %v3021 = vshrl.u32 %v3020, 7
    %v3022 = vsub.s32 0, %v3021
    %v3023 = vrot.slane %v3018, %v3022
    %v3025 = vmul.f32 %v3007, %v3023
    %3026 = vadd.xlane.f32.xlu0 %v3025
    %v3027 = vpop.xlane.xlu0 %3026
    %v3028 = vld [vmem:[#allocation12] sm:$0xff]
    %v3029 = vadd.f32 %v3028, %v3027
    %v3030 = vsel %vm201, %v3029, -inf
    %3031 = vmax.xlane.f32.xlu0 %v3030
    %v3032 = vpop.xlane.xlu0 %3031
    %v3033 = vsub.f32 %v3029, %v3032
    %v3034 = vmul.f32 %v3033, 1.442695
    %v3035 = vpow.pop %v3034
    %v3036 = vsel %vm201, %v3035, 0.0
    %3037 = vadd.xlane.f32.xlu0 %v3036
    %v3038 = vpop.xlane.xlu0 %3037
    %v3039 = vrcp.pop %v3038
    %v3040 = vmul.f32 %v3035, %v3039
    %v3041 = vlaneseq
    %v3042 = vshrl.u32 %v3041, 7
    %v3043 = vsub.s32 0, %v3042
    %v3044 = vrot.slane %v3040, %v3043
    %3046 = vbcast.lane.b32.xlu0 %v3044, 256
    %v3047 = vpop.permute.xlu0 %3046
    %v3048 = vlaneseq
    %v3049 = vshrl.u32 %v3048, 7
    %v3050 = vsub.s32 1, %v3049
    %v3051 = vrot.slane %v3040, %v3050
    %3053 = vbcast.lane.b32.xlu0 %v3051, 256
    %v3054 = vpop.permute.xlu0 %3053
    %v3055 = vlaneseq
    %v3056 = vshrl.u32 %v3055, 7
    %v3057 = vsub.s32 2, %v3056
    %v3058 = vrot.slane %v3040, %v3057
    %3060 = vbcast.lane.b32.xlu0 %v3058, 256
    %v3061 = vpop.permute.xlu0 %3060
    %v3062 = vlaneseq
    %v3063 = vshrl.u32 %v3062, 7
    %v3064 = vsub.s32 3, %v3063
    %v3065 = vrot.slane %v3040, %v3064
    %3067 = vbcast.lane.b32.xlu0 %v3065, 256
    %v3068 = vpop.permute.xlu0 %3067
    %v3069 = vlaneseq
    %v3070 = vshrl.u32 %v3069, 7
    %v3071 = vsub.s32 4, %v3070
    %v3072 = vrot.slane %v3040, %v3071
    %3074 = vbcast.lane.b32.xlu0 %v3072, 256
    %v3075 = vpop.permute.xlu0 %3074
    %v3076 = vlaneseq
    %v3077 = vshrl.u32 %v3076, 7
    %v3078 = vsub.s32 5, %v3077
    %v3079 = vrot.slane %v3040, %v3078
    %3081 = vbcast.lane.b32.xlu0 %v3079, 256
    %v3082 = vpop.permute.xlu0 %3081
    %v3083 = vlaneseq
    %v3084 = vshrl.u32 %v3083, 7
    %v3085 = vsub.s32 6, %v3084
    %v3086 = vrot.slane %v3040, %v3085
    %3088 = vbcast.lane.b32.xlu0 %v3086, 256
    %v3089 = vpop.permute.xlu0 %3088
    %v3090 = vlaneseq
    %v3091 = vshrl.u32 %v3090, 7
    %v3092 = vsub.s32 7, %v3091
    %v3093 = vrot.slane %v3040, %v3092
    %3095 = vbcast.lane.b32.xlu0 %v3093, 256
    %v3096 = vpop.permute.xlu0 %3095
    %v3097 = vld [vmem:[#allocation14] sm:$0xff]
    %v3098 = vld [vmem:[#allocation14 + $0x8] sm:$0xff]
    %v3099 = vld [vmem:[#allocation14 + $0x10] sm:$0xff]
    %v3100 = vld [vmem:[#allocation14 + $0x18] sm:$0xff]
    %v3101 = vld [vmem:[#allocation14 + $0x20] sm:$0xff]
    %v3102 = vld [vmem:[#allocation14 + $0x28] sm:$0xff]
    %v3103 = vld [vmem:[#allocation14 + $0x30] sm:$0xff]
    %v3104 = vld [vmem:[#allocation14 + $0x38] sm:$0xff]
    %v3105 = vmul.f32 %v3047, %v3097
    %v3106 = vmul.f32 %v3054, %v3098
    %v3107 = vmul.f32 %v3061, %v3099
    %v3108 = vmul.f32 %v3068, %v3100
    %v3109 = vmul.f32 %v3075, %v3101
    %v3110 = vmul.f32 %v3082, %v3102
    %v3111 = vmul.f32 %v3089, %v3103
    %v3112 = vmul.f32 %v3096, %v3104
    %v3113 = vrot.slane %v3105, 4
    %v3114 = vadd.f32 %v3105, %v3113
    %v3115 = vrot.slane %v3114, 2
    %v3116 = vadd.f32 %v3114, %v3115
    %v3117 = vrot.slane %v3116, 1
    %v3118 = vadd.f32 %v3116, %v3117
    %v3119 = vrot.slane %v3106, 4
    %v3120 = vadd.f32 %v3106, %v3119
    %v3121 = vrot.slane %v3120, 2
    %v3122 = vadd.f32 %v3120, %v3121
    %v3123 = vrot.slane %v3122, 1
    %v3124 = vadd.f32 %v3122, %v3123
    %v3125 = vrot.slane %v3107, 4
    %v3126 = vadd.f32 %v3107, %v3125
    %v3127 = vrot.slane %v3126, 2
    %v3128 = vadd.f32 %v3126, %v3127
    %v3129 = vrot.slane %v3128, 1
    %v3130 = vadd.f32 %v3128, %v3129
    %v3131 = vrot.slane %v3108, 4
    %v3132 = vadd.f32 %v3108, %v3131
    %v3133 = vrot.slane %v3132, 2
    %v3134 = vadd.f32 %v3132, %v3133
    %v3135 = vrot.slane %v3134, 1
    %v3136 = vadd.f32 %v3134, %v3135
    %v3137 = vrot.slane %v3109, 4
    %v3138 = vadd.f32 %v3109, %v3137
    %v3139 = vrot.slane %v3138, 2
    %v3140 = vadd.f32 %v3138, %v3139
    %v3141 = vrot.slane %v3140, 1
    %v3142 = vadd.f32 %v3140, %v3141
    %v3143 = vrot.slane %v3110, 4
    %v3144 = vadd.f32 %v3110, %v3143
    %v3145 = vrot.slane %v3144, 2
    %v3146 = vadd.f32 %v3144, %v3145
    %v3147 = vrot.slane %v3146, 1
    %v3148 = vadd.f32 %v3146, %v3147
    %v3149 = vrot.slane %v3111, 4
    %v3150 = vadd.f32 %v3111, %v3149
    %v3151 = vrot.slane %v3150, 2
    %v3152 = vadd.f32 %v3150, %v3151
    %v3153 = vrot.slane %v3152, 1
    %v3154 = vadd.f32 %v3152, %v3153
    %v3155 = vrot.slane %v3112, 4
    %v3156 = vadd.f32 %v3112, %v3155
    %v3157 = vrot.slane %v3156, 2
    %v3158 = vadd.f32 %v3156, %v3157
    %v3159 = vrot.slane %v3158, 1
    %v3160 = vadd.f32 %v3158, %v3159
    %v3161 = vld [vmem:[%s10] sm:$0x3f]
    %v3170 = vsel %vm342, %v3124, %v3118
    %v3171 = vsel %vm344, %v3130, %v3170
    %v3172 = vsel %vm346, %v3136, %v3171
    %v3173 = vsel %vm348, %v3142, %v3172
    %v3174 = vsel %vm350, %v3148, %v3173
    %v3175 = vsel %vm352, %v3154, %v3174
    %v3176 = vsel %vm354, %v3160, %v3175
    %v3178 = vpack.c.bf16 %v3016, %v3016
    %v3179 = vpack.c.bf16 %v3017, %v3017
    %v3180 = vpack.c.bf16 %v3176, %v3176
    %v3181 = vld [vmem:[#allocation17] sm:$0xff]
    %v3182 = vld [vmem:[#allocation17 + $0x8] sm:$0xf]
    %v3183 = vld [vmem:[#allocation17 + $0xc] sm:$0xff]
    %v3184 = vld [vmem:[#allocation17 + $0x14] sm:$0xf]
    %v3185 = vld [vmem:[#allocation17 + $0x18] sm:$0xff]
    %v3186 = vld [vmem:[#allocation17 + $0x20] sm:$0xf]
    %v3187 = vld [vmem:[#allocation17 + $0x24] sm:$0xff]
    %v3188 = vld [vmem:[#allocation17 + $0x2c] sm:$0xf]
    %v3189 = vld [vmem:[#allocation17 + $0x30] sm:$0xff]
    %v3190 = vld [vmem:[#allocation17 + $0x38] sm:$0xf]
    %v3191 = vld [vmem:[#allocation17 + $0x3c] sm:$0xff]
    %v3192 = vld [vmem:[#allocation17 + $0x44] sm:$0xf]
    %v3193 = vld [vmem:[#allocation17 + $0x48] sm:$0xff]
    %v3194 = vld [vmem:[#allocation17 + $0x50] sm:$0xf]
    %v3195 = vld [vmem:[#allocation17 + $0x54] sm:$0xff]
    %v3196 = vld [vmem:[#allocation17 + $0x5c] sm:$0xf]
    %v3197 = vld [vmem:[#allocation17 + $0x60] sm:$0xff]
    %v3198 = vld [vmem:[#allocation17 + $0x68] sm:$0xf]
    %v3199 = vld [vmem:[#allocation17 + $0x6c] sm:$0xff]
    %v3200 = vld [vmem:[#allocation17 + $0x74] sm:$0xf]
    %v3201 = vld [vmem:[#allocation17 + $0x78] sm:$0xff]
    %v3202 = vld [vmem:[#allocation17 + $0x80] sm:$0xf]
    %v3203 = vld [vmem:[#allocation17 + $0x84] sm:$0xff]
    %v3204 = vld [vmem:[#allocation17 + $0x8c] sm:$0xf]
    %v3205 = vld [vmem:[#allocation17 + $0x90] sm:$0xff]
    %v3206 = vld [vmem:[#allocation17 + $0x98] sm:$0xf]
    %v3207 = vld [vmem:[#allocation17 + $0x9c] sm:$0xff]
    %v3208 = vld [vmem:[#allocation17 + $0xa4] sm:$0xf]
    %v3209 = vld [vmem:[#allocation17 + $0xa8] sm:$0xff]
    %v3210 = vld [vmem:[#allocation17 + $0xb0] sm:$0xf]
    %v3211 = vld [vmem:[#allocation17 + $0xb4] sm:$0xff]
    %v3212 = vld [vmem:[#allocation17 + $0xbc] sm:$0xf]
    %v3213 = vld [vmem:[#allocation17 + $0xc0] sm:$0xff]
    %v3214 = vld [vmem:[#allocation17 + $0xc8] sm:$0xf]
    %v3215 = vld [vmem:[#allocation17 + $0xcc] sm:$0xff]
    %v3216 = vld [vmem:[#allocation17 + $0xd4] sm:$0xf]
    %v3217 = vld [vmem:[#allocation17 + $0xd8] sm:$0xff]
    %v3218 = vld [vmem:[#allocation17 + $0xe0] sm:$0xf]
    %v3219 = vld [vmem:[#allocation17 + $0xe4] sm:$0xff]
    %v3220 = vld [vmem:[#allocation17 + $0xec] sm:$0xf]
    %v3221 = vld [vmem:[#allocation17 + $0xf0] sm:$0xff]
    %v3222 = vld [vmem:[#allocation17 + $0xf8] sm:$0xf]
    %v3223 = vld [vmem:[#allocation17 + $0xfc] sm:$0xff]
    %v3224 = vld [vmem:[#allocation17 + $0x104] sm:$0xf]
    %v3225 = vld [vmem:[#allocation17 + $0x108] sm:$0xff]
    %v3226 = vld [vmem:[#allocation17 + $0x110] sm:$0xf]
    %v3227 = vld [vmem:[#allocation17 + $0x114] sm:$0xff]
    %v3228 = vld [vmem:[#allocation17 + $0x11c] sm:$0xf]
    %v3229 = vld [vmem:[#allocation17 + $0x120] sm:$0xff]
    %v3230 = vld [vmem:[#allocation17 + $0x128] sm:$0xf]
    %v3231 = vld [vmem:[#allocation17 + $0x12c] sm:$0xff]
    %v3232 = vld [vmem:[#allocation17 + $0x134] sm:$0xf]
    %v3233 = vld [vmem:[#allocation17 + $0x138] sm:$0xff]
    %v3234 = vld [vmem:[#allocation17 + $0x140] sm:$0xf]
    %v3235 = vld [vmem:[#allocation17 + $0x144] sm:$0xff]
    %v3236 = vld [vmem:[#allocation17 + $0x14c] sm:$0xf]
    %v3237 = vld [vmem:[#allocation17 + $0x150] sm:$0xff]
    %v3238 = vld [vmem:[#allocation17 + $0x158] sm:$0xf]
    %v3239 = vld [vmem:[#allocation17 + $0x15c] sm:$0xff]
    %v3240 = vld [vmem:[#allocation17 + $0x164] sm:$0xf]
    %v3241 = vld [vmem:[#allocation17 + $0x168] sm:$0xff]
    %v3242 = vld [vmem:[#allocation17 + $0x170] sm:$0xf]
    %v3243 = vld [vmem:[#allocation17 + $0x174] sm:$0xff]
    %v3244 = vld [vmem:[#allocation17 + $0x17c] sm:$0xf]
    %v3245 = vld [vmem:[#allocation17 + $0x180] sm:$0xff]
    %v3246 = vld [vmem:[#allocation17 + $0x188] sm:$0xf]
    %v3247 = vld [vmem:[#allocation17 + $0x18c] sm:$0xff]
    %v3248 = vld [vmem:[#allocation17 + $0x194] sm:$0xf]
    %v3249 = vld [vmem:[#allocation17 + $0x198] sm:$0xff]
    %v3250 = vld [vmem:[#allocation17 + $0x1a0] sm:$0xf]
    %v3251 = vld [vmem:[#allocation17 + $0x1a4] sm:$0xff]
    %v3252 = vld [vmem:[#allocation17 + $0x1ac] sm:$0xf]
    %v3253 = vld [vmem:[#allocation17 + $0x1b0] sm:$0xff]
    %v3254 = vld [vmem:[#allocation17 + $0x1b8] sm:$0xf]
    %v3255 = vld [vmem:[#allocation17 + $0x1bc] sm:$0xff]
    %v3256 = vld [vmem:[#allocation17 + $0x1c4] sm:$0xf]
    %v3257 = vld [vmem:[#allocation17 + $0x1c8] sm:$0xff]
    %v3258 = vld [vmem:[#allocation17 + $0x1d0] sm:$0xf]
    %v3259 = vld [vmem:[#allocation17 + $0x1d4] sm:$0xff]
    %v3260 = vld [vmem:[#allocation17 + $0x1dc] sm:$0xf]
    %v3261 = vld [vmem:[#allocation17 + $0x1e0] sm:$0xff]
    %v3262 = vld [vmem:[#allocation17 + $0x1e8] sm:$0xf]
    %v3263 = vld [vmem:[#allocation17 + $0x1ec] sm:$0xff]
    %v3264 = vld [vmem:[#allocation17 + $0x1f4] sm:$0xf]
    %v3265 = vld [vmem:[#allocation17 + $0x1f8] sm:$0xff]
    %v3266 = vld [vmem:[#allocation17 + $0x200] sm:$0xf]
    %v3267 = vld [vmem:[#allocation17 + $0x204] sm:$0xff]
    %v3268 = vld [vmem:[#allocation17 + $0x20c] sm:$0xf]
    %v3269 = vld [vmem:[#allocation17 + $0x210] sm:$0xff]
    %v3270 = vld [vmem:[#allocation17 + $0x218] sm:$0xf]
    %v3271 = vld [vmem:[#allocation17 + $0x21c] sm:$0xff]
    %v3272 = vld [vmem:[#allocation17 + $0x224] sm:$0xf]
    %v3273 = vld [vmem:[#allocation17 + $0x228] sm:$0xff]
    %v3274 = vld [vmem:[#allocation17 + $0x230] sm:$0xf]
    %v3275 = vld [vmem:[#allocation17 + $0x234] sm:$0xff]
    %v3276 = vld [vmem:[#allocation17 + $0x23c] sm:$0xf]
    %v3278 = vlaneseq
    %v3279 = vshrl.u32 %v3278, 7
    %v3280 = vsub.s32 0, %v3279
    %v3281 = vrot.slane %v3161, %v3280
    %v3282 = vlaneseq
    %v3283 = vshrl.u32 %v3282, 7
    %v3284 = vsub.s32 2, %v3283
    %v3285 = vrot.slane %v3161, %v3284
    %v3286 = vlaneseq
    %v3287 = vshrl.u32 %v3286, 7
    %v3288 = vsub.s32 4, %v3287
    %v3289 = vrot.slane %v3161, %v3288
    %v3293 = vlaneseq
    %v3294 = vshrl.u32 %v3293, 7
    %v3295 = vsub.s32 0, %v3294
    %v3296 = vrot.slane %v3281, %v3295
    %v3297 = vlaneseq
    %v3298 = vshrl.u32 %v3297, 7
    %v3299 = vsub.s32 0, %v3298
    %v3300 = vrot.slane %v3285, %v3299
    %v3301 = vlaneseq
    %v3302 = vshrl.u32 %v3301, 7
    %v3303 = vsub.s32 0, %v3302
    %v3304 = vrot.slane %v3289, %v3303
    %v3401 = vunpack.c.l.b16 %v3181
    %v3402 = vunpack.c.h.b16 %v3181
    %v3403 = vunpack.c.l.b16 %v3182
    %v3404 = vunpack.c.l.b16 %v3183
    %v3405 = vunpack.c.h.b16 %v3183
    %v3406 = vunpack.c.l.b16 %v3184
    %v3407 = vunpack.c.l.b16 %v3185
    %v3408 = vunpack.c.h.b16 %v3185
    %v3409 = vunpack.c.l.b16 %v3186
    %v3410 = vunpack.c.l.b16 %v3187
    %v3411 = vunpack.c.h.b16 %v3187
    %v3412 = vunpack.c.l.b16 %v3188
    %v3413 = vunpack.c.l.b16 %v3189
    %v3414 = vunpack.c.h.b16 %v3189
    %v3415 = vunpack.c.l.b16 %v3190
    %v3416 = vunpack.c.l.b16 %v3191
    %v3417 = vunpack.c.h.b16 %v3191
    %v3418 = vunpack.c.l.b16 %v3192
    %v3419 = vunpack.c.l.b16 %v3193
    %v3420 = vunpack.c.h.b16 %v3193
    %v3421 = vunpack.c.l.b16 %v3194
    %v3422 = vunpack.c.l.b16 %v3195
    %v3423 = vunpack.c.h.b16 %v3195
    %v3424 = vunpack.c.l.b16 %v3196
    %v3425 = vunpack.c.l.b16 %v3197
    %v3426 = vunpack.c.h.b16 %v3197
    %v3427 = vunpack.c.l.b16 %v3198
    %v3428 = vunpack.c.l.b16 %v3199
    %v3429 = vunpack.c.h.b16 %v3199
    %v3430 = vunpack.c.l.b16 %v3200
    %v3431 = vunpack.c.l.b16 %v3201
    %v3432 = vunpack.c.h.b16 %v3201
    %v3433 = vunpack.c.l.b16 %v3202
    %v3434 = vunpack.c.l.b16 %v3203
    %v3435 = vunpack.c.h.b16 %v3203
    %v3436 = vunpack.c.l.b16 %v3204
    %v3437 = vunpack.c.l.b16 %v3205
    %v3438 = vunpack.c.h.b16 %v3205
    %v3439 = vunpack.c.l.b16 %v3206
    %v3440 = vunpack.c.l.b16 %v3207
    %v3441 = vunpack.c.h.b16 %v3207
    %v3442 = vunpack.c.l.b16 %v3208
    %v3443 = vunpack.c.l.b16 %v3209
    %v3444 = vunpack.c.h.b16 %v3209
    %v3445 = vunpack.c.l.b16 %v3210
    %v3446 = vunpack.c.l.b16 %v3211
    %v3447 = vunpack.c.h.b16 %v3211
    %v3448 = vunpack.c.l.b16 %v3212
    %v3449 = vunpack.c.l.b16 %v3213
    %v3450 = vunpack.c.h.b16 %v3213
    %v3451 = vunpack.c.l.b16 %v3214
    %v3452 = vunpack.c.l.b16 %v3215
    %v3453 = vunpack.c.h.b16 %v3215
    %v3454 = vunpack.c.l.b16 %v3216
    %v3455 = vunpack.c.l.b16 %v3217
    %v3456 = vunpack.c.h.b16 %v3217
    %v3457 = vunpack.c.l.b16 %v3218
    %v3458 = vunpack.c.l.b16 %v3219
    %v3459 = vunpack.c.h.b16 %v3219
    %v3460 = vunpack.c.l.b16 %v3220
    %v3461 = vunpack.c.l.b16 %v3221
    %v3462 = vunpack.c.h.b16 %v3221
    %v3463 = vunpack.c.l.b16 %v3222
    %v3464 = vunpack.c.l.b16 %v3223
    %v3465 = vunpack.c.h.b16 %v3223
    %v3466 = vunpack.c.l.b16 %v3224
    %v3467 = vunpack.c.l.b16 %v3225
    %v3468 = vunpack.c.h.b16 %v3225
    %v3469 = vunpack.c.l.b16 %v3226
    %v3470 = vunpack.c.l.b16 %v3227
    %v3471 = vunpack.c.h.b16 %v3227
    %v3472 = vunpack.c.l.b16 %v3228
    %v3473 = vunpack.c.l.b16 %v3229
    %v3474 = vunpack.c.h.b16 %v3229
    %v3475 = vunpack.c.l.b16 %v3230
    %v3476 = vunpack.c.l.b16 %v3231
    %v3477 = vunpack.c.h.b16 %v3231
    %v3478 = vunpack.c.l.b16 %v3232
    %v3479 = vunpack.c.l.b16 %v3233
    %v3480 = vunpack.c.h.b16 %v3233
    %v3481 = vunpack.c.l.b16 %v3234
    %v3482 = vunpack.c.l.b16 %v3235
    %v3483 = vunpack.c.h.b16 %v3235
    %v3484 = vunpack.c.l.b16 %v3236
    %v3485 = vunpack.c.l.b16 %v3237
    %v3486 = vunpack.c.h.b16 %v3237
    %v3487 = vunpack.c.l.b16 %v3238
    %v3488 = vunpack.c.l.b16 %v3239
    %v3489 = vunpack.c.h.b16 %v3239
    %v3490 = vunpack.c.l.b16 %v3240
    %v3491 = vunpack.c.l.b16 %v3241
    %v3492 = vunpack.c.h.b16 %v3241
    %v3493 = vunpack.c.l.b16 %v3242
    %v3494 = vunpack.c.l.b16 %v3243
    %v3495 = vunpack.c.h.b16 %v3243
    %v3496 = vunpack.c.l.b16 %v3244
    %v3497 = vunpack.c.l.b16 %v3245
    %v3498 = vunpack.c.h.b16 %v3245
    %v3499 = vunpack.c.l.b16 %v3246
    %v3500 = vunpack.c.l.b16 %v3247
    %v3501 = vunpack.c.h.b16 %v3247
    %v3502 = vunpack.c.l.b16 %v3248
    %v3503 = vunpack.c.l.b16 %v3249
    %v3504 = vunpack.c.h.b16 %v3249
    %v3505 = vunpack.c.l.b16 %v3250
    %v3506 = vunpack.c.l.b16 %v3251
    %v3507 = vunpack.c.h.b16 %v3251
    %v3508 = vunpack.c.l.b16 %v3252
    %v3509 = vunpack.c.l.b16 %v3253
    %v3510 = vunpack.c.h.b16 %v3253
    %v3511 = vunpack.c.l.b16 %v3254
    %v3512 = vunpack.c.l.b16 %v3255
    %v3513 = vunpack.c.h.b16 %v3255
    %v3514 = vunpack.c.l.b16 %v3256
    %v3515 = vunpack.c.l.b16 %v3257
    %v3516 = vunpack.c.h.b16 %v3257
    %v3517 = vunpack.c.l.b16 %v3258
    %v3518 = vunpack.c.l.b16 %v3259
    %v3519 = vunpack.c.h.b16 %v3259
    %v3520 = vunpack.c.l.b16 %v3260
    %v3521 = vunpack.c.l.b16 %v3261
    %v3522 = vunpack.c.h.b16 %v3261
    %v3523 = vunpack.c.l.b16 %v3262
    %v3524 = vunpack.c.l.b16 %v3263
    %v3525 = vunpack.c.h.b16 %v3263
    %v3526 = vunpack.c.l.b16 %v3264
    %v3527 = vunpack.c.l.b16 %v3265
    %v3528 = vunpack.c.h.b16 %v3265
    %v3529 = vunpack.c.l.b16 %v3266
    %v3530 = vunpack.c.l.b16 %v3267
    %v3531 = vunpack.c.h.b16 %v3267
    %v3532 = vunpack.c.l.b16 %v3268
    %v3533 = vunpack.c.l.b16 %v3269
    %v3534 = vunpack.c.h.b16 %v3269
    %v3535 = vunpack.c.l.b16 %v3270
    %v3536 = vunpack.c.l.b16 %v3271
    %v3537 = vunpack.c.h.b16 %v3271
    %v3538 = vunpack.c.l.b16 %v3272
    %v3539 = vunpack.c.l.b16 %v3273
    %v3540 = vunpack.c.h.b16 %v3273
    %v3541 = vunpack.c.l.b16 %v3274
    %v3542 = vunpack.c.l.b16 %v3275
    %v3543 = vunpack.c.h.b16 %v3275
    %v3544 = vunpack.c.l.b16 %v3276
    %v3545 = vpack.c.b16 %v3404, %v3401
    %v3546 = vpack.c.b16 %v3405, %v3402
    %v3547 = vpack.c.b16 %v3406, %v3403
    %v3548 = vpack.c.b16 %v3410, %v3407
    %v3549 = vpack.c.b16 %v3411, %v3408
    %v3550 = vpack.c.b16 %v3412, %v3409
    %v3551 = vpack.c.b16 %v3416, %v3413
    %v3552 = vpack.c.b16 %v3417, %v3414
    %v3553 = vpack.c.b16 %v3418, %v3415
    %v3554 = vpack.c.b16 %v3422, %v3419
    %v3555 = vpack.c.b16 %v3423, %v3420
    %v3556 = vpack.c.b16 %v3424, %v3421
    %v3557 = vpack.c.b16 %v3428, %v3425
    %v3558 = vpack.c.b16 %v3429, %v3426
    %v3559 = vpack.c.b16 %v3430, %v3427
    %v3560 = vpack.c.b16 %v3434, %v3431
    %v3561 = vpack.c.b16 %v3435, %v3432
    %v3562 = vpack.c.b16 %v3436, %v3433
    %v3563 = vpack.c.b16 %v3440, %v3437
    %v3564 = vpack.c.b16 %v3441, %v3438
    %v3565 = vpack.c.b16 %v3442, %v3439
    %v3566 = vpack.c.b16 %v3446, %v3443
    %v3567 = vpack.c.b16 %v3447, %v3444
    %v3568 = vpack.c.b16 %v3448, %v3445
    %v3569 = vpack.c.b16 %v3452, %v3449
    %v3570 = vpack.c.b16 %v3453, %v3450
    %v3571 = vpack.c.b16 %v3454, %v3451
    %v3572 = vpack.c.b16 %v3458, %v3455
    %v3573 = vpack.c.b16 %v3459, %v3456
    %v3574 = vpack.c.b16 %v3460, %v3457
    %v3575 = vpack.c.b16 %v3464, %v3461
    %v3576 = vpack.c.b16 %v3465, %v3462
    %v3577 = vpack.c.b16 %v3466, %v3463
    %v3578 = vpack.c.b16 %v3470, %v3467
    %v3579 = vpack.c.b16 %v3471, %v3468
    %v3580 = vpack.c.b16 %v3472, %v3469
    %v3581 = vpack.c.b16 %v3476, %v3473
    %v3582 = vpack.c.b16 %v3477, %v3474
    %v3583 = vpack.c.b16 %v3478, %v3475
    %v3584 = vpack.c.b16 %v3482, %v3479
    %v3585 = vpack.c.b16 %v3483, %v3480
    %v3586 = vpack.c.b16 %v3484, %v3481
    %v3587 = vpack.c.b16 %v3488, %v3485
    %v3588 = vpack.c.b16 %v3489, %v3486
    %v3589 = vpack.c.b16 %v3490, %v3487
    %v3590 = vpack.c.b16 %v3494, %v3491
    %v3591 = vpack.c.b16 %v3495, %v3492
    %v3592 = vpack.c.b16 %v3496, %v3493
    %v3593 = vpack.c.b16 %v3500, %v3497
    %v3594 = vpack.c.b16 %v3501, %v3498
    %v3595 = vpack.c.b16 %v3502, %v3499
    %v3596 = vpack.c.b16 %v3506, %v3503
    %v3597 = vpack.c.b16 %v3507, %v3504
    %v3598 = vpack.c.b16 %v3508, %v3505
    %v3599 = vpack.c.b16 %v3512, %v3509
    %v3600 = vpack.c.b16 %v3513, %v3510
    %v3601 = vpack.c.b16 %v3514, %v3511
    %v3602 = vpack.c.b16 %v3518, %v3515
    %v3603 = vpack.c.b16 %v3519, %v3516
    %v3604 = vpack.c.b16 %v3520, %v3517
    %v3605 = vpack.c.b16 %v3524, %v3521
    %v3606 = vpack.c.b16 %v3525, %v3522
    %v3607 = vpack.c.b16 %v3526, %v3523
    %v3608 = vpack.c.b16 %v3530, %v3527
    %v3609 = vpack.c.b16 %v3531, %v3528
    %v3610 = vpack.c.b16 %v3532, %v3529
    %v3611 = vpack.c.b16 %v3536, %v3533
    %v3612 = vpack.c.b16 %v3537, %v3534
    %v3613 = vpack.c.b16 %v3538, %v3535
    %v3614 = vpack.c.b16 %v3542, %v3539
    %v3615 = vpack.c.b16 %v3543, %v3540
    %v3616 = vpack.c.b16 %v3544, %v3541
    %3689 = vmatprep.subr.bf16.mxu0 %v3567
    %3690 = vmatpush1.bf16.msra.mxu0 %v3566
    %3691 = vmatprep.subr.bf16.mxu0 %v3564
    %3692 = vmatpush1.bf16.msra.mxu0 %v3563
    %3693 = vmatprep.subr.bf16.mxu0 %v3561
    %3694 = vmatpush1.bf16.msra.mxu0 %v3560
    %3695 = vmatprep.subr.bf16.mxu0 %v3558
    %3696 = vmatpush1.bf16.msra.mxu0 %v3557
    %3697 = vmatprep.subr.bf16.mxu0 %v3555
    %3698 = vmatpush1.bf16.msra.mxu0 %v3554
    %3699 = vmatprep.subr.bf16.mxu0 %v3552
    %3700 = vmatpush1.bf16.msra.mxu0 %v3551
    %3701 = vmatprep.subr.bf16.mxu0 %v3549
    %3702 = vmatpush1.bf16.msra.mxu0 %v3548
    %3703 = vmatprep.subr.bf16.mxu0 %v3546
    %3704 = vmatpush1.bf16.msra.mxu0 %v3545
    %3705 = vmatprep.subr.bf16.mxu0 %v3591
    %3706 = vmatpush2.bf16.msra.mxu0 %v3590
    %3707 = vmatprep.subr.bf16.mxu0 %v3588
    %3708 = vmatpush2.bf16.msra.mxu0 %v3587
    %3709 = vmatprep.subr.bf16.mxu0 %v3585
    %3710 = vmatpush2.bf16.msra.mxu0 %v3584
    %3711 = vmatprep.subr.bf16.mxu0 %v3582
    %3712 = vmatpush2.bf16.msra.mxu0 %v3581
    %3713 = vmatprep.subr.bf16.mxu0 %v3579
    %3714 = vmatpush2.bf16.msra.mxu0 %v3578
    %3715 = vmatprep.subr.bf16.mxu0 %v3576
    %3716 = vmatpush2.bf16.msra.mxu0 %v3575
    %3717 = vmatprep.subr.bf16.mxu0 %v3573
    %3718 = vmatpush2.bf16.msra.mxu0 %v3572
    %3719 = vmatprep.subr.bf16.mxu0 %v3570
    %3720 = vmatpush2.bf16.msra.mxu0 %v3569
    %3721 = vmatprep.mubr.bf16.mxu0 %v3179
    %3722 = vmatmul.mubr.bf16.gmra.mxu0 %v3178
    %v3723 = vpop.f32.mrf.mxu0
    %v3724 = vadd.f32 %v3296, %v3723
    %v3725 = vpop.f32.mrf.mxu0
    %v3726 = vadd.f32 %v3300, %v3725
    %v3727 = vpop.f32.mrf.mxu0
    %v3728 = vpop.f32.mrf.mxu0
    %3729 = vdwg.mxu0
    %3730 = vmatprep.subr.bf16.mxu0 %v3615
    %3731 = vmatpush1.bf16.msra.mxu0 %v3614
    %3732 = vmatprep.subr.bf16.mxu0 %v3612
    %3733 = vmatpush1.bf16.msra.mxu0 %v3611
    %3734 = vmatprep.subr.bf16.mxu0 %v3609
    %3735 = vmatpush1.bf16.msra.mxu0 %v3608
    %3736 = vmatprep.subr.bf16.mxu0 %v3606
    %3737 = vmatpush1.bf16.msra.mxu0 %v3605
    %3738 = vmatprep.subr.bf16.mxu0 %v3603
    %3739 = vmatpush1.bf16.msra.mxu0 %v3602
    %3740 = vmatprep.subr.bf16.mxu0 %v3600
    %3741 = vmatpush1.bf16.msra.mxu0 %v3599
    %3742 = vmatprep.subr.bf16.mxu0 %v3597
    %3743 = vmatpush1.bf16.msra.mxu0 %v3596
    %3744 = vmatprep.subr.bf16.mxu0 %v3594
    %3745 = vmatpush1.bf16.msra.mxu0 %v3593
    %3746 = vmatprep.subr.bf16.mxu0 0
    %3747 = vmatpush2.bf16.msra.mxu0 0
    %3748 = vmatprep.subr.bf16.mxu0 0
    %3749 = vmatpush2.bf16.msra.mxu0 0
    %3750 = vmatprep.subr.bf16.mxu0 0
    %3751 = vmatpush2.bf16.msra.mxu0 0
    %3752 = vmatprep.subr.bf16.mxu0 0
    %3753 = vmatpush2.bf16.msra.mxu0 0
    %3754 = vmatprep.subr.bf16.mxu0 0
    %3755 = vmatpush2.bf16.msra.mxu0 0
    %3756 = vmatprep.subr.bf16.mxu0 0
    %3757 = vmatpush2.bf16.msra.mxu0 0
    %3758 = vmatprep.subr.bf16.mxu0 0
    %3759 = vmatpush2.bf16.msra.mxu0 0
    %3760 = vmatprep.subr.bf16.mxu0 0
    %3761 = vmatpush2.bf16.msra.mxu0 0
    %3762 = vmatprep.mubr.bf16.mxu0 0
    %3763 = vmatmul.mubr.bf16.gmra.mxu0 %v3180
    %v3764 = vpop.f32.mrf.mxu0
    %v3765 = vadd.f32 %v3724, %v3764
    %v3766 = vpop.f32.mrf.mxu0
    %v3767 = vadd.f32 %v3726, %v3766
    %v3768 = vpop.f32.mrf.mxu0
    %v3769 = vpop.f32.mrf.mxu0
    %3770 = vdwg.mxu0
    %3771 = vmatprep.subr.bf16.mxu0 0
    %3772 = vmatpush1.bf16.msra.mxu0 %v3568
    %3773 = vmatprep.subr.bf16.mxu0 0
    %3774 = vmatpush1.bf16.msra.mxu0 %v3565
    %3775 = vmatprep.subr.bf16.mxu0 0
    %3776 = vmatpush1.bf16.msra.mxu0 %v3562
    %3777 = vmatprep.subr.bf16.mxu0 0
    %3778 = vmatpush1.bf16.msra.mxu0 %v3559
    %3779 = vmatprep.subr.bf16.mxu0 0
    %3780 = vmatpush1.bf16.msra.mxu0 %v3556
    %3781 = vmatprep.subr.bf16.mxu0 0
    %3782 = vmatpush1.bf16.msra.mxu0 %v3553
    %3783 = vmatprep.subr.bf16.mxu0 0
    %3784 = vmatpush1.bf16.msra.mxu0 %v3550
    %3785 = vmatprep.subr.bf16.mxu0 0
    %3786 = vmatpush1.bf16.msra.mxu0 %v3547
    %3787 = vmatprep.subr.bf16.mxu0 0
    %3788 = vmatpush2.bf16.msra.mxu0 %v3592
    %3789 = vmatprep.subr.bf16.mxu0 0
    %3790 = vmatpush2.bf16.msra.mxu0 %v3589
    %3791 = vmatprep.subr.bf16.mxu0 0
    %3792 = vmatpush2.bf16.msra.mxu0 %v3586
    %3793 = vmatprep.subr.bf16.mxu0 0
    %3794 = vmatpush2.bf16.msra.mxu0 %v3583
    %3795 = vmatprep.subr.bf16.mxu0 0
    %3796 = vmatpush2.bf16.msra.mxu0 %v3580
    %3797 = vmatprep.subr.bf16.mxu0 0
    %3798 = vmatpush2.bf16.msra.mxu0 %v3577
    %3799 = vmatprep.subr.bf16.mxu0 0
    %3800 = vmatpush2.bf16.msra.mxu0 %v3574
    %3801 = vmatprep.subr.bf16.mxu0 0
    %3802 = vmatpush2.bf16.msra.mxu0 %v3571
    %3803 = vmatprep.mubr.bf16.mxu0 %v3179
    %3804 = vmatmul.mubr.bf16.gmra.mxu0 %v3178
    %v3805 = vpop.f32.mrf.mxu0
    %v3806 = vadd.f32 %v3304, %v3805
    %v3807 = vpop.f32.mrf.mxu0
    %v3808 = vpop.f32.mrf.mxu0
    %v3809 = vpop.f32.mrf.mxu0
    %3810 = vdwg.mxu0
    %3811 = vmatprep.subr.bf16.mxu0 0
    %3812 = vmatpush1.bf16.msra.mxu0 %v3616
    %3813 = vmatprep.subr.bf16.mxu0 0
    %3814 = vmatpush1.bf16.msra.mxu0 %v3613
    %3815 = vmatprep.subr.bf16.mxu0 0
    %3816 = vmatpush1.bf16.msra.mxu0 %v3610
    %3817 = vmatprep.subr.bf16.mxu0 0
    %3818 = vmatpush1.bf16.msra.mxu0 %v3607
    %3819 = vmatprep.subr.bf16.mxu0 0
    %3820 = vmatpush1.bf16.msra.mxu0 %v3604
    %3821 = vmatprep.subr.bf16.mxu0 0
    %3822 = vmatpush1.bf16.msra.mxu0 %v3601
    %3823 = vmatprep.subr.bf16.mxu0 0
    %3824 = vmatpush1.bf16.msra.mxu0 %v3598
    %3825 = vmatprep.subr.bf16.mxu0 0
    %3826 = vmatpush1.bf16.msra.mxu0 %v3595
    %3827 = vmatprep.subr.bf16.mxu0 0
    %3828 = vmatpush2.bf16.msra.mxu0 0
    %3829 = vmatprep.subr.bf16.mxu0 0
    %3830 = vmatpush2.bf16.msra.mxu0 0
    %3831 = vmatprep.subr.bf16.mxu0 0
    %3832 = vmatpush2.bf16.msra.mxu0 0
    %3833 = vmatprep.subr.bf16.mxu0 0
    %3834 = vmatpush2.bf16.msra.mxu0 0
    %3835 = vmatprep.subr.bf16.mxu0 0
    %3836 = vmatpush2.bf16.msra.mxu0 0
    %3837 = vmatprep.subr.bf16.mxu0 0
    %3838 = vmatpush2.bf16.msra.mxu0 0
    %3839 = vmatprep.subr.bf16.mxu0 0
    %3840 = vmatpush2.bf16.msra.mxu0 0
    %3841 = vmatprep.subr.bf16.mxu0 0
    %3842 = vmatpush2.bf16.msra.mxu0 0
    %3843 = vmatprep.mubr.bf16.mxu0 0
    %3844 = vmatmul.mubr.bf16.gmra.mxu0 %v3180
    %v3845 = vpop.f32.mrf.mxu0
    %v3846 = vadd.f32 %v3806, %v3845
    %v3847 = vpop.f32.mrf.mxu0
    %v3848 = vpop.f32.mrf.mxu0
    %v3849 = vpop.f32.mrf.mxu0
    %3850 = vdwg.mxu0
    %v3851 = vpack.c.bf16 %v3007, %v3007
    %v3852 = vld [vmem:[#allocation18] sm:$0xff]
    %v3853 = vld [vmem:[#allocation18 + $0x8] sm:$0xf]
    %v3854 = vld [vmem:[#allocation18 + $0xc] sm:$0xff]
    %v3855 = vld [vmem:[#allocation18 + $0x14] sm:$0xf]
    %v3856 = vld [vmem:[#allocation18 + $0x18] sm:$0xff]
    %v3857 = vld [vmem:[#allocation18 + $0x20] sm:$0xf]
    %v3858 = vld [vmem:[#allocation18 + $0x24] sm:$0xff]
    %v3859 = vld [vmem:[#allocation18 + $0x2c] sm:$0xf]
    %v3860 = vld [vmem:[#allocation18 + $0x30] sm:$0xff]
    %v3861 = vld [vmem:[#allocation18 + $0x38] sm:$0xf]
    %v3862 = vld [vmem:[#allocation18 + $0x3c] sm:$0xff]
    %v3863 = vld [vmem:[#allocation18 + $0x44] sm:$0xf]
    %v3864 = vld [vmem:[#allocation18 + $0x48] sm:$0xff]
    %v3865 = vld [vmem:[#allocation18 + $0x50] sm:$0xf]
    %v3866 = vld [vmem:[#allocation18 + $0x54] sm:$0xff]
    %v3867 = vld [vmem:[#allocation18 + $0x5c] sm:$0xf]
    %v3868 = vld [vmem:[#allocation18 + $0x60] sm:$0xff]
    %v3869 = vld [vmem:[#allocation18 + $0x68] sm:$0xf]
    %v3870 = vld [vmem:[#allocation18 + $0x6c] sm:$0xff]
    %v3871 = vld [vmem:[#allocation18 + $0x74] sm:$0xf]
    %v3872 = vld [vmem:[#allocation18 + $0x78] sm:$0xff]
    %v3873 = vld [vmem:[#allocation18 + $0x80] sm:$0xf]
    %v3874 = vld [vmem:[#allocation18 + $0x84] sm:$0xff]
    %v3875 = vld [vmem:[#allocation18 + $0x8c] sm:$0xf]
    %v3876 = vld [vmem:[#allocation18 + $0x90] sm:$0xff]
    %v3877 = vld [vmem:[#allocation18 + $0x98] sm:$0xf]
    %v3878 = vld [vmem:[#allocation18 + $0x9c] sm:$0xff]
    %v3879 = vld [vmem:[#allocation18 + $0xa4] sm:$0xf]
    %v3880 = vld [vmem:[#allocation18 + $0xa8] sm:$0xff]
    %v3881 = vld [vmem:[#allocation18 + $0xb0] sm:$0xf]
    %v3882 = vld [vmem:[#allocation18 + $0xb4] sm:$0xff]
    %v3883 = vld [vmem:[#allocation18 + $0xbc] sm:$0xf]
    %v3884 = vlaneseq
    %v3885 = vshrl.u32 %v3884, 7
    %v3886 = vsub.s32 1, %v3885
    %v3887 = vrot.slane %v3161, %v3886
    %v3888 = vlaneseq
    %v3889 = vshrl.u32 %v3888, 7
    %v3890 = vsub.s32 3, %v3889
    %v3891 = vrot.slane %v3161, %v3890
    %v3892 = vlaneseq
    %v3893 = vshrl.u32 %v3892, 7
    %v3894 = vsub.s32 5, %v3893
    %v3895 = vrot.slane %v3161, %v3894
    %v3899 = vlaneseq
    %v3900 = vshrl.u32 %v3899, 7
    %v3901 = vsub.s32 1, %v3900
    %v3902 = vrot.slane %v3887, %v3901
    %v3903 = vlaneseq
    %v3904 = vshrl.u32 %v3903, 7
    %v3905 = vsub.s32 1, %v3904
    %v3906 = vrot.slane %v3891, %v3905
    %v3907 = vlaneseq
    %v3908 = vshrl.u32 %v3907, 7
    %v3909 = vsub.s32 1, %v3908
    %v3910 = vrot.slane %v3895, %v3909
    %v3943 = vunpack.c.l.b16 %v3852
    %v3944 = vunpack.c.h.b16 %v3852
    %v3945 = vunpack.c.l.b16 %v3853
    %v3946 = vunpack.c.l.b16 %v3854
    %v3947 = vunpack.c.h.b16 %v3854
    %v3948 = vunpack.c.l.b16 %v3855
    %v3949 = vunpack.c.l.b16 %v3856
    %v3950 = vunpack.c.h.b16 %v3856
    %v3951 = vunpack.c.l.b16 %v3857
    %v3952 = vunpack.c.l.b16 %v3858
    %v3953 = vunpack.c.h.b16 %v3858
    %v3954 = vunpack.c.l.b16 %v3859
    %v3955 = vunpack.c.l.b16 %v3860
    %v3956 = vunpack.c.h.b16 %v3860
    %v3957 = vunpack.c.l.b16 %v3861
    %v3958 = vunpack.c.l.b16 %v3862
    %v3959 = vunpack.c.h.b16 %v3862
    %v3960 = vunpack.c.l.b16 %v3863
    %v3961 = vunpack.c.l.b16 %v3864
    %v3962 = vunpack.c.h.b16 %v3864
    %v3963 = vunpack.c.l.b16 %v3865
    %v3964 = vunpack.c.l.b16 %v3866
    %v3965 = vunpack.c.h.b16 %v3866
    %v3966 = vunpack.c.l.b16 %v3867
    %v3967 = vunpack.c.l.b16 %v3868
    %v3968 = vunpack.c.h.b16 %v3868
    %v3969 = vunpack.c.l.b16 %v3869
    %v3970 = vunpack.c.l.b16 %v3870
    %v3971 = vunpack.c.h.b16 %v3870
    %v3972 = vunpack.c.l.b16 %v3871
    %v3973 = vunpack.c.l.b16 %v3872
    %v3974 = vunpack.c.h.b16 %v3872
    %v3975 = vunpack.c.l.b16 %v3873
    %v3976 = vunpack.c.l.b16 %v3874
    %v3977 = vunpack.c.h.b16 %v3874
    %v3978 = vunpack.c.l.b16 %v3875
    %v3979 = vunpack.c.l.b16 %v3876
    %v3980 = vunpack.c.h.b16 %v3876
    %v3981 = vunpack.c.l.b16 %v3877
    %v3982 = vunpack.c.l.b16 %v3878
    %v3983 = vunpack.c.h.b16 %v3878
    %v3984 = vunpack.c.l.b16 %v3879
    %v3985 = vunpack.c.l.b16 %v3880
    %v3986 = vunpack.c.h.b16 %v3880
    %v3987 = vunpack.c.l.b16 %v3881
    %v3988 = vunpack.c.l.b16 %v3882
    %v3989 = vunpack.c.h.b16 %v3882
    %v3990 = vunpack.c.l.b16 %v3883
    %v3991 = vpack.c.b16 %v3946, %v3943
    %v3992 = vpack.c.b16 %v3947, %v3944
    %v3993 = vpack.c.b16 %v3948, %v3945
    %v3994 = vpack.c.b16 %v3952, %v3949
    %v3995 = vpack.c.b16 %v3953, %v3950
    %v3996 = vpack.c.b16 %v3954, %v3951
    %v3997 = vpack.c.b16 %v3958, %v3955
    %v3998 = vpack.c.b16 %v3959, %v3956
    %v3999 = vpack.c.b16 %v3960, %v3957
    %v4000 = vpack.c.b16 %v3964, %v3961
    %v4001 = vpack.c.b16 %v3965, %v3962
    %v4002 = vpack.c.b16 %v3966, %v3963
    %v4003 = vpack.c.b16 %v3970, %v3967
    %v4004 = vpack.c.b16 %v3971, %v3968
    %v4005 = vpack.c.b16 %v3972, %v3969
    %v4006 = vpack.c.b16 %v3976, %v3973
    %v4007 = vpack.c.b16 %v3977, %v3974
    %v4008 = vpack.c.b16 %v3978, %v3975
    %v4009 = vpack.c.b16 %v3982, %v3979
    %v4010 = vpack.c.b16 %v3983, %v3980
    %v4011 = vpack.c.b16 %v3984, %v3981
    %v4012 = vpack.c.b16 %v3988, %v3985
    %v4013 = vpack.c.b16 %v3989, %v3986
    %v4014 = vpack.c.b16 %v3990, %v3987
    %4039 = vmatprep.subr.bf16.mxu0 %v4013
    %4040 = vmatpush1.bf16.msra.mxu0 %v4012
    %4041 = vmatprep.subr.bf16.mxu0 %v4010
    %4042 = vmatpush1.bf16.msra.mxu0 %v4009
    %4043 = vmatprep.subr.bf16.mxu0 %v4007
    %4044 = vmatpush1.bf16.msra.mxu0 %v4006
    %4045 = vmatprep.subr.bf16.mxu0 %v4004
    %4046 = vmatpush1.bf16.msra.mxu0 %v4003
    %4047 = vmatprep.subr.bf16.mxu0 %v4001
    %4048 = vmatpush1.bf16.msra.mxu0 %v4000
    %4049 = vmatprep.subr.bf16.mxu0 %v3998
    %4050 = vmatpush1.bf16.msra.mxu0 %v3997
    %4051 = vmatprep.subr.bf16.mxu0 %v3995
    %4052 = vmatpush1.bf16.msra.mxu0 %v3994
    %4053 = vmatprep.subr.bf16.mxu0 %v3992
    %4054 = vmatpush1.bf16.msra.mxu0 %v3991
    %4055 = vmatprep.subr.bf16.mxu0 0
    %4056 = vmatpush2.bf16.msra.mxu0 0
    %4057 = vmatprep.subr.bf16.mxu0 0
    %4058 = vmatpush2.bf16.msra.mxu0 0
    %4059 = vmatprep.subr.bf16.mxu0 0
    %4060 = vmatpush2.bf16.msra.mxu0 0
    %4061 = vmatprep.subr.bf16.mxu0 0
    %4062 = vmatpush2.bf16.msra.mxu0 0
    %4063 = vmatprep.subr.bf16.mxu0 0
    %4064 = vmatpush2.bf16.msra.mxu0 0
    %4065 = vmatprep.subr.bf16.mxu0 0
    %4066 = vmatpush2.bf16.msra.mxu0 0
    %4067 = vmatprep.subr.bf16.mxu0 0
    %4068 = vmatpush2.bf16.msra.mxu0 0
    %4069 = vmatprep.subr.bf16.mxu0 0
    %4070 = vmatpush2.bf16.msra.mxu0 0
    %4071 = vmatprep.mubr.bf16.mxu0 0
    %4072 = vmatmul.mubr.bf16.gmra.mxu0 %v3851
    %v4073 = vpop.f32.mrf.mxu0
    %v4074 = vadd.f32 %v3902, %v4073
    %v4075 = vpop.f32.mrf.mxu0
    %v4076 = vadd.f32 %v3906, %v4075
    %v4077 = vpop.f32.mrf.mxu0
    %v4078 = vpop.f32.mrf.mxu0
    %4079 = vdwg.mxu0
    %4080 = vmatprep.subr.bf16.mxu0 0
    %4081 = vmatpush1.bf16.msra.mxu0 %v4014
    %4082 = vmatprep.subr.bf16.mxu0 0
    %4083 = vmatpush1.bf16.msra.mxu0 %v4011
    %4084 = vmatprep.subr.bf16.mxu0 0
    %4085 = vmatpush1.bf16.msra.mxu0 %v4008
    %4086 = vmatprep.subr.bf16.mxu0 0
    %4087 = vmatpush1.bf16.msra.mxu0 %v4005
    %4088 = vmatprep.subr.bf16.mxu0 0
    %4089 = vmatpush1.bf16.msra.mxu0 %v4002
    %4090 = vmatprep.subr.bf16.mxu0 0
    %4091 = vmatpush1.bf16.msra.mxu0 %v3999
    %4092 = vmatprep.subr.bf16.mxu0 0
    %4093 = vmatpush1.bf16.msra.mxu0 %v3996
    %4094 = vmatprep.subr.bf16.mxu0 0
    %4095 = vmatpush1.bf16.msra.mxu0 %v3993
    %4096 = vmatprep.subr.bf16.mxu0 0
    %4097 = vmatpush2.bf16.msra.mxu0 0
    %4098 = vmatprep.subr.bf16.mxu0 0
    %4099 = vmatpush2.bf16.msra.mxu0 0
    %4100 = vmatprep.subr.bf16.mxu0 0
    %4101 = vmatpush2.bf16.msra.mxu0 0
    %4102 = vmatprep.subr.bf16.mxu0 0
    %4103 = vmatpush2.bf16.msra.mxu0 0
    %4104 = vmatprep.subr.bf16.mxu0 0
    %4105 = vmatpush2.bf16.msra.mxu0 0
    %4106 = vmatprep.subr.bf16.mxu0 0
    %4107 = vmatpush2.bf16.msra.mxu0 0
    %4108 = vmatprep.subr.bf16.mxu0 0
    %4109 = vmatpush2.bf16.msra.mxu0 0
    %4110 = vmatprep.subr.bf16.mxu0 0
    %4111 = vmatpush2.bf16.msra.mxu0 0
    %4112 = vmatprep.mubr.bf16.mxu0 0
    %4113 = vmatmul.mubr.bf16.gmra.mxu0 %v3851
    %v4114 = vpop.f32.mrf.mxu0
    %v4115 = vadd.f32 %v3910, %v4114
    %v4116 = vpop.f32.mrf.mxu0
    %v4117 = vpop.f32.mrf.mxu0
    %v4118 = vpop.f32.mrf.mxu0
    %4119 = vdwg.mxu0
    %v4120 = vadd.f32 %v3765, %v4074
    %v4121 = vxor.u32 %v4120, 2147483648
    %v4122 = vmul.f32 %v4121, 1.442695
    %v4123 = vpow.pop %v4122
    %v4124 = vadd.f32 %v4123, 1.0
    %v4125 = vrcp.pop %v4124
    %v4126 = vmul.f32 1.0, %v4125
    %v4127 = vadd.f32 %v3767, %v4076
    %v4128 = vxor.u32 %v4127, 2147483648
    %v4129 = vmul.f32 %v4128, 1.442695
    %v4130 = vpow.pop %v4129
    %v4131 = vadd.f32 %v4130, 1.0
    %v4132 = vrcp.pop %v4131
    %v4133 = vmul.f32 1.0, %v4132
    %v4134 = vmul.f32 %v4126, %v4115
    %v4135 = vadd.f32 %v3846, %v4134
    %v4136 = vtanh.pop %v4135
    %v4137 = vsub.f32 1.0, %v4133
    %v4138 = vmul.f32 %v4137, %v4136
    %v4139 = vmul.f32 %v4133, %v3007
    %v4140 = vadd.f32 %v4138, %v4139
    %v4141 = vpack.c.bf16 %v4140, %v4140
    %v4142 = vld [vmem:[#allocation20] sm:$0xf]
    %v4143 = vld [vmem:[#allocation20 + $0x4] sm:$0xf]
    %v4144 = vld [vmem:[#allocation20 + $0x8] sm:$0xf]
    %v4145 = vld [vmem:[#allocation20 + $0xc] sm:$0xf]
    %v4146 = vld [vmem:[#allocation20 + $0x10] sm:$0xf]
    %v4147 = vld [vmem:[#allocation20 + $0x14] sm:$0xf]
    %v4148 = vld [vmem:[#allocation20 + $0x18] sm:$0xf]
    %v4149 = vld [vmem:[#allocation20 + $0x1c] sm:$0xf]
    %v4150 = vld [vmem:[#allocation20 + $0x20] sm:$0xf]
    %v4151 = vld [vmem:[#allocation20 + $0x24] sm:$0xf]
    %v4152 = vld [vmem:[#allocation20 + $0x28] sm:$0xf]
    %v4153 = vld [vmem:[#allocation20 + $0x2c] sm:$0xf]
    %v4154 = vld [vmem:[#allocation20 + $0x30] sm:$0xf]
    %v4155 = vld [vmem:[#allocation20 + $0x34] sm:$0xf]
    %v4156 = vld [vmem:[#allocation20 + $0x38] sm:$0xf]
    %v4157 = vld [vmem:[#allocation20 + $0x3c] sm:$0xf]
    %v4158 = vld [vmem:[%s12] sm:$0x1]
    %v4160 = vlaneseq
    %v4161 = vshrl.u32 %v4160, 7
    %v4162 = vsub.s32 0, %v4161
    %v4163 = vrot.slane %v4158, %v4162
    %v4181 = vunpack.c.l.b16 %v4142
    %v4182 = vunpack.c.l.b16 %v4143
    %v4183 = vunpack.c.l.b16 %v4144
    %v4184 = vunpack.c.l.b16 %v4145
    %v4185 = vunpack.c.l.b16 %v4146
    %v4186 = vunpack.c.l.b16 %v4147
    %v4187 = vunpack.c.l.b16 %v4148
    %v4188 = vunpack.c.l.b16 %v4149
    %v4189 = vunpack.c.l.b16 %v4150
    %v4190 = vunpack.c.l.b16 %v4151
    %v4191 = vunpack.c.l.b16 %v4152
    %v4192 = vunpack.c.l.b16 %v4153
    %v4193 = vunpack.c.l.b16 %v4154
    %v4194 = vunpack.c.l.b16 %v4155
    %v4195 = vunpack.c.l.b16 %v4156
    %v4196 = vunpack.c.l.b16 %v4157
    %v4197 = vpack.c.b16 %v4182, %v4181
    %v4198 = vpack.c.b16 %v4184, %v4183
    %v4199 = vpack.c.b16 %v4186, %v4185
    %v4200 = vpack.c.b16 %v4188, %v4187
    %v4201 = vpack.c.b16 %v4190, %v4189
    %v4202 = vpack.c.b16 %v4192, %v4191
    %v4203 = vpack.c.b16 %v4194, %v4193
    %v4204 = vpack.c.b16 %v4196, %v4195
    %4213 = vmatprep.subr.bf16.mxu0 0
    %4214 = vmatpush1.bf16.msra.mxu0 %v4204
    %4215 = vmatprep.subr.bf16.mxu0 0
    %4216 = vmatpush1.bf16.msra.mxu0 %v4203
    %4217 = vmatprep.subr.bf16.mxu0 0
    %4218 = vmatpush1.bf16.msra.mxu0 %v4202
    %4219 = vmatprep.subr.bf16.mxu0 0
    %4220 = vmatpush1.bf16.msra.mxu0 %v4201
    %4221 = vmatprep.subr.bf16.mxu0 0
    %4222 = vmatpush1.bf16.msra.mxu0 %v4200
    %4223 = vmatprep.subr.bf16.mxu0 0
    %4224 = vmatpush1.bf16.msra.mxu0 %v4199
    %4225 = vmatprep.subr.bf16.mxu0 0
    %4226 = vmatpush1.bf16.msra.mxu0 %v4198
    %4227 = vmatprep.subr.bf16.mxu0 0
    %4228 = vmatpush1.bf16.msra.mxu0 %v4197
    %4229 = vmatprep.subr.bf16.mxu0 0
    %4230 = vmatpush2.bf16.msra.mxu0 0
    %4231 = vmatprep.subr.bf16.mxu0 0
    %4232 = vmatpush2.bf16.msra.mxu0 0
    %4233 = vmatprep.subr.bf16.mxu0 0
    %4234 = vmatpush2.bf16.msra.mxu0 0
    %4235 = vmatprep.subr.bf16.mxu0 0
    %4236 = vmatpush2.bf16.msra.mxu0 0
    %4237 = vmatprep.subr.bf16.mxu0 0
    %4238 = vmatpush2.bf16.msra.mxu0 0
    %4239 = vmatprep.subr.bf16.mxu0 0
    %4240 = vmatpush2.bf16.msra.mxu0 0
    %4241 = vmatprep.subr.bf16.mxu0 0
    %4242 = vmatpush2.bf16.msra.mxu0 0
    %4243 = vmatprep.subr.bf16.mxu0 0
    %4244 = vmatpush2.bf16.msra.mxu0 0
    %4245 = vmatprep.mubr.bf16.mxu0 0
    %4246 = vmatmul.mubr.bf16.gmra.mxu0 %v4141
    %v4247 = vpop.f32.mrf.mxu0
    %v4248 = vadd.f32 %v4163, %v4247
    %v4249 = vpop.f32.mrf.mxu0
    %v4250 = vpop.f32.mrf.mxu0
    %v4251 = vpop.f32.mrf.mxu0
    %4252 = vdwg.mxu0
    %s4253 = scalar_lea.vmem [#allocation21], 16
    %4254 = vst [vmem:[%s4253] sm:$0xff] %v4248
    %4255 = vmax.xlane.f32.xlu0 %v4248
    %v4256 = vpop.xlane.xlu0 %4255
    %vm4257 = vcmp.eq.f32.partialorder %v4248, %v4256
    %v4258 = vsel %vm4257, %v1434, 128
    %v4259 = vand.u32 %v4258, 65535
    %v4260 = vshra.s32 %v4258, 16
    %v4261 = vcvt.s32.f32 %v4259
    %v4262 = vcvt.s32.f32 %v4260
    %4263 = vmin.xlane.f32.xlu0 %v4262
    %v4264 = vpop.xlane.xlu0 %4263
    %vm4265 = vcmp.eq.f32.partialorder %v4262, %v4264
    %v4266 = vsel %vm4265, %v4261, inf
    %4267 = vmin.xlane.f32.xlu0 %v4266
    %v4268 = vpop.xlane.xlu0 %4267
    %v4269 = vcvt.f32.s32 %v4268
    %v4270 = vcvt.f32.s32 %v4264
    %v4271 = vshll.u32 %v4270, 16
    %v4272 = vadd.s32 %v4271, %v4269
    %vm4273 = vcmp.eq.s32.totalorder %v1434, %v4272
    %v4274 = vsel %vm4273, 1, 0
    %v4275 = vcvt.s32.f32 %v4274
    %v4276 = vpack.c.bf16 %v4275, %v4275
    %v4277 = vld [vmem:[#allocation15] sm:$0xff]
    %v4278 = vld [vmem:[#allocation15 + $0x8] sm:$0xff]
    %v4279 = vld [vmem:[#allocation15 + $0x10] sm:$0xff]
    %v4280 = vld [vmem:[#allocation15 + $0x18] sm:$0xff]
    %v4281 = vld [vmem:[#allocation15 + $0x20] sm:$0xff]
    %v4282 = vld [vmem:[#allocation15 + $0x28] sm:$0xff]
    %v4283 = vld [vmem:[#allocation15 + $0x30] sm:$0xff]
    %v4284 = vld [vmem:[#allocation15 + $0x38] sm:$0xff]
    %v4285 = vld [vmem:[#allocation15 + $0x40] sm:$0xff]
    %v4286 = vld [vmem:[#allocation15 + $0x48] sm:$0xff]
    %v4287 = vld [vmem:[#allocation15 + $0x50] sm:$0xff]
    %v4288 = vld [vmem:[#allocation15 + $0x58] sm:$0xff]
    %v4289 = vld [vmem:[#allocation15 + $0x60] sm:$0xff]
    %v4290 = vld [vmem:[#allocation15 + $0x68] sm:$0xff]
    %v4291 = vld [vmem:[#allocation15 + $0x70] sm:$0xff]
    %v4292 = vld [vmem:[#allocation15 + $0x78] sm:$0xff]
    %v4309 = vunpack.c.l.b16 %v4277
    %v4310 = vunpack.c.h.b16 %v4277
    %v4311 = vunpack.c.l.b16 %v4278
    %v4312 = vunpack.c.h.b16 %v4278
    %v4313 = vunpack.c.l.b16 %v4279
    %v4314 = vunpack.c.h.b16 %v4279
    %v4315 = vunpack.c.l.b16 %v4280
    %v4316 = vunpack.c.h.b16 %v4280
    %v4317 = vunpack.c.l.b16 %v4281
    %v4318 = vunpack.c.h.b16 %v4281
    %v4319 = vunpack.c.l.b16 %v4282
    %v4320 = vunpack.c.h.b16 %v4282
    %v4321 = vunpack.c.l.b16 %v4283
    %v4322 = vunpack.c.h.b16 %v4283
    %v4323 = vunpack.c.l.b16 %v4284
    %v4324 = vunpack.c.h.b16 %v4284
    %v4325 = vunpack.c.l.b16 %v4285
    %v4326 = vunpack.c.h.b16 %v4285
    %v4327 = vunpack.c.l.b16 %v4286
    %v4328 = vunpack.c.h.b16 %v4286
    %v4329 = vunpack.c.l.b16 %v4287
    %v4330 = vunpack.c.h.b16 %v4287
    %v4331 = vunpack.c.l.b16 %v4288
    %v4332 = vunpack.c.h.b16 %v4288
    %v4333 = vunpack.c.l.b16 %v4289
    %v4334 = vunpack.c.h.b16 %v4289
    %v4335 = vunpack.c.l.b16 %v4290
    %v4336 = vunpack.c.h.b16 %v4290
    %v4337 = vunpack.c.l.b16 %v4291
    %v4338 = vunpack.c.h.b16 %v4291
    %v4339 = vunpack.c.l.b16 %v4292
    %v4340 = vunpack.c.h.b16 %v4292
    %v4341 = vpack.c.b16 %v4311, %v4309
    %v4342 = vpack.c.b16 %v4312, %v4310
    %v4343 = vpack.c.b16 %v4315, %v4313
    %v4344 = vpack.c.b16 %v4316, %v4314
    %v4345 = vpack.c.b16 %v4319, %v4317
    %v4346 = vpack.c.b16 %v4320, %v4318
    %v4347 = vpack.c.b16 %v4323, %v4321
    %v4348 = vpack.c.b16 %v4324, %v4322
    %v4349 = vpack.c.b16 %v4327, %v4325
    %v4350 = vpack.c.b16 %v4328, %v4326
    %v4351 = vpack.c.b16 %v4331, %v4329
    %v4352 = vpack.c.b16 %v4332, %v4330
    %v4353 = vpack.c.b16 %v4335, %v4333
    %v4354 = vpack.c.b16 %v4336, %v4334
    %v4355 = vpack.c.b16 %v4339, %v4337
    %v4356 = vpack.c.b16 %v4340, %v4338
    %4373 = vmatprep.subr.bf16.mxu0 %v4356
    %4374 = vmatpush1.bf16.msra.mxu0 %v4355
    %4375 = vmatprep.subr.bf16.mxu0 %v4354
    %4376 = vmatpush1.bf16.msra.mxu0 %v4353
    %4377 = vmatprep.subr.bf16.mxu0 %v4352
    %4378 = vmatpush1.bf16.msra.mxu0 %v4351
    %4379 = vmatprep.subr.bf16.mxu0 %v4350
    %4380 = vmatpush1.bf16.msra.mxu0 %v4349
    %4381 = vmatprep.subr.bf16.mxu0 %v4348
    %4382 = vmatpush1.bf16.msra.mxu0 %v4347
    %4383 = vmatprep.subr.bf16.mxu0 %v4346
    %4384 = vmatpush1.bf16.msra.mxu0 %v4345
    %4385 = vmatprep.subr.bf16.mxu0 %v4344
    %4386 = vmatpush1.bf16.msra.mxu0 %v4343
    %4387 = vmatprep.subr.bf16.mxu0 %v4342
    %4388 = vmatpush1.bf16.msra.mxu0 %v4341
    %4389 = vmatprep.subr.bf16.mxu0 0
    %4390 = vmatpush2.bf16.msra.mxu0 0
    %4391 = vmatprep.subr.bf16.mxu0 0
    %4392 = vmatpush2.bf16.msra.mxu0 0
    %4393 = vmatprep.subr.bf16.mxu0 0
    %4394 = vmatpush2.bf16.msra.mxu0 0
    %4395 = vmatprep.subr.bf16.mxu0 0
    %4396 = vmatpush2.bf16.msra.mxu0 0
    %4397 = vmatprep.subr.bf16.mxu0 0
    %4398 = vmatpush2.bf16.msra.mxu0 0
    %4399 = vmatprep.subr.bf16.mxu0 0
    %4400 = vmatpush2.bf16.msra.mxu0 0
    %4401 = vmatprep.subr.bf16.mxu0 0
    %4402 = vmatpush2.bf16.msra.mxu0 0
    %4403 = vmatprep.subr.bf16.mxu0 0
    %4404 = vmatpush2.bf16.msra.mxu0 0
    %4405 = vmatprep.mubr.bf16.mxu0 0
    %4406 = vmatmul.mubr.bf16.gmra.mxu0 %v4276
    %v4407 = vpop.f32.mrf.mxu0
    %v4408 = vadd.f32 0.0, %v4407
    %v4409 = vpop.f32.mrf.mxu0
    %v4410 = vadd.f32 0.0, %v4409
    %v4411 = vpop.f32.mrf.mxu0
    %v4412 = vpop.f32.mrf.mxu0
    %4413 = vdwg.mxu0
    %4414 = vst [vmem:[#allocation3] sm:$0xff] %v4408
    %4415 = vst [vmem:[#allocation3 + $0x8] sm:$0xff] %v4410
    %4416 = vst [vmem:[#allocation2] sm:$0xff] %v4140
    %v4417 = vld [vmem:[#allocation2] sm:$0xff]
    %s4418 = sld [smem:[#allocation4 + $0x3]]
    %v4419 = vstv %s4418
    %vm4420 = vcmp.ne.s32.totalorder %v4419, 0
    %s4421 = scalar_lea.vmem [#allocation8], 48
    %v4422 = vld [vmem:[%s4421] sm:$0xff]
    %v4423 = vld [vmem:[%s4421 + $0x8] sm:$0xff]
    %v4424 = vld [vmem:[#allocation3] sm:$0xff]
    %v4425 = vld [vmem:[#allocation3 + $0x8] sm:$0xff]
    %v4426 = vsel %vm4420, %v4422, %v4424
    %v4427 = vsel %vm4420, %v4423, %v4425
    %v4428 = vld [vmem:[%s7] sm:$0x1]
    %v4430 = vlaneseq
    %v4431 = vshrl.u32 %v4430, 7
    %v4432 = vsub.s32 0, %v4431
    %v4433 = vrot.slane %v4428, %v4432
    %v4435 = vmul.f32 %v4417, %v4433
    %4436 = vadd.xlane.f32.xlu0 %v4435
    %v4437 = vpop.xlane.xlu0 %4436
    %v4438 = vld [vmem:[#allocation12] sm:$0xff]
    %v4439 = vadd.f32 %v4438, %v4437
    %v4440 = vsel %vm201, %v4439, -inf
    %4441 = vmax.xlane.f32.xlu0 %v4440
    %v4442 = vpop.xlane.xlu0 %4441
    %v4443 = vsub.f32 %v4439, %v4442
    %v4444 = vmul.f32 %v4443, 1.442695
    %v4445 = vpow.pop %v4444
    %v4446 = vsel %vm201, %v4445, 0.0
    %4447 = vadd.xlane.f32.xlu0 %v4446
    %v4448 = vpop.xlane.xlu0 %4447
    %v4449 = vrcp.pop %v4448
    %v4450 = vmul.f32 %v4445, %v4449
    %v4451 = vlaneseq
    %v4452 = vshrl.u32 %v4451, 7
    %v4453 = vsub.s32 0, %v4452
    %v4454 = vrot.slane %v4450, %v4453
    %4456 = vbcast.lane.b32.xlu0 %v4454, 256
    %v4457 = vpop.permute.xlu0 %4456
    %v4458 = vlaneseq
    %v4459 = vshrl.u32 %v4458, 7
    %v4460 = vsub.s32 1, %v4459
    %v4461 = vrot.slane %v4450, %v4460
    %4463 = vbcast.lane.b32.xlu0 %v4461, 256
    %v4464 = vpop.permute.xlu0 %4463
    %v4465 = vlaneseq
    %v4466 = vshrl.u32 %v4465, 7
    %v4467 = vsub.s32 2, %v4466
    %v4468 = vrot.slane %v4450, %v4467
    %4470 = vbcast.lane.b32.xlu0 %v4468, 256
    %v4471 = vpop.permute.xlu0 %4470
    %v4472 = vlaneseq
    %v4473 = vshrl.u32 %v4472, 7
    %v4474 = vsub.s32 3, %v4473
    %v4475 = vrot.slane %v4450, %v4474
    %4477 = vbcast.lane.b32.xlu0 %v4475, 256
    %v4478 = vpop.permute.xlu0 %4477
    %v4479 = vlaneseq
    %v4480 = vshrl.u32 %v4479, 7
    %v4481 = vsub.s32 4, %v4480
    %v4482 = vrot.slane %v4450, %v4481
    %4484 = vbcast.lane.b32.xlu0 %v4482, 256
    %v4485 = vpop.permute.xlu0 %4484
    %v4486 = vlaneseq
    %v4487 = vshrl.u32 %v4486, 7
    %v4488 = vsub.s32 5, %v4487
    %v4489 = vrot.slane %v4450, %v4488
    %4491 = vbcast.lane.b32.xlu0 %v4489, 256
    %v4492 = vpop.permute.xlu0 %4491
    %v4493 = vlaneseq
    %v4494 = vshrl.u32 %v4493, 7
    %v4495 = vsub.s32 6, %v4494
    %v4496 = vrot.slane %v4450, %v4495
    %4498 = vbcast.lane.b32.xlu0 %v4496, 256
    %v4499 = vpop.permute.xlu0 %4498
    %v4500 = vlaneseq
    %v4501 = vshrl.u32 %v4500, 7
    %v4502 = vsub.s32 7, %v4501
    %v4503 = vrot.slane %v4450, %v4502
    %4505 = vbcast.lane.b32.xlu0 %v4503, 256
    %v4506 = vpop.permute.xlu0 %4505
    %v4507 = vld [vmem:[#allocation14] sm:$0xff]
    %v4508 = vld [vmem:[#allocation14 + $0x8] sm:$0xff]
    %v4509 = vld [vmem:[#allocation14 + $0x10] sm:$0xff]
    %v4510 = vld [vmem:[#allocation14 + $0x18] sm:$0xff]
    %v4511 = vld [vmem:[#allocation14 + $0x20] sm:$0xff]
    %v4512 = vld [vmem:[#allocation14 + $0x28] sm:$0xff]
    %v4513 = vld [vmem:[#allocation14 + $0x30] sm:$0xff]
    %v4514 = vld [vmem:[#allocation14 + $0x38] sm:$0xff]
    %v4515 = vmul.f32 %v4457, %v4507
    %v4516 = vmul.f32 %v4464, %v4508
    %v4517 = vmul.f32 %v4471, %v4509
    %v4518 = vmul.f32 %v4478, %v4510
    %v4519 = vmul.f32 %v4485, %v4511
    %v4520 = vmul.f32 %v4492, %v4512
    %v4521 = vmul.f32 %v4499, %v4513
    %v4522 = vmul.f32 %v4506, %v4514
    %v4523 = vrot.slane %v4515, 4
    %v4524 = vadd.f32 %v4515, %v4523
    %v4525 = vrot.slane %v4524, 2
    %v4526 = vadd.f32 %v4524, %v4525
    %v4527 = vrot.slane %v4526, 1
    %v4528 = vadd.f32 %v4526, %v4527
    %v4529 = vrot.slane %v4516, 4
    %v4530 = vadd.f32 %v4516, %v4529
    %v4531 = vrot.slane %v4530, 2
    %v4532 = vadd.f32 %v4530, %v4531
    %v4533 = vrot.slane %v4532, 1
    %v4534 = vadd.f32 %v4532, %v4533
    %v4535 = vrot.slane %v4517, 4
    %v4536 = vadd.f32 %v4517, %v4535
    %v4537 = vrot.slane %v4536, 2
    %v4538 = vadd.f32 %v4536, %v4537
    %v4539 = vrot.slane %v4538, 1
    %v4540 = vadd.f32 %v4538, %v4539
    %v4541 = vrot.slane %v4518, 4
    %v4542 = vadd.f32 %v4518, %v4541
    %v4543 = vrot.slane %v4542, 2
    %v4544 = vadd.f32 %v4542, %v4543
    %v4545 = vrot.slane %v4544, 1
    %v4546 = vadd.f32 %v4544, %v4545
    %v4547 = vrot.slane %v4519, 4
    %v4548 = vadd.f32 %v4519, %v4547
    %v4549 = vrot.slane %v4548, 2
    %v4550 = vadd.f32 %v4548, %v4549
    %v4551 = vrot.slane %v4550, 1
    %v4552 = vadd.f32 %v4550, %v4551
    %v4553 = vrot.slane %v4520, 4
    %v4554 = vadd.f32 %v4520, %v4553
    %v4555 = vrot.slane %v4554, 2
    %v4556 = vadd.f32 %v4554, %v4555
    %v4557 = vrot.slane %v4556, 1
    %v4558 = vadd.f32 %v4556, %v4557
    %v4559 = vrot.slane %v4521, 4
    %v4560 = vadd.f32 %v4521, %v4559
    %v4561 = vrot.slane %v4560, 2
    %v4562 = vadd.f32 %v4560, %v4561
    %v4563 = vrot.slane %v4562, 1
    %v4564 = vadd.f32 %v4562, %v4563
    %v4565 = vrot.slane %v4522, 4
    %v4566 = vadd.f32 %v4522, %v4565
    %v4567 = vrot.slane %v4566, 2
    %v4568 = vadd.f32 %v4566, %v4567
    %v4569 = vrot.slane %v4568, 1
    %v4570 = vadd.f32 %v4568, %v4569
    %v4571 = vld [vmem:[%s10] sm:$0x3f]
    %v4580 = vsel %vm342, %v4534, %v4528
    %v4581 = vsel %vm344, %v4540, %v4580
    %v4582 = vsel %vm346, %v4546, %v4581
    %v4583 = vsel %vm348, %v4552, %v4582
    %v4584 = vsel %vm350, %v4558, %v4583
    %v4585 = vsel %vm352, %v4564, %v4584
    %v4586 = vsel %vm354, %v4570, %v4585
    %v4588 = vpack.c.bf16 %v4426, %v4426
    %v4589 = vpack.c.bf16 %v4427, %v4427
    %v4590 = vpack.c.bf16 %v4586, %v4586
    %v4591 = vld [vmem:[#allocation17] sm:$0xff]
    %v4592 = vld [vmem:[#allocation17 + $0x8] sm:$0xf]
    %v4593 = vld [vmem:[#allocation17 + $0xc] sm:$0xff]
    %v4594 = vld [vmem:[#allocation17 + $0x14] sm:$0xf]
    %v4595 = vld [vmem:[#allocation17 + $0x18] sm:$0xff]
    %v4596 = vld [vmem:[#allocation17 + $0x20] sm:$0xf]
    %v4597 = vld [vmem:[#allocation17 + $0x24] sm:$0xff]
    %v4598 = vld [vmem:[#allocation17 + $0x2c] sm:$0xf]
    %v4599 = vld [vmem:[#allocation17 + $0x30] sm:$0xff]
    %v4600 = vld [vmem:[#allocation17 + $0x38] sm:$0xf]
    %v4601 = vld [vmem:[#allocation17 + $0x3c] sm:$0xff]
    %v4602 = vld [vmem:[#allocation17 + $0x44] sm:$0xf]
    %v4603 = vld [vmem:[#allocation17 + $0x48] sm:$0xff]
    %v4604 = vld [vmem:[#allocation17 + $0x50] sm:$0xf]
    %v4605 = vld [vmem:[#allocation17 + $0x54] sm:$0xff]
    %v4606 = vld [vmem:[#allocation17 + $0x5c] sm:$0xf]
    %v4607 = vld [vmem:[#allocation17 + $0x60] sm:$0xff]
    %v4608 = vld [vmem:[#allocation17 + $0x68] sm:$0xf]
    %v4609 = vld [vmem:[#allocation17 + $0x6c] sm:$0xff]
    %v4610 = vld [vmem:[#allocation17 + $0x74] sm:$0xf]
    %v4611 = vld [vmem:[#allocation17 + $0x78] sm:$0xff]
    %v4612 = vld [vmem:[#allocation17 + $0x80] sm:$0xf]
    %v4613 = vld [vmem:[#allocation17 + $0x84] sm:$0xff]
    %v4614 = vld [vmem:[#allocation17 + $0x8c] sm:$0xf]
    %v4615 = vld [vmem:[#allocation17 + $0x90] sm:$0xff]
    %v4616 = vld [vmem:[#allocation17 + $0x98] sm:$0xf]
    %v4617 = vld [vmem:[#allocation17 + $0x9c] sm:$0xff]
    %v4618 = vld [vmem:[#allocation17 + $0xa4] sm:$0xf]
    %v4619 = vld [vmem:[#allocation17 + $0xa8] sm:$0xff]
    %v4620 = vld [vmem:[#allocation17 + $0xb0] sm:$0xf]
    %v4621 = vld [vmem:[#allocation17 + $0xb4] sm:$0xff]
    %v4622 = vld [vmem:[#allocation17 + $0xbc] sm:$0xf]
    %v4623 = vld [vmem:[#allocation17 + $0xc0] sm:$0xff]
    %v4624 = vld [vmem:[#allocation17 + $0xc8] sm:$0xf]
    %v4625 = vld [vmem:[#allocation17 + $0xcc] sm:$0xff]
    %v4626 = vld [vmem:[#allocation17 + $0xd4] sm:$0xf]
    %v4627 = vld [vmem:[#allocation17 + $0xd8] sm:$0xff]
    %v4628 = vld [vmem:[#allocation17 + $0xe0] sm:$0xf]
    %v4629 = vld [vmem:[#allocation17 + $0xe4] sm:$0xff]
    %v4630 = vld [vmem:[#allocation17 + $0xec] sm:$0xf]
    %v4631 = vld [vmem:[#allocation17 + $0xf0] sm:$0xff]
    %v4632 = vld [vmem:[#allocation17 + $0xf8] sm:$0xf]
    %v4633 = vld [vmem:[#allocation17 + $0xfc] sm:$0xff]
    %v4634 = vld [vmem:[#allocation17 + $0x104] sm:$0xf]
    %v4635 = vld [vmem:[#allocation17 + $0x108] sm:$0xff]
    %v4636 = vld [vmem:[#allocation17 + $0x110] sm:$0xf]
    %v4637 = vld [vmem:[#allocation17 + $0x114] sm:$0xff]
    %v4638 = vld [vmem:[#allocation17 + $0x11c] sm:$0xf]
    %v4639 = vld [vmem:[#allocation17 + $0x120] sm:$0xff]
    %v4640 = vld [vmem:[#allocation17 + $0x128] sm:$0xf]
    %v4641 = vld [vmem:[#allocation17 + $0x12c] sm:$0xff]
    %v4642 = vld [vmem:[#allocation17 + $0x134] sm:$0xf]
    %v4643 = vld [vmem:[#allocation17 + $0x138] sm:$0xff]
    %v4644 = vld [vmem:[#allocation17 + $0x140] sm:$0xf]
    %v4645 = vld [vmem:[#allocation17 + $0x144] sm:$0xff]
    %v4646 = vld [vmem:[#allocation17 + $0x14c] sm:$0xf]
    %v4647 = vld [vmem:[#allocation17 + $0x150] sm:$0xff]
    %v4648 = vld [vmem:[#allocation17 + $0x158] sm:$0xf]
    %v4649 = vld [vmem:[#allocation17 + $0x15c] sm:$0xff]
    %v4650 = vld [vmem:[#allocation17 + $0x164] sm:$0xf]
    %v4651 = vld [vmem:[#allocation17 + $0x168] sm:$0xff]
    %v4652 = vld [vmem:[#allocation17 + $0x170] sm:$0xf]
    %v4653 = vld [vmem:[#allocation17 + $0x174] sm:$0xff]
    %v4654 = vld [vmem:[#allocation17 + $0x17c] sm:$0xf]
    %v4655 = vld [vmem:[#allocation17 + $0x180] sm:$0xff]
    %v4656 = vld [vmem:[#allocation17 + $0x188] sm:$0xf]
    %v4657 = vld [vmem:[#allocation17 + $0x18c] sm:$0xff]
    %v4658 = vld [vmem:[#allocation17 + $0x194] sm:$0xf]
    %v4659 = vld [vmem:[#allocation17 + $0x198] sm:$0xff]
    %v4660 = vld [vmem:[#allocation17 + $0x1a0] sm:$0xf]
    %v4661 = vld [vmem:[#allocation17 + $0x1a4] sm:$0xff]
    %v4662 = vld [vmem:[#allocation17 + $0x1ac] sm:$0xf]
    %v4663 = vld [vmem:[#allocation17 + $0x1b0] sm:$0xff]
    %v4664 = vld [vmem:[#allocation17 + $0x1b8] sm:$0xf]
    %v4665 = vld [vmem:[#allocation17 + $0x1bc] sm:$0xff]
    %v4666 = vld [vmem:[#allocation17 + $0x1c4] sm:$0xf]
    %v4667 = vld [vmem:[#allocation17 + $0x1c8] sm:$0xff]
    %v4668 = vld [vmem:[#allocation17 + $0x1d0] sm:$0xf]
    %v4669 = vld [vmem:[#allocation17 + $0x1d4] sm:$0xff]
    %v4670 = vld [vmem:[#allocation17 + $0x1dc] sm:$0xf]
    %v4671 = vld [vmem:[#allocation17 + $0x1e0] sm:$0xff]
    %v4672 = vld [vmem:[#allocation17 + $0x1e8] sm:$0xf]
    %v4673 = vld [vmem:[#allocation17 + $0x1ec] sm:$0xff]
    %v4674 = vld [vmem:[#allocation17 + $0x1f4] sm:$0xf]
    %v4675 = vld [vmem:[#allocation17 + $0x1f8] sm:$0xff]
    %v4676 = vld [vmem:[#allocation17 + $0x200] sm:$0xf]
    %v4677 = vld [vmem:[#allocation17 + $0x204] sm:$0xff]
    %v4678 = vld [vmem:[#allocation17 + $0x20c] sm:$0xf]
    %v4679 = vld [vmem:[#allocation17 + $0x210] sm:$0xff]
    %v4680 = vld [vmem:[#allocation17 + $0x218] sm:$0xf]
    %v4681 = vld [vmem:[#allocation17 + $0x21c] sm:$0xff]
    %v4682 = vld [vmem:[#allocation17 + $0x224] sm:$0xf]
    %v4683 = vld [vmem:[#allocation17 + $0x228] sm:$0xff]
    %v4684 = vld [vmem:[#allocation17 + $0x230] sm:$0xf]
    %v4685 = vld [vmem:[#allocation17 + $0x234] sm:$0xff]
    %v4686 = vld [vmem:[#allocation17 + $0x23c] sm:$0xf]
    %v4688 = vlaneseq
    %v4689 = vshrl.u32 %v4688, 7
    %v4690 = vsub.s32 0, %v4689
    %v4691 = vrot.slane %v4571, %v4690
    %v4692 = vlaneseq
    %v4693 = vshrl.u32 %v4692, 7
    %v4694 = vsub.s32 2, %v4693
    %v4695 = vrot.slane %v4571, %v4694
    %v4696 = vlaneseq
    %v4697 = vshrl.u32 %v4696, 7
    %v4698 = vsub.s32 4, %v4697
    %v4699 = vrot.slane %v4571, %v4698
    %v4703 = vlaneseq
    %v4704 = vshrl.u32 %v4703, 7
    %v4705 = vsub.s32 0, %v4704
    %v4706 = vrot.slane %v4691, %v4705
    %v4707 = vlaneseq
    %v4708 = vshrl.u32 %v4707, 7
    %v4709 = vsub.s32 0, %v4708
    %v4710 = vrot.slane %v4695, %v4709
    %v4711 = vlaneseq
    %v4712 = vshrl.u32 %v4711, 7
    %v4713 = vsub.s32 0, %v4712
    %v4714 = vrot.slane %v4699, %v4713
    %v4811 = vunpack.c.l.b16 %v4591
    %v4812 = vunpack.c.h.b16 %v4591
    %v4813 = vunpack.c.l.b16 %v4592
    %v4814 = vunpack.c.l.b16 %v4593
    %v4815 = vunpack.c.h.b16 %v4593
    %v4816 = vunpack.c.l.b16 %v4594
    %v4817 = vunpack.c.l.b16 %v4595
    %v4818 = vunpack.c.h.b16 %v4595
    %v4819 = vunpack.c.l.b16 %v4596
    %v4820 = vunpack.c.l.b16 %v4597
    %v4821 = vunpack.c.h.b16 %v4597
    %v4822 = vunpack.c.l.b16 %v4598
    %v4823 = vunpack.c.l.b16 %v4599
    %v4824 = vunpack.c.h.b16 %v4599
    %v4825 = vunpack.c.l.b16 %v4600
    %v4826 = vunpack.c.l.b16 %v4601
    %v4827 = vunpack.c.h.b16 %v4601
    %v4828 = vunpack.c.l.b16 %v4602
    %v4829 = vunpack.c.l.b16 %v4603
    %v4830 = vunpack.c.h.b16 %v4603
    %v4831 = vunpack.c.l.b16 %v4604
    %v4832 = vunpack.c.l.b16 %v4605
    %v4833 = vunpack.c.h.b16 %v4605
    %v4834 = vunpack.c.l.b16 %v4606
    %v4835 = vunpack.c.l.b16 %v4607
    %v4836 = vunpack.c.h.b16 %v4607
    %v4837 = vunpack.c.l.b16 %v4608
    %v4838 = vunpack.c.l.b16 %v4609
    %v4839 = vunpack.c.h.b16 %v4609
    %v4840 = vunpack.c.l.b16 %v4610
    %v4841 = vunpack.c.l.b16 %v4611
    %v4842 = vunpack.c.h.b16 %v4611
    %v4843 = vunpack.c.l.b16 %v4612
    %v4844 = vunpack.c.l.b16 %v4613
    %v4845 = vunpack.c.h.b16 %v4613
    %v4846 = vunpack.c.l.b16 %v4614
    %v4847 = vunpack.c.l.b16 %v4615
    %v4848 = vunpack.c.h.b16 %v4615
    %v4849 = vunpack.c.l.b16 %v4616
    %v4850 = vunpack.c.l.b16 %v4617
    %v4851 = vunpack.c.h.b16 %v4617
    %v4852 = vunpack.c.l.b16 %v4618
    %v4853 = vunpack.c.l.b16 %v4619
    %v4854 = vunpack.c.h.b16 %v4619
    %v4855 = vunpack.c.l.b16 %v4620
    %v4856 = vunpack.c.l.b16 %v4621
    %v4857 = vunpack.c.h.b16 %v4621
    %v4858 = vunpack.c.l.b16 %v4622
    %v4859 = vunpack.c.l.b16 %v4623
    %v4860 = vunpack.c.h.b16 %v4623
    %v4861 = vunpack.c.l.b16 %v4624
    %v4862 = vunpack.c.l.b16 %v4625
    %v4863 = vunpack.c.h.b16 %v4625
    %v4864 = vunpack.c.l.b16 %v4626
    %v4865 = vunpack.c.l.b16 %v4627
    %v4866 = vunpack.c.h.b16 %v4627
    %v4867 = vunpack.c.l.b16 %v4628
    %v4868 = vunpack.c.l.b16 %v4629
    %v4869 = vunpack.c.h.b16 %v4629
    %v4870 = vunpack.c.l.b16 %v4630
    %v4871 = vunpack.c.l.b16 %v4631
    %v4872 = vunpack.c.h.b16 %v4631
    %v4873 = vunpack.c.l.b16 %v4632
    %v4874 = vunpack.c.l.b16 %v4633
    %v4875 = vunpack.c.h.b16 %v4633
    %v4876 = vunpack.c.l.b16 %v4634
    %v4877 = vunpack.c.l.b16 %v4635
    %v4878 = vunpack.c.h.b16 %v4635
    %v4879 = vunpack.c.l.b16 %v4636
    %v4880 = vunpack.c.l.b16 %v4637
    %v4881 = vunpack.c.h.b16 %v4637
    %v4882 = vunpack.c.l.b16 %v4638
    %v4883 = vunpack.c.l.b16 %v4639
    %v4884 = vunpack.c.h.b16 %v4639
    %v4885 = vunpack.c.l.b16 %v4640
    %v4886 = vunpack.c.l.b16 %v4641
    %v4887 = vunpack.c.h.b16 %v4641
    %v4888 = vunpack.c.l.b16 %v4642
    %v4889 = vunpack.c.l.b16 %v4643
    %v4890 = vunpack.c.h.b16 %v4643
    %v4891 = vunpack.c.l.b16 %v4644
    %v4892 = vunpack.c.l.b16 %v4645
    %v4893 = vunpack.c.h.b16 %v4645
    %v4894 = vunpack.c.l.b16 %v4646
    %v4895 = vunpack.c.l.b16 %v4647
    %v4896 = vunpack.c.h.b16 %v4647
    %v4897 = vunpack.c.l.b16 %v4648
    %v4898 = vunpack.c.l.b16 %v4649
    %v4899 = vunpack.c.h.b16 %v4649
    %v4900 = vunpack.c.l.b16 %v4650
    %v4901 = vunpack.c.l.b16 %v4651
    %v4902 = vunpack.c.h.b16 %v4651
    %v4903 = vunpack.c.l.b16 %v4652
    %v4904 = vunpack.c.l.b16 %v4653
    %v4905 = vunpack.c.h.b16 %v4653
    %v4906 = vunpack.c.l.b16 %v4654
    %v4907 = vunpack.c.l.b16 %v4655
    %v4908 = vunpack.c.h.b16 %v4655
    %v4909 = vunpack.c.l.b16 %v4656
    %v4910 = vunpack.c.l.b16 %v4657
    %v4911 = vunpack.c.h.b16 %v4657
    %v4912 = vunpack.c.l.b16 %v4658
    %v4913 = vunpack.c.l.b16 %v4659
    %v4914 = vunpack.c.h.b16 %v4659
    %v4915 = vunpack.c.l.b16 %v4660
    %v4916 = vunpack.c.l.b16 %v4661
    %v4917 = vunpack.c.h.b16 %v4661
    %v4918 = vunpack.c.l.b16 %v4662
    %v4919 = vunpack.c.l.b16 %v4663
    %v4920 = vunpack.c.h.b16 %v4663
    %v4921 = vunpack.c.l.b16 %v4664
    %v4922 = vunpack.c.l.b16 %v4665
    %v4923 = vunpack.c.h.b16 %v4665
    %v4924 = vunpack.c.l.b16 %v4666
    %v4925 = vunpack.c.l.b16 %v4667
    %v4926 = vunpack.c.h.b16 %v4667
    %v4927 = vunpack.c.l.b16 %v4668
    %v4928 = vunpack.c.l.b16 %v4669
    %v4929 = vunpack.c.h.b16 %v4669
    %v4930 = vunpack.c.l.b16 %v4670
    %v4931 = vunpack.c.l.b16 %v4671
    %v4932 = vunpack.c.h.b16 %v4671
    %v4933 = vunpack.c.l.b16 %v4672
    %v4934 = vunpack.c.l.b16 %v4673
    %v4935 = vunpack.c.h.b16 %v4673
    %v4936 = vunpack.c.l.b16 %v4674
    %v4937 = vunpack.c.l.b16 %v4675
    %v4938 = vunpack.c.h.b16 %v4675
    %v4939 = vunpack.c.l.b16 %v4676
    %v4940 = vunpack.c.l.b16 %v4677
    %v4941 = vunpack.c.h.b16 %v4677
    %v4942 = vunpack.c.l.b16 %v4678
    %v4943 = vunpack.c.l.b16 %v4679
    %v4944 = vunpack.c.h.b16 %v4679
    %v4945 = vunpack.c.l.b16 %v4680
    %v4946 = vunpack.c.l.b16 %v4681
    %v4947 = vunpack.c.h.b16 %v4681
    %v4948 = vunpack.c.l.b16 %v4682
    %v4949 = vunpack.c.l.b16 %v4683
    %v4950 = vunpack.c.h.b16 %v4683
    %v4951 = vunpack.c.l.b16 %v4684
    %v4952 = vunpack.c.l.b16 %v4685
    %v4953 = vunpack.c.h.b16 %v4685
    %v4954 = vunpack.c.l.b16 %v4686
    %v4955 = vpack.c.b16 %v4814, %v4811
    %v4956 = vpack.c.b16 %v4815, %v4812
    %v4957 = vpack.c.b16 %v4816, %v4813
    %v4958 = vpack.c.b16 %v4820, %v4817
    %v4959 = vpack.c.b16 %v4821, %v4818
    %v4960 = vpack.c.b16 %v4822, %v4819
    %v4961 = vpack.c.b16 %v4826, %v4823
    %v4962 = vpack.c.b16 %v4827, %v4824
    %v4963 = vpack.c.b16 %v4828, %v4825
    %v4964 = vpack.c.b16 %v4832, %v4829
    %v4965 = vpack.c.b16 %v4833, %v4830
    %v4966 = vpack.c.b16 %v4834, %v4831
    %v4967 = vpack.c.b16 %v4838, %v4835
    %v4968 = vpack.c.b16 %v4839, %v4836
    %v4969 = vpack.c.b16 %v4840, %v4837
    %v4970 = vpack.c.b16 %v4844, %v4841
    %v4971 = vpack.c.b16 %v4845, %v4842
    %v4972 = vpack.c.b16 %v4846, %v4843
    %v4973 = vpack.c.b16 %v4850, %v4847
    %v4974 = vpack.c.b16 %v4851, %v4848
    %v4975 = vpack.c.b16 %v4852, %v4849
    %v4976 = vpack.c.b16 %v4856, %v4853
    %v4977 = vpack.c.b16 %v4857, %v4854
    %v4978 = vpack.c.b16 %v4858, %v4855
    %v4979 = vpack.c.b16 %v4862, %v4859
    %v4980 = vpack.c.b16 %v4863, %v4860
    %v4981 = vpack.c.b16 %v4864, %v4861
    %v4982 = vpack.c.b16 %v4868, %v4865
    %v4983 = vpack.c.b16 %v4869, %v4866
    %v4984 = vpack.c.b16 %v4870, %v4867
    %v4985 = vpack.c.b16 %v4874, %v4871
    %v4986 = vpack.c.b16 %v4875, %v4872
    %v4987 = vpack.c.b16 %v4876, %v4873
    %v4988 = vpack.c.b16 %v4880, %v4877
    %v4989 = vpack.c.b16 %v4881, %v4878
    %v4990 = vpack.c.b16 %v4882, %v4879
    %v4991 = vpack.c.b16 %v4886, %v4883
    %v4992 = vpack.c.b16 %v4887, %v4884
    %v4993 = vpack.c.b16 %v4888, %v4885
    %v4994 = vpack.c.b16 %v4892, %v4889
    %v4995 = vpack.c.b16 %v4893, %v4890
    %v4996 = vpack.c.b16 %v4894, %v4891
    %v4997 = vpack.c.b16 %v4898, %v4895
    %v4998 = vpack.c.b16 %v4899, %v4896
    %v4999 = vpack.c.b16 %v4900, %v4897
    %v5000 = vpack.c.b16 %v4904, %v4901
    %v5001 = vpack.c.b16 %v4905, %v4902
    %v5002 = vpack.c.b16 %v4906, %v4903
    %v5003 = vpack.c.b16 %v4910, %v4907
    %v5004 = vpack.c.b16 %v4911, %v4908
    %v5005 = vpack.c.b16 %v4912, %v4909
    %v5006 = vpack.c.b16 %v4916, %v4913
    %v5007 = vpack.c.b16 %v4917, %v4914
    %v5008 = vpack.c.b16 %v4918, %v4915
    %v5009 = vpack.c.b16 %v4922, %v4919
    %v5010 = vpack.c.b16 %v4923, %v4920
    %v5011 = vpack.c.b16 %v4924, %v4921
    %v5012 = vpack.c.b16 %v4928, %v4925
    %v5013 = vpack.c.b16 %v4929, %v4926
    %v5014 = vpack.c.b16 %v4930, %v4927
    %v5015 = vpack.c.b16 %v4934, %v4931
    %v5016 = vpack.c.b16 %v4935, %v4932
    %v5017 = vpack.c.b16 %v4936, %v4933
    %v5018 = vpack.c.b16 %v4940, %v4937
    %v5019 = vpack.c.b16 %v4941, %v4938
    %v5020 = vpack.c.b16 %v4942, %v4939
    %v5021 = vpack.c.b16 %v4946, %v4943
    %v5022 = vpack.c.b16 %v4947, %v4944
    %v5023 = vpack.c.b16 %v4948, %v4945
    %v5024 = vpack.c.b16 %v4952, %v4949
    %v5025 = vpack.c.b16 %v4953, %v4950
    %v5026 = vpack.c.b16 %v4954, %v4951
    %5099 = vmatprep.subr.bf16.mxu0 %v4977
    %5100 = vmatpush1.bf16.msra.mxu0 %v4976
    %5101 = vmatprep.subr.bf16.mxu0 %v4974
    %5102 = vmatpush1.bf16.msra.mxu0 %v4973
    %5103 = vmatprep.subr.bf16.mxu0 %v4971
    %5104 = vmatpush1.bf16.msra.mxu0 %v4970
    %5105 = vmatprep.subr.bf16.mxu0 %v4968
    %5106 = vmatpush1.bf16.msra.mxu0 %v4967
    %5107 = vmatprep.subr.bf16.mxu0 %v4965
    %5108 = vmatpush1.bf16.msra.mxu0 %v4964
    %5109 = vmatprep.subr.bf16.mxu0 %v4962
    %5110 = vmatpush1.bf16.msra.mxu0 %v4961
    %5111 = vmatprep.subr.bf16.mxu0 %v4959
    %5112 = vmatpush1.bf16.msra.mxu0 %v4958
    %5113 = vmatprep.subr.bf16.mxu0 %v4956
    %5114 = vmatpush1.bf16.msra.mxu0 %v4955
    %5115 = vmatprep.subr.bf16.mxu0 %v5001
    %5116 = vmatpush2.bf16.msra.mxu0 %v5000
    %5117 = vmatprep.subr.bf16.mxu0 %v4998
    %5118 = vmatpush2.bf16.msra.mxu0 %v4997
    %5119 = vmatprep.subr.bf16.mxu0 %v4995
    %5120 = vmatpush2.bf16.msra.mxu0 %v4994
    %5121 = vmatprep.subr.bf16.mxu0 %v4992
    %5122 = vmatpush2.bf16.msra.mxu0 %v4991
    %5123 = vmatprep.subr.bf16.mxu0 %v4989
    %5124 = vmatpush2.bf16.msra.mxu0 %v4988
    %5125 = vmatprep.subr.bf16.mxu0 %v4986
    %5126 = vmatpush2.bf16.msra.mxu0 %v4985
    %5127 = vmatprep.subr.bf16.mxu0 %v4983
    %5128 = vmatpush2.bf16.msra.mxu0 %v4982
    %5129 = vmatprep.subr.bf16.mxu0 %v4980
    %5130 = vmatpush2.bf16.msra.mxu0 %v4979
    %5131 = vmatprep.mubr.bf16.mxu0 %v4589
    %5132 = vmatmul.mubr.bf16.gmra.mxu0 %v4588
    %v5133 = vpop.f32.mrf.mxu0
    %v5134 = vadd.f32 %v4706, %v5133
    %v5135 = vpop.f32.mrf.mxu0
    %v5136 = vadd.f32 %v4710, %v5135
    %v5137 = vpop.f32.mrf.mxu0
    %v5138 = vpop.f32.mrf.mxu0
    %5139 = vdwg.mxu0
    %5140 = vmatprep.subr.bf16.mxu0 %v5025
    %5141 = vmatpush1.bf16.msra.mxu0 %v5024
    %5142 = vmatprep.subr.bf16.mxu0 %v5022
    %5143 = vmatpush1.bf16.msra.mxu0 %v5021
    %5144 = vmatprep.subr.bf16.mxu0 %v5019
    %5145 = vmatpush1.bf16.msra.mxu0 %v5018
    %5146 = vmatprep.subr.bf16.mxu0 %v5016
    %5147 = vmatpush1.bf16.msra.mxu0 %v5015
    %5148 = vmatprep.subr.bf16.mxu0 %v5013
    %5149 = vmatpush1.bf16.msra.mxu0 %v5012
    %5150 = vmatprep.subr.bf16.mxu0 %v5010
    %5151 = vmatpush1.bf16.msra.mxu0 %v5009
    %5152 = vmatprep.subr.bf16.mxu0 %v5007
    %5153 = vmatpush1.bf16.msra.mxu0 %v5006
    %5154 = vmatprep.subr.bf16.mxu0 %v5004
    %5155 = vmatpush1.bf16.msra.mxu0 %v5003
    %5156 = vmatprep.subr.bf16.mxu0 0
    %5157 = vmatpush2.bf16.msra.mxu0 0
    %5158 = vmatprep.subr.bf16.mxu0 0
    %5159 = vmatpush2.bf16.msra.mxu0 0
    %5160 = vmatprep.subr.bf16.mxu0 0
    %5161 = vmatpush2.bf16.msra.mxu0 0
    %5162 = vmatprep.subr.bf16.mxu0 0
    %5163 = vmatpush2.bf16.msra.mxu0 0
    %5164 = vmatprep.subr.bf16.mxu0 0
    %5165 = vmatpush2.bf16.msra.mxu0 0
    %5166 = vmatprep.subr.bf16.mxu0 0
    %5167 = vmatpush2.bf16.msra.mxu0 0
    %5168 = vmatprep.subr.bf16.mxu0 0
    %5169 = vmatpush2.bf16.msra.mxu0 0
    %5170 = vmatprep.subr.bf16.mxu0 0
    %5171 = vmatpush2.bf16.msra.mxu0 0
    %5172 = vmatprep.mubr.bf16.mxu0 0
    %5173 = vmatmul.mubr.bf16.gmra.mxu0 %v4590
    %v5174 = vpop.f32.mrf.mxu0
    %v5175 = vadd.f32 %v5134, %v5174
    %v5176 = vpop.f32.mrf.mxu0
    %v5177 = vadd.f32 %v5136, %v5176
    %v5178 = vpop.f32.mrf.mxu0
    %v5179 = vpop.f32.mrf.mxu0
    %5180 = vdwg.mxu0
    %5181 = vmatprep.subr.bf16.mxu0 0
    %5182 = vmatpush1.bf16.msra.mxu0 %v4978
    %5183 = vmatprep.subr.bf16.mxu0 0
    %5184 = vmatpush1.bf16.msra.mxu0 %v4975
    %5185 = vmatprep.subr.bf16.mxu0 0
    %5186 = vmatpush1.bf16.msra.mxu0 %v4972
    %5187 = vmatprep.subr.bf16.mxu0 0
    %5188 = vmatpush1.bf16.msra.mxu0 %v4969
    %5189 = vmatprep.subr.bf16.mxu0 0
    %5190 = vmatpush1.bf16.msra.mxu0 %v4966
    %5191 = vmatprep.subr.bf16.mxu0 0
    %5192 = vmatpush1.bf16.msra.mxu0 %v4963
    %5193 = vmatprep.subr.bf16.mxu0 0
    %5194 = vmatpush1.bf16.msra.mxu0 %v4960
    %5195 = vmatprep.subr.bf16.mxu0 0
    %5196 = vmatpush1.bf16.msra.mxu0 %v4957
    %5197 = vmatprep.subr.bf16.mxu0 0
    %5198 = vmatpush2.bf16.msra.mxu0 %v5002
    %5199 = vmatprep.subr.bf16.mxu0 0
    %5200 = vmatpush2.bf16.msra.mxu0 %v4999
    %5201 = vmatprep.subr.bf16.mxu0 0
    %5202 = vmatpush2.bf16.msra.mxu0 %v4996
    %5203 = vmatprep.subr.bf16.mxu0 0
    %5204 = vmatpush2.bf16.msra.mxu0 %v4993
    %5205 = vmatprep.subr.bf16.mxu0 0
    %5206 = vmatpush2.bf16.msra.mxu0 %v4990
    %5207 = vmatprep.subr.bf16.mxu0 0
    %5208 = vmatpush2.bf16.msra.mxu0 %v4987
    %5209 = vmatprep.subr.bf16.mxu0 0
    %5210 = vmatpush2.bf16.msra.mxu0 %v4984
    %5211 = vmatprep.subr.bf16.mxu0 0
    %5212 = vmatpush2.bf16.msra.mxu0 %v4981
    %5213 = vmatprep.mubr.bf16.mxu0 %v4589
    %5214 = vmatmul.mubr.bf16.gmra.mxu0 %v4588
    %v5215 = vpop.f32.mrf.mxu0
    %v5216 = vadd.f32 %v4714, %v5215
    %v5217 = vpop.f32.mrf.mxu0
    %v5218 = vpop.f32.mrf.mxu0
    %v5219 = vpop.f32.mrf.mxu0
    %5220 = vdwg.mxu0
    %5221 = vmatprep.subr.bf16.mxu0 0
    %5222 = vmatpush1.bf16.msra.mxu0 %v5026
    %5223 = vmatprep.subr.bf16.mxu0 0
    %5224 = vmatpush1.bf16.msra.mxu0 %v5023
    %5225 = vmatprep.subr.bf16.mxu0 0
    %5226 = vmatpush1.bf16.msra.mxu0 %v5020
    %5227 = vmatprep.subr.bf16.mxu0 0
    %5228 = vmatpush1.bf16.msra.mxu0 %v5017
    %5229 = vmatprep.subr.bf16.mxu0 0
    %5230 = vmatpush1.bf16.msra.mxu0 %v5014
    %5231 = vmatprep.subr.bf16.mxu0 0
    %5232 = vmatpush1.bf16.msra.mxu0 %v5011
    %5233 = vmatprep.subr.bf16.mxu0 0
    %5234 = vmatpush1.bf16.msra.mxu0 %v5008
    %5235 = vmatprep.subr.bf16.mxu0 0
    %5236 = vmatpush1.bf16.msra.mxu0 %v5005
    %5237 = vmatprep.subr.bf16.mxu0 0
    %5238 = vmatpush2.bf16.msra.mxu0 0
    %5239 = vmatprep.subr.bf16.mxu0 0
    %5240 = vmatpush2.bf16.msra.mxu0 0
    %5241 = vmatprep.subr.bf16.mxu0 0
    %5242 = vmatpush2.bf16.msra.mxu0 0
    %5243 = vmatprep.subr.bf16.mxu0 0
    %5244 = vmatpush2.bf16.msra.mxu0 0
    %5245 = vmatprep.subr.bf16.mxu0 0
    %5246 = vmatpush2.bf16.msra.mxu0 0
    %5247 = vmatprep.subr.bf16.mxu0 0
    %5248 = vmatpush2.bf16.msra.mxu0 0
    %5249 = vmatprep.subr.bf16.mxu0 0
    %5250 = vmatpush2.bf16.msra.mxu0 0
    %5251 = vmatprep.subr.bf16.mxu0 0
    %5252 = vmatpush2.bf16.msra.mxu0 0
    %5253 = vmatprep.mubr.bf16.mxu0 0
    %5254 = vmatmul.mubr.bf16.gmra.mxu0 %v4590
    %v5255 = vpop.f32.mrf.mxu0
    %v5256 = vadd.f32 %v5216, %v5255
    %v5257 = vpop.f32.mrf.mxu0
    %v5258 = vpop.f32.mrf.mxu0
    %v5259 = vpop.f32.mrf.mxu0
    %5260 = vdwg.mxu0
    %v5261 = vpack.c.bf16 %v4417, %v4417
    %v5262 = vld [vmem:[#allocation18] sm:$0xff]
    %v5263 = vld [vmem:[#allocation18 + $0x8] sm:$0xf]
    %v5264 = vld [vmem:[#allocation18 + $0xc] sm:$0xff]
    %v5265 = vld [vmem:[#allocation18 + $0x14] sm:$0xf]
    %v5266 = vld [vmem:[#allocation18 + $0x18] sm:$0xff]
    %v5267 = vld [vmem:[#allocation18 + $0x20] sm:$0xf]
    %v5268 = vld [vmem:[#allocation18 + $0x24] sm:$0xff]
    %v5269 = vld [vmem:[#allocation18 + $0x2c] sm:$0xf]
    %v5270 = vld [vmem:[#allocation18 + $0x30] sm:$0xff]
    %v5271 = vld [vmem:[#allocation18 + $0x38] sm:$0xf]
    %v5272 = vld [vmem:[#allocation18 + $0x3c] sm:$0xff]
    %v5273 = vld [vmem:[#allocation18 + $0x44] sm:$0xf]
    %v5274 = vld [vmem:[#allocation18 + $0x48] sm:$0xff]
    %v5275 = vld [vmem:[#allocation18 + $0x50] sm:$0xf]
    %v5276 = vld [vmem:[#allocation18 + $0x54] sm:$0xff]
    %v5277 = vld [vmem:[#allocation18 + $0x5c] sm:$0xf]
    %v5278 = vld [vmem:[#allocation18 + $0x60] sm:$0xff]
    %v5279 = vld [vmem:[#allocation18 + $0x68] sm:$0xf]
    %v5280 = vld [vmem:[#allocation18 + $0x6c] sm:$0xff]
    %v5281 = vld [vmem:[#allocation18 + $0x74] sm:$0xf]
    %v5282 = vld [vmem:[#allocation18 + $0x78] sm:$0xff]
    %v5283 = vld [vmem:[#allocation18 + $0x80] sm:$0xf]
    %v5284 = vld [vmem:[#allocation18 + $0x84] sm:$0xff]
    %v5285 = vld [vmem:[#allocation18 + $0x8c] sm:$0xf]
    %v5286 = vld [vmem:[#allocation18 + $0x90] sm:$0xff]
    %v5287 = vld [vmem:[#allocation18 + $0x98] sm:$0xf]
    %v5288 = vld [vmem:[#allocation18 + $0x9c] sm:$0xff]
    %v5289 = vld [vmem:[#allocation18 + $0xa4] sm:$0xf]
    %v5290 = vld [vmem:[#allocation18 + $0xa8] sm:$0xff]
    %v5291 = vld [vmem:[#allocation18 + $0xb0] sm:$0xf]
    %v5292 = vld [vmem:[#allocation18 + $0xb4] sm:$0xff]
    %v5293 = vld [vmem:[#allocation18 + $0xbc] sm:$0xf]
    %v5294 = vlaneseq
    %v5295 = vshrl.u32 %v5294, 7
    %v5296 = vsub.s32 1, %v5295
    %v5297 = vrot.slane %v4571, %v5296
    %v5298 = vlaneseq
    %v5299 = vshrl.u32 %v5298, 7
    %v5300 = vsub.s32 3, %v5299
    %v5301 = vrot.slane %v4571, %v5300
    %v5302 = vlaneseq
    %v5303 = vshrl.u32 %v5302, 7
    %v5304 = vsub.s32 5, %v5303
    %v5305 = vrot.slane %v4571, %v5304
    %v5309 = vlaneseq
    %v5310 = vshrl.u32 %v5309, 7
    %v5311 = vsub.s32 1, %v5310
    %v5312 = vrot.slane %v5297, %v5311
    %v5313 = vlaneseq
    %v5314 = vshrl.u32 %v5313, 7
    %v5315 = vsub.s32 1, %v5314
    %v5316 = vrot.slane %v5301, %v5315
    %v5317 = vlaneseq
    %v5318 = vshrl.u32 %v5317, 7
    %v5319 = vsub.s32 1, %v5318
    %v5320 = vrot.slane %v5305, %v5319
    %v5353 = vunpack.c.l.b16 %v5262
    %v5354 = vunpack.c.h.b16 %v5262
    %v5355 = vunpack.c.l.b16 %v5263
    %v5356 = vunpack.c.l.b16 %v5264
    %v5357 = vunpack.c.h.b16 %v5264
    %v5358 = vunpack.c.l.b16 %v5265
    %v5359 = vunpack.c.l.b16 %v5266
    %v5360 = vunpack.c.h.b16 %v5266
    %v5361 = vunpack.c.l.b16 %v5267
    %v5362 = vunpack.c.l.b16 %v5268
    %v5363 = vunpack.c.h.b16 %v5268
    %v5364 = vunpack.c.l.b16 %v5269
    %v5365 = vunpack.c.l.b16 %v5270
    %v5366 = vunpack.c.h.b16 %v5270
    %v5367 = vunpack.c.l.b16 %v5271
    %v5368 = vunpack.c.l.b16 %v5272
    %v5369 = vunpack.c.h.b16 %v5272
    %v5370 = vunpack.c.l.b16 %v5273
    %v5371 = vunpack.c.l.b16 %v5274
    %v5372 = vunpack.c.h.b16 %v5274
    %v5373 = vunpack.c.l.b16 %v5275
    %v5374 = vunpack.c.l.b16 %v5276
    %v5375 = vunpack.c.h.b16 %v5276
    %v5376 = vunpack.c.l.b16 %v5277
    %v5377 = vunpack.c.l.b16 %v5278
    %v5378 = vunpack.c.h.b16 %v5278
    %v5379 = vunpack.c.l.b16 %v5279
    %v5380 = vunpack.c.l.b16 %v5280
    %v5381 = vunpack.c.h.b16 %v5280
    %v5382 = vunpack.c.l.b16 %v5281
    %v5383 = vunpack.c.l.b16 %v5282
    %v5384 = vunpack.c.h.b16 %v5282
    %v5385 = vunpack.c.l.b16 %v5283
    %v5386 = vunpack.c.l.b16 %v5284
    %v5387 = vunpack.c.h.b16 %v5284
    %v5388 = vunpack.c.l.b16 %v5285
    %v5389 = vunpack.c.l.b16 %v5286
    %v5390 = vunpack.c.h.b16 %v5286
    %v5391 = vunpack.c.l.b16 %v5287
    %v5392 = vunpack.c.l.b16 %v5288
    %v5393 = vunpack.c.h.b16 %v5288
    %v5394 = vunpack.c.l.b16 %v5289
    %v5395 = vunpack.c.l.b16 %v5290
    %v5396 = vunpack.c.h.b16 %v5290
    %v5397 = vunpack.c.l.b16 %v5291
    %v5398 = vunpack.c.l.b16 %v5292
    %v5399 = vunpack.c.h.b16 %v5292
    %v5400 = vunpack.c.l.b16 %v5293
    %v5401 = vpack.c.b16 %v5356, %v5353
    %v5402 = vpack.c.b16 %v5357, %v5354
    %v5403 = vpack.c.b16 %v5358, %v5355
    %v5404 = vpack.c.b16 %v5362, %v5359
    %v5405 = vpack.c.b16 %v5363, %v5360
    %v5406 = vpack.c.b16 %v5364, %v5361
    %v5407 = vpack.c.b16 %v5368, %v5365
    %v5408 = vpack.c.b16 %v5369, %v5366
    %v5409 = vpack.c.b16 %v5370, %v5367
    %v5410 = vpack.c.b16 %v5374, %v5371
    %v5411 = vpack.c.b16 %v5375, %v5372
    %v5412 = vpack.c.b16 %v5376, %v5373
    %v5413 = vpack.c.b16 %v5380, %v5377
    %v5414 = vpack.c.b16 %v5381, %v5378
    %v5415 = vpack.c.b16 %v5382, %v5379
    %v5416 = vpack.c.b16 %v5386, %v5383
    %v5417 = vpack.c.b16 %v5387, %v5384
    %v5418 = vpack.c.b16 %v5388, %v5385
    %v5419 = vpack.c.b16 %v5392, %v5389
    %v5420 = vpack.c.b16 %v5393, %v5390
    %v5421 = vpack.c.b16 %v5394, %v5391
    %v5422 = vpack.c.b16 %v5398, %v5395
    %v5423 = vpack.c.b16 %v5399, %v5396
    %v5424 = vpack.c.b16 %v5400, %v5397
    %5449 = vmatprep.subr.bf16.mxu0 %v5423
    %5450 = vmatpush1.bf16.msra.mxu0 %v5422
    %5451 = vmatprep.subr.bf16.mxu0 %v5420
    %5452 = vmatpush1.bf16.msra.mxu0 %v5419
    %5453 = vmatprep.subr.bf16.mxu0 %v5417
    %5454 = vmatpush1.bf16.msra.mxu0 %v5416
    %5455 = vmatprep.subr.bf16.mxu0 %v5414
    %5456 = vmatpush1.bf16.msra.mxu0 %v5413
    %5457 = vmatprep.subr.bf16.mxu0 %v5411
    %5458 = vmatpush1.bf16.msra.mxu0 %v5410
    %5459 = vmatprep.subr.bf16.mxu0 %v5408
    %5460 = vmatpush1.bf16.msra.mxu0 %v5407
    %5461 = vmatprep.subr.bf16.mxu0 %v5405
    %5462 = vmatpush1.bf16.msra.mxu0 %v5404
    %5463 = vmatprep.subr.bf16.mxu0 %v5402
    %5464 = vmatpush1.bf16.msra.mxu0 %v5401
    %5465 = vmatprep.subr.bf16.mxu0 0
    %5466 = vmatpush2.bf16.msra.mxu0 0
    %5467 = vmatprep.subr.bf16.mxu0 0
    %5468 = vmatpush2.bf16.msra.mxu0 0
    %5469 = vmatprep.subr.bf16.mxu0 0
    %5470 = vmatpush2.bf16.msra.mxu0 0
    %5471 = vmatprep.subr.bf16.mxu0 0
    %5472 = vmatpush2.bf16.msra.mxu0 0
    %5473 = vmatprep.subr.bf16.mxu0 0
    %5474 = vmatpush2.bf16.msra.mxu0 0
    %5475 = vmatprep.subr.bf16.mxu0 0
    %5476 = vmatpush2.bf16.msra.mxu0 0
    %5477 = vmatprep.subr.bf16.mxu0 0
    %5478 = vmatpush2.bf16.msra.mxu0 0
    %5479 = vmatprep.subr.bf16.mxu0 0
    %5480 = vmatpush2.bf16.msra.mxu0 0
    %5481 = vmatprep.mubr.bf16.mxu0 0
    %5482 = vmatmul.mubr.bf16.gmra.mxu0 %v5261
    %v5483 = vpop.f32.mrf.mxu0
    %v5484 = vadd.f32 %v5312, %v5483
    %v5485 = vpop.f32.mrf.mxu0
    %v5486 = vadd.f32 %v5316, %v5485
    %v5487 = vpop.f32.mrf.mxu0
    %v5488 = vpop.f32.mrf.mxu0
    %5489 = vdwg.mxu0
    %5490 = vmatprep.subr.bf16.mxu0 0
    %5491 = vmatpush1.bf16.msra.mxu0 %v5424
    %5492 = vmatprep.subr.bf16.mxu0 0
    %5493 = vmatpush1.bf16.msra.mxu0 %v5421
    %5494 = vmatprep.subr.bf16.mxu0 0
    %5495 = vmatpush1.bf16.msra.mxu0 %v5418
    %5496 = vmatprep.subr.bf16.mxu0 0
    %5497 = vmatpush1.bf16.msra.mxu0 %v5415
    %5498 = vmatprep.subr.bf16.mxu0 0
    %5499 = vmatpush1.bf16.msra.mxu0 %v5412
    %5500 = vmatprep.subr.bf16.mxu0 0
    %5501 = vmatpush1.bf16.msra.mxu0 %v5409
    %5502 = vmatprep.subr.bf16.mxu0 0
    %5503 = vmatpush1.bf16.msra.mxu0 %v5406
    %5504 = vmatprep.subr.bf16.mxu0 0
    %5505 = vmatpush1.bf16.msra.mxu0 %v5403
    %5506 = vmatprep.subr.bf16.mxu0 0
    %5507 = vmatpush2.bf16.msra.mxu0 0
    %5508 = vmatprep.subr.bf16.mxu0 0
    %5509 = vmatpush2.bf16.msra.mxu0 0
    %5510 = vmatprep.subr.bf16.mxu0 0
    %5511 = vmatpush2.bf16.msra.mxu0 0
    %5512 = vmatprep.subr.bf16.mxu0 0
    %5513 = vmatpush2.bf16.msra.mxu0 0
    %5514 = vmatprep.subr.bf16.mxu0 0
    %5515 = vmatpush2.bf16.msra.mxu0 0
    %5516 = vmatprep.subr.bf16.mxu0 0
    %5517 = vmatpush2.bf16.msra.mxu0 0
    %5518 = vmatprep.subr.bf16.mxu0 0
    %5519 = vmatpush2.bf16.msra.mxu0 0
    %5520 = vmatprep.subr.bf16.mxu0 0
    %5521 = vmatpush2.bf16.msra.mxu0 0
    %5522 = vmatprep.mubr.bf16.mxu0 0
    %5523 = vmatmul.mubr.bf16.gmra.mxu0 %v5261
    %v5524 = vpop.f32.mrf.mxu0
    %v5525 = vadd.f32 %v5320, %v5524
    %v5526 = vpop.f32.mrf.mxu0
    %v5527 = vpop.f32.mrf.mxu0
    %v5528 = vpop.f32.mrf.mxu0
    %5529 = vdwg.mxu0
    %v5530 = vadd.f32 %v5175, %v5484
    %v5531 = vxor.u32 %v5530, 2147483648
    %v5532 = vmul.f32 %v5531, 1.442695
    %v5533 = vpow.pop %v5532
    %v5534 = vadd.f32 %v5533, 1.0
    %v5535 = vrcp.pop %v5534
    %v5536 = vmul.f32 1.0, %v5535
    %v5537 = vadd.f32 %v5177, %v5486
    %v5538 = vxor.u32 %v5537, 2147483648
    %v5539 = vmul.f32 %v5538, 1.442695
    %v5540 = vpow.pop %v5539
    %v5541 = vadd.f32 %v5540, 1.0
    %v5542 = vrcp.pop %v5541
    %v5543 = vmul.f32 1.0, %v5542
    %v5544 = vmul.f32 %v5536, %v5525
    %v5545 = vadd.f32 %v5256, %v5544
    %v5546 = vtanh.pop %v5545
    %v5547 = vsub.f32 1.0, %v5543
    %v5548 = vmul.f32 %v5547, %v5546
    %v5549 = vmul.f32 %v5543, %v4417
    %v5550 = vadd.f32 %v5548, %v5549
    %v5551 = vpack.c.bf16 %v5550, %v5550
    %v5552 = vld [vmem:[#allocation20] sm:$0xf]
    %v5553 = vld [vmem:[#allocation20 + $0x4] sm:$0xf]
    %v5554 = vld [vmem:[#allocation20 + $0x8] sm:$0xf]
    %v5555 = vld [vmem:[#allocation20 + $0xc] sm:$0xf]
    %v5556 = vld [vmem:[#allocation20 + $0x10] sm:$0xf]
    %v5557 = vld [vmem:[#allocation20 + $0x14] sm:$0xf]
    %v5558 = vld [vmem:[#allocation20 + $0x18] sm:$0xf]
    %v5559 = vld [vmem:[#allocation20 + $0x1c] sm:$0xf]
    %v5560 = vld [vmem:[#allocation20 + $0x20] sm:$0xf]
    %v5561 = vld [vmem:[#allocation20 + $0x24] sm:$0xf]
    %v5562 = vld [vmem:[#allocation20 + $0x28] sm:$0xf]
    %v5563 = vld [vmem:[#allocation20 + $0x2c] sm:$0xf]
    %v5564 = vld [vmem:[#allocation20 + $0x30] sm:$0xf]
    %v5565 = vld [vmem:[#allocation20 + $0x34] sm:$0xf]
    %v5566 = vld [vmem:[#allocation20 + $0x38] sm:$0xf]
    %v5567 = vld [vmem:[#allocation20 + $0x3c] sm:$0xf]
    %v5568 = vld [vmem:[%s12] sm:$0x1]
    %v5570 = vlaneseq
    %v5571 = vshrl.u32 %v5570, 7
    %v5572 = vsub.s32 0, %v5571
    %v5573 = vrot.slane %v5568, %v5572
    %v5591 = vunpack.c.l.b16 %v5552
    %v5592 = vunpack.c.l.b16 %v5553
    %v5593 = vunpack.c.l.b16 %v5554
    %v5594 = vunpack.c.l.b16 %v5555
    %v5595 = vunpack.c.l.b16 %v5556
    %v5596 = vunpack.c.l.b16 %v5557
    %v5597 = vunpack.c.l.b16 %v5558
    %v5598 = vunpack.c.l.b16 %v5559
    %v5599 = vunpack.c.l.b16 %v5560
    %v5600 = vunpack.c.l.b16 %v5561
    %v5601 = vunpack.c.l.b16 %v5562
    %v5602 = vunpack.c.l.b16 %v5563
    %v5603 = vunpack.c.l.b16 %v5564
    %v5604 = vunpack.c.l.b16 %v5565
    %v5605 = vunpack.c.l.b16 %v5566
    %v5606 = vunpack.c.l.b16 %v5567
    %v5607 = vpack.c.b16 %v5592, %v5591
    %v5608 = vpack.c.b16 %v5594, %v5593
    %v5609 = vpack.c.b16 %v5596, %v5595
    %v5610 = vpack.c.b16 %v5598, %v5597
    %v5611 = vpack.c.b16 %v5600, %v5599
    %v5612 = vpack.c.b16 %v5602, %v5601
    %v5613 = vpack.c.b16 %v5604, %v5603
    %v5614 = vpack.c.b16 %v5606, %v5605
    %5623 = vmatprep.subr.bf16.mxu0 0
    %5624 = vmatpush1.bf16.msra.mxu0 %v5614
    %5625 = vmatprep.subr.bf16.mxu0 0
    %5626 = vmatpush1.bf16.msra.mxu0 %v5613
    %5627 = vmatprep.subr.bf16.mxu0 0
    %5628 = vmatpush1.bf16.msra.mxu0 %v5612
    %5629 = vmatprep.subr.bf16.mxu0 0
    %5630 = vmatpush1.bf16.msra.mxu0 %v5611
    %5631 = vmatprep.subr.bf16.mxu0 0
    %5632 = vmatpush1.bf16.msra.mxu0 %v5610
    %5633 = vmatprep.subr.bf16.mxu0 0
    %5634 = vmatpush1.bf16.msra.mxu0 %v5609
    %5635 = vmatprep.subr.bf16.mxu0 0
    %5636 = vmatpush1.bf16.msra.mxu0 %v5608
    %5637 = vmatprep.subr.bf16.mxu0 0
    %5638 = vmatpush1.bf16.msra.mxu0 %v5607
    %5639 = vmatprep.subr.bf16.mxu0 0
    %5640 = vmatpush2.bf16.msra.mxu0 0
    %5641 = vmatprep.subr.bf16.mxu0 0
    %5642 = vmatpush2.bf16.msra.mxu0 0
    %5643 = vmatprep.subr.bf16.mxu0 0
    %5644 = vmatpush2.bf16.msra.mxu0 0
    %5645 = vmatprep.subr.bf16.mxu0 0
    %5646 = vmatpush2.bf16.msra.mxu0 0
    %5647 = vmatprep.subr.bf16.mxu0 0
    %5648 = vmatpush2.bf16.msra.mxu0 0
    %5649 = vmatprep.subr.bf16.mxu0 0
    %5650 = vmatpush2.bf16.msra.mxu0 0
    %5651 = vmatprep.subr.bf16.mxu0 0
    %5652 = vmatpush2.bf16.msra.mxu0 0
    %5653 = vmatprep.subr.bf16.mxu0 0
    %5654 = vmatpush2.bf16.msra.mxu0 0
    %5655 = vmatprep.mubr.bf16.mxu0 0
    %5656 = vmatmul.mubr.bf16.gmra.mxu0 %v5551
    %v5657 = vpop.f32.mrf.mxu0
    %v5658 = vadd.f32 %v5573, %v5657
    %v5659 = vpop.f32.mrf.mxu0
    %v5660 = vpop.f32.mrf.mxu0
    %v5661 = vpop.f32.mrf.mxu0
    %5662 = vdwg.mxu0
    %s5663 = scalar_lea.vmem [#allocation21], 24
    %5664 = vst [vmem:[%s5663] sm:$0xff] %v5658
    %5665 = vmax.xlane.f32.xlu0 %v5658
    %v5666 = vpop.xlane.xlu0 %5665
    %vm5667 = vcmp.eq.f32.partialorder %v5658, %v5666
    %v5668 = vsel %vm5667, %v1434, 128
    %v5669 = vand.u32 %v5668, 65535
    %v5670 = vshra.s32 %v5668, 16
    %v5671 = vcvt.s32.f32 %v5669
    %v5672 = vcvt.s32.f32 %v5670
    %5673 = vmin.xlane.f32.xlu0 %v5672
    %v5674 = vpop.xlane.xlu0 %5673
    %vm5675 = vcmp.eq.f32.partialorder %v5672, %v5674
    %v5676 = vsel %vm5675, %v5671, inf
    %5677 = vmin.xlane.f32.xlu0 %v5676
    %v5678 = vpop.xlane.xlu0 %5677
    %v5679 = vcvt.f32.s32 %v5678
    %v5680 = vcvt.f32.s32 %v5674
    %v5681 = vshll.u32 %v5680, 16
    %v5682 = vadd.s32 %v5681, %v5679
    %vm5683 = vcmp.eq.s32.totalorder %v1434, %v5682
    %v5684 = vsel %vm5683, 1, 0
    %v5685 = vcvt.s32.f32 %v5684
    %v5686 = vpack.c.bf16 %v5685, %v5685
    %v5687 = vld [vmem:[#allocation15] sm:$0xff]
    %v5688 = vld [vmem:[#allocation15 + $0x8] sm:$0xff]
    %v5689 = vld [vmem:[#allocation15 + $0x10] sm:$0xff]
    %v5690 = vld [vmem:[#allocation15 + $0x18] sm:$0xff]
    %v5691 = vld [vmem:[#allocation15 + $0x20] sm:$0xff]
    %v5692 = vld [vmem:[#allocation15 + $0x28] sm:$0xff]
    %v5693 = vld [vmem:[#allocation15 + $0x30] sm:$0xff]
    %v5694 = vld [vmem:[#allocation15 + $0x38] sm:$0xff]
    %v5695 = vld [vmem:[#allocation15 + $0x40] sm:$0xff]
    %v5696 = vld [vmem:[#allocation15 + $0x48] sm:$0xff]
    %v5697 = vld [vmem:[#allocation15 + $0x50] sm:$0xff]
    %v5698 = vld [vmem:[#allocation15 + $0x58] sm:$0xff]
    %v5699 = vld [vmem:[#allocation15 + $0x60] sm:$0xff]
    %v5700 = vld [vmem:[#allocation15 + $0x68] sm:$0xff]
    %v5701 = vld [vmem:[#allocation15 + $0x70] sm:$0xff]
    %v5702 = vld [vmem:[#allocation15 + $0x78] sm:$0xff]
    %v5719 = vunpack.c.l.b16 %v5687
    %v5720 = vunpack.c.h.b16 %v5687
    %v5721 = vunpack.c.l.b16 %v5688
    %v5722 = vunpack.c.h.b16 %v5688
    %v5723 = vunpack.c.l.b16 %v5689
    %v5724 = vunpack.c.h.b16 %v5689
    %v5725 = vunpack.c.l.b16 %v5690
    %v5726 = vunpack.c.h.b16 %v5690
    %v5727 = vunpack.c.l.b16 %v5691
    %v5728 = vunpack.c.h.b16 %v5691
    %v5729 = vunpack.c.l.b16 %v5692
    %v5730 = vunpack.c.h.b16 %v5692
    %v5731 = vunpack.c.l.b16 %v5693
    %v5732 = vunpack.c.h.b16 %v5693
    %v5733 = vunpack.c.l.b16 %v5694
    %v5734 = vunpack.c.h.b16 %v5694
    %v5735 = vunpack.c.l.b16 %v5695
    %v5736 = vunpack.c.h.b16 %v5695
    %v5737 = vunpack.c.l.b16 %v5696
    %v5738 = vunpack.c.h.b16 %v5696
    %v5739 = vunpack.c.l.b16 %v5697
    %v5740 = vunpack.c.h.b16 %v5697
    %v5741 = vunpack.c.l.b16 %v5698
    %v5742 = vunpack.c.h.b16 %v5698
    %v5743 = vunpack.c.l.b16 %v5699
    %v5744 = vunpack.c.h.b16 %v5699
    %v5745 = vunpack.c.l.b16 %v5700
    %v5746 = vunpack.c.h.b16 %v5700
    %v5747 = vunpack.c.l.b16 %v5701
    %v5748 = vunpack.c.h.b16 %v5701
    %v5749 = vunpack.c.l.b16 %v5702
    %v5750 = vunpack.c.h.b16 %v5702
    %v5751 = vpack.c.b16 %v5721, %v5719
    %v5752 = vpack.c.b16 %v5722, %v5720
    %v5753 = vpack.c.b16 %v5725, %v5723
    %v5754 = vpack.c.b16 %v5726, %v5724
    %v5755 = vpack.c.b16 %v5729, %v5727
    %v5756 = vpack.c.b16 %v5730, %v5728
    %v5757 = vpack.c.b16 %v5733, %v5731
    %v5758 = vpack.c.b16 %v5734, %v5732
    %v5759 = vpack.c.b16 %v5737, %v5735
    %v5760 = vpack.c.b16 %v5738, %v5736
    %v5761 = vpack.c.b16 %v5741, %v5739
    %v5762 = vpack.c.b16 %v5742, %v5740
    %v5763 = vpack.c.b16 %v5745, %v5743
    %v5764 = vpack.c.b16 %v5746, %v5744
    %v5765 = vpack.c.b16 %v5749, %v5747
    %v5766 = vpack.c.b16 %v5750, %v5748
    %5783 = vmatprep.subr.bf16.mxu0 %v5766
    %5784 = vmatpush1.bf16.msra.mxu0 %v5765
    %5785 = vmatprep.subr.bf16.mxu0 %v5764
    %5786 = vmatpush1.bf16.msra.mxu0 %v5763
    %5787 = vmatprep.subr.bf16.mxu0 %v5762
    %5788 = vmatpush1.bf16.msra.mxu0 %v5761
    %5789 = vmatprep.subr.bf16.mxu0 %v5760
    %5790 = vmatpush1.bf16.msra.mxu0 %v5759
    %5791 = vmatprep.subr.bf16.mxu0 %v5758
    %5792 = vmatpush1.bf16.msra.mxu0 %v5757
    %5793 = vmatprep.subr.bf16.mxu0 %v5756
    %5794 = vmatpush1.bf16.msra.mxu0 %v5755
    %5795 = vmatprep.subr.bf16.mxu0 %v5754
    %5796 = vmatpush1.bf16.msra.mxu0 %v5753
    %5797 = vmatprep.subr.bf16.mxu0 %v5752
    %5798 = vmatpush1.bf16.msra.mxu0 %v5751
    %5799 = vmatprep.subr.bf16.mxu0 0
    %5800 = vmatpush2.bf16.msra.mxu0 0
    %5801 = vmatprep.subr.bf16.mxu0 0
    %5802 = vmatpush2.bf16.msra.mxu0 0
    %5803 = vmatprep.subr.bf16.mxu0 0
    %5804 = vmatpush2.bf16.msra.mxu0 0
    %5805 = vmatprep.subr.bf16.mxu0 0
    %5806 = vmatpush2.bf16.msra.mxu0 0
    %5807 = vmatprep.subr.bf16.mxu0 0
    %5808 = vmatpush2.bf16.msra.mxu0 0
    %5809 = vmatprep.subr.bf16.mxu0 0
    %5810 = vmatpush2.bf16.msra.mxu0 0
    %5811 = vmatprep.subr.bf16.mxu0 0
    %5812 = vmatpush2.bf16.msra.mxu0 0
    %5813 = vmatprep.subr.bf16.mxu0 0
    %5814 = vmatpush2.bf16.msra.mxu0 0
    %5815 = vmatprep.mubr.bf16.mxu0 0
    %5816 = vmatmul.mubr.bf16.gmra.mxu0 %v5686
    %v5817 = vpop.f32.mrf.mxu0
    %v5818 = vadd.f32 0.0, %v5817
    %v5819 = vpop.f32.mrf.mxu0
    %v5820 = vadd.f32 0.0, %v5819
    %v5821 = vpop.f32.mrf.mxu0
    %v5822 = vpop.f32.mrf.mxu0
    %5823 = vdwg.mxu0
    %5824 = vst [vmem:[#allocation3] sm:$0xff] %v5818
    %5825 = vst [vmem:[#allocation3 + $0x8] sm:$0xff] %v5820
    %5826 = vst [vmem:[#allocation2] sm:$0xff] %v5550
    %v5827 = vld [vmem:[#allocation2] sm:$0xff]
    %s5828 = sld [smem:[#allocation4 + $0x4]]
    %v5829 = vstv %s5828
    %vm5830 = vcmp.ne.s32.totalorder %v5829, 0
    %s5831 = scalar_lea.vmem [#allocation8], 64
    %v5832 = vld [vmem:[%s5831] sm:$0xff]
    %v5833 = vld [vmem:[%s5831 + $0x8] sm:$0xff]
    %v5834 = vld [vmem:[#allocation3] sm:$0xff]
    %v5835 = vld [vmem:[#allocation3 + $0x8] sm:$0xff]
    %v5836 = vsel %vm5830, %v5832, %v5834
    %v5837 = vsel %vm5830, %v5833, %v5835
    %v5838 = vld [vmem:[%s7] sm:$0x1]
    %v5840 = vlaneseq
    %v5841 = vshrl.u32 %v5840, 7
    %v5842 = vsub.s32 0, %v5841
    %v5843 = vrot.slane %v5838, %v5842
    %v5845 = vmul.f32 %v5827, %v5843
    %5846 = vadd.xlane.f32.xlu0 %v5845
    %v5847 = vpop.xlane.xlu0 %5846
    %v5848 = vld [vmem:[#allocation12] sm:$0xff]
    %v5849 = vadd.f32 %v5848, %v5847
    %v5850 = vsel %vm201, %v5849, -inf
    %5851 = vmax.xlane.f32.xlu0 %v5850
    %v5852 = vpop.xlane.xlu0 %5851
    %v5853 = vsub.f32 %v5849, %v5852
    %v5854 = vmul.f32 %v5853, 1.442695
    %v5855 = vpow.pop %v5854
    %v5856 = vsel %vm201, %v5855, 0.0
    %5857 = vadd.xlane.f32.xlu0 %v5856
    %v5858 = vpop.xlane.xlu0 %5857
    %v5859 = vrcp.pop %v5858
    %v5860 = vmul.f32 %v5855, %v5859
    %v5861 = vlaneseq
    %v5862 = vshrl.u32 %v5861, 7
    %v5863 = vsub.s32 0, %v5862
    %v5864 = vrot.slane %v5860, %v5863
    %5866 = vbcast.lane.b32.xlu0 %v5864, 256
    %v5867 = vpop.permute.xlu0 %5866
    %v5868 = vlaneseq
    %v5869 = vshrl.u32 %v5868, 7
    %v5870 = vsub.s32 1, %v5869
    %v5871 = vrot.slane %v5860, %v5870
    %5873 = vbcast.lane.b32.xlu0 %v5871, 256
    %v5874 = vpop.permute.xlu0 %5873
    %v5875 = vlaneseq
    %v5876 = vshrl.u32 %v5875, 7
    %v5877 = vsub.s32 2, %v5876
    %v5878 = vrot.slane %v5860, %v5877
    %5880 = vbcast.lane.b32.xlu0 %v5878, 256
    %v5881 = vpop.permute.xlu0 %5880
    %v5882 = vlaneseq
    %v5883 = vshrl.u32 %v5882, 7
    %v5884 = vsub.s32 3, %v5883
    %v5885 = vrot.slane %v5860, %v5884
    %5887 = vbcast.lane.b32.xlu0 %v5885, 256
    %v5888 = vpop.permute.xlu0 %5887
    %v5889 = vlaneseq
    %v5890 = vshrl.u32 %v5889, 7
    %v5891 = vsub.s32 4, %v5890
    %v5892 = vrot.slane %v5860, %v5891
    %5894 = vbcast.lane.b32.xlu0 %v5892, 256
    %v5895 = vpop.permute.xlu0 %5894
    %v5896 = vlaneseq
    %v5897 = vshrl.u32 %v5896, 7
    %v5898 = vsub.s32 5, %v5897
    %v5899 = vrot.slane %v5860, %v5898
    %5901 = vbcast.lane.b32.xlu0 %v5899, 256
    %v5902 = vpop.permute.xlu0 %5901
    %v5903 = vlaneseq
    %v5904 = vshrl.u32 %v5903, 7
    %v5905 = vsub.s32 6, %v5904
    %v5906 = vrot.slane %v5860, %v5905
    %5908 = vbcast.lane.b32.xlu0 %v5906, 256
    %v5909 = vpop.permute.xlu0 %5908
    %v5910 = vlaneseq
    %v5911 = vshrl.u32 %v5910, 7
    %v5912 = vsub.s32 7, %v5911
    %v5913 = vrot.slane %v5860, %v5912
    %5915 = vbcast.lane.b32.xlu0 %v5913, 256
    %v5916 = vpop.permute.xlu0 %5915
    %v5917 = vld [vmem:[#allocation14] sm:$0xff]
    %v5918 = vld [vmem:[#allocation14 + $0x8] sm:$0xff]
    %v5919 = vld [vmem:[#allocation14 + $0x10] sm:$0xff]
    %v5920 = vld [vmem:[#allocation14 + $0x18] sm:$0xff]
    %v5921 = vld [vmem:[#allocation14 + $0x20] sm:$0xff]
    %v5922 = vld [vmem:[#allocation14 + $0x28] sm:$0xff]
    %v5923 = vld [vmem:[#allocation14 + $0x30] sm:$0xff]
    %v5924 = vld [vmem:[#allocation14 + $0x38] sm:$0xff]
    %v5925 = vmul.f32 %v5867, %v5917
    %v5926 = vmul.f32 %v5874, %v5918
    %v5927 = vmul.f32 %v5881, %v5919
    %v5928 = vmul.f32 %v5888, %v5920
    %v5929 = vmul.f32 %v5895, %v5921
    %v5930 = vmul.f32 %v5902, %v5922
    %v5931 = vmul.f32 %v5909, %v5923
    %v5932 = vmul.f32 %v5916, %v5924
    %v5933 = vrot.slane %v5925, 4
    %v5934 = vadd.f32 %v5925, %v5933
    %v5935 = vrot.slane %v5934, 2
    %v5936 = vadd.f32 %v5934, %v5935
    %v5937 = vrot.slane %v5936, 1
    %v5938 = vadd.f32 %v5936, %v5937
    %v5939 = vrot.slane %v5926, 4
    %v5940 = vadd.f32 %v5926, %v5939
    %v5941 = vrot.slane %v5940, 2
    %v5942 = vadd.f32 %v5940, %v5941
    %v5943 = vrot.slane %v5942, 1
    %v5944 = vadd.f32 %v5942, %v5943
    %v5945 = vrot.slane %v5927, 4
    %v5946 = vadd.f32 %v5927, %v5945
    %v5947 = vrot.slane %v5946, 2
    %v5948 = vadd.f32 %v5946, %v5947
    %v5949 = vrot.slane %v5948, 1
    %v5950 = vadd.f32 %v5948, %v5949
    %v5951 = vrot.slane %v5928, 4
    %v5952 = vadd.f32 %v5928, %v5951
    %v5953 = vrot.slane %v5952, 2
    %v5954 = vadd.f32 %v5952, %v5953
    %v5955 = vrot.slane %v5954, 1
    %v5956 = vadd.f32 %v5954, %v5955
    %v5957 = vrot.slane %v5929, 4
    %v5958 = vadd.f32 %v5929, %v5957
    %v5959 = vrot.slane %v5958, 2
    %v5960 = vadd.f32 %v5958, %v5959
    %v5961 = vrot.slane %v5960, 1
    %v5962 = vadd.f32 %v5960, %v5961
    %v5963 = vrot.slane %v5930, 4
    %v5964 = vadd.f32 %v5930, %v5963
    %v5965 = vrot.slane %v5964, 2
    %v5966 = vadd.f32 %v5964, %v5965
    %v5967 = vrot.slane %v5966, 1
    %v5968 = vadd.f32 %v5966, %v5967
    %v5969 = vrot.slane %v5931, 4
    %v5970 = vadd.f32 %v5931, %v5969
    %v5971 = vrot.slane %v5970, 2
    %v5972 = vadd.f32 %v5970, %v5971
    %v5973 = vrot.slane %v5972, 1
    %v5974 = vadd.f32 %v5972, %v5973
    %v5975 = vrot.slane %v5932, 4
    %v5976 = vadd.f32 %v5932, %v5975
    %v5977 = vrot.slane %v5976, 2
    %v5978 = vadd.f32 %v5976, %v5977
    %v5979 = vrot.slane %v5978, 1
    %v5980 = vadd.f32 %v5978, %v5979
    %v5981 = vld [vmem:[%s10] sm:$0x3f]
    %v5990 = vsel %vm342, %v5944, %v5938
    %v5991 = vsel %vm344, %v5950, %v5990
    %v5992 = vsel %vm346, %v5956, %v5991
    %v5993 = vsel %vm348, %v5962, %v5992
    %v5994 = vsel %vm350, %v5968, %v5993
    %v5995 = vsel %vm352, %v5974, %v5994
    %v5996 = vsel %vm354, %v5980, %v5995
    %v5998 = vpack.c.bf16 %v5836, %v5836
    %v5999 = vpack.c.bf16 %v5837, %v5837
    %v6000 = vpack.c.bf16 %v5996, %v5996
    %v6001 = vld [vmem:[#allocation17] sm:$0xff]
    %v6002 = vld [vmem:[#allocation17 + $0x8] sm:$0xf]
    %v6003 = vld [vmem:[#allocation17 + $0xc] sm:$0xff]
    %v6004 = vld [vmem:[#allocation17 + $0x14] sm:$0xf]
    %v6005 = vld [vmem:[#allocation17 + $0x18] sm:$0xff]
    %v6006 = vld [vmem:[#allocation17 + $0x20] sm:$0xf]
    %v6007 = vld [vmem:[#allocation17 + $0x24] sm:$0xff]
    %v6008 = vld [vmem:[#allocation17 + $0x2c] sm:$0xf]
    %v6009 = vld [vmem:[#allocation17 + $0x30] sm:$0xff]
    %v6010 = vld [vmem:[#allocation17 + $0x38] sm:$0xf]
    %v6011 = vld [vmem:[#allocation17 + $0x3c] sm:$0xff]
    %v6012 = vld [vmem:[#allocation17 + $0x44] sm:$0xf]
    %v6013 = vld [vmem:[#allocation17 + $0x48] sm:$0xff]
    %v6014 = vld [vmem:[#allocation17 + $0x50] sm:$0xf]
    %v6015 = vld [vmem:[#allocation17 + $0x54] sm:$0xff]
    %v6016 = vld [vmem:[#allocation17 + $0x5c] sm:$0xf]
    %v6017 = vld [vmem:[#allocation17 + $0x60] sm:$0xff]
    %v6018 = vld [vmem:[#allocation17 + $0x68] sm:$0xf]
    %v6019 = vld [vmem:[#allocation17 + $0x6c] sm:$0xff]
    %v6020 = vld [vmem:[#allocation17 + $0x74] sm:$0xf]
    %v6021 = vld [vmem:[#allocation17 + $0x78] sm:$0xff]
    %v6022 = vld [vmem:[#allocation17 + $0x80] sm:$0xf]
    %v6023 = vld [vmem:[#allocation17 + $0x84] sm:$0xff]
    %v6024 = vld [vmem:[#allocation17 + $0x8c] sm:$0xf]
    %v6025 = vld [vmem:[#allocation17 + $0x90] sm:$0xff]
    %v6026 = vld [vmem:[#allocation17 + $0x98] sm:$0xf]
    %v6027 = vld [vmem:[#allocation17 + $0x9c] sm:$0xff]
    %v6028 = vld [vmem:[#allocation17 + $0xa4] sm:$0xf]
    %v6029 = vld [vmem:[#allocation17 + $0xa8] sm:$0xff]
    %v6030 = vld [vmem:[#allocation17 + $0xb0] sm:$0xf]
    %v6031 = vld [vmem:[#allocation17 + $0xb4] sm:$0xff]
    %v6032 = vld [vmem:[#allocation17 + $0xbc] sm:$0xf]
    %v6033 = vld [vmem:[#allocation17 + $0xc0] sm:$0xff]
    %v6034 = vld [vmem:[#allocation17 + $0xc8] sm:$0xf]
    %v6035 = vld [vmem:[#allocation17 + $0xcc] sm:$0xff]
    %v6036 = vld [vmem:[#allocation17 + $0xd4] sm:$0xf]
    %v6037 = vld [vmem:[#allocation17 + $0xd8] sm:$0xff]
    %v6038 = vld [vmem:[#allocation17 + $0xe0] sm:$0xf]
    %v6039 = vld [vmem:[#allocation17 + $0xe4] sm:$0xff]
    %v6040 = vld [vmem:[#allocation17 + $0xec] sm:$0xf]
    %v6041 = vld [vmem:[#allocation17 + $0xf0] sm:$0xff]
    %v6042 = vld [vmem:[#allocation17 + $0xf8] sm:$0xf]
    %v6043 = vld [vmem:[#allocation17 + $0xfc] sm:$0xff]
    %v6044 = vld [vmem:[#allocation17 + $0x104] sm:$0xf]
    %v6045 = vld [vmem:[#allocation17 + $0x108] sm:$0xff]
    %v6046 = vld [vmem:[#allocation17 + $0x110] sm:$0xf]
    %v6047 = vld [vmem:[#allocation17 + $0x114] sm:$0xff]
    %v6048 = vld [vmem:[#allocation17 + $0x11c] sm:$0xf]
    %v6049 = vld [vmem:[#allocation17 + $0x120] sm:$0xff]
    %v6050 = vld [vmem:[#allocation17 + $0x128] sm:$0xf]
    %v6051 = vld [vmem:[#allocation17 + $0x12c] sm:$0xff]
    %v6052 = vld [vmem:[#allocation17 + $0x134] sm:$0xf]
    %v6053 = vld [vmem:[#allocation17 + $0x138] sm:$0xff]
    %v6054 = vld [vmem:[#allocation17 + $0x140] sm:$0xf]
    %v6055 = vld [vmem:[#allocation17 + $0x144] sm:$0xff]
    %v6056 = vld [vmem:[#allocation17 + $0x14c] sm:$0xf]
    %v6057 = vld [vmem:[#allocation17 + $0x150] sm:$0xff]
    %v6058 = vld [vmem:[#allocation17 + $0x158] sm:$0xf]
    %v6059 = vld [vmem:[#allocation17 + $0x15c] sm:$0xff]
    %v6060 = vld [vmem:[#allocation17 + $0x164] sm:$0xf]
    %v6061 = vld [vmem:[#allocation17 + $0x168] sm:$0xff]
    %v6062 = vld [vmem:[#allocation17 + $0x170] sm:$0xf]
    %v6063 = vld [vmem:[#allocation17 + $0x174] sm:$0xff]
    %v6064 = vld [vmem:[#allocation17 + $0x17c] sm:$0xf]
    %v6065 = vld [vmem:[#allocation17 + $0x180] sm:$0xff]
    %v6066 = vld [vmem:[#allocation17 + $0x188] sm:$0xf]
    %v6067 = vld [vmem:[#allocation17 + $0x18c] sm:$0xff]
    %v6068 = vld [vmem:[#allocation17 + $0x194] sm:$0xf]
    %v6069 = vld [vmem:[#allocation17 + $0x198] sm:$0xff]
    %v6070 = vld [vmem:[#allocation17 + $0x1a0] sm:$0xf]
    %v6071 = vld [vmem:[#allocation17 + $0x1a4] sm:$0xff]
    %v6072 = vld [vmem:[#allocation17 + $0x1ac] sm:$0xf]
    %v6073 = vld [vmem:[#allocation17 + $0x1b0] sm:$0xff]
    %v6074 = vld [vmem:[#allocation17 + $0x1b8] sm:$0xf]
    %v6075 = vld [vmem:[#allocation17 + $0x1bc] sm:$0xff]
    %v6076 = vld [vmem:[#allocation17 + $0x1c4] sm:$0xf]
    %v6077 = vld [vmem:[#allocation17 + $0x1c8] sm:$0xff]
    %v6078 = vld [vmem:[#allocation17 + $0x1d0] sm:$0xf]
    %v6079 = vld [vmem:[#allocation17 + $0x1d4] sm:$0xff]
    %v6080 = vld [vmem:[#allocation17 + $0x1dc] sm:$0xf]
    %v6081 = vld [vmem:[#allocation17 + $0x1e0] sm:$0xff]
    %v6082 = vld [vmem:[#allocation17 + $0x1e8] sm:$0xf]
    %v6083 = vld [vmem:[#allocation17 + $0x1ec] sm:$0xff]
    %v6084 = vld [vmem:[#allocation17 + $0x1f4] sm:$0xf]
    %v6085 = vld [vmem:[#allocation17 + $0x1f8] sm:$0xff]
    %v6086 = vld [vmem:[#allocation17 + $0x200] sm:$0xf]
    %v6087 = vld [vmem:[#allocation17 + $0x204] sm:$0xff]
    %v6088 = vld [vmem:[#allocation17 + $0x20c] sm:$0xf]
    %v6089 = vld [vmem:[#allocation17 + $0x210] sm:$0xff]
    %v6090 = vld [vmem:[#allocation17 + $0x218] sm:$0xf]
    %v6091 = vld [vmem:[#allocation17 + $0x21c] sm:$0xff]
    %v6092 = vld [vmem:[#allocation17 + $0x224] sm:$0xf]
    %v6093 = vld [vmem:[#allocation17 + $0x228] sm:$0xff]
    %v6094 = vld [vmem:[#allocation17 + $0x230] sm:$0xf]
    %v6095 = vld [vmem:[#allocation17 + $0x234] sm:$0xff]
    %v6096 = vld [vmem:[#allocation17 + $0x23c] sm:$0xf]
    %v6098 = vlaneseq
    %v6099 = vshrl.u32 %v6098, 7
    %v6100 = vsub.s32 0, %v6099
    %v6101 = vrot.slane %v5981, %v6100
    %v6102 = vlaneseq
    %v6103 = vshrl.u32 %v6102, 7
    %v6104 = vsub.s32 2, %v6103
    %v6105 = vrot.slane %v5981, %v6104
    %v6106 = vlaneseq
    %v6107 = vshrl.u32 %v6106, 7
    %v6108 = vsub.s32 4, %v6107
    %v6109 = vrot.slane %v5981, %v6108
    %v6113 = vlaneseq
    %v6114 = vshrl.u32 %v6113, 7
    %v6115 = vsub.s32 0, %v6114
    %v6116 = vrot.slane %v6101, %v6115
    %v6117 = vlaneseq
    %v6118 = vshrl.u32 %v6117, 7
    %v6119 = vsub.s32 0, %v6118
    %v6120 = vrot.slane %v6105, %v6119
    %v6121 = vlaneseq
    %v6122 = vshrl.u32 %v6121, 7
    %v6123 = vsub.s32 0, %v6122
    %v6124 = vrot.slane %v6109, %v6123
    %v6221 = vunpack.c.l.b16 %v6001
    %v6222 = vunpack.c.h.b16 %v6001
    %v6223 = vunpack.c.l.b16 %v6002
    %v6224 = vunpack.c.l.b16 %v6003
    %v6225 = vunpack.c.h.b16 %v6003
    %v6226 = vunpack.c.l.b16 %v6004
    %v6227 = vunpack.c.l.b16 %v6005
    %v6228 = vunpack.c.h.b16 %v6005
    %v6229 = vunpack.c.l.b16 %v6006
    %v6230 = vunpack.c.l.b16 %v6007
    %v6231 = vunpack.c.h.b16 %v6007
    %v6232 = vunpack.c.l.b16 %v6008
    %v6233 = vunpack.c.l.b16 %v6009
    %v6234 = vunpack.c.h.b16 %v6009
    %v6235 = vunpack.c.l.b16 %v6010
    %v6236 = vunpack.c.l.b16 %v6011
    %v6237 = vunpack.c.h.b16 %v6011
    %v6238 = vunpack.c.l.b16 %v6012
    %v6239 = vunpack.c.l.b16 %v6013
    %v6240 = vunpack.c.h.b16 %v6013
    %v6241 = vunpack.c.l.b16 %v6014
    %v6242 = vunpack.c.l.b16 %v6015
    %v6243 = vunpack.c.h.b16 %v6015
    %v6244 = vunpack.c.l.b16 %v6016
    %v6245 = vunpack.c.l.b16 %v6017
    %v6246 = vunpack.c.h.b16 %v6017
    %v6247 = vunpack.c.l.b16 %v6018
    %v6248 = vunpack.c.l.b16 %v6019
    %v6249 = vunpack.c.h.b16 %v6019
    %v6250 = vunpack.c.l.b16 %v6020
    %v6251 = vunpack.c.l.b16 %v6021
    %v6252 = vunpack.c.h.b16 %v6021
    %v6253 = vunpack.c.l.b16 %v6022
    %v6254 = vunpack.c.l.b16 %v6023
    %v6255 = vunpack.c.h.b16 %v6023
    %v6256 = vunpack.c.l.b16 %v6024
    %v6257 = vunpack.c.l.b16 %v6025
    %v6258 = vunpack.c.h.b16 %v6025
    %v6259 = vunpack.c.l.b16 %v6026
    %v6260 = vunpack.c.l.b16 %v6027
    %v6261 = vunpack.c.h.b16 %v6027
    %v6262 = vunpack.c.l.b16 %v6028
    %v6263 = vunpack.c.l.b16 %v6029
    %v6264 = vunpack.c.h.b16 %v6029
    %v6265 = vunpack.c.l.b16 %v6030
    %v6266 = vunpack.c.l.b16 %v6031
    %v6267 = vunpack.c.h.b16 %v6031
    %v6268 = vunpack.c.l.b16 %v6032
    %v6269 = vunpack.c.l.b16 %v6033
    %v6270 = vunpack.c.h.b16 %v6033
    %v6271 = vunpack.c.l.b16 %v6034
    %v6272 = vunpack.c.l.b16 %v6035
    %v6273 = vunpack.c.h.b16 %v6035
    %v6274 = vunpack.c.l.b16 %v6036
    %v6275 = vunpack.c.l.b16 %v6037
    %v6276 = vunpack.c.h.b16 %v6037
    %v6277 = vunpack.c.l.b16 %v6038
    %v6278 = vunpack.c.l.b16 %v6039
    %v6279 = vunpack.c.h.b16 %v6039
    %v6280 = vunpack.c.l.b16 %v6040
    %v6281 = vunpack.c.l.b16 %v6041
    %v6282 = vunpack.c.h.b16 %v6041
    %v6283 = vunpack.c.l.b16 %v6042
    %v6284 = vunpack.c.l.b16 %v6043
    %v6285 = vunpack.c.h.b16 %v6043
    %v6286 = vunpack.c.l.b16 %v6044
    %v6287 = vunpack.c.l.b16 %v6045
    %v6288 = vunpack.c.h.b16 %v6045
    %v6289 = vunpack.c.l.b16 %v6046
    %v6290 = vunpack.c.l.b16 %v6047
    %v6291 = vunpack.c.h.b16 %v6047
    %v6292 = vunpack.c.l.b16 %v6048
    %v6293 = vunpack.c.l.b16 %v6049
    %v6294 = vunpack.c.h.b16 %v6049
    %v6295 = vunpack.c.l.b16 %v6050
    %v6296 = vunpack.c.l.b16 %v6051
    %v6297 = vunpack.c.h.b16 %v6051
    %v6298 = vunpack.c.l.b16 %v6052
    %v6299 = vunpack.c.l.b16 %v6053
    %v6300 = vunpack.c.h.b16 %v6053
    %v6301 = vunpack.c.l.b16 %v6054
    %v6302 = vunpack.c.l.b16 %v6055
    %v6303 = vunpack.c.h.b16 %v6055
    %v6304 = vunpack.c.l.b16 %v6056
    %v6305 = vunpack.c.l.b16 %v6057
    %v6306 = vunpack.c.h.b16 %v6057
    %v6307 = vunpack.c.l.b16 %v6058
    %v6308 = vunpack.c.l.b16 %v6059
    %v6309 = vunpack.c.h.b16 %v6059
    %v6310 = vunpack.c.l.b16 %v6060
    %v6311 = vunpack.c.l.b16 %v6061
    %v6312 = vunpack.c.h.b16 %v6061
    %v6313 = vunpack.c.l.b16 %v6062
    %v6314 = vunpack.c.l.b16 %v6063
    %v6315 = vunpack.c.h.b16 %v6063
    %v6316 = vunpack.c.l.b16 %v6064
    %v6317 = vunpack.c.l.b16 %v6065
    %v6318 = vunpack.c.h.b16 %v6065
    %v6319 = vunpack.c.l.b16 %v6066
    %v6320 = vunpack.c.l.b16 %v6067
    %v6321 = vunpack.c.h.b16 %v6067
    %v6322 = vunpack.c.l.b16 %v6068
    %v6323 = vunpack.c.l.b16 %v6069
    %v6324 = vunpack.c.h.b16 %v6069
    %v6325 = vunpack.c.l.b16 %v6070
    %v6326 = vunpack.c.l.b16 %v6071
    %v6327 = vunpack.c.h.b16 %v6071
    %v6328 = vunpack.c.l.b16 %v6072
    %v6329 = vunpack.c.l.b16 %v6073
    %v6330 = vunpack.c.h.b16 %v6073
    %v6331 = vunpack.c.l.b16 %v6074
    %v6332 = vunpack.c.l.b16 %v6075
    %v6333 = vunpack.c.h.b16 %v6075
    %v6334 = vunpack.c.l.b16 %v6076
    %v6335 = vunpack.c.l.b16 %v6077
    %v6336 = vunpack.c.h.b16 %v6077
    %v6337 = vunpack.c.l.b16 %v6078
    %v6338 = vunpack.c.l.b16 %v6079
    %v6339 = vunpack.c.h.b16 %v6079
    %v6340 = vunpack.c.l.b16 %v6080
    %v6341 = vunpack.c.l.b16 %v6081
    %v6342 = vunpack.c.h.b16 %v6081
    %v6343 = vunpack.c.l.b16 %v6082
    %v6344 = vunpack.c.l.b16 %v6083
    %v6345 = vunpack.c.h.b16 %v6083
    %v6346 = vunpack.c.l.b16 %v6084
    %v6347 = vunpack.c.l.b16 %v6085
    %v6348 = vunpack.c.h.b16 %v6085
    %v6349 = vunpack.c.l.b16 %v6086
    %v6350 = vunpack.c.l.b16 %v6087
    %v6351 = vunpack.c.h.b16 %v6087
    %v6352 = vunpack.c.l.b16 %v6088
    %v6353 = vunpack.c.l.b16 %v6089
    %v6354 = vunpack.c.h.b16 %v6089
    %v6355 = vunpack.c.l.b16 %v6090
    %v6356 = vunpack.c.l.b16 %v6091
    %v6357 = vunpack.c.h.b16 %v6091
    %v6358 = vunpack.c.l.b16 %v6092
    %v6359 = vunpack.c.l.b16 %v6093
    %v6360 = vunpack.c.h.b16 %v6093
    %v6361 = vunpack.c.l.b16 %v6094
    %v6362 = vunpack.c.l.b16 %v6095
    %v6363 = vunpack.c.h.b16 %v6095
    %v6364 = vunpack.c.l.b16 %v6096
    %v6365 = vpack.c.b16 %v6224, %v6221
    %v6366 = vpack.c.b16 %v6225, %v6222
    %v6367 = vpack.c.b16 %v6226, %v6223
    %v6368 = vpack.c.b16 %v6230, %v6227
    %v6369 = vpack.c.b16 %v6231, %v6228
    %v6370 = vpack.c.b16 %v6232, %v6229
    %v6371 = vpack.c.b16 %v6236, %v6233
    %v6372 = vpack.c.b16 %v6237, %v6234
    %v6373 = vpack.c.b16 %v6238, %v6235
    %v6374 = vpack.c.b16 %v6242, %v6239
    %v6375 = vpack.c.b16 %v6243, %v6240
    %v6376 = vpack.c.b16 %v6244, %v6241
    %v6377 = vpack.c.b16 %v6248, %v6245
    %v6378 = vpack.c.b16 %v6249, %v6246
    %v6379 = vpack.c.b16 %v6250, %v6247
    %v6380 = vpack.c.b16 %v6254, %v6251
    %v6381 = vpack.c.b16 %v6255, %v6252
    %v6382 = vpack.c.b16 %v6256, %v6253
    %v6383 = vpack.c.b16 %v6260, %v6257
    %v6384 = vpack.c.b16 %v6261, %v6258
    %v6385 = vpack.c.b16 %v6262, %v6259
    %v6386 = vpack.c.b16 %v6266, %v6263
    %v6387 = vpack.c.b16 %v6267, %v6264
    %v6388 = vpack.c.b16 %v6268, %v6265
    %v6389 = vpack.c.b16 %v6272, %v6269
    %v6390 = vpack.c.b16 %v6273, %v6270
    %v6391 = vpack.c.b16 %v6274, %v6271
    %v6392 = vpack.c.b16 %v6278, %v6275
    %v6393 = vpack.c.b16 %v6279, %v6276
    %v6394 = vpack.c.b16 %v6280, %v6277
    %v6395 = vpack.c.b16 %v6284, %v6281
    %v6396 = vpack.c.b16 %v6285, %v6282
    %v6397 = vpack.c.b16 %v6286, %v6283
    %v6398 = vpack.c.b16 %v6290, %v6287
    %v6399 = vpack.c.b16 %v6291, %v6288
    %v6400 = vpack.c.b16 %v6292, %v6289
    %v6401 = vpack.c.b16 %v6296, %v6293
    %v6402 = vpack.c.b16 %v6297, %v6294
    %v6403 = vpack.c.b16 %v6298, %v6295
    %v6404 = vpack.c.b16 %v6302, %v6299
    %v6405 = vpack.c.b16 %v6303, %v6300
    %v6406 = vpack.c.b16 %v6304, %v6301
    %v6407 = vpack.c.b16 %v6308, %v6305
    %v6408 = vpack.c.b16 %v6309, %v6306
    %v6409 = vpack.c.b16 %v6310, %v6307
    %v6410 = vpack.c.b16 %v6314, %v6311
    %v6411 = vpack.c.b16 %v6315, %v6312
    %v6412 = vpack.c.b16 %v6316, %v6313
    %v6413 = vpack.c.b16 %v6320, %v6317
    %v6414 = vpack.c.b16 %v6321, %v6318
    %v6415 = vpack.c.b16 %v6322, %v6319
    %v6416 = vpack.c.b16 %v6326, %v6323
    %v6417 = vpack.c.b16 %v6327, %v6324
    %v6418 = vpack.c.b16 %v6328, %v6325
    %v6419 = vpack.c.b16 %v6332, %v6329
    %v6420 = vpack.c.b16 %v6333, %v6330
    %v6421 = vpack.c.b16 %v6334, %v6331
    %v6422 = vpack.c.b16 %v6338, %v6335
    %v6423 = vpack.c.b16 %v6339, %v6336
    %v6424 = vpack.c.b16 %v6340, %v6337
    %v6425 = vpack.c.b16 %v6344, %v6341
    %v6426 = vpack.c.b16 %v6345, %v6342
    %v6427 = vpack.c.b16 %v6346, %v6343
    %v6428 = vpack.c.b16 %v6350, %v6347
    %v6429 = vpack.c.b16 %v6351, %v6348
    %v6430 = vpack.c.b16 %v6352, %v6349
    %v6431 = vpack.c.b16 %v6356, %v6353
    %v6432 = vpack.c.b16 %v6357, %v6354
    %v6433 = vpack.c.b16 %v6358, %v6355
    %v6434 = vpack.c.b16 %v6362, %v6359
    %v6435 = vpack.c.b16 %v6363, %v6360
    %v6436 = vpack.c.b16 %v6364, %v6361
    %6509 = vmatprep.subr.bf16.mxu0 %v6387
    %6510 = vmatpush1.bf16.msra.mxu0 %v6386
    %6511 = vmatprep.subr.bf16.mxu0 %v6384
    %6512 = vmatpush1.bf16.msra.mxu0 %v6383
    %6513 = vmatprep.subr.bf16.mxu0 %v6381
    %6514 = vmatpush1.bf16.msra.mxu0 %v6380
    %6515 = vmatprep.subr.bf16.mxu0 %v6378
    %6516 = vmatpush1.bf16.msra.mxu0 %v6377
    %6517 = vmatprep.subr.bf16.mxu0 %v6375
    %6518 = vmatpush1.bf16.msra.mxu0 %v6374
    %6519 = vmatprep.subr.bf16.mxu0 %v6372
    %6520 = vmatpush1.bf16.msra.mxu0 %v6371
    %6521 = vmatprep.subr.bf16.mxu0 %v6369
    %6522 = vmatpush1.bf16.msra.mxu0 %v6368
    %6523 = vmatprep.subr.bf16.mxu0 %v6366
    %6524 = vmatpush1.bf16.msra.mxu0 %v6365
    %6525 = vmatprep.subr.bf16.mxu0 %v6411
    %6526 = vmatpush2.bf16.msra.mxu0 %v6410
    %6527 = vmatprep.subr.bf16.mxu0 %v6408
    %6528 = vmatpush2.bf16.msra.mxu0 %v6407
    %6529 = vmatprep.subr.bf16.mxu0 %v6405
    %6530 = vmatpush2.bf16.msra.mxu0 %v6404
    %6531 = vmatprep.subr.bf16.mxu0 %v6402
    %6532 = vmatpush2.bf16.msra.mxu0 %v6401
    %6533 = vmatprep.subr.bf16.mxu0 %v6399
    %6534 = vmatpush2.bf16.msra.mxu0 %v6398
    %6535 = vmatprep.subr.bf16.mxu0 %v6396
    %6536 = vmatpush2.bf16.msra.mxu0 %v6395
    %6537 = vmatprep.subr.bf16.mxu0 %v6393
    %6538 = vmatpush2.bf16.msra.mxu0 %v6392
    %6539 = vmatprep.subr.bf16.mxu0 %v6390
    %6540 = vmatpush2.bf16.msra.mxu0 %v6389
    %6541 = vmatprep.mubr.bf16.mxu0 %v5999
    %6542 = vmatmul.mubr.bf16.gmra.mxu0 %v5998
    %v6543 = vpop.f32.mrf.mxu0
    %v6544 = vadd.f32 %v6116, %v6543
    %v6545 = vpop.f32.mrf.mxu0
    %v6546 = vadd.f32 %v6120, %v6545
    %v6547 = vpop.f32.mrf.mxu0
    %v6548 = vpop.f32.mrf.mxu0
    %6549 = vdwg.mxu0
    %6550 = vmatprep.subr.bf16.mxu0 %v6435
    %6551 = vmatpush1.bf16.msra.mxu0 %v6434
    %6552 = vmatprep.subr.bf16.mxu0 %v6432
    %6553 = vmatpush1.bf16.msra.mxu0 %v6431
    %6554 = vmatprep.subr.bf16.mxu0 %v6429
    %6555 = vmatpush1.bf16.msra.mxu0 %v6428
    %6556 = vmatprep.subr.bf16.mxu0 %v6426
    %6557 = vmatpush1.bf16.msra.mxu0 %v6425
    %6558 = vmatprep.subr.bf16.mxu0 %v6423
    %6559 = vmatpush1.bf16.msra.mxu0 %v6422
    %6560 = vmatprep.subr.bf16.mxu0 %v6420
    %6561 = vmatpush1.bf16.msra.mxu0 %v6419
    %6562 = vmatprep.subr.bf16.mxu0 %v6417
    %6563 = vmatpush1.bf16.msra.mxu0 %v6416
    %6564 = vmatprep.subr.bf16.mxu0 %v6414
    %6565 = vmatpush1.bf16.msra.mxu0 %v6413
    %6566 = vmatprep.subr.bf16.mxu0 0
    %6567 = vmatpush2.bf16.msra.mxu0 0
    %6568 = vmatprep.subr.bf16.mxu0 0
    %6569 = vmatpush2.bf16.msra.mxu0 0
    %6570 = vmatprep.subr.bf16.mxu0 0
    %6571 = vmatpush2.bf16.msra.mxu0 0
    %6572 = vmatprep.subr.bf16.mxu0 0
    %6573 = vmatpush2.bf16.msra.mxu0 0
    %6574 = vmatprep.subr.bf16.mxu0 0
    %6575 = vmatpush2.bf16.msra.mxu0 0
    %6576 = vmatprep.subr.bf16.mxu0 0
    %6577 = vmatpush2.bf16.msra.mxu0 0
    %6578 = vmatprep.subr.bf16.mxu0 0
    %6579 = vmatpush2.bf16.msra.mxu0 0
    %6580 = vmatprep.subr.bf16.mxu0 0
    %6581 = vmatpush2.bf16.msra.mxu0 0
    %6582 = vmatprep.mubr.bf16.mxu0 0
    %6583 = vmatmul.mubr.bf16.gmra.mxu0 %v6000
    %v6584 = vpop.f32.mrf.mxu0
    %v6585 = vadd.f32 %v6544, %v6584
    %v6586 = vpop.f32.mrf.mxu0
    %v6587 = vadd.f32 %v6546, %v6586
    %v6588 = vpop.f32.mrf.mxu0
    %v6589 = vpop.f32.mrf.mxu0
    %6590 = vdwg.mxu0
    %6591 = vmatprep.subr.bf16.mxu0 0
    %6592 = vmatpush1.bf16.msra.mxu0 %v6388
    %6593 = vmatprep.subr.bf16.mxu0 0
    %6594 = vmatpush1.bf16.msra.mxu0 %v6385
    %6595 = vmatprep.subr.bf16.mxu0 0
    %6596 = vmatpush1.bf16.msra.mxu0 %v6382
    %6597 = vmatprep.subr.bf16.mxu0 0
    %6598 = vmatpush1.bf16.msra.mxu0 %v6379
    %6599 = vmatprep.subr.bf16.mxu0 0
    %6600 = vmatpush1.bf16.msra.mxu0 %v6376
    %6601 = vmatprep.subr.bf16.mxu0 0
    %6602 = vmatpush1.bf16.msra.mxu0 %v6373
    %6603 = vmatprep.subr.bf16.mxu0 0
    %6604 = vmatpush1.bf16.msra.mxu0 %v6370
    %6605 = vmatprep.subr.bf16.mxu0 0
    %6606 = vmatpush1.bf16.msra.mxu0 %v6367
    %6607 = vmatprep.subr.bf16.mxu0 0
    %6608 = vmatpush2.bf16.msra.mxu0 %v6412
    %6609 = vmatprep.subr.bf16.mxu0 0
    %6610 = vmatpush2.bf16.msra.mxu0 %v6409
    %6611 = vmatprep.subr.bf16.mxu0 0
    %6612 = vmatpush2.bf16.msra.mxu0 %v6406
    %6613 = vmatprep.subr.bf16.mxu0 0
    %6614 = vmatpush2.bf16.msra.mxu0 %v6403
    %6615 = vmatprep.subr.bf16.mxu0 0
    %6616 = vmatpush2.bf16.msra.mxu0 %v6400
    %6617 = vmatprep.subr.bf16.mxu0 0
    %6618 = vmatpush2.bf16.msra.mxu0 %v6397
    %6619 = vmatprep.subr.bf16.mxu0 0
    %6620 = vmatpush2.bf16.msra.mxu0 %v6394
    %6621 = vmatprep.subr.bf16.mxu0 0
    %6622 = vmatpush2.bf16.msra.mxu0 %v6391
    %6623 = vmatprep.mubr.bf16.mxu0 %v5999
    %6624 = vmatmul.mubr.bf16.gmra.mxu0 %v5998
    %v6625 = vpop.f32.mrf.mxu0
    %v6626 = vadd.f32 %v6124, %v6625
    %v6627 = vpop.f32.mrf.mxu0
    %v6628 = vpop.f32.mrf.mxu0
    %v6629 = vpop.f32.mrf.mxu0
    %6630 = vdwg.mxu0
    %6631 = vmatprep.subr.bf16.mxu0 0
    %6632 = vmatpush1.bf16.msra.mxu0 %v6436
    %6633 = vmatprep.subr.bf16.mxu0 0
    %6634 = vmatpush1.bf16.msra.mxu0 %v6433
    %6635 = vmatprep.subr.bf16.mxu0 0
    %6636 = vmatpush1.bf16.msra.mxu0 %v6430
    %6637 = vmatprep.subr.bf16.mxu0 0
    %6638 = vmatpush1.bf16.msra.mxu0 %v6427
    %6639 = vmatprep.subr.bf16.mxu0 0
    %6640 = vmatpush1.bf16.msra.mxu0 %v6424
    %6641 = vmatprep.subr.bf16.mxu0 0
    %6642 = vmatpush1.bf16.msra.mxu0 %v6421
    %6643 = vmatprep.subr.bf16.mxu0 0
    %6644 = vmatpush1.bf16.msra.mxu0 %v6418
    %6645 = vmatprep.subr.bf16.mxu0 0
    %6646 = vmatpush1.bf16.msra.mxu0 %v6415
    %6647 = vmatprep.subr.bf16.mxu0 0
    %6648 = vmatpush2.bf16.msra.mxu0 0
    %6649 = vmatprep.subr.bf16.mxu0 0
    %6650 = vmatpush2.bf16.msra.mxu0 0
    %6651 = vmatprep.subr.bf16.mxu0 0
    %6652 = vmatpush2.bf16.msra.mxu0 0
    %6653 = vmatprep.subr.bf16.mxu0 0
    %6654 = vmatpush2.bf16.msra.mxu0 0
    %6655 = vmatprep.subr.bf16.mxu0 0
    %6656 = vmatpush2.bf16.msra.mxu0 0
    %6657 = vmatprep.subr.bf16.mxu0 0
    %6658 = vmatpush2.bf16.msra.mxu0 0
    %6659 = vmatprep.subr.bf16.mxu0 0
    %6660 = vmatpush2.bf16.msra.mxu0 0
    %6661 = vmatprep.subr.bf16.mxu0 0
    %6662 = vmatpush2.bf16.msra.mxu0 0
    %6663 = vmatprep.mubr.bf16.mxu0 0
    %6664 = vmatmul.mubr.bf16.gmra.mxu0 %v6000
    %v6665 = vpop.f32.mrf.mxu0
    %v6666 = vadd.f32 %v6626, %v6665
    %v6667 = vpop.f32.mrf.mxu0
    %v6668 = vpop.f32.mrf.mxu0
    %v6669 = vpop.f32.mrf.mxu0
    %6670 = vdwg.mxu0
    %v6671 = vpack.c.bf16 %v5827, %v5827
    %v6672 = vld [vmem:[#allocation18] sm:$0xff]
    %v6673 = vld [vmem:[#allocation18 + $0x8] sm:$0xf]
    %v6674 = vld [vmem:[#allocation18 + $0xc] sm:$0xff]
    %v6675 = vld [vmem:[#allocation18 + $0x14] sm:$0xf]
    %v6676 = vld [vmem:[#allocation18 + $0x18] sm:$0xff]
    %v6677 = vld [vmem:[#allocation18 + $0x20] sm:$0xf]
    %v6678 = vld [vmem:[#allocation18 + $0x24] sm:$0xff]
    %v6679 = vld [vmem:[#allocation18 + $0x2c] sm:$0xf]
    %v6680 = vld [vmem:[#allocation18 + $0x30] sm:$0xff]
    %v6681 = vld [vmem:[#allocation18 + $0x38] sm:$0xf]
    %v6682 = vld [vmem:[#allocation18 + $0x3c] sm:$0xff]
    %v6683 = vld [vmem:[#allocation18 + $0x44] sm:$0xf]
    %v6684 = vld [vmem:[#allocation18 + $0x48] sm:$0xff]
    %v6685 = vld [vmem:[#allocation18 + $0x50] sm:$0xf]
    %v6686 = vld [vmem:[#allocation18 + $0x54] sm:$0xff]
    %v6687 = vld [vmem:[#allocation18 + $0x5c] sm:$0xf]
    %v6688 = vld [vmem:[#allocation18 + $0x60] sm:$0xff]
    %v6689 = vld [vmem:[#allocation18 + $0x68] sm:$0xf]
    %v6690 = vld [vmem:[#allocation18 + $0x6c] sm:$0xff]
    %v6691 = vld [vmem:[#allocation18 + $0x74] sm:$0xf]
    %v6692 = vld [vmem:[#allocation18 + $0x78] sm:$0xff]
    %v6693 = vld [vmem:[#allocation18 + $0x80] sm:$0xf]
    %v6694 = vld [vmem:[#allocation18 + $0x84] sm:$0xff]
    %v6695 = vld [vmem:[#allocation18 + $0x8c] sm:$0xf]
    %v6696 = vld [vmem:[#allocation18 + $0x90] sm:$0xff]
    %v6697 = vld [vmem:[#allocation18 + $0x98] sm:$0xf]
    %v6698 = vld [vmem:[#allocation18 + $0x9c] sm:$0xff]
    %v6699 = vld [vmem:[#allocation18 + $0xa4] sm:$0xf]
    %v6700 = vld [vmem:[#allocation18 + $0xa8] sm:$0xff]
    %v6701 = vld [vmem:[#allocation18 + $0xb0] sm:$0xf]
    %v6702 = vld [vmem:[#allocation18 + $0xb4] sm:$0xff]
    %v6703 = vld [vmem:[#allocation18 + $0xbc] sm:$0xf]
    %v6704 = vlaneseq
    %v6705 = vshrl.u32 %v6704, 7
    %v6706 = vsub.s32 1, %v6705
    %v6707 = vrot.slane %v5981, %v6706
    %v6708 = vlaneseq
    %v6709 = vshrl.u32 %v6708, 7
    %v6710 = vsub.s32 3, %v6709
    %v6711 = vrot.slane %v5981, %v6710
    %v6712 = vlaneseq
    %v6713 = vshrl.u32 %v6712, 7
    %v6714 = vsub.s32 5, %v6713
    %v6715 = vrot.slane %v5981, %v6714
    %v6719 = vlaneseq
    %v6720 = vshrl.u32 %v6719, 7
    %v6721 = vsub.s32 1, %v6720
    %v6722 = vrot.slane %v6707, %v6721
    %v6723 = vlaneseq
    %v6724 = vshrl.u32 %v6723, 7
    %v6725 = vsub.s32 1, %v6724
    %v6726 = vrot.slane %v6711, %v6725
    %v6727 = vlaneseq
    %v6728 = vshrl.u32 %v6727, 7
    %v6729 = vsub.s32 1, %v6728
    %v6730 = vrot.slane %v6715, %v6729
    %v6763 = vunpack.c.l.b16 %v6672
    %v6764 = vunpack.c.h.b16 %v6672
    %v6765 = vunpack.c.l.b16 %v6673
    %v6766 = vunpack.c.l.b16 %v6674
    %v6767 = vunpack.c.h.b16 %v6674
    %v6768 = vunpack.c.l.b16 %v6675
    %v6769 = vunpack.c.l.b16 %v6676
    %v6770 = vunpack.c.h.b16 %v6676
    %v6771 = vunpack.c.l.b16 %v6677
    %v6772 = vunpack.c.l.b16 %v6678
    %v6773 = vunpack.c.h.b16 %v6678
    %v6774 = vunpack.c.l.b16 %v6679
    %v6775 = vunpack.c.l.b16 %v6680
    %v6776 = vunpack.c.h.b16 %v6680
    %v6777 = vunpack.c.l.b16 %v6681
    %v6778 = vunpack.c.l.b16 %v6682
    %v6779 = vunpack.c.h.b16 %v6682
    %v6780 = vunpack.c.l.b16 %v6683
    %v6781 = vunpack.c.l.b16 %v6684
    %v6782 = vunpack.c.h.b16 %v6684
    %v6783 = vunpack.c.l.b16 %v6685
    %v6784 = vunpack.c.l.b16 %v6686
    %v6785 = vunpack.c.h.b16 %v6686
    %v6786 = vunpack.c.l.b16 %v6687
    %v6787 = vunpack.c.l.b16 %v6688
    %v6788 = vunpack.c.h.b16 %v6688
    %v6789 = vunpack.c.l.b16 %v6689
    %v6790 = vunpack.c.l.b16 %v6690
    %v6791 = vunpack.c.h.b16 %v6690
    %v6792 = vunpack.c.l.b16 %v6691
    %v6793 = vunpack.c.l.b16 %v6692
    %v6794 = vunpack.c.h.b16 %v6692
    %v6795 = vunpack.c.l.b16 %v6693
    %v6796 = vunpack.c.l.b16 %v6694
    %v6797 = vunpack.c.h.b16 %v6694
    %v6798 = vunpack.c.l.b16 %v6695
    %v6799 = vunpack.c.l.b16 %v6696
    %v6800 = vunpack.c.h.b16 %v6696
    %v6801 = vunpack.c.l.b16 %v6697
    %v6802 = vunpack.c.l.b16 %v6698
    %v6803 = vunpack.c.h.b16 %v6698
    %v6804 = vunpack.c.l.b16 %v6699
    %v6805 = vunpack.c.l.b16 %v6700
    %v6806 = vunpack.c.h.b16 %v6700
    %v6807 = vunpack.c.l.b16 %v6701
    %v6808 = vunpack.c.l.b16 %v6702
    %v6809 = vunpack.c.h.b16 %v6702
    %v6810 = vunpack.c.l.b16 %v6703
    %v6811 = vpack.c.b16 %v6766, %v6763
    %v6812 = vpack.c.b16 %v6767, %v6764
    %v6813 = vpack.c.b16 %v6768, %v6765
    %v6814 = vpack.c.b16 %v6772, %v6769
    %v6815 = vpack.c.b16 %v6773, %v6770
    %v6816 = vpack.c.b16 %v6774, %v6771
    %v6817 = vpack.c.b16 %v6778, %v6775
    %v6818 = vpack.c.b16 %v6779, %v6776
    %v6819 = vpack.c.b16 %v6780, %v6777
    %v6820 = vpack.c.b16 %v6784, %v6781
    %v6821 = vpack.c.b16 %v6785, %v6782
    %v6822 = vpack.c.b16 %v6786, %v6783
    %v6823 = vpack.c.b16 %v6790, %v6787
    %v6824 = vpack.c.b16 %v6791, %v6788
    %v6825 = vpack.c.b16 %v6792, %v6789
    %v6826 = vpack.c.b16 %v6796, %v6793
    %v6827 = vpack.c.b16 %v6797, %v6794
    %v6828 = vpack.c.b16 %v6798, %v6795
    %v6829 = vpack.c.b16 %v6802, %v6799
    %v6830 = vpack.c.b16 %v6803, %v6800
    %v6831 = vpack.c.b16 %v6804, %v6801
    %v6832 = vpack.c.b16 %v6808, %v6805
    %v6833 = vpack.c.b16 %v6809, %v6806
    %v6834 = vpack.c.b16 %v6810, %v6807
    %6859 = vmatprep.subr.bf16.mxu0 %v6833
    %6860 = vmatpush1.bf16.msra.mxu0 %v6832
    %6861 = vmatprep.subr.bf16.mxu0 %v6830
    %6862 = vmatpush1.bf16.msra.mxu0 %v6829
    %6863 = vmatprep.subr.bf16.mxu0 %v6827
    %6864 = vmatpush1.bf16.msra.mxu0 %v6826
    %6865 = vmatprep.subr.bf16.mxu0 %v6824
    %6866 = vmatpush1.bf16.msra.mxu0 %v6823
    %6867 = vmatprep.subr.bf16.mxu0 %v6821
    %6868 = vmatpush1.bf16.msra.mxu0 %v6820
    %6869 = vmatprep.subr.bf16.mxu0 %v6818
    %6870 = vmatpush1.bf16.msra.mxu0 %v6817
    %6871 = vmatprep.subr.bf16.mxu0 %v6815
    %6872 = vmatpush1.bf16.msra.mxu0 %v6814
    %6873 = vmatprep.subr.bf16.mxu0 %v6812
    %6874 = vmatpush1.bf16.msra.mxu0 %v6811
    %6875 = vmatprep.subr.bf16.mxu0 0
    %6876 = vmatpush2.bf16.msra.mxu0 0
    %6877 = vmatprep.subr.bf16.mxu0 0
    %6878 = vmatpush2.bf16.msra.mxu0 0
    %6879 = vmatprep.subr.bf16.mxu0 0
    %6880 = vmatpush2.bf16.msra.mxu0 0
    %6881 = vmatprep.subr.bf16.mxu0 0
    %6882 = vmatpush2.bf16.msra.mxu0 0
    %6883 = vmatprep.subr.bf16.mxu0 0
    %6884 = vmatpush2.bf16.msra.mxu0 0
    %6885 = vmatprep.subr.bf16.mxu0 0
    %6886 = vmatpush2.bf16.msra.mxu0 0
    %6887 = vmatprep.subr.bf16.mxu0 0
    %6888 = vmatpush2.bf16.msra.mxu0 0
    %6889 = vmatprep.subr.bf16.mxu0 0
    %6890 = vmatpush2.bf16.msra.mxu0 0
    %6891 = vmatprep.mubr.bf16.mxu0 0
    %6892 = vmatmul.mubr.bf16.gmra.mxu0 %v6671
    %v6893 = vpop.f32.mrf.mxu0
    %v6894 = vadd.f32 %v6722, %v6893
    %v6895 = vpop.f32.mrf.mxu0
    %v6896 = vadd.f32 %v6726, %v6895
    %v6897 = vpop.f32.mrf.mxu0
    %v6898 = vpop.f32.mrf.mxu0
    %6899 = vdwg.mxu0
    %6900 = vmatprep.subr.bf16.mxu0 0
    %6901 = vmatpush1.bf16.msra.mxu0 %v6834
    %6902 = vmatprep.subr.bf16.mxu0 0
    %6903 = vmatpush1.bf16.msra.mxu0 %v6831
    %6904 = vmatprep.subr.bf16.mxu0 0
    %6905 = vmatpush1.bf16.msra.mxu0 %v6828
    %6906 = vmatprep.subr.bf16.mxu0 0
    %6907 = vmatpush1.bf16.msra.mxu0 %v6825
    %6908 = vmatprep.subr.bf16.mxu0 0
    %6909 = vmatpush1.bf16.msra.mxu0 %v6822
    %6910 = vmatprep.subr.bf16.mxu0 0
    %6911 = vmatpush1.bf16.msra.mxu0 %v6819
    %6912 = vmatprep.subr.bf16.mxu0 0
    %6913 = vmatpush1.bf16.msra.mxu0 %v6816
    %6914 = vmatprep.subr.bf16.mxu0 0
    %6915 = vmatpush1.bf16.msra.mxu0 %v6813
    %6916 = vmatprep.subr.bf16.mxu0 0
    %6917 = vmatpush2.bf16.msra.mxu0 0
    %6918 = vmatprep.subr.bf16.mxu0 0
    %6919 = vmatpush2.bf16.msra.mxu0 0
    %6920 = vmatprep.subr.bf16.mxu0 0
    %6921 = vmatpush2.bf16.msra.mxu0 0
    %6922 = vmatprep.subr.bf16.mxu0 0
    %6923 = vmatpush2.bf16.msra.mxu0 0
    %6924 = vmatprep.subr.bf16.mxu0 0
    %6925 = vmatpush2.bf16.msra.mxu0 0
    %6926 = vmatprep.subr.bf16.mxu0 0
    %6927 = vmatpush2.bf16.msra.mxu0 0
    %6928 = vmatprep.subr.bf16.mxu0 0
    %6929 = vmatpush2.bf16.msra.mxu0 0
    %6930 = vmatprep.subr.bf16.mxu0 0
    %6931 = vmatpush2.bf16.msra.mxu0 0
    %6932 = vmatprep.mubr.bf16.mxu0 0
    %6933 = vmatmul.mubr.bf16.gmra.mxu0 %v6671
    %v6934 = vpop.f32.mrf.mxu0
    %v6935 = vadd.f32 %v6730, %v6934
    %v6936 = vpop.f32.mrf.mxu0
    %v6937 = vpop.f32.mrf.mxu0
    %v6938 = vpop.f32.mrf.mxu0
    %6939 = vdwg.mxu0
    %v6940 = vadd.f32 %v6585, %v6894
    %v6941 = vxor.u32 %v6940, 2147483648
    %v6942 = vmul.f32 %v6941, 1.442695
    %v6943 = vpow.pop %v6942
    %v6944 = vadd.f32 %v6943, 1.0
    %v6945 = vrcp.pop %v6944
    %v6946 = vmul.f32 1.0, %v6945
    %v6947 = vadd.f32 %v6587, %v6896
    %v6948 = vxor.u32 %v6947, 2147483648
    %v6949 = vmul.f32 %v6948, 1.442695
    %v6950 = vpow.pop %v6949
    %v6951 = vadd.f32 %v6950, 1.0
    %v6952 = vrcp.pop %v6951
    %v6953 = vmul.f32 1.0, %v6952
    %v6954 = vmul.f32 %v6946, %v6935
    %v6955 = vadd.f32 %v6666, %v6954
    %v6956 = vtanh.pop %v6955
    %v6957 = vsub.f32 1.0, %v6953
    %v6958 = vmul.f32 %v6957, %v6956
    %v6959 = vmul.f32 %v6953, %v5827
    %v6960 = vadd.f32 %v6958, %v6959
    %v6961 = vpack.c.bf16 %v6960, %v6960
    %v6962 = vld [vmem:[#allocation20] sm:$0xf]
    %v6963 = vld [vmem:[#allocation20 + $0x4] sm:$0xf]
    %v6964 = vld [vmem:[#allocation20 + $0x8] sm:$0xf]
    %v6965 = vld [vmem:[#allocation20 + $0xc] sm:$0xf]
    %v6966 = vld [vmem:[#allocation20 + $0x10] sm:$0xf]
    %v6967 = vld [vmem:[#allocation20 + $0x14] sm:$0xf]
    %v6968 = vld [vmem:[#allocation20 + $0x18] sm:$0xf]
    %v6969 = vld [vmem:[#allocation20 + $0x1c] sm:$0xf]
    %v6970 = vld [vmem:[#allocation20 + $0x20] sm:$0xf]
    %v6971 = vld [vmem:[#allocation20 + $0x24] sm:$0xf]
    %v6972 = vld [vmem:[#allocation20 + $0x28] sm:$0xf]
    %v6973 = vld [vmem:[#allocation20 + $0x2c] sm:$0xf]
    %v6974 = vld [vmem:[#allocation20 + $0x30] sm:$0xf]
    %v6975 = vld [vmem:[#allocation20 + $0x34] sm:$0xf]
    %v6976 = vld [vmem:[#allocation20 + $0x38] sm:$0xf]
    %v6977 = vld [vmem:[#allocation20 + $0x3c] sm:$0xf]
    %v6978 = vld [vmem:[%s12] sm:$0x1]
    %v6980 = vlaneseq
    %v6981 = vshrl.u32 %v6980, 7
    %v6982 = vsub.s32 0, %v6981
    %v6983 = vrot.slane %v6978, %v6982
    %v7001 = vunpack.c.l.b16 %v6962
    %v7002 = vunpack.c.l.b16 %v6963
    %v7003 = vunpack.c.l.b16 %v6964
    %v7004 = vunpack.c.l.b16 %v6965
    %v7005 = vunpack.c.l.b16 %v6966
    %v7006 = vunpack.c.l.b16 %v6967
    %v7007 = vunpack.c.l.b16 %v6968
    %v7008 = vunpack.c.l.b16 %v6969
    %v7009 = vunpack.c.l.b16 %v6970
    %v7010 = vunpack.c.l.b16 %v6971
    %v7011 = vunpack.c.l.b16 %v6972
    %v7012 = vunpack.c.l.b16 %v6973
    %v7013 = vunpack.c.l.b16 %v6974
    %v7014 = vunpack.c.l.b16 %v6975
    %v7015 = vunpack.c.l.b16 %v6976
    %v7016 = vunpack.c.l.b16 %v6977
    %v7017 = vpack.c.b16 %v7002, %v7001
    %v7018 = vpack.c.b16 %v7004, %v7003
    %v7019 = vpack.c.b16 %v7006, %v7005
    %v7020 = vpack.c.b16 %v7008, %v7007
    %v7021 = vpack.c.b16 %v7010, %v7009
    %v7022 = vpack.c.b16 %v7012, %v7011
    %v7023 = vpack.c.b16 %v7014, %v7013
    %v7024 = vpack.c.b16 %v7016, %v7015
    %7033 = vmatprep.subr.bf16.mxu0 0
    %7034 = vmatpush1.bf16.msra.mxu0 %v7024
    %7035 = vmatprep.subr.bf16.mxu0 0
    %7036 = vmatpush1.bf16.msra.mxu0 %v7023
    %7037 = vmatprep.subr.bf16.mxu0 0
    %7038 = vmatpush1.bf16.msra.mxu0 %v7022
    %7039 = vmatprep.subr.bf16.mxu0 0
    %7040 = vmatpush1.bf16.msra.mxu0 %v7021
    %7041 = vmatprep.subr.bf16.mxu0 0
    %7042 = vmatpush1.bf16.msra.mxu0 %v7020
    %7043 = vmatprep.subr.bf16.mxu0 0
    %7044 = vmatpush1.bf16.msra.mxu0 %v7019
    %7045 = vmatprep.subr.bf16.mxu0 0
    %7046 = vmatpush1.bf16.msra.mxu0 %v7018
    %7047 = vmatprep.subr.bf16.mxu0 0
    %7048 = vmatpush1.bf16.msra.mxu0 %v7017
    %7049 = vmatprep.subr.bf16.mxu0 0
    %7050 = vmatpush2.bf16.msra.mxu0 0
    %7051 = vmatprep.subr.bf16.mxu0 0
    %7052 = vmatpush2.bf16.msra.mxu0 0
    %7053 = vmatprep.subr.bf16.mxu0 0
    %7054 = vmatpush2.bf16.msra.mxu0 0
    %7055 = vmatprep.subr.bf16.mxu0 0
    %7056 = vmatpush2.bf16.msra.mxu0 0
    %7057 = vmatprep.subr.bf16.mxu0 0
    %7058 = vmatpush2.bf16.msra.mxu0 0
    %7059 = vmatprep.subr.bf16.mxu0 0
    %7060 = vmatpush2.bf16.msra.mxu0 0
    %7061 = vmatprep.subr.bf16.mxu0 0
    %7062 = vmatpush2.bf16.msra.mxu0 0
    %7063 = vmatprep.subr.bf16.mxu0 0
    %7064 = vmatpush2.bf16.msra.mxu0 0
    %7065 = vmatprep.mubr.bf16.mxu0 0
    %7066 = vmatmul.mubr.bf16.gmra.mxu0 %v6961
    %v7067 = vpop.f32.mrf.mxu0
    %v7068 = vadd.f32 %v6983, %v7067
    %v7069 = vpop.f32.mrf.mxu0
    %v7070 = vpop.f32.mrf.mxu0
    %v7071 = vpop.f32.mrf.mxu0
    %7072 = vdwg.mxu0
    %s7073 = scalar_lea.vmem [#allocation21], 32
    %7074 = vst [vmem:[%s7073] sm:$0xff] %v7068
    %7075 = vmax.xlane.f32.xlu0 %v7068
    %v7076 = vpop.xlane.xlu0 %7075
    %vm7077 = vcmp.eq.f32.partialorder %v7068, %v7076
    %v7078 = vsel %vm7077, %v1434, 128
    %v7079 = vand.u32 %v7078, 65535
    %v7080 = vshra.s32 %v7078, 16
    %v7081 = vcvt.s32.f32 %v7079
    %v7082 = vcvt.s32.f32 %v7080
    %7083 = vmin.xlane.f32.xlu0 %v7082
    %v7084 = vpop.xlane.xlu0 %7083
    %vm7085 = vcmp.eq.f32.partialorder %v7082, %v7084
    %v7086 = vsel %vm7085, %v7081, inf
    %7087 = vmin.xlane.f32.xlu0 %v7086
    %v7088 = vpop.xlane.xlu0 %7087
    %v7089 = vcvt.f32.s32 %v7088
    %v7090 = vcvt.f32.s32 %v7084
    %v7091 = vshll.u32 %v7090, 16
    %v7092 = vadd.s32 %v7091, %v7089
    %vm7093 = vcmp.eq.s32.totalorder %v1434, %v7092
    %v7094 = vsel %vm7093, 1, 0
    %v7095 = vcvt.s32.f32 %v7094
    %v7096 = vpack.c.bf16 %v7095, %v7095
    %v7097 = vld [vmem:[#allocation15] sm:$0xff]
    %v7098 = vld [vmem:[#allocation15 + $0x8] sm:$0xff]
    %v7099 = vld [vmem:[#allocation15 + $0x10] sm:$0xff]
    %v7100 = vld [vmem:[#allocation15 + $0x18] sm:$0xff]
    %v7101 = vld [vmem:[#allocation15 + $0x20] sm:$0xff]
    %v7102 = vld [vmem:[#allocation15 + $0x28] sm:$0xff]
    %v7103 = vld [vmem:[#allocation15 + $0x30] sm:$0xff]
    %v7104 = vld [vmem:[#allocation15 + $0x38] sm:$0xff]
    %v7105 = vld [vmem:[#allocation15 + $0x40] sm:$0xff]
    %v7106 = vld [vmem:[#allocation15 + $0x48] sm:$0xff]
    %v7107 = vld [vmem:[#allocation15 + $0x50] sm:$0xff]
    %v7108 = vld [vmem:[#allocation15 + $0x58] sm:$0xff]
    %v7109 = vld [vmem:[#allocation15 + $0x60] sm:$0xff]
    %v7110 = vld [vmem:[#allocation15 + $0x68] sm:$0xff]
    %v7111 = vld [vmem:[#allocation15 + $0x70] sm:$0xff]
    %v7112 = vld [vmem:[#allocation15 + $0x78] sm:$0xff]
    %v7129 = vunpack.c.l.b16 %v7097
    %v7130 = vunpack.c.h.b16 %v7097
    %v7131 = vunpack.c.l.b16 %v7098
    %v7132 = vunpack.c.h.b16 %v7098
    %v7133 = vunpack.c.l.b16 %v7099
    %v7134 = vunpack.c.h.b16 %v7099
    %v7135 = vunpack.c.l.b16 %v7100
    %v7136 = vunpack.c.h.b16 %v7100
    %v7137 = vunpack.c.l.b16 %v7101
    %v7138 = vunpack.c.h.b16 %v7101
    %v7139 = vunpack.c.l.b16 %v7102
    %v7140 = vunpack.c.h.b16 %v7102
    %v7141 = vunpack.c.l.b16 %v7103
    %v7142 = vunpack.c.h.b16 %v7103
    %v7143 = vunpack.c.l.b16 %v7104
    %v7144 = vunpack.c.h.b16 %v7104
    %v7145 = vunpack.c.l.b16 %v7105
    %v7146 = vunpack.c.h.b16 %v7105
    %v7147 = vunpack.c.l.b16 %v7106
    %v7148 = vunpack.c.h.b16 %v7106
    %v7149 = vunpack.c.l.b16 %v7107
    %v7150 = vunpack.c.h.b16 %v7107
    %v7151 = vunpack.c.l.b16 %v7108
    %v7152 = vunpack.c.h.b16 %v7108
    %v7153 = vunpack.c.l.b16 %v7109
    %v7154 = vunpack.c.h.b16 %v7109
    %v7155 = vunpack.c.l.b16 %v7110
    %v7156 = vunpack.c.h.b16 %v7110
    %v7157 = vunpack.c.l.b16 %v7111
    %v7158 = vunpack.c.h.b16 %v7111
    %v7159 = vunpack.c.l.b16 %v7112
    %v7160 = vunpack.c.h.b16 %v7112
    %v7161 = vpack.c.b16 %v7131, %v7129
    %v7162 = vpack.c.b16 %v7132, %v7130
    %v7163 = vpack.c.b16 %v7135, %v7133
    %v7164 = vpack.c.b16 %v7136, %v7134
    %v7165 = vpack.c.b16 %v7139, %v7137
    %v7166 = vpack.c.b16 %v7140, %v7138
    %v7167 = vpack.c.b16 %v7143, %v7141
    %v7168 = vpack.c.b16 %v7144, %v7142
    %v7169 = vpack.c.b16 %v7147, %v7145
    %v7170 = vpack.c.b16 %v7148, %v7146
    %v7171 = vpack.c.b16 %v7151, %v7149
    %v7172 = vpack.c.b16 %v7152, %v7150
    %v7173 = vpack.c.b16 %v7155, %v7153
    %v7174 = vpack.c.b16 %v7156, %v7154
    %v7175 = vpack.c.b16 %v7159, %v7157
    %v7176 = vpack.c.b16 %v7160, %v7158
    %7193 = vmatprep.subr.bf16.mxu0 %v7176
    %7194 = vmatpush1.bf16.msra.mxu0 %v7175
    %7195 = vmatprep.subr.bf16.mxu0 %v7174
    %7196 = vmatpush1.bf16.msra.mxu0 %v7173
    %7197 = vmatprep.subr.bf16.mxu0 %v7172
    %7198 = vmatpush1.bf16.msra.mxu0 %v7171
    %7199 = vmatprep.subr.bf16.mxu0 %v7170
    %7200 = vmatpush1.bf16.msra.mxu0 %v7169
    %7201 = vmatprep.subr.bf16.mxu0 %v7168
    %7202 = vmatpush1.bf16.msra.mxu0 %v7167
    %7203 = vmatprep.subr.bf16.mxu0 %v7166
    %7204 = vmatpush1.bf16.msra.mxu0 %v7165
    %7205 = vmatprep.subr.bf16.mxu0 %v7164
    %7206 = vmatpush1.bf16.msra.mxu0 %v7163
    %7207 = vmatprep.subr.bf16.mxu0 %v7162
    %7208 = vmatpush1.bf16.msra.mxu0 %v7161
    %7209 = vmatprep.subr.bf16.mxu0 0
    %7210 = vmatpush2.bf16.msra.mxu0 0
    %7211 = vmatprep.subr.bf16.mxu0 0
    %7212 = vmatpush2.bf16.msra.mxu0 0
    %7213 = vmatprep.subr.bf16.mxu0 0
    %7214 = vmatpush2.bf16.msra.mxu0 0
    %7215 = vmatprep.subr.bf16.mxu0 0
    %7216 = vmatpush2.bf16.msra.mxu0 0
    %7217 = vmatprep.subr.bf16.mxu0 0
    %7218 = vmatpush2.bf16.msra.mxu0 0
    %7219 = vmatprep.subr.bf16.mxu0 0
    %7220 = vmatpush2.bf16.msra.mxu0 0
    %7221 = vmatprep.subr.bf16.mxu0 0
    %7222 = vmatpush2.bf16.msra.mxu0 0
    %7223 = vmatprep.subr.bf16.mxu0 0
    %7224 = vmatpush2.bf16.msra.mxu0 0
    %7225 = vmatprep.mubr.bf16.mxu0 0
    %7226 = vmatmul.mubr.bf16.gmra.mxu0 %v7096
    %v7227 = vpop.f32.mrf.mxu0
    %v7228 = vadd.f32 0.0, %v7227
    %v7229 = vpop.f32.mrf.mxu0
    %v7230 = vadd.f32 0.0, %v7229
    %v7231 = vpop.f32.mrf.mxu0
    %v7232 = vpop.f32.mrf.mxu0
    %7233 = vdwg.mxu0
    %7234 = vst [vmem:[#allocation3] sm:$0xff] %v7228
    %7235 = vst [vmem:[#allocation3 + $0x8] sm:$0xff] %v7230
    %7236 = vst [vmem:[#allocation2] sm:$0xff] %v6960
    // Predicated region
    $region94: #{tpu_custom_call.1} parent=1 // pred_check
      _
    $region95: #{tpu_custom_call.1} parent=1 // pred_check_branch
      %7238 = sbr.rel (0) target = $region97
    $region96: #{tpu_custom_call.1} parent=1 // pred_region
      %s7240 = ssub.s32 640, 640
      %7241 = vsyncadd [#allocation6], %s7240
      %s7242 = sshll.u32 [#allocation21], 4
      %s7243 = int_to_ptr.vmem [resolvable:$true] %s7242
      %7248 = dma.vmem_to_hbm [thread:$0]  %s7243, 640, %s13, [#allocation6], 128, 128, 8
    $region97: #{tpu_custom_call.1} parent=1 // pred_fallthru
      _
    // Predicated region
    $region98: #{tpu_custom_call.1} parent=1 // pred_check
      _
    $region99: #{tpu_custom_call.1} parent=1 // pred_check_branch
      %7250 = sbr.rel (0) target = $region101
    $region100: #{tpu_custom_call.1} parent=1 // pred_region
      %7251 = dma.done [#allocation6], 640
    $region101: #{tpu_custom_call.1} parent=1 // pred_fallthru
      _
    %7252 = vsyncpa [#allocation5], 1
    %7253 = vsyncpa [#allocation10], 1
    %7254 = vsyncpa [#allocation13], 1
    %7255 = vsyncpa [#allocation16], 1
    %7256 = vsyncpa [#allocation19], 1
    %7257 = vsyncpa [#allocation6], 1
    %7258 = vsyncpa [#allocation7], 1

</llo_original>
